<compile_context>
chip_gen: v5e
topology: v5e:2x2
jax: 0.10.0
libtpu: 0.0.40
codegen_flags: <defaults>
</compile_context>

<pallas_src>
import functools

import jax
import jax.numpy as jnp
from jax.experimental import pallas as pl
from jax.experimental.pallas import tpu as pltpu


# ---------------------------------------------------------------------------
# In-kernel helpers (traced inside Pallas kernels)
# ---------------------------------------------------------------------------
def _causal_cumsum2(a, b):
    """Inclusive causal prefix sums along T of two (1, T) f32 rows.

    Hillis-Steele scan: ceil(log2(T)) steps of (zero-extend, shift, add) on a
    packed (2, T) array.  O(T log T) work, O(T) memory — replaces the previous
    O(T^2) (T, T) triangular matmul."""
    rows = jnp.concatenate([a, b], axis=0)                    # (2, T)
    T = rows.shape[1]
    shift = 1
    while shift < T:
        shifted = jnp.concatenate(
            [jnp.zeros((2, shift), rows.dtype), rows[:, :T - shift]], axis=1)
        rows = rows + shifted
        shift *= 2
    return rows[0:1, :], rows[1:2, :]


def _cln_cf(x, gain, bias, eps=1e-8):
    """Cumulative (causal) layer norm, channels-first.

    x: (C, T) f32, gain/bias: (C, 1) f32.  Normalizes over channels + all past
    time steps (same math as the canonical Conv-TasNet cLN)."""
    C, T = x.shape
    step_sum = jnp.sum(x, axis=0, keepdims=True)              # (1, T)
    step_pow = jnp.sum(x * x, axis=0, keepdims=True)          # (1, T)
    cum_sum, cum_pow = _causal_cumsum2(step_sum, step_pow)    # (1, T) each
    cnt = (jax.lax.broadcasted_iota(jnp.int32, (1, T), 1).astype(jnp.float32)
           + 1.0) * float(C)
    cum_mean = cum_sum / cnt
    cum_var = (cum_pow - 2.0 * cum_mean * cum_sum) / cnt + cum_mean * cum_mean
    inv_std = jax.lax.rsqrt(jnp.maximum(cum_var, 0.0) + eps)
    return (x - cum_mean) * inv_std * gain + bias


def _prelu(x, alpha):
    return jnp.where(x >= 0.0, x, alpha * x)


def _dot_cf(w_bf16, x_f32):
    """Channels-first matmul on the MXU: bf16 inputs, f32 accumulation."""
    return jnp.dot(w_bf16, x_f32.astype(jnp.bfloat16),
                   preferred_element_type=jnp.float32)


# ---------------------------------------------------------------------------
# Encoder kernel: Conv1d(1, enc_dim, win, stride=win//2) as ONE (enc_dim,win)x(win,T)
# matmul (the two half-window matmuls of v2 are merged).
# ---------------------------------------------------------------------------
def _encoder_kernel(x_ref, w_ref, o_ref, *, T):
    # x_ref: (1, stride, T+1)  -- column t holds samples [t*stride, (t+1)*stride)
    # w_ref: (enc_dim, win) bf16
    x = x_ref[0].astype(jnp.bfloat16)                         # (stride, T+1)
    xw = jnp.concatenate([x[:, 0:T], x[:, 1:T + 1]], axis=0)  # (win, T) frames
    o_ref[0] = jnp.dot(w_ref[...], xw, preferred_element_type=jnp.float32)


def encoder_cf(xr, w):
    Bc, stride, Tp1 = xr.shape
    T = Tp1 - 1
    enc_dim, win = w.shape
    return pl.pallas_call(
        functools.partial(_encoder_kernel, T=T),
        out_shape=jax.ShapeDtypeStruct((Bc, enc_dim, T), jnp.float32),
        grid=(Bc,),
        in_specs=[
            pl.BlockSpec((1, stride, Tp1), lambda i: (i, 0, 0)),
            pl.BlockSpec((enc_dim, win), lambda i: (0, 0)),
        ],
        out_specs=pl.BlockSpec((1, enc_dim, T), lambda i: (i, 0, 0)),
        compiler_params=pltpu.CompilerParams(dimension_semantics=("parallel",)),
    )(xr, w)


# ---------------------------------------------------------------------------
# Fully fused TCN kernel: front cLN + bottleneck + all blocks (+ FiLM) in one call.
# Grid is (B,), parallel; all weights are VMEM-resident; residual stream never
# leaves VMEM between blocks.
# ---------------------------------------------------------------------------
def _tcn_kernel(enc_ref, ssl_ref, ln_g_ref, ln_b_ref, bn_w_ref, bn_b_ref,
                film_w_ref, film_b_ref, w1_ref, vec_ref, wd_ref, wr_ref, br_ref,
                alpha_ref, o_ref, dwbuf,
                *, n_blocks, layer, kernel, film_loc, feat, hidden,
                max_pad, pad_lead):
    T = enc_ref.shape[-1]

    # Zero the causal left-pad region of the depthwise scratch once per grid step
    # (it is never overwritten afterwards; kept unconditional — not program_id-gated —
    # so each megacore shard of the batch axis initializes its own scratch).
    dwbuf[:, pad_lead - max_pad:pad_lead] = jnp.zeros((hidden, max_pad), jnp.float32)

    # ---- front end: cLN over (ch * enc_dim) channels, then the 1x1 bottleneck ----
    xn = _cln_cf(enc_ref[0], ln_g_ref[...], ln_b_ref[...])
    h = _dot_cf(bn_w_ref[...], xn) + bn_b_ref[...]            # (feat, T)

    # ---- stacked TCN blocks ----
    for i in range(n_blocks):
        dilation = 2 ** (i % layer)
        pad = (kernel - 1) * dilation

        if i == film_loc:
            # FiLM projection fused in: [ssl_weight ; ssl_bias] = Wf @ ssl + bf
            film = _dot_cf(film_w_ref[...], ssl_ref[0]) + film_b_ref[...]
            h = h * film[0:feat, :] + film[feat:2 * feat, :]

        b1 = vec_ref[i, :, 0:1]
        g1 = vec_ref[i, :, 1:2]
        bb1 = vec_ref[i, :, 2:3]
        bd = vec_ref[i, :, 3:4]
        g2 = vec_ref[i, :, 4:5]
        bb2 = vec_ref[i, :, 5:6]
        a1 = alpha_ref[i, 0]                                  # SMEM scalars
        a2 = alpha_ref[i, 1]

        # 1x1 bottleneck -> hidden channels, PReLU, cLN
        y = _dot_cf(w1_ref[i], h) + b1                        # (hidden, T)
        y = _cln_cf(_prelu(y, a1), g1, bb1)

        # depthwise dilated causal conv; data store at a 128-aligned offset,
        # causal left-pad zeros already resident in the scratch
        dwbuf[:, pad_lead:pad_lead + T] = y
        base = pad_lead - pad
        acc = wd_ref[i, :, 0:1] * dwbuf[:, base:base + T]
        for k in range(1, kernel):
            off = base + k * dilation
            acc = acc + wd_ref[i, :, k:k + 1] * dwbuf[:, off:off + T]
        y = _cln_cf(_prelu(acc + bd, a2), g2, bb2)

        # 1x1 back to the feature dim + residual add
        h = h + _dot_cf(wr_ref[i], y) + br_ref[i]

    o_ref[0] = h


def tcn_cf(enc_view, ssl, params, cfg):
    B, Cin, T = enc_view.shape
    condi = ssl.shape[1]
    feat, hidden = cfg["feature_dim"], cfg["hidden"]
    K, layer, stack = cfg["kernel"], cfg["layer"], cfg["stack"]
    n_blocks = layer * stack
    max_pad = (K - 1) * (2 ** (layer - 1))
    pad_lead = ((max_pad + 127) // 128) * 128                 # lane-aligned data start

    kfn = functools.partial(
        _tcn_kernel, n_blocks=n_blocks, layer=layer, kernel=K,
        film_loc=cfg["Film_loc"], feat=feat, hidden=hidden,
        max_pad=max_pad, pad_lead=pad_lead)

    # scoped VMEM limit sized from the real working set, capped below v7x physical
    weight_keys = ("ln_g", "ln_b", "bn_w", "bn_b", "film_w", "film_b",
                   "w1_all", "vec_all", "wd_all", "wr_all", "br_all")
    wbytes = sum(int(params[k].size) * params[k].dtype.itemsize for k in weight_keys)
    need = (2 * (Cin + condi + feat) * T * 4                  # double-buffered I/O tiles
            + hidden * (pad_lead + T) * 4                     # depthwise scratch
            + 8 * max(Cin, hidden) * T * 4                    # live intermediates
            + 2 * wbytes + (4 << 20))
    vmem_limit = int(min(max(need, 32 << 20), 56 << 20))

    in_specs = [
        pl.BlockSpec((1, Cin, T), lambda b: (b, 0, 0)),
        pl.BlockSpec((1, condi, T), lambda b: (b, 0, 0)),
        pl.BlockSpec((Cin, 1), lambda b: (0, 0)),
        pl.BlockSpec((Cin, 1), lambda b: (0, 0)),
        pl.BlockSpec((feat, Cin), lambda b: (0, 0)),
        pl.BlockSpec((feat, 1), lambda b: (0, 0)),
        pl.BlockSpec((2 * feat, condi), lambda b: (0, 0)),
        pl.BlockSpec((2 * feat, 1), lambda b: (0, 0)),
        pl.BlockSpec((n_blocks, hidden, feat), lambda b: (0, 0, 0)),
        pl.BlockSpec((n_blocks, hidden, 6), lambda b: (0, 0, 0)),
        pl.BlockSpec((n_blocks, hidden, K), lambda b: (0, 0, 0)),
        pl.BlockSpec((n_blocks, feat, hidden), lambda b: (0, 0, 0)),
        pl.BlockSpec((n_blocks, feat, 1), lambda b: (0, 0, 0)),
        pl.BlockSpec(memory_space=pltpu.MemorySpace.SMEM),    # PReLU alphas
    ]
    return pl.pallas_call(
        kfn,
        out_shape=jax.ShapeDtypeStruct((B, feat, T), jnp.float32),
        grid=(B,),
        in_specs=in_specs,
        out_specs=pl.BlockSpec((1, feat, T), lambda b: (b, 0, 0)),
        scratch_shapes=[pltpu.VMEM((hidden, pad_lead + T), jnp.float32)],
        compiler_params=pltpu.CompilerParams(
            dimension_semantics=("parallel",),
            vmem_limit_bytes=vmem_limit),
    )(enc_view, ssl, params["ln_g"], params["ln_b"], params["bn_w"],
      params["bn_b"], params["film_w"], params["film_b"], params["w1_all"],
      params["vec_all"], params["wd_all"], params["wr_all"], params["br_all"],
      params["alpha_all"])


# ---------------------------------------------------------------------------
# Fused back end: PReLU -> speaker-stacked mask 1x1 -> sigmoid -> mask*target
# -> per-speaker decoder matmul -> lane-dense in-kernel overlap-add.
# Grid is (B,) only: both speakers share one MXU matmul (M = num_spk*enc_dim).
# ---------------------------------------------------------------------------
def _mask_decoder_kernel(h_ref, t_ref, ow_ref, ob_ref, oa_ref, dw_ref, o_ref,
                         *, stride, enc_dim, num_spk):
    hp = _prelu(h_ref[0], oa_ref[0])                          # (feat, T)
    m = _dot_cf(ow_ref[...], hp) + ob_ref[...]                # (num_spk*enc_dim, T)
    masks = jax.nn.sigmoid(m)
    tgt = t_ref[0]                                            # (enc_dim, T)
    T = tgt.shape[-1]
    zcol = jnp.zeros((stride, 1), jnp.float32)
    for s in range(num_spk):
        masked = masks[s * enc_dim:(s + 1) * enc_dim, :] * tgt
        decf = _dot_cf(dw_ref[...], masked)                   # (win, T) synthesis frames
        first = decf[0:stride, :]                             # 50%-overlap halves
        second = decf[stride:2 * stride, :]
        # overlap-add as one lane-dense (stride, T+1) tile: column u = samples
        # [u*stride, (u+1)*stride)
        ola = (jnp.concatenate([first, zcol], axis=1)
               + jnp.concatenate([zcol, second], axis=1))
        o_ref[0, s] = ola


def mask_decoder_cf(h, target, out_w, out_b, out_a, dec_w, *, stride):
    B, feat, T = h.shape
    enc_dim = target.shape[1]
    M = out_w.shape[0]
    num_spk = M // enc_dim
    win = dec_w.shape[0]
    kfn = functools.partial(_mask_decoder_kernel, stride=stride,
                            enc_dim=enc_dim, num_spk=num_spk)
    return pl.pallas_call(
        kfn,
        out_shape=jax.ShapeDtypeStruct((B, num_spk, stride, T + 1), jnp.float32),
        grid=(B,),
        in_specs=[
            pl.BlockSpec((1, feat, T), lambda b: (b, 0, 0)),
            pl.BlockSpec((1, enc_dim, T), lambda b: (b, 0, 0)),
            pl.BlockSpec((M, feat), lambda b: (0, 0)),
            pl.BlockSpec((M, 1), lambda b: (0, 0)),
            pl.BlockSpec(memory_space=pltpu.MemorySpace.SMEM),   # PReLU alpha
            pl.BlockSpec((win, enc_dim), lambda b: (0, 0)),
        ],
        out_specs=pl.BlockSpec((1, num_spk, stride, T + 1), lambda b: (b, 0, 0, 0)),
        compiler_params=pltpu.CompilerParams(dimension_semantics=("parallel",)),
    )(h, target, out_w, out_b, out_a, dec_w)


# ---------------------------------------------------------------------------
# Model config / parameters (downsized but structurally faithful)
# ---------------------------------------------------------------------------
CFG = dict(
    enc_dim=64, feature_dim=32, sr=16000, win_ms=2, layer=2, stack=1, kernel=3,
    num_spk=2, ch_size=2, condi_dim=24, Film_loc=1,
)
CFG["win"] = int(CFG["sr"] * CFG["win_ms"] / 1000)   # 32
CFG["stride"] = CFG["win"] // 2                      # 16
CFG["hidden"] = CFG["feature_dim"] * 4               # 128


def init_params(key, cfg):
    enc_dim, feat, hidden = cfg["enc_dim"], cfg["feature_dim"], cfg["hidden"]
    ch, win, K = cfg["ch_size"], cfg["win"], cfg["kernel"]
    num_spk, condi = cfg["num_spk"], cfg["condi_dim"]
    n_blocks = cfg["stack"] * cfg["layer"]

    keys = list(jax.random.split(key, 32))
    ki = iter(keys)

    def nrm(shape, scale=0.1):
        return scale * jax.random.normal(next(ki), shape, dtype=jnp.float32)

    params = {
        "enc_w": nrm((enc_dim, win)).astype(jnp.bfloat16),            # merged window
        "film_w": nrm((2 * feat, condi)).astype(jnp.bfloat16),        # [weight ; bias] branches
        "film_b": nrm((2 * feat, 1)),
        "ln_g": jnp.ones((ch * enc_dim, 1), jnp.float32),
        "ln_b": jnp.zeros((ch * enc_dim, 1), jnp.float32),
        "bn_w": nrm((feat, ch * enc_dim)).astype(jnp.bfloat16),
        "bn_b": nrm((feat, 1)),
        "out_w": nrm((num_spk * enc_dim, feat)).astype(jnp.bfloat16), # speaker-stacked
        "out_b": nrm((num_spk * enc_dim, 1)),
        "out_a": jnp.full((1,), 0.25, jnp.float32),
        "dec_w": nrm((win, enc_dim)).astype(jnp.bfloat16),
        # stacked per-block TCN weights (kept VMEM-resident in the fused kernel)
        "w1_all": nrm((n_blocks, hidden, feat)).astype(jnp.bfloat16),
        "wd_all": nrm((n_blocks, hidden, K)),
        "wr_all": nrm((n_blocks, feat, hidden)).astype(jnp.bfloat16),
        "br_all": nrm((n_blocks, feat, 1)),
        "alpha_all": jnp.full((n_blocks, 2), 0.25, jnp.float32),
    }
    # packed per-channel vectors: [b1, g1, bb1, bd, g2, bb2]
    b1 = nrm((n_blocks, hidden))
    bd = nrm((n_blocks, hidden))
    ones = jnp.ones((n_blocks, hidden), jnp.float32)
    zeros = jnp.zeros((n_blocks, hidden), jnp.float32)
    params["vec_all"] = jnp.stack([b1, ones, zeros, bd, ones, zeros], axis=2)
    return params


# ---------------------------------------------------------------------------
# Forward pass
# ---------------------------------------------------------------------------
def tasnet_forward(params, x, ssl_condition, cfg):
    B, ch, nsample = x.shape
    win, stride = cfg["win"], cfg["stride"]
    enc_dim = cfg["enc_dim"]
    num_spk = cfg["num_spk"]

    x = x.astype(jnp.float32)
    xin = x.reshape(B * ch, nsample)

    # ---- pad_signal (padding == 'auto') ----
    rest = win - (stride + nsample % win) % win
    if rest > 0:
        xin = jnp.pad(xin, ((0, 0), (0, rest)))
    xin = jnp.pad(xin, ((0, 0), (stride, stride)))
    L = xin.shape[-1]
    T = (L - win) // stride + 1                # L == (T + 1) * stride exactly

    # ---- encoder: in-kernel strided framing, channels-first output ----
    xr = jnp.transpose(xin.reshape(B * ch, T + 1, stride), (0, 2, 1))   # (B*ch, stride, T+1)
    enc = encoder_cf(xr, params["enc_w"])                               # (B*ch, enc_dim, T)

    enc4 = enc.reshape(B, ch, enc_dim, T)
    target = enc4[:, 0]                                                 # reference channel
    enc_view = enc4.reshape(B, ch * enc_dim, T)

    # ---- SSL condition (FiLM projection itself is fused into the Film_loc block) ----
    ssl = jnp.squeeze(ssl_condition, axis=1).astype(jnp.float32)        # (B, condi, T_cond)
    frame_ratio = T // ssl.shape[-1]
    ssl = jnp.repeat(ssl, frame_ratio, axis=-1)                         # (B, condi, T)

    # ---- fully fused TCN (front cLN + bottleneck + all blocks + FiLM) ----
    h = tcn_cf(enc_view, ssl, params, cfg)                              # (B, feat, T)

    # ---- fused mask + decoder + overlap-add ----
    dec = mask_decoder_cf(h, target, params["out_w"], params["out_b"],
                          params["out_a"], params["dec_w"], stride=stride)
    # dec: (B, num_spk, stride, T+1); flatten time-major and strip the aux padding
    sig = jnp.transpose(dec, (0, 1, 3, 2)).reshape(B, num_spk, (T + 1) * stride)
    out = sig[:, :, stride:(T + 1) * stride - (rest + stride)]          # (B, spk, nsample)
    return out.reshape(B, -1)                                           # (B, num_spk*nsample)


# ---------------------------------------------------------------------------
if __name__ == "__main__":
    key = jax.random.PRNGKey(0)
    pkey, xkey, skey = jax.random.split(key, 3)

    params = init_params(pkey, CFG)

    B, ch, nsample = 2, CFG["ch_size"], 480      # -> T = 32 encoder frames
    T_cond = 8                                   # frame_ratio = 4, remainder 0
    x = jax.random.normal(xkey, (B, ch, nsample), dtype=jnp.float32)
    ssl_condition = jax.random.normal(
        skey, (B, 1, CFG["condi_dim"], T_cond), dtype=jnp.float32)

    fwd = jax.jit(functools.partial(tasnet_forward, cfg=CFG))
    out = fwd(params, x, ssl_condition)
    out = jax.block_until_ready(out)
    assert out.shape == (B, CFG["num_spk"] * nsample), out.shape
    print("KERNEL_OK")
</pallas_src>

<mosaic_0001>
module attributes {stable_mosaic.version = 11 : i64} {
  func.func @_encoder_kernel(%arg0: i32, %arg1: memref<1x16x33xf32, #tpu.memory_space<vmem>>, %arg2: memref<64x32xbf16, #tpu.memory_space<vmem>>, %arg3: memref<1x64x32xf32, #tpu.memory_space<vmem>>) attributes {dimension_semantics = [#tpu.dimension_semantics<parallel>], iteration_bounds = array<i64: 4>, scalar_prefetch = 0 : i64, scratch_operands = 0 : i64, tpu.core_type = #tpu.core_type<tc>, window_params = [{transform_indices = @transform_0, window_bounds = array<i64: 1, 16, 33>}, {pipeline_mode = #tpu.pipeline_mode<synchronous>, transform_indices = @transform_1, window_bounds = array<i64: 64, 32>}, {transform_indices = @transform_2, window_bounds = array<i64: 1, 64, 32>}]} {
    %c0 = arith.constant 0 : index
    %c0_0 = arith.constant 0 : index
    %c0_1 = arith.constant 0 : index
    %0 = vector.load %arg1[%c0, %c0_0, %c0_1] : memref<1x16x33xf32, #tpu.memory_space<vmem>>, vector<1x16x33xf32>
    %1 = vector.shape_cast %0 : vector<1x16x33xf32> to vector<16x33xf32>
    %2 = arith.truncf %1 : vector<16x33xf32> to vector<16x33xbf16>
    %3 = vector.extract_strided_slice %2 {offsets = [0, 0], sizes = [16, 32], strides = [1, 1]} : vector<16x33xbf16> to vector<16x32xbf16>
    %4 = vector.extract_strided_slice %2 {offsets = [0, 1], sizes = [16, 32], strides = [1, 1]} : vector<16x33xbf16> to vector<16x32xbf16>
    %5 = tpu.concatenate %3, %4 in 0 : vector<16x32xbf16>, vector<16x32xbf16> -> vector<32x32xbf16>
    %c0_2 = arith.constant 0 : index
    %c0_3 = arith.constant 0 : index
    %6 = vector.load %arg2[%c0_2, %c0_3] : memref<64x32xbf16, #tpu.memory_space<vmem>>, vector<64x32xbf16>
    %cst = arith.constant dense<0.000000e+00> : vector<64x32xf32>
    %7 = tpu.matmul %6, %5, %cst {dimension_numbers = #tpu.dot_dimension_numbers<[1], [0], [0], [1], [0, 0, 1, 1], [], []>} : vector<64x32xbf16>, vector<32x32xbf16>, vector<64x32xf32> -> vector<64x32xf32>
    %c0_4 = arith.constant 0 : index
    %c0_5 = arith.constant 0 : index
    %c0_6 = arith.constant 0 : index
    %8 = vector.load %arg3[%c0_4, %c0_5, %c0_6] : memref<1x64x32xf32, #tpu.memory_space<vmem>>, vector<1x64x32xf32>
    %9 = vector.shape_cast %8 : vector<1x64x32xf32> to vector<64x32xf32>
    %10 = vector.shape_cast %7 : vector<64x32xf32> to vector<1x64x32xf32>
    tpu.vector_store %arg3[%c0_4, %c0_5, %c0_6], %10 {strides = array<i32>} : memref<1x64x32xf32, #tpu.memory_space<vmem>>, vector<1x64x32xf32>,
    return
  }
  func.func @transform_0(%arg0: i32) -> (i32, i32, i32) {
    %c0_i32 = arith.constant 0 : i32
    %c0_i32_0 = arith.constant 0 : i32
    %c0_i32_1 = arith.constant 0 : i32
    return %arg0, %c0_i32, %c0_i32_0 : i32, i32, i32
  }
  func.func @transform_1(%arg0: i32) -> (i32, i32) {
    %c0_i32 = arith.constant 0 : i32
    %c0_i32_0 = arith.constant 0 : i32
    %c0_i32_1 = arith.constant 0 : i32
    return %c0_i32, %c0_i32_0 : i32, i32
  }
  func.func @transform_2(%arg0: i32) -> (i32, i32, i32) {
    %c0_i32 = arith.constant 0 : i32
    %c0_i32_0 = arith.constant 0 : i32
    %c0_i32_1 = arith.constant 0 : i32
    return %arg0, %c0_i32, %c0_i32_0 : i32, i32, i32
  }
}

module attributes {stable_mosaic.version = 11 : i64} {
  func.func @_mask_decoder_kernel(%arg0: i32, %arg1: memref<1x32x32xf32, #tpu.memory_space<vmem>>, %arg2: memref<1x64x32xf32, #tpu.memory_space<vmem>>, %arg3: memref<128x32xbf16, #tpu.memory_space<vmem>>, %arg4: memref<128x1xf32, #tpu.memory_space<vmem>>, %arg5: memref<1xf32, #tpu.memory_space<smem>>, %arg6: memref<32x64xbf16, #tpu.memory_space<vmem>>, %arg7: memref<1x2x16x33xf32, #tpu.memory_space<vmem>>) attributes {dimension_semantics = [#tpu.dimension_semantics<parallel>], iteration_bounds = array<i64: 2>, scalar_prefetch = 0 : i64, scratch_operands = 0 : i64, tpu.core_type = #tpu.core_type<tc>, window_params = [{transform_indices = @transform_0, window_bounds = array<i64: 1, 32, 32>}, {transform_indices = @transform_1, window_bounds = array<i64: 1, 64, 32>}, {pipeline_mode = #tpu.pipeline_mode<synchronous>, transform_indices = @transform_2, window_bounds = array<i64: 128, 32>}, {pipeline_mode = #tpu.pipeline_mode<synchronous>, transform_indices = @transform_3, window_bounds = array<i64: 128, 1>}, {transform_indices = @transform_4, window_bounds = array<i64: 1>}, {pipeline_mode = #tpu.pipeline_mode<synchronous>, transform_indices = @transform_5, window_bounds = array<i64: 32, 64>}, {transform_indices = @transform_6, window_bounds = array<i64: 1, 2, 16, 33>}]} {
    %c0 = arith.constant 0 : index
    %c0_0 = arith.constant 0 : index
    %c0_1 = arith.constant 0 : index
    %0 = vector.load %arg1[%c0, %c0_0, %c0_1] : memref<1x32x32xf32, #tpu.memory_space<vmem>>, vector<1x32x32xf32>
    %1 = vector.shape_cast %0 : vector<1x32x32xf32> to vector<32x32xf32>
    %c0_2 = arith.constant 0 : index
    %2 = memref.load %arg5[%c0_2] : memref<1xf32, #tpu.memory_space<smem>>
    %cst = arith.constant 0.000000e+00 : f32
    %3 = vector.broadcast %cst : f32 to vector<32x32xf32>
    %4 = arith.cmpf oge, %1, %3 : vector<32x32xf32>
    %5 = vector.broadcast %2 : f32 to vector<32x32xf32>
    %6 = arith.mulf %5, %1 : vector<32x32xf32>
    %7 = arith.select %4, %1, %6 : vector<32x32xi1>, vector<32x32xf32>
    %c0_3 = arith.constant 0 : index
    %c0_4 = arith.constant 0 : index
    %8 = vector.load %arg3[%c0_3, %c0_4] : memref<128x32xbf16, #tpu.memory_space<vmem>>, vector<128x32xbf16>
    %9 = arith.truncf %7 : vector<32x32xf32> to vector<32x32xbf16>
    %cst_5 = arith.constant dense<0.000000e+00> : vector<128x32xf32>
    %10 = tpu.matmul %8, %9, %cst_5 {dimension_numbers = #tpu.dot_dimension_numbers<[1], [0], [0], [1], [0, 0, 1, 1], [], []>} : vector<128x32xbf16>, vector<32x32xbf16>, vector<128x32xf32> -> vector<128x32xf32>
    %c0_6 = arith.constant 0 : index
    %c0_7 = arith.constant 0 : index
    %11 = vector.load %arg4[%c0_6, %c0_7] : memref<128x1xf32, #tpu.memory_space<vmem>>, vector<128x1xf32>
    %12 = vector.broadcast %11 : vector<128x1xf32> to vector<128x32xf32>
    %13 = arith.addf %10, %12 : vector<128x32xf32>
    %14 = arith.negf %13 : vector<128x32xf32>
    %15 = math.exp %14 : vector<128x32xf32>
    %cst_8 = arith.constant 1.000000e+00 : f32
    %16 = vector.broadcast %cst_8 : f32 to vector<128x32xf32>
    %17 = arith.addf %16, %15 : vector<128x32xf32>
    %18 = arith.divf %16, %17 : vector<128x32xf32>
    %c0_9 = arith.constant 0 : index
    %c0_10 = arith.constant 0 : index
    %c0_11 = arith.constant 0 : index
    %19 = vector.load %arg2[%c0_9, %c0_10, %c0_11] : memref<1x64x32xf32, #tpu.memory_space<vmem>>, vector<1x64x32xf32>
    %20 = vector.shape_cast %19 : vector<1x64x32xf32> to vector<64x32xf32>
    %cst_12 = arith.constant 0.000000e+00 : f32
    %21 = vector.broadcast %cst_12 : f32 to vector<16x1xf32>
    %22 = vector.extract_strided_slice %18 {offsets = [0, 0], sizes = [64, 32], strides = [1, 1]} : vector<128x32xf32> to vector<64x32xf32>
    %23 = arith.mulf %22, %20 : vector<64x32xf32>
    %c0_13 = arith.constant 0 : index
    %c0_14 = arith.constant 0 : index
    %24 = vector.load %arg6[%c0_13, %c0_14] : memref<32x64xbf16, #tpu.memory_space<vmem>>, vector<32x64xbf16>
    %25 = arith.truncf %23 : vector<64x32xf32> to vector<64x32xbf16>
    %cst_15 = arith.constant dense<0.000000e+00> : vector<32x32xf32>
    %26 = tpu.matmul %24, %25, %cst_15 {dimension_numbers = #tpu.dot_dimension_numbers<[1], [0], [0], [1], [0, 0, 1, 1], [], []>} : vector<32x64xbf16>, vector<64x32xbf16>, vector<32x32xf32> -> vector<32x32xf32>
    %27 = vector.extract_strided_slice %26 {offsets = [0, 0], sizes = [16, 32], strides = [1, 1]} : vector<32x32xf32> to vector<16x32xf32>
    %28 = vector.extract_strided_slice %26 {offsets = [16, 0], sizes = [16, 32], strides = [1, 1]} : vector<32x32xf32> to vector<16x32xf32>
    %29 = tpu.concatenate %27, %21 in 1 : vector<16x32xf32>, vector<16x1xf32> -> vector<16x33xf32>
    %30 = tpu.concatenate %21, %28 in 1 : vector<16x1xf32>, vector<16x32xf32> -> vector<16x33xf32>
    %31 = arith.addf %29, %30 : vector<16x33xf32>
    %c0_16 = arith.constant 0 : index
    %c0_17 = arith.constant 0 : index
    %c0_18 = arith.constant 0 : index
    %c0_19 = arith.constant 0 : index
    %32 = vector.load %arg7[%c0_16, %c0_17, %c0_18, %c0_19] : memref<1x2x16x33xf32, #tpu.memory_space<vmem>>, vector<1x1x16x33xf32>
    %33 = vector.shape_cast %32 : vector<1x1x16x33xf32> to vector<16x33xf32>
    %34 = vector.shape_cast %31 : vector<16x33xf32> to vector<1x1x16x33xf32>
    tpu.vector_store %arg7[%c0_16, %c0_17, %c0_18, %c0_19], %34 {strides = array<i32>} : memref<1x2x16x33xf32, #tpu.memory_space<vmem>>, vector<1x1x16x33xf32>,
    %35 = vector.extract_strided_slice %18 {offsets = [64, 0], sizes = [64, 32], strides = [1, 1]} : vector<128x32xf32> to vector<64x32xf32>
    %36 = arith.mulf %35, %20 : vector<64x32xf32>
    %c0_20 = arith.constant 0 : index
    %c0_21 = arith.constant 0 : index
    %37 = vector.load %arg6[%c0_20, %c0_21] : memref<32x64xbf16, #tpu.memory_space<vmem>>, vector<32x64xbf16>
    %38 = arith.truncf %36 : vector<64x32xf32> to vector<64x32xbf16>
    %cst_22 = arith.constant dense<0.000000e+00> : vector<32x32xf32>
    %39 = tpu.matmul %37, %38, %cst_22 {dimension_numbers = #tpu.dot_dimension_numbers<[1], [0], [0], [1], [0, 0, 1, 1], [], []>} : vector<32x64xbf16>, vector<64x32xbf16>, vector<32x32xf32> -> vector<32x32xf32>
    %40 = vector.extract_strided_slice %39 {offsets = [0, 0], sizes = [16, 32], strides = [1, 1]} : vector<32x32xf32> to vector<16x32xf32>
    %41 = vector.extract_strided_slice %39 {offsets = [16, 0], sizes = [16, 32], strides = [1, 1]} : vector<32x32xf32> to vector<16x32xf32>
    %42 = tpu.concatenate %40, %21 in 1 : vector<16x32xf32>, vector<16x1xf32> -> vector<16x33xf32>
    %43 = tpu.concatenate %21, %41 in 1 : vector<16x1xf32>, vector<16x32xf32> -> vector<16x33xf32>
    %44 = arith.addf %42, %43 : vector<16x33xf32>
    %c0_23 = arith.constant 0 : index
    %c1 = arith.constant 1 : index
    %c0_24 = arith.constant 0 : index
    %c0_25 = arith.constant 0 : index
    %45 = vector.load %arg7[%c0_23, %c1, %c0_24, %c0_25] : memref<1x2x16x33xf32, #tpu.memory_space<vmem>>, vector<1x1x16x33xf32>
    %46 = vector.shape_cast %45 : vector<1x1x16x33xf32> to vector<16x33xf32>
    %47 = vector.shape_cast %44 : vector<16x33xf32> to vector<1x1x16x33xf32>
    tpu.vector_store %arg7[%c0_23, %c1, %c0_24, %c0_25], %47 {strides = array<i32>} : memref<1x2x16x33xf32, #tpu.memory_space<vmem>>, vector<1x1x16x33xf32>,
    return
  }
  func.func @transform_0(%arg0: i32) -> (i32, i32, i32) {
    %c0_i32 = arith.constant 0 : i32
    %c0_i32_0 = arith.constant 0 : i32
    %c0_i32_1 = arith.constant 0 : i32
    return %arg0, %c0_i32, %c0_i32_0 : i32, i32, i32
  }
  func.func @transform_1(%arg0: i32) -> (i32, i32, i32) {
    %c0_i32 = arith.constant 0 : i32
    %c0_i32_0 = arith.constant 0 : i32
    %c0_i32_1 = arith.constant 0 : i32
    return %arg0, %c0_i32, %c0_i32_0 : i32, i32, i32
  }
  func.func @transform_2(%arg0: i32) -> (i32, i32) {
    %c0_i32 = arith.constant 0 : i32
    %c0_i32_0 = arith.constant 0 : i32
    %c0_i32_1 = arith.constant 0 : i32
    return %c0_i32, %c0_i32_0 : i32, i32
  }
  func.func @transform_3(%arg0: i32) -> (i32, i32) {
    %c0_i32 = arith.constant 0 : i32
    %c0_i32_0 = arith.constant 0 : i32
    %c0_i32_1 = arith.constant 0 : i32
    return %c0_i32, %c0_i32_0 : i32, i32
  }
  func.func @transform_4(%arg0: i32) -> i32 {
    %c0_i32 = arith.constant 0 : i32
    %c0_i32_0 = arith.constant 0 : i32
    return %c0_i32 : i32
  }
  func.func @transform_5(%arg0: i32) -> (i32, i32) {
    %c0_i32 = arith.constant 0 : i32
    %c0_i32_0 = arith.constant 0 : i32
    %c0_i32_1 = arith.constant 0 : i32
    return %c0_i32, %c0_i32_0 : i32, i32
  }
  func.func @transform_6(%arg0: i32) -> (i32, i32, i32, i32) {
    %c0_i32 = arith.constant 0 : i32
    %c0_i32_0 = arith.constant 0 : i32
    %c0_i32_1 = arith.constant 0 : i32
    %c0_i32_2 = arith.constant 0 : i32
    return %arg0, %c0_i32, %c0_i32_0, %c0_i32_1 : i32, i32, i32, i32
  }
}

module attributes {stable_mosaic.version = 11 : i64} {
  func.func @_tcn_kernel(%arg0: i32, %arg1: memref<1x128x32xf32, #tpu.memory_space<vmem>>, %arg2: memref<1x24x32xf32, #tpu.memory_space<vmem>>, %arg3: memref<128x1xf32, #tpu.memory_space<vmem>>, %arg4: memref<128x1xf32, #tpu.memory_space<vmem>>, %arg5: memref<32x128xbf16, #tpu.memory_space<vmem>>, %arg6: memref<32x1xf32, #tpu.memory_space<vmem>>, %arg7: memref<64x24xbf16, #tpu.memory_space<vmem>>, %arg8: memref<64x1xf32, #tpu.memory_space<vmem>>, %arg9: memref<2x128x32xbf16, #tpu.memory_space<vmem>>, %arg10: memref<2x128x6xf32, #tpu.memory_space<vmem>>, %arg11: memref<2x128x3xf32, #tpu.memory_space<vmem>>, %arg12: memref<2x32x128xbf16, #tpu.memory_space<vmem>>, %arg13: memref<2x32x1xf32, #tpu.memory_space<vmem>>, %arg14: memref<2x2xf32, #tpu.memory_space<smem>>, %arg15: memref<1x32x32xf32, #tpu.memory_space<vmem>>, %arg16: memref<128x160xf32, #tpu.memory_space<vmem>>) attributes {dimension_semantics = [#tpu.dimension_semantics<parallel>], iteration_bounds = array<i64: 2>, scalar_prefetch = 0 : i64, scratch_operands = 1 : i64, tpu.core_type = #tpu.core_type<tc>, window_params = [{transform_indices = @transform_0, window_bounds = array<i64: 1, 128, 32>}, {transform_indices = @transform_1, window_bounds = array<i64: 1, 24, 32>}, {pipeline_mode = #tpu.pipeline_mode<synchronous>, transform_indices = @transform_2, window_bounds = array<i64: 128, 1>}, {pipeline_mode = #tpu.pipeline_mode<synchronous>, transform_indices = @transform_3, window_bounds = array<i64: 128, 1>}, {pipeline_mode = #tpu.pipeline_mode<synchronous>, transform_indices = @transform_4, window_bounds = array<i64: 32, 128>}, {pipeline_mode = #tpu.pipeline_mode<synchronous>, transform_indices = @transform_5, window_bounds = array<i64: 32, 1>}, {pipeline_mode = #tpu.pipeline_mode<synchronous>, transform_indices = @transform_6, window_bounds = array<i64: 64, 24>}, {pipeline_mode = #tpu.pipeline_mode<synchronous>, transform_indices = @transform_7, window_bounds = array<i64: 64, 1>}, {pipeline_mode = #tpu.pipeline_mode<synchronous>, transform_indices = @transform_8, window_bounds = array<i64: 2, 128, 32>}, {pipeline_mode = #tpu.pipeline_mode<synchronous>, transform_indices = @transform_9, window_bounds = array<i64: 2, 128, 6>}, {pipeline_mode = #tpu.pipeline_mode<synchronous>, transform_indices = @transform_10, window_bounds = array<i64: 2, 128, 3>}, {pipeline_mode = #tpu.pipeline_mode<synchronous>, transform_indices = @transform_11, window_bounds = array<i64: 2, 32, 128>}, {pipeline_mode = #tpu.pipeline_mode<synchronous>, transform_indices = @transform_12, window_bounds = array<i64: 2, 32, 1>}, {transform_indices = @transform_13, window_bounds = array<i64: 2, 2>}, {transform_indices = @transform_14, window_bounds = array<i64: 1, 32, 32>}]} {
    %cst = arith.constant 0.000000e+00 : f32
    %0 = vector.broadcast %cst : f32 to vector<128x4xf32>
    %c0 = arith.constant 0 : index
    %c124 = arith.constant 124 : index
    %1 = vector.load %arg16[%c0, %c124] : memref<128x160xf32, #tpu.memory_space<vmem>>, vector<128x4xf32>
    tpu.vector_store %arg16[%c0, %c124], %0 {strides = array<i32>} : memref<128x160xf32, #tpu.memory_space<vmem>>, vector<128x4xf32>,
    %c0_0 = arith.constant 0 : index
    %c0_1 = arith.constant 0 : index
    %c0_2 = arith.constant 0 : index
    %2 = vector.load %arg1[%c0_0, %c0_1, %c0_2] : memref<1x128x32xf32, #tpu.memory_space<vmem>>, vector<1x128x32xf32>
    %3 = vector.shape_cast %2 : vector<1x128x32xf32> to vector<128x32xf32>
    %c0_3 = arith.constant 0 : index
    %c0_4 = arith.constant 0 : index
    %4 = vector.load %arg3[%c0_3, %c0_4] : memref<128x1xf32, #tpu.memory_space<vmem>>, vector<128x1xf32>
    %c0_5 = arith.constant 0 : index
    %c0_6 = arith.constant 0 : index
    %5 = vector.load %arg4[%c0_5, %c0_6] : memref<128x1xf32, #tpu.memory_space<vmem>>, vector<128x1xf32>
    %cst_7 = arith.constant dense<0.000000e+00> : vector<32xf32>
    %6 = vector.multi_reduction <add>, %3, %cst_7 [0] : vector<128x32xf32> to vector<32xf32>
    %7 = vector.shape_cast %6 : vector<32xf32> to vector<1x32xf32>
    %8 = arith.mulf %3, %3 : vector<128x32xf32>
    %cst_8 = arith.constant dense<0.000000e+00> : vector<32xf32>
    %9 = vector.multi_reduction <add>, %8, %cst_8 [0] : vector<128x32xf32> to vector<32xf32>
    %10 = vector.shape_cast %9 : vector<32xf32> to vector<1x32xf32>
    %11 = tpu.concatenate %7, %10 in 0 : vector<1x32xf32>, vector<1x32xf32> -> vector<2x32xf32>
    %cst_9 = arith.constant 0.000000e+00 : f32
    %12 = vector.broadcast %cst_9 : f32 to vector<2x1xf32>
    %13 = vector.extract_strided_slice %11 {offsets = [0, 0], sizes = [2, 31], strides = [1, 1]} : vector<2x32xf32> to vector<2x31xf32>
    %14 = tpu.concatenate %12, %13 in 1 : vector<2x1xf32>, vector<2x31xf32> -> vector<2x32xf32>
    %15 = arith.addf %11, %14 : vector<2x32xf32>
    %cst_10 = arith.constant 0.000000e+00 : f32
    %16 = vector.broadcast %cst_10 : f32 to vector<2x2xf32>
    %17 = vector.extract_strided_slice %15 {offsets = [0, 0], sizes = [2, 30], strides = [1, 1]} : vector<2x32xf32> to vector<2x30xf32>
    %18 = tpu.concatenate %16, %17 in 1 : vector<2x2xf32>, vector<2x30xf32> -> vector<2x32xf32>
    %19 = arith.addf %15, %18 : vector<2x32xf32>
    %cst_11 = arith.constant 0.000000e+00 : f32
    %20 = vector.broadcast %cst_11 : f32 to vector<2x4xf32>
    %21 = vector.extract_strided_slice %19 {offsets = [0, 0], sizes = [2, 28], strides = [1, 1]} : vector<2x32xf32> to vector<2x28xf32>
    %22 = tpu.concatenate %20, %21 in 1 : vector<2x4xf32>, vector<2x28xf32> -> vector<2x32xf32>
    %23 = arith.addf %19, %22 : vector<2x32xf32>
    %cst_12 = arith.constant 0.000000e+00 : f32
    %24 = vector.broadcast %cst_12 : f32 to vector<2x8xf32>
    %25 = vector.extract_strided_slice %23 {offsets = [0, 0], sizes = [2, 24], strides = [1, 1]} : vector<2x32xf32> to vector<2x24xf32>
    %26 = tpu.concatenate %24, %25 in 1 : vector<2x8xf32>, vector<2x24xf32> -> vector<2x32xf32>
    %27 = arith.addf %23, %26 : vector<2x32xf32>
    %cst_13 = arith.constant 0.000000e+00 : f32
    %28 = vector.broadcast %cst_13 : f32 to vector<2x16xf32>
    %29 = vector.extract_strided_slice %27 {offsets = [0, 0], sizes = [2, 16], strides = [1, 1]} : vector<2x32xf32> to vector<2x16xf32>
    %30 = tpu.concatenate %28, %29 in 1 : vector<2x16xf32>, vector<2x16xf32> -> vector<2x32xf32>
    %31 = arith.addf %27, %30 : vector<2x32xf32>
    %32 = vector.extract_strided_slice %31 {offsets = [0, 0], sizes = [1, 32], strides = [1, 1]} : vector<2x32xf32> to vector<1x32xf32>
    %33 = vector.extract_strided_slice %31 {offsets = [1, 0], sizes = [1, 32], strides = [1, 1]} : vector<2x32xf32> to vector<1x32xf32>
    %34 = tpu.iota {dimensions = array<i32: 1>} : vector<1x32xi32>
    %35 = arith.sitofp %34 : vector<1x32xi32> to vector<1x32xf32>
    %cst_14 = arith.constant 1.000000e+00 : f32
    %36 = vector.broadcast %cst_14 : f32 to vector<1x32xf32>
    %37 = arith.addf %35, %36 : vector<1x32xf32>
    %cst_15 = arith.constant 1.280000e+02 : f32
    %38 = vector.broadcast %cst_15 : f32 to vector<1x32xf32>
    %39 = arith.mulf %37, %38 : vector<1x32xf32>
    %40 = arith.divf %32, %39 : vector<1x32xf32>
    %cst_16 = arith.constant 2.000000e+00 : f32
    %41 = vector.broadcast %cst_16 : f32 to vector<1x32xf32>
    %42 = arith.mulf %41, %40 : vector<1x32xf32>
    %43 = arith.mulf %42, %32 : vector<1x32xf32>
    %44 = arith.subf %33, %43 : vector<1x32xf32>
    %45 = arith.divf %44, %39 : vector<1x32xf32>
    %46 = arith.mulf %40, %40 : vector<1x32xf32>
    %47 = arith.addf %45, %46 : vector<1x32xf32>
    %cst_17 = arith.constant 0.000000e+00 : f32
    %48 = vector.broadcast %cst_17 : f32 to vector<1x32xf32>
    %49 = arith.maximumf %47, %48 : vector<1x32xf32>
    %cst_18 = arith.constant 9.99999993E-9 : f32
    %50 = vector.broadcast %cst_18 : f32 to vector<1x32xf32>
    %51 = arith.addf %49, %50 : vector<1x32xf32>
    %52 = math.rsqrt %51 : vector<1x32xf32>
    %53 = vector.broadcast %40 : vector<1x32xf32> to vector<128x32xf32>
    %54 = arith.subf %3, %53 : vector<128x32xf32>
    %55 = vector.broadcast %52 : vector<1x32xf32> to vector<128x32xf32>
    %56 = arith.mulf %54, %55 : vector<128x32xf32>
    %57 = vector.broadcast %4 : vector<128x1xf32> to vector<128x32xf32>
    %58 = arith.mulf %56, %57 : vector<128x32xf32>
    %59 = vector.broadcast %5 : vector<128x1xf32> to vector<128x32xf32>
    %60 = arith.addf %58, %59 : vector<128x32xf32>
    %c0_19 = arith.constant 0 : index
    %c0_20 = arith.constant 0 : index
    %61 = vector.load %arg5[%c0_19, %c0_20] : memref<32x128xbf16, #tpu.memory_space<vmem>>, vector<32x128xbf16>
    %62 = arith.truncf %60 : vector<128x32xf32> to vector<128x32xbf16>
    %cst_21 = arith.constant dense<0.000000e+00> : vector<32x32xf32>
    %63 = tpu.matmul %61, %62, %cst_21 {dimension_numbers = #tpu.dot_dimension_numbers<[1], [0], [0], [1], [0, 0, 1, 1], [], []>} : vector<32x128xbf16>, vector<128x32xbf16>, vector<32x32xf32> -> vector<32x32xf32>
    %c0_22 = arith.constant 0 : index
    %c0_23 = arith.constant 0 : index
    %64 = vector.load %arg6[%c0_22, %c0_23] : memref<32x1xf32, #tpu.memory_space<vmem>>, vector<32x1xf32>
    %65 = vector.broadcast %64 : vector<32x1xf32> to vector<32x32xf32>
    %66 = arith.addf %63, %65 : vector<32x32xf32>
    %c0_24 = arith.constant 0 : index
    %c0_25 = arith.constant 0 : index
    %c0_26 = arith.constant 0 : index
    %67 = vector.load %arg10[%c0_24, %c0_25, %c0_26] : memref<2x128x6xf32, #tpu.memory_space<vmem>>, vector<1x128x1xf32>
    %68 = vector.shape_cast %67 : vector<1x128x1xf32> to vector<128x1xf32>
    %c0_27 = arith.constant 0 : index
    %c0_28 = arith.constant 0 : index
    %c1 = arith.constant 1 : index
    %69 = vector.load %arg10[%c0_27, %c0_28, %c1] : memref<2x128x6xf32, #tpu.memory_space<vmem>>, vector<1x128x1xf32>
    %70 = vector.shape_cast %69 : vector<1x128x1xf32> to vector<128x1xf32>
    %c0_29 = arith.constant 0 : index
    %c0_30 = arith.constant 0 : index
    %c2 = arith.constant 2 : index
    %71 = vector.load %arg10[%c0_29, %c0_30, %c2] : memref<2x128x6xf32, #tpu.memory_space<vmem>>, vector<1x128x1xf32>
    %72 = vector.shape_cast %71 : vector<1x128x1xf32> to vector<128x1xf32>
    %c0_31 = arith.constant 0 : index
    %c0_32 = arith.constant 0 : index
    %c3 = arith.constant 3 : index
    %73 = vector.load %arg10[%c0_31, %c0_32, %c3] : memref<2x128x6xf32, #tpu.memory_space<vmem>>, vector<1x128x1xf32>
    %74 = vector.shape_cast %73 : vector<1x128x1xf32> to vector<128x1xf32>
    %c0_33 = arith.constant 0 : index
    %c0_34 = arith.constant 0 : index
    %c4 = arith.constant 4 : index
    %75 = vector.load %arg10[%c0_33, %c0_34, %c4] : memref<2x128x6xf32, #tpu.memory_space<vmem>>, vector<1x128x1xf32>
    %76 = vector.shape_cast %75 : vector<1x128x1xf32> to vector<128x1xf32>
    %c0_35 = arith.constant 0 : index
    %c0_36 = arith.constant 0 : index
    %c5 = arith.constant 5 : index
    %77 = vector.load %arg10[%c0_35, %c0_36, %c5] : memref<2x128x6xf32, #tpu.memory_space<vmem>>, vector<1x128x1xf32>
    %78 = vector.shape_cast %77 : vector<1x128x1xf32> to vector<128x1xf32>
    %c0_37 = arith.constant 0 : index
    %c0_38 = arith.constant 0 : index
    %79 = memref.load %arg14[%c0_37, %c0_38] : memref<2x2xf32, #tpu.memory_space<smem>>
    %c0_39 = arith.constant 0 : index
    %c1_40 = arith.constant 1 : index
    %80 = memref.load %arg14[%c0_39, %c1_40] : memref<2x2xf32, #tpu.memory_space<smem>>
    %c0_41 = arith.constant 0 : index
    %c0_42 = arith.constant 0 : index
    %c0_43 = arith.constant 0 : index
    %81 = vector.load %arg9[%c0_41, %c0_42, %c0_43] : memref<2x128x32xbf16, #tpu.memory_space<vmem>>, vector<1x128x32xbf16>
    %82 = vector.shape_cast %81 : vector<1x128x32xbf16> to vector<128x32xbf16>
    %83 = arith.truncf %66 : vector<32x32xf32> to vector<32x32xbf16>
    %cst_44 = arith.constant dense<0.000000e+00> : vector<128x32xf32>
    %84 = tpu.matmul %82, %83, %cst_44 {dimension_numbers = #tpu.dot_dimension_numbers<[1], [0], [0], [1], [0, 0, 1, 1], [], []>} : vector<128x32xbf16>, vector<32x32xbf16>, vector<128x32xf32> -> vector<128x32xf32>
    %85 = vector.broadcast %68 : vector<128x1xf32> to vector<128x32xf32>
    %86 = arith.addf %84, %85 : vector<128x32xf32>
    %cst_45 = arith.constant 0.000000e+00 : f32
    %87 = vector.broadcast %cst_45 : f32 to vector<128x32xf32>
    %88 = arith.cmpf oge, %86, %87 : vector<128x32xf32>
    %89 = vector.broadcast %79 : f32 to vector<128x32xf32>
    %90 = arith.mulf %89, %86 : vector<128x32xf32>
    %91 = arith.select %88, %86, %90 : vector<128x32xi1>, vector<128x32xf32>
    %cst_46 = arith.constant dense<0.000000e+00> : vector<32xf32>
    %92 = vector.multi_reduction <add>, %91, %cst_46 [0] : vector<128x32xf32> to vector<32xf32>
    %93 = vector.shape_cast %92 : vector<32xf32> to vector<1x32xf32>
    %94 = arith.mulf %91, %91 : vector<128x32xf32>
    %cst_47 = arith.constant dense<0.000000e+00> : vector<32xf32>
    %95 = vector.multi_reduction <add>, %94, %cst_47 [0] : vector<128x32xf32> to vector<32xf32>
    %96 = vector.shape_cast %95 : vector<32xf32> to vector<1x32xf32>
    %97 = tpu.concatenate %93, %96 in 0 : vector<1x32xf32>, vector<1x32xf32> -> vector<2x32xf32>
    %cst_48 = arith.constant 0.000000e+00 : f32
    %98 = vector.broadcast %cst_48 : f32 to vector<2x1xf32>
    %99 = vector.extract_strided_slice %97 {offsets = [0, 0], sizes = [2, 31], strides = [1, 1]} : vector<2x32xf32> to vector<2x31xf32>
    %100 = tpu.concatenate %98, %99 in 1 : vector<2x1xf32>, vector<2x31xf32> -> vector<2x32xf32>
    %101 = arith.addf %97, %100 : vector<2x32xf32>
    %cst_49 = arith.constant 0.000000e+00 : f32
    %102 = vector.broadcast %cst_49 : f32 to vector<2x2xf32>
    %103 = vector.extract_strided_slice %101 {offsets = [0, 0], sizes = [2, 30], strides = [1, 1]} : vector<2x32xf32> to vector<2x30xf32>
    %104 = tpu.concatenate %102, %103 in 1 : vector<2x2xf32>, vector<2x30xf32> -> vector<2x32xf32>
    %105 = arith.addf %101, %104 : vector<2x32xf32>
    %cst_50 = arith.constant 0.000000e+00 : f32
    %106 = vector.broadcast %cst_50 : f32 to vector<2x4xf32>
    %107 = vector.extract_strided_slice %105 {offsets = [0, 0], sizes = [2, 28], strides = [1, 1]} : vector<2x32xf32> to vector<2x28xf32>
    %108 = tpu.concatenate %106, %107 in 1 : vector<2x4xf32>, vector<2x28xf32> -> vector<2x32xf32>
    %109 = arith.addf %105, %108 : vector<2x32xf32>
    %cst_51 = arith.constant 0.000000e+00 : f32
    %110 = vector.broadcast %cst_51 : f32 to vector<2x8xf32>
    %111 = vector.extract_strided_slice %109 {offsets = [0, 0], sizes = [2, 24], strides = [1, 1]} : vector<2x32xf32> to vector<2x24xf32>
    %112 = tpu.concatenate %110, %111 in 1 : vector<2x8xf32>, vector<2x24xf32> -> vector<2x32xf32>
    %113 = arith.addf %109, %112 : vector<2x32xf32>
    %cst_52 = arith.constant 0.000000e+00 : f32
    %114 = vector.broadcast %cst_52 : f32 to vector<2x16xf32>
    %115 = vector.extract_strided_slice %113 {offsets = [0, 0], sizes = [2, 16], strides = [1, 1]} : vector<2x32xf32> to vector<2x16xf32>
    %116 = tpu.concatenate %114, %115 in 1 : vector<2x16xf32>, vector<2x16xf32> -> vector<2x32xf32>
    %117 = arith.addf %113, %116 : vector<2x32xf32>
    %118 = vector.extract_strided_slice %117 {offsets = [0, 0], sizes = [1, 32], strides = [1, 1]} : vector<2x32xf32> to vector<1x32xf32>
    %119 = vector.extract_strided_slice %117 {offsets = [1, 0], sizes = [1, 32], strides = [1, 1]} : vector<2x32xf32> to vector<1x32xf32>
    %120 = tpu.iota {dimensions = array<i32: 1>} : vector<1x32xi32>
    %121 = arith.sitofp %120 : vector<1x32xi32> to vector<1x32xf32>
    %cst_53 = arith.constant 1.000000e+00 : f32
    %122 = vector.broadcast %cst_53 : f32 to vector<1x32xf32>
    %123 = arith.addf %121, %122 : vector<1x32xf32>
    %cst_54 = arith.constant 1.280000e+02 : f32
    %124 = vector.broadcast %cst_54 : f32 to vector<1x32xf32>
    %125 = arith.mulf %123, %124 : vector<1x32xf32>
    %126 = arith.divf %118, %125 : vector<1x32xf32>
    %cst_55 = arith.constant 2.000000e+00 : f32
    %127 = vector.broadcast %cst_55 : f32 to vector<1x32xf32>
    %128 = arith.mulf %127, %126 : vector<1x32xf32>
    %129 = arith.mulf %128, %118 : vector<1x32xf32>
    %130 = arith.subf %119, %129 : vector<1x32xf32>
    %131 = arith.divf %130, %125 : vector<1x32xf32>
    %132 = arith.mulf %126, %126 : vector<1x32xf32>
    %133 = arith.addf %131, %132 : vector<1x32xf32>
    %cst_56 = arith.constant 0.000000e+00 : f32
    %134 = vector.broadcast %cst_56 : f32 to vector<1x32xf32>
    %135 = arith.maximumf %133, %134 : vector<1x32xf32>
    %cst_57 = arith.constant 9.99999993E-9 : f32
    %136 = vector.broadcast %cst_57 : f32 to vector<1x32xf32>
    %137 = arith.addf %135, %136 : vector<1x32xf32>
    %138 = math.rsqrt %137 : vector<1x32xf32>
    %139 = vector.broadcast %126 : vector<1x32xf32> to vector<128x32xf32>
    %140 = arith.subf %91, %139 : vector<128x32xf32>
    %141 = vector.broadcast %138 : vector<1x32xf32> to vector<128x32xf32>
    %142 = arith.mulf %140, %141 : vector<128x32xf32>
    %143 = vector.broadcast %70 : vector<128x1xf32> to vector<128x32xf32>
    %144 = arith.mulf %142, %143 : vector<128x32xf32>
    %145 = vector.broadcast %72 : vector<128x1xf32> to vector<128x32xf32>
    %146 = arith.addf %144, %145 : vector<128x32xf32>
    %c0_58 = arith.constant 0 : index
    %c128 = arith.constant 128 : index
    %147 = vector.load %arg16[%c0_58, %c128] : memref<128x160xf32, #tpu.memory_space<vmem>>, vector<128x32xf32>
    tpu.vector_store %arg16[%c0_58, %c128], %146 {strides = array<i32>} : memref<128x160xf32, #tpu.memory_space<vmem>>, vector<128x32xf32>,
    %c0_59 = arith.constant 0 : index
    %c0_60 = arith.constant 0 : index
    %c0_61 = arith.constant 0 : index
    %148 = vector.load %arg11[%c0_59, %c0_60, %c0_61] : memref<2x128x3xf32, #tpu.memory_space<vmem>>, vector<1x128x1xf32>
    %149 = vector.shape_cast %148 : vector<1x128x1xf32> to vector<128x1xf32>
    %c0_62 = arith.constant 0 : index
    %c126 = arith.constant 126 : index
    %150 = vector.load %arg16[%c0_62, %c126] : memref<128x160xf32, #tpu.memory_space<vmem>>, vector<128x32xf32>
    %151 = vector.broadcast %149 : vector<128x1xf32> to vector<128x32xf32>
    %152 = arith.mulf %151, %150 : vector<128x32xf32>
    %c0_63 = arith.constant 0 : index
    %c0_64 = arith.constant 0 : index
    %c1_65 = arith.constant 1 : index
    %153 = vector.load %arg11[%c0_63, %c0_64, %c1_65] : memref<2x128x3xf32, #tpu.memory_space<vmem>>, vector<1x128x1xf32>
    %154 = vector.shape_cast %153 : vector<1x128x1xf32> to vector<128x1xf32>
    %c0_66 = arith.constant 0 : index
    %c127 = arith.constant 127 : index
    %155 = vector.load %arg16[%c0_66, %c127] : memref<128x160xf32, #tpu.memory_space<vmem>>, vector<128x32xf32>
    %156 = vector.broadcast %154 : vector<128x1xf32> to vector<128x32xf32>
    %157 = arith.mulf %156, %155 : vector<128x32xf32>
    %158 = arith.addf %152, %157 : vector<128x32xf32>
    %c0_67 = arith.constant 0 : index
    %c0_68 = arith.constant 0 : index
    %c2_69 = arith.constant 2 : index
    %159 = vector.load %arg11[%c0_67, %c0_68, %c2_69] : memref<2x128x3xf32, #tpu.memory_space<vmem>>, vector<1x128x1xf32>
    %160 = vector.shape_cast %159 : vector<1x128x1xf32> to vector<128x1xf32>
    %c0_70 = arith.constant 0 : index
    %c128_71 = arith.constant 128 : index
    %161 = vector.load %arg16[%c0_70, %c128_71] : memref<128x160xf32, #tpu.memory_space<vmem>>, vector<128x32xf32>
    %162 = vector.broadcast %160 : vector<128x1xf32> to vector<128x32xf32>
    %163 = arith.mulf %162, %161 : vector<128x32xf32>
    %164 = arith.addf %158, %163 : vector<128x32xf32>
    %165 = vector.broadcast %74 : vector<128x1xf32> to vector<128x32xf32>
    %166 = arith.addf %164, %165 : vector<128x32xf32>
    %cst_72 = arith.constant 0.000000e+00 : f32
    %167 = vector.broadcast %cst_72 : f32 to vector<128x32xf32>
    %168 = arith.cmpf oge, %166, %167 : vector<128x32xf32>
    %169 = vector.broadcast %80 : f32 to vector<128x32xf32>
    %170 = arith.mulf %169, %166 : vector<128x32xf32>
    %171 = arith.select %168, %166, %170 : vector<128x32xi1>, vector<128x32xf32>
    %cst_73 = arith.constant dense<0.000000e+00> : vector<32xf32>
    %172 = vector.multi_reduction <add>, %171, %cst_73 [0] : vector<128x32xf32> to vector<32xf32>
    %173 = vector.shape_cast %172 : vector<32xf32> to vector<1x32xf32>
    %174 = arith.mulf %171, %171 : vector<128x32xf32>
    %cst_74 = arith.constant dense<0.000000e+00> : vector<32xf32>
    %175 = vector.multi_reduction <add>, %174, %cst_74 [0] : vector<128x32xf32> to vector<32xf32>
    %176 = vector.shape_cast %175 : vector<32xf32> to vector<1x32xf32>
    %177 = tpu.concatenate %173, %176 in 0 : vector<1x32xf32>, vector<1x32xf32> -> vector<2x32xf32>
    %cst_75 = arith.constant 0.000000e+00 : f32
    %178 = vector.broadcast %cst_75 : f32 to vector<2x1xf32>
    %179 = vector.extract_strided_slice %177 {offsets = [0, 0], sizes = [2, 31], strides = [1, 1]} : vector<2x32xf32> to vector<2x31xf32>
    %180 = tpu.concatenate %178, %179 in 1 : vector<2x1xf32>, vector<2x31xf32> -> vector<2x32xf32>
    %181 = arith.addf %177, %180 : vector<2x32xf32>
    %cst_76 = arith.constant 0.000000e+00 : f32
    %182 = vector.broadcast %cst_76 : f32 to vector<2x2xf32>
    %183 = vector.extract_strided_slice %181 {offsets = [0, 0], sizes = [2, 30], strides = [1, 1]} : vector<2x32xf32> to vector<2x30xf32>
    %184 = tpu.concatenate %182, %183 in 1 : vector<2x2xf32>, vector<2x30xf32> -> vector<2x32xf32>
    %185 = arith.addf %181, %184 : vector<2x32xf32>
    %cst_77 = arith.constant 0.000000e+00 : f32
    %186 = vector.broadcast %cst_77 : f32 to vector<2x4xf32>
    %187 = vector.extract_strided_slice %185 {offsets = [0, 0], sizes = [2, 28], strides = [1, 1]} : vector<2x32xf32> to vector<2x28xf32>
    %188 = tpu.concatenate %186, %187 in 1 : vector<2x4xf32>, vector<2x28xf32> -> vector<2x32xf32>
    %189 = arith.addf %185, %188 : vector<2x32xf32>
    %cst_78 = arith.constant 0.000000e+00 : f32
    %190 = vector.broadcast %cst_78 : f32 to vector<2x8xf32>
    %191 = vector.extract_strided_slice %189 {offsets = [0, 0], sizes = [2, 24], strides = [1, 1]} : vector<2x32xf32> to vector<2x24xf32>
    %192 = tpu.concatenate %190, %191 in 1 : vector<2x8xf32>, vector<2x24xf32> -> vector<2x32xf32>
    %193 = arith.addf %189, %192 : vector<2x32xf32>
    %cst_79 = arith.constant 0.000000e+00 : f32
    %194 = vector.broadcast %cst_79 : f32 to vector<2x16xf32>
    %195 = vector.extract_strided_slice %193 {offsets = [0, 0], sizes = [2, 16], strides = [1, 1]} : vector<2x32xf32> to vector<2x16xf32>
    %196 = tpu.concatenate %194, %195 in 1 : vector<2x16xf32>, vector<2x16xf32> -> vector<2x32xf32>
    %197 = arith.addf %193, %196 : vector<2x32xf32>
    %198 = vector.extract_strided_slice %197 {offsets = [0, 0], sizes = [1, 32], strides = [1, 1]} : vector<2x32xf32> to vector<1x32xf32>
    %199 = vector.extract_strided_slice %197 {offsets = [1, 0], sizes = [1, 32], strides = [1, 1]} : vector<2x32xf32> to vector<1x32xf32>
    %200 = tpu.iota {dimensions = array<i32: 1>} : vector<1x32xi32>
    %201 = arith.sitofp %200 : vector<1x32xi32> to vector<1x32xf32>
    %cst_80 = arith.constant 1.000000e+00 : f32
    %202 = vector.broadcast %cst_80 : f32 to vector<1x32xf32>
    %203 = arith.addf %201, %202 : vector<1x32xf32>
    %cst_81 = arith.constant 1.280000e+02 : f32
    %204 = vector.broadcast %cst_81 : f32 to vector<1x32xf32>
    %205 = arith.mulf %203, %204 : vector<1x32xf32>
    %206 = arith.divf %198, %205 : vector<1x32xf32>
    %cst_82 = arith.constant 2.000000e+00 : f32
    %207 = vector.broadcast %cst_82 : f32 to vector<1x32xf32>
    %208 = arith.mulf %207, %206 : vector<1x32xf32>
    %209 = arith.mulf %208, %198 : vector<1x32xf32>
    %210 = arith.subf %199, %209 : vector<1x32xf32>
    %211 = arith.divf %210, %205 : vector<1x32xf32>
    %212 = arith.mulf %206, %206 : vector<1x32xf32>
    %213 = arith.addf %211, %212 : vector<1x32xf32>
    %cst_83 = arith.constant 0.000000e+00 : f32
    %214 = vector.broadcast %cst_83 : f32 to vector<1x32xf32>
    %215 = arith.maximumf %213, %214 : vector<1x32xf32>
    %cst_84 = arith.constant 9.99999993E-9 : f32
    %216 = vector.broadcast %cst_84 : f32 to vector<1x32xf32>
    %217 = arith.addf %215, %216 : vector<1x32xf32>
    %218 = math.rsqrt %217 : vector<1x32xf32>
    %219 = vector.broadcast %206 : vector<1x32xf32> to vector<128x32xf32>
    %220 = arith.subf %171, %219 : vector<128x32xf32>
    %221 = vector.broadcast %218 : vector<1x32xf32> to vector<128x32xf32>
    %222 = arith.mulf %220, %221 : vector<128x32xf32>
    %223 = vector.broadcast %76 : vector<128x1xf32> to vector<128x32xf32>
    %224 = arith.mulf %222, %223 : vector<128x32xf32>
    %225 = vector.broadcast %78 : vector<128x1xf32> to vector<128x32xf32>
    %226 = arith.addf %224, %225 : vector<128x32xf32>
    %c0_85 = arith.constant 0 : index
    %c0_86 = arith.constant 0 : index
    %c0_87 = arith.constant 0 : index
    %227 = vector.load %arg12[%c0_85, %c0_86, %c0_87] : memref<2x32x128xbf16, #tpu.memory_space<vmem>>, vector<1x32x128xbf16>
    %228 = vector.shape_cast %227 : vector<1x32x128xbf16> to vector<32x128xbf16>
    %229 = arith.truncf %226 : vector<128x32xf32> to vector<128x32xbf16>
    %cst_88 = arith.constant dense<0.000000e+00> : vector<32x32xf32>
    %230 = tpu.matmul %228, %229, %cst_88 {dimension_numbers = #tpu.dot_dimension_numbers<[1], [0], [0], [1], [0, 0, 1, 1], [], []>} : vector<32x128xbf16>, vector<128x32xbf16>, vector<32x32xf32> -> vector<32x32xf32>
    %231 = arith.addf %66, %230 : vector<32x32xf32>
    %c0_89 = arith.constant 0 : index
    %c0_90 = arith.constant 0 : index
    %c0_91 = arith.constant 0 : index
    %232 = vector.load %arg13[%c0_89, %c0_90, %c0_91] : memref<2x32x1xf32, #tpu.memory_space<vmem>>, vector<1x32x1xf32>
    %233 = vector.shape_cast %232 : vector<1x32x1xf32> to vector<32x1xf32>
    %234 = vector.broadcast %233 : vector<32x1xf32> to vector<32x32xf32>
    %235 = arith.addf %231, %234 : vector<32x32xf32>
    %c0_92 = arith.constant 0 : index
    %c0_93 = arith.constant 0 : index
    %236 = vector.load %arg7[%c0_92, %c0_93] : memref<64x24xbf16, #tpu.memory_space<vmem>>, vector<64x24xbf16>
    %c0_94 = arith.constant 0 : index
    %c0_95 = arith.constant 0 : index
    %c0_96 = arith.constant 0 : index
    %237 = vector.load %arg2[%c0_94, %c0_95, %c0_96] : memref<1x24x32xf32, #tpu.memory_space<vmem>>, vector<1x24x32xf32>
    %238 = vector.shape_cast %237 : vector<1x24x32xf32> to vector<24x32xf32>
    %239 = arith.truncf %238 : vector<24x32xf32> to vector<24x32xbf16>
    %cst_97 = arith.constant dense<0.000000e+00> : vector<64x32xf32>
    %240 = tpu.matmul %236, %239, %cst_97 {dimension_numbers = #tpu.dot_dimension_numbers<[1], [0], [0], [1], [0, 0, 1, 1], [], []>} : vector<64x24xbf16>, vector<24x32xbf16>, vector<64x32xf32> -> vector<64x32xf32>
    %c0_98 = arith.constant 0 : index
    %c0_99 = arith.constant 0 : index
    %241 = vector.load %arg8[%c0_98, %c0_99] : memref<64x1xf32, #tpu.memory_space<vmem>>, vector<64x1xf32>
    %242 = vector.broadcast %241 : vector<64x1xf32> to vector<64x32xf32>
    %243 = arith.addf %240, %242 : vector<64x32xf32>
    %244 = vector.extract_strided_slice %243 {offsets = [0, 0], sizes = [32, 32], strides = [1, 1]} : vector<64x32xf32> to vector<32x32xf32>
    %245 = arith.mulf %235, %244 : vector<32x32xf32>
    %246 = vector.extract_strided_slice %243 {offsets = [32, 0], sizes = [32, 32], strides = [1, 1]} : vector<64x32xf32> to vector<32x32xf32>
    %247 = arith.addf %245, %246 : vector<32x32xf32>
    %c1_100 = arith.constant 1 : index
    %c0_101 = arith.constant 0 : index
    %c0_102 = arith.constant 0 : index
    %248 = vector.load %arg10[%c1_100, %c0_101, %c0_102] : memref<2x128x6xf32, #tpu.memory_space<vmem>>, vector<1x128x1xf32>
    %249 = vector.shape_cast %248 : vector<1x128x1xf32> to vector<128x1xf32>
    %c1_103 = arith.constant 1 : index
    %c0_104 = arith.constant 0 : index
    %c1_105 = arith.constant 1 : index
    %250 = vector.load %arg10[%c1_103, %c0_104, %c1_105] : memref<2x128x6xf32, #tpu.memory_space<vmem>>, vector<1x128x1xf32>
    %251 = vector.shape_cast %250 : vector<1x128x1xf32> to vector<128x1xf32>
    %c1_106 = arith.constant 1 : index
    %c0_107 = arith.constant 0 : index
    %c2_108 = arith.constant 2 : index
    %252 = vector.load %arg10[%c1_106, %c0_107, %c2_108] : memref<2x128x6xf32, #tpu.memory_space<vmem>>, vector<1x128x1xf32>
    %253 = vector.shape_cast %252 : vector<1x128x1xf32> to vector<128x1xf32>
    %c1_109 = arith.constant 1 : index
    %c0_110 = arith.constant 0 : index
    %c3_111 = arith.constant 3 : index
    %254 = vector.load %arg10[%c1_109, %c0_110, %c3_111] : memref<2x128x6xf32, #tpu.memory_space<vmem>>, vector<1x128x1xf32>
    %255 = vector.shape_cast %254 : vector<1x128x1xf32> to vector<128x1xf32>
    %c1_112 = arith.constant 1 : index
    %c0_113 = arith.constant 0 : index
    %c4_114 = arith.constant 4 : index
    %256 = vector.load %arg10[%c1_112, %c0_113, %c4_114] : memref<2x128x6xf32, #tpu.memory_space<vmem>>, vector<1x128x1xf32>
    %257 = vector.shape_cast %256 : vector<1x128x1xf32> to vector<128x1xf32>
    %c1_115 = arith.constant 1 : index
    %c0_116 = arith.constant 0 : index
    %c5_117 = arith.constant 5 : index
    %258 = vector.load %arg10[%c1_115, %c0_116, %c5_117] : memref<2x128x6xf32, #tpu.memory_space<vmem>>, vector<1x128x1xf32>
    %259 = vector.shape_cast %258 : vector<1x128x1xf32> to vector<128x1xf32>
    %c1_118 = arith.constant 1 : index
    %c0_119 = arith.constant 0 : index
    %260 = memref.load %arg14[%c1_118, %c0_119] : memref<2x2xf32, #tpu.memory_space<smem>>
    %c1_120 = arith.constant 1 : index
    %c1_121 = arith.constant 1 : index
    %261 = memref.load %arg14[%c1_120, %c1_121] : memref<2x2xf32, #tpu.memory_space<smem>>
    %c1_122 = arith.constant 1 : index
    %c0_123 = arith.constant 0 : index
    %c0_124 = arith.constant 0 : index
    %262 = vector.load %arg9[%c1_122, %c0_123, %c0_124] : memref<2x128x32xbf16, #tpu.memory_space<vmem>>, vector<1x128x32xbf16>
    %263 = vector.shape_cast %262 : vector<1x128x32xbf16> to vector<128x32xbf16>
    %264 = arith.truncf %247 : vector<32x32xf32> to vector<32x32xbf16>
    %cst_125 = arith.constant dense<0.000000e+00> : vector<128x32xf32>
    %265 = tpu.matmul %263, %264, %cst_125 {dimension_numbers = #tpu.dot_dimension_numbers<[1], [0], [0], [1], [0, 0, 1, 1], [], []>} : vector<128x32xbf16>, vector<32x32xbf16>, vector<128x32xf32> -> vector<128x32xf32>
    %266 = vector.broadcast %249 : vector<128x1xf32> to vector<128x32xf32>
    %267 = arith.addf %265, %266 : vector<128x32xf32>
    %cst_126 = arith.constant 0.000000e+00 : f32
    %268 = vector.broadcast %cst_126 : f32 to vector<128x32xf32>
    %269 = arith.cmpf oge, %267, %268 : vector<128x32xf32>
    %270 = vector.broadcast %260 : f32 to vector<128x32xf32>
    %271 = arith.mulf %270, %267 : vector<128x32xf32>
    %272 = arith.select %269, %267, %271 : vector<128x32xi1>, vector<128x32xf32>
    %cst_127 = arith.constant dense<0.000000e+00> : vector<32xf32>
    %273 = vector.multi_reduction <add>, %272, %cst_127 [0] : vector<128x32xf32> to vector<32xf32>
    %274 = vector.shape_cast %273 : vector<32xf32> to vector<1x32xf32>
    %275 = arith.mulf %272, %272 : vector<128x32xf32>
    %cst_128 = arith.constant dense<0.000000e+00> : vector<32xf32>
    %276 = vector.multi_reduction <add>, %275, %cst_128 [0] : vector<128x32xf32> to vector<32xf32>
    %277 = vector.shape_cast %276 : vector<32xf32> to vector<1x32xf32>
    %278 = tpu.concatenate %274, %277 in 0 : vector<1x32xf32>, vector<1x32xf32> -> vector<2x32xf32>
    %cst_129 = arith.constant 0.000000e+00 : f32
    %279 = vector.broadcast %cst_129 : f32 to vector<2x1xf32>
    %280 = vector.extract_strided_slice %278 {offsets = [0, 0], sizes = [2, 31], strides = [1, 1]} : vector<2x32xf32> to vector<2x31xf32>
    %281 = tpu.concatenate %279, %280 in 1 : vector<2x1xf32>, vector<2x31xf32> -> vector<2x32xf32>
    %282 = arith.addf %278, %281 : vector<2x32xf32>
    %cst_130 = arith.constant 0.000000e+00 : f32
    %283 = vector.broadcast %cst_130 : f32 to vector<2x2xf32>
    %284 = vector.extract_strided_slice %282 {offsets = [0, 0], sizes = [2, 30], strides = [1, 1]} : vector<2x32xf32> to vector<2x30xf32>
    %285 = tpu.concatenate %283, %284 in 1 : vector<2x2xf32>, vector<2x30xf32> -> vector<2x32xf32>
    %286 = arith.addf %282, %285 : vector<2x32xf32>
    %cst_131 = arith.constant 0.000000e+00 : f32
    %287 = vector.broadcast %cst_131 : f32 to vector<2x4xf32>
    %288 = vector.extract_strided_slice %286 {offsets = [0, 0], sizes = [2, 28], strides = [1, 1]} : vector<2x32xf32> to vector<2x28xf32>
    %289 = tpu.concatenate %287, %288 in 1 : vector<2x4xf32>, vector<2x28xf32> -> vector<2x32xf32>
    %290 = arith.addf %286, %289 : vector<2x32xf32>
    %cst_132 = arith.constant 0.000000e+00 : f32
    %291 = vector.broadcast %cst_132 : f32 to vector<2x8xf32>
    %292 = vector.extract_strided_slice %290 {offsets = [0, 0], sizes = [2, 24], strides = [1, 1]} : vector<2x32xf32> to vector<2x24xf32>
    %293 = tpu.concatenate %291, %292 in 1 : vector<2x8xf32>, vector<2x24xf32> -> vector<2x32xf32>
    %294 = arith.addf %290, %293 : vector<2x32xf32>
    %cst_133 = arith.constant 0.000000e+00 : f32
    %295 = vector.broadcast %cst_133 : f32 to vector<2x16xf32>
    %296 = vector.extract_strided_slice %294 {offsets = [0, 0], sizes = [2, 16], strides = [1, 1]} : vector<2x32xf32> to vector<2x16xf32>
    %297 = tpu.concatenate %295, %296 in 1 : vector<2x16xf32>, vector<2x16xf32> -> vector<2x32xf32>
    %298 = arith.addf %294, %297 : vector<2x32xf32>
    %299 = vector.extract_strided_slice %298 {offsets = [0, 0], sizes = [1, 32], strides = [1, 1]} : vector<2x32xf32> to vector<1x32xf32>
    %300 = vector.extract_strided_slice %298 {offsets = [1, 0], sizes = [1, 32], strides = [1, 1]} : vector<2x32xf32> to vector<1x32xf32>
    %301 = tpu.iota {dimensions = array<i32: 1>} : vector<1x32xi32>
    %302 = arith.sitofp %301 : vector<1x32xi32> to vector<1x32xf32>
    %cst_134 = arith.constant 1.000000e+00 : f32
    %303 = vector.broadcast %cst_134 : f32 to vector<1x32xf32>
    %304 = arith.addf %302, %303 : vector<1x32xf32>
    %cst_135 = arith.constant 1.280000e+02 : f32
    %305 = vector.broadcast %cst_135 : f32 to vector<1x32xf32>
    %306 = arith.mulf %304, %305 : vector<1x32xf32>
    %307 = arith.divf %299, %306 : vector<1x32xf32>
    %cst_136 = arith.constant 2.000000e+00 : f32
    %308 = vector.broadcast %cst_136 : f32 to vector<1x32xf32>
    %309 = arith.mulf %308, %307 : vector<1x32xf32>
    %310 = arith.mulf %309, %299 : vector<1x32xf32>
    %311 = arith.subf %300, %310 : vector<1x32xf32>
    %312 = arith.divf %311, %306 : vector<1x32xf32>
    %313 = arith.mulf %307, %307 : vector<1x32xf32>
    %314 = arith.addf %312, %313 : vector<1x32xf32>
    %cst_137 = arith.constant 0.000000e+00 : f32
    %315 = vector.broadcast %cst_137 : f32 to vector<1x32xf32>
    %316 = arith.maximumf %314, %315 : vector<1x32xf32>
    %cst_138 = arith.constant 9.99999993E-9 : f32
    %317 = vector.broadcast %cst_138 : f32 to vector<1x32xf32>
    %318 = arith.addf %316, %317 : vector<1x32xf32>
    %319 = math.rsqrt %318 : vector<1x32xf32>
    %320 = vector.broadcast %307 : vector<1x32xf32> to vector<128x32xf32>
    %321 = arith.subf %272, %320 : vector<128x32xf32>
    %322 = vector.broadcast %319 : vector<1x32xf32> to vector<128x32xf32>
    %323 = arith.mulf %321, %322 : vector<128x32xf32>
    %324 = vector.broadcast %251 : vector<128x1xf32> to vector<128x32xf32>
    %325 = arith.mulf %323, %324 : vector<128x32xf32>
    %326 = vector.broadcast %253 : vector<128x1xf32> to vector<128x32xf32>
    %327 = arith.addf %325, %326 : vector<128x32xf32>
    %c0_139 = arith.constant 0 : index
    %c128_140 = arith.constant 128 : index
    %328 = vector.load %arg16[%c0_139, %c128_140] : memref<128x160xf32, #tpu.memory_space<vmem>>, vector<128x32xf32>
    tpu.vector_store %arg16[%c0_139, %c128_140], %327 {strides = array<i32>} : memref<128x160xf32, #tpu.memory_space<vmem>>, vector<128x32xf32>,
    %c1_141 = arith.constant 1 : index
    %c0_142 = arith.constant 0 : index
    %c0_143 = arith.constant 0 : index
    %329 = vector.load %arg11[%c1_141, %c0_142, %c0_143] : memref<2x128x3xf32, #tpu.memory_space<vmem>>, vector<1x128x1xf32>
    %330 = vector.shape_cast %329 : vector<1x128x1xf32> to vector<128x1xf32>
    %c0_144 = arith.constant 0 : index
    %c124_145 = arith.constant 124 : index
    %331 = vector.load %arg16[%c0_144, %c124_145] : memref<128x160xf32, #tpu.memory_space<vmem>>, vector<128x32xf32>
    %332 = vector.broadcast %330 : vector<128x1xf32> to vector<128x32xf32>
    %333 = arith.mulf %332, %331 : vector<128x32xf32>
    %c1_146 = arith.constant 1 : index
    %c0_147 = arith.constant 0 : index
    %c1_148 = arith.constant 1 : index
    %334 = vector.load %arg11[%c1_146, %c0_147, %c1_148] : memref<2x128x3xf32, #tpu.memory_space<vmem>>, vector<1x128x1xf32>
    %335 = vector.shape_cast %334 : vector<1x128x1xf32> to vector<128x1xf32>
    %c0_149 = arith.constant 0 : index
    %c126_150 = arith.constant 126 : index
    %336 = vector.load %arg16[%c0_149, %c126_150] : memref<128x160xf32, #tpu.memory_space<vmem>>, vector<128x32xf32>
    %337 = vector.broadcast %335 : vector<128x1xf32> to vector<128x32xf32>
    %338 = arith.mulf %337, %336 : vector<128x32xf32>
    %339 = arith.addf %333, %338 : vector<128x32xf32>
    %c1_151 = arith.constant 1 : index
    %c0_152 = arith.constant 0 : index
    %c2_153 = arith.constant 2 : index
    %340 = vector.load %arg11[%c1_151, %c0_152, %c2_153] : memref<2x128x3xf32, #tpu.memory_space<vmem>>, vector<1x128x1xf32>
    %341 = vector.shape_cast %340 : vector<1x128x1xf32> to vector<128x1xf32>
    %c0_154 = arith.constant 0 : index
    %c128_155 = arith.constant 128 : index
    %342 = vector.load %arg16[%c0_154, %c128_155] : memref<128x160xf32, #tpu.memory_space<vmem>>, vector<128x32xf32>
    %343 = vector.broadcast %341 : vector<128x1xf32> to vector<128x32xf32>
    %344 = arith.mulf %343, %342 : vector<128x32xf32>
    %345 = arith.addf %339, %344 : vector<128x32xf32>
    %346 = vector.broadcast %255 : vector<128x1xf32> to vector<128x32xf32>
    %347 = arith.addf %345, %346 : vector<128x32xf32>
    %cst_156 = arith.constant 0.000000e+00 : f32
    %348 = vector.broadcast %cst_156 : f32 to vector<128x32xf32>
    %349 = arith.cmpf oge, %347, %348 : vector<128x32xf32>
    %350 = vector.broadcast %261 : f32 to vector<128x32xf32>
    %351 = arith.mulf %350, %347 : vector<128x32xf32>
    %352 = arith.select %349, %347, %351 : vector<128x32xi1>, vector<128x32xf32>
    %cst_157 = arith.constant dense<0.000000e+00> : vector<32xf32>
    %353 = vector.multi_reduction <add>, %352, %cst_157 [0] : vector<128x32xf32> to vector<32xf32>
    %354 = vector.shape_cast %353 : vector<32xf32> to vector<1x32xf32>
    %355 = arith.mulf %352, %352 : vector<128x32xf32>
    %cst_158 = arith.constant dense<0.000000e+00> : vector<32xf32>
    %356 = vector.multi_reduction <add>, %355, %cst_158 [0] : vector<128x32xf32> to vector<32xf32>
    %357 = vector.shape_cast %356 : vector<32xf32> to vector<1x32xf32>
    %358 = tpu.concatenate %354, %357 in 0 : vector<1x32xf32>, vector<1x32xf32> -> vector<2x32xf32>
    %cst_159 = arith.constant 0.000000e+00 : f32
    %359 = vector.broadcast %cst_159 : f32 to vector<2x1xf32>
    %360 = vector.extract_strided_slice %358 {offsets = [0, 0], sizes = [2, 31], strides = [1, 1]} : vector<2x32xf32> to vector<2x31xf32>
    %361 = tpu.concatenate %359, %360 in 1 : vector<2x1xf32>, vector<2x31xf32> -> vector<2x32xf32>
    %362 = arith.addf %358, %361 : vector<2x32xf32>
    %cst_160 = arith.constant 0.000000e+00 : f32
    %363 = vector.broadcast %cst_160 : f32 to vector<2x2xf32>
    %364 = vector.extract_strided_slice %362 {offsets = [0, 0], sizes = [2, 30], strides = [1, 1]} : vector<2x32xf32> to vector<2x30xf32>
    %365 = tpu.concatenate %363, %364 in 1 : vector<2x2xf32>, vector<2x30xf32> -> vector<2x32xf32>
    %366 = arith.addf %362, %365 : vector<2x32xf32>
    %cst_161 = arith.constant 0.000000e+00 : f32
    %367 = vector.broadcast %cst_161 : f32 to vector<2x4xf32>
    %368 = vector.extract_strided_slice %366 {offsets = [0, 0], sizes = [2, 28], strides = [1, 1]} : vector<2x32xf32> to vector<2x28xf32>
    %369 = tpu.concatenate %367, %368 in 1 : vector<2x4xf32>, vector<2x28xf32> -> vector<2x32xf32>
    %370 = arith.addf %366, %369 : vector<2x32xf32>
    %cst_162 = arith.constant 0.000000e+00 : f32
    %371 = vector.broadcast %cst_162 : f32 to vector<2x8xf32>
    %372 = vector.extract_strided_slice %370 {offsets = [0, 0], sizes = [2, 24], strides = [1, 1]} : vector<2x32xf32> to vector<2x24xf32>
    %373 = tpu.concatenate %371, %372 in 1 : vector<2x8xf32>, vector<2x24xf32> -> vector<2x32xf32>
    %374 = arith.addf %370, %373 : vector<2x32xf32>
    %cst_163 = arith.constant 0.000000e+00 : f32
    %375 = vector.broadcast %cst_163 : f32 to vector<2x16xf32>
    %376 = vector.extract_strided_slice %374 {offsets = [0, 0], sizes = [2, 16], strides = [1, 1]} : vector<2x32xf32> to vector<2x16xf32>
    %377 = tpu.concatenate %375, %376 in 1 : vector<2x16xf32>, vector<2x16xf32> -> vector<2x32xf32>
    %378 = arith.addf %374, %377 : vector<2x32xf32>
    %379 = vector.extract_strided_slice %378 {offsets = [0, 0], sizes = [1, 32], strides = [1, 1]} : vector<2x32xf32> to vector<1x32xf32>
    %380 = vector.extract_strided_slice %378 {offsets = [1, 0], sizes = [1, 32], strides = [1, 1]} : vector<2x32xf32> to vector<1x32xf32>
    %381 = tpu.iota {dimensions = array<i32: 1>} : vector<1x32xi32>
    %382 = arith.sitofp %381 : vector<1x32xi32> to vector<1x32xf32>
    %cst_164 = arith.constant 1.000000e+00 : f32
    %383 = vector.broadcast %cst_164 : f32 to vector<1x32xf32>
    %384 = arith.addf %382, %383 : vector<1x32xf32>
    %cst_165 = arith.constant 1.280000e+02 : f32
    %385 = vector.broadcast %cst_165 : f32 to vector<1x32xf32>
    %386 = arith.mulf %384, %385 : vector<1x32xf32>
    %387 = arith.divf %379, %386 : vector<1x32xf32>
    %cst_166 = arith.constant 2.000000e+00 : f32
    %388 = vector.broadcast %cst_166 : f32 to vector<1x32xf32>
    %389 = arith.mulf %388, %387 : vector<1x32xf32>
    %390 = arith.mulf %389, %379 : vector<1x32xf32>
    %391 = arith.subf %380, %390 : vector<1x32xf32>
    %392 = arith.divf %391, %386 : vector<1x32xf32>
    %393 = arith.mulf %387, %387 : vector<1x32xf32>
    %394 = arith.addf %392, %393 : vector<1x32xf32>
    %cst_167 = arith.constant 0.000000e+00 : f32
    %395 = vector.broadcast %cst_167 : f32 to vector<1x32xf32>
    %396 = arith.maximumf %394, %395 : vector<1x32xf32>
    %cst_168 = arith.constant 9.99999993E-9 : f32
    %397 = vector.broadcast %cst_168 : f32 to vector<1x32xf32>
    %398 = arith.addf %396, %397 : vector<1x32xf32>
    %399 = math.rsqrt %398 : vector<1x32xf32>
    %400 = vector.broadcast %387 : vector<1x32xf32> to vector<128x32xf32>
    %401 = arith.subf %352, %400 : vector<128x32xf32>
    %402 = vector.broadcast %399 : vector<1x32xf32> to vector<128x32xf32>
    %403 = arith.mulf %401, %402 : vector<128x32xf32>
    %404 = vector.broadcast %257 : vector<128x1xf32> to vector<128x32xf32>
    %405 = arith.mulf %403, %404 : vector<128x32xf32>
    %406 = vector.broadcast %259 : vector<128x1xf32> to vector<128x32xf32>
    %407 = arith.addf %405, %406 : vector<128x32xf32>
    %c1_169 = arith.constant 1 : index
    %c0_170 = arith.constant 0 : index
    %c0_171 = arith.constant 0 : index
    %408 = vector.load %arg12[%c1_169, %c0_170, %c0_171] : memref<2x32x128xbf16, #tpu.memory_space<vmem>>, vector<1x32x128xbf16>
    %409 = vector.shape_cast %408 : vector<1x32x128xbf16> to vector<32x128xbf16>
    %410 = arith.truncf %407 : vector<128x32xf32> to vector<128x32xbf16>
    %cst_172 = arith.constant dense<0.000000e+00> : vector<32x32xf32>
    %411 = tpu.matmul %409, %410, %cst_172 {dimension_numbers = #tpu.dot_dimension_numbers<[1], [0], [0], [1], [0, 0, 1, 1], [], []>} : vector<32x128xbf16>, vector<128x32xbf16>, vector<32x32xf32> -> vector<32x32xf32>
    %412 = arith.addf %247, %411 : vector<32x32xf32>
    %c1_173 = arith.constant 1 : index
    %c0_174 = arith.constant 0 : index
    %c0_175 = arith.constant 0 : index
    %413 = vector.load %arg13[%c1_173, %c0_174, %c0_175] : memref<2x32x1xf32, #tpu.memory_space<vmem>>, vector<1x32x1xf32>
    %414 = vector.shape_cast %413 : vector<1x32x1xf32> to vector<32x1xf32>
    %415 = vector.broadcast %414 : vector<32x1xf32> to vector<32x32xf32>
    %416 = arith.addf %412, %415 : vector<32x32xf32>
    %c0_176 = arith.constant 0 : index
    %c0_177 = arith.constant 0 : index
    %c0_178 = arith.constant 0 : index
    %417 = vector.load %arg15[%c0_176, %c0_177, %c0_178] : memref<1x32x32xf32, #tpu.memory_space<vmem>>, vector<1x32x32xf32>
    %418 = vector.shape_cast %417 : vector<1x32x32xf32> to vector<32x32xf32>
    %419 = vector.shape_cast %416 : vector<32x32xf32> to vector<1x32x32xf32>
    tpu.vector_store %arg15[%c0_176, %c0_177, %c0_178], %419 {strides = array<i32>} : memref<1x32x32xf32, #tpu.memory_space<vmem>>, vector<1x32x32xf32>,
    return
  }
  func.func @transform_0(%arg0: i32) -> (i32, i32, i32) {
    %c0_i32 = arith.constant 0 : i32
    %c0_i32_0 = arith.constant 0 : i32
    %c0_i32_1 = arith.constant 0 : i32
    return %arg0, %c0_i32, %c0_i32_0 : i32, i32, i32
  }
  func.func @transform_1(%arg0: i32) -> (i32, i32, i32) {
    %c0_i32 = arith.constant 0 : i32
    %c0_i32_0 = arith.constant 0 : i32
    %c0_i32_1 = arith.constant 0 : i32
    return %arg0, %c0_i32, %c0_i32_0 : i32, i32, i32
  }
  func.func @transform_2(%arg0: i32) -> (i32, i32) {
    %c0_i32 = arith.constant 0 : i32
    %c0_i32_0 = arith.constant 0 : i32
    %c0_i32_1 = arith.constant 0 : i32
    return %c0_i32, %c0_i32_0 : i32, i32
  }
  func.func @transform_3(%arg0: i32) -> (i32, i32) {
    %c0_i32 = arith.constant 0 : i32
    %c0_i32_0 = arith.constant 0 : i32
    %c0_i32_1 = arith.constant 0 : i32
    return %c0_i32, %c0_i32_0 : i32, i32
  }
  func.func @transform_4(%arg0: i32) -> (i32, i32) {
    %c0_i32 = arith.constant 0 : i32
    %c0_i32_0 = arith.constant 0 : i32
    %c0_i32_1 = arith.constant 0 : i32
    return %c0_i32, %c0_i32_0 : i32, i32
  }
  func.func @transform_5(%arg0: i32) -> (i32, i32) {
    %c0_i32 = arith.constant 0 : i32
    %c0_i32_0 = arith.constant 0 : i32
    %c0_i32_1 = arith.constant 0 : i32
    return %c0_i32, %c0_i32_0 : i32, i32
  }
  func.func @transform_6(%arg0: i32) -> (i32, i32) {
    %c0_i32 = arith.constant 0 : i32
    %c0_i32_0 = arith.constant 0 : i32
    %c0_i32_1 = arith.constant 0 : i32
    return %c0_i32, %c0_i32_0 : i32, i32
  }
  func.func @transform_7(%arg0: i32) -> (i32, i32) {
    %c0_i32 = arith.constant 0 : i32
    %c0_i32_0 = arith.constant 0 : i32
    %c0_i32_1 = arith.constant 0 : i32
    return %c0_i32, %c0_i32_0 : i32, i32
  }
  func.func @transform_8(%arg0: i32) -> (i32, i32, i32) {
    %c0_i32 = arith.constant 0 : i32
    %c0_i32_0 = arith.constant 0 : i32
    %c0_i32_1 = arith.constant 0 : i32
    %c0_i32_2 = arith.constant 0 : i32
    return %c0_i32, %c0_i32_0, %c0_i32_1 : i32, i32, i32
  }
  func.func @transform_9(%arg0: i32) -> (i32, i32, i32) {
    %c0_i32 = arith.constant 0 : i32
    %c0_i32_0 = arith.constant 0 : i32
    %c0_i32_1 = arith.constant 0 : i32
    %c0_i32_2 = arith.constant 0 : i32
    return %c0_i32, %c0_i32_0, %c0_i32_1 : i32, i32, i32
  }
  func.func @transform_10(%arg0: i32) -> (i32, i32, i32) {
    %c0_i32 = arith.constant 0 : i32
    %c0_i32_0 = arith.constant 0 : i32
    %c0_i32_1 = arith.constant 0 : i32
    %c0_i32_2 = arith.constant 0 : i32
    return %c0_i32, %c0_i32_0, %c0_i32_1 : i32, i32, i32
  }
  func.func @transform_11(%arg0: i32) -> (i32, i32, i32) {
    %c0_i32 = arith.constant 0 : i32
    %c0_i32_0 = arith.constant 0 : i32
    %c0_i32_1 = arith.constant 0 : i32
    %c0_i32_2 = arith.constant 0 : i32
    return %c0_i32, %c0_i32_0, %c0_i32_1 : i32, i32, i32
  }
  func.func @transform_12(%arg0: i32) -> (i32, i32, i32) {
    %c0_i32 = arith.constant 0 : i32
    %c0_i32_0 = arith.constant 0 : i32
    %c0_i32_1 = arith.constant 0 : i32
    %c0_i32_2 = arith.constant 0 : i32
    return %c0_i32, %c0_i32_0, %c0_i32_1 : i32, i32, i32
  }
  func.func @transform_13(%arg0: i32) -> (i32, i32) {
    %c0_i32 = arith.constant 0 : i32
    %c0_i32_0 = arith.constant 0 : i32
    %c0_i32_1 = arith.constant 0 : i32
    return %c0_i32, %c0_i32_0 : i32, i32
  }
  func.func @transform_14(%arg0: i32) -> (i32, i32, i32) {
    %c0_i32 = arith.constant 0 : i32
    %c0_i32_0 = arith.constant 0 : i32
    %c0_i32_1 = arith.constant 0 : i32
    return %arg0, %c0_i32, %c0_i32_0 : i32, i32, i32
  }
}

</mosaic_0001>

<llo_original>
// kernel: tasnet_forward.3
$region0: #{tasnet_forward.3}
  #allocation0 [shape = 'u32[]', space=smem, size = 0x4, offset = 0x4, fixed_abs, tag = 'smem constant byte address 0x4 - core index']
  #allocation1 [shape = 'u32[72,128]{1,0:T(1,128)}', space=vmem, size = 0x9000, scoped, tag = 'internal scratch']
  %s0 = inlined_call_operand.vmem [shape: f32[4,16,33], index: 0, kind: input, shape index: {}]
  %s1 = inlined_call_operand.vmem [shape: bf16[64,32], index: 1, kind: input, shape index: {}]
  %s2 = inlined_call_operand.vmem [shape: f32[4,64,32], index: 2, kind: output, shape index: {}]
  %s3 = sld [smem:[#allocation0]]
  $region41: #{tasnet_forward.3} parent=0
    _
  %s5 = ssub.s32 1, %s3
  %s6 = scalar_select 0, %s5, %s3
  loop: start=0, step=1, limit=6
  $region2: #{tasnet_forward.3} parent=0 // loop_pre_header
    _
  $region3: #{tasnet_forward.3} parent=0 // loop_header
    %s8 = sphi 0, %s12
    %p9 = scmp.ge.s32.totalorder %s8, 6
    %s18 = sphi 0, %s20
    %s21 = sphi 0, %s18
    %s22 = sphi 0, %s21
    %s38 = sphi 0, %s22
    %s42 = sphi 0, %s42
    %s44 = sphi 0, %s42
    %s45 = sphi 0, %s44
    %s59 = sphi 0, %s45
    %s65 = sphi 0, %s67
    %s68 = sphi 0, %s65
    %s69 = sphi 0, %s68
    %s85 = sphi 0, %s69
  $region4: #{tasnet_forward.3} parent=0 // loop_header_branch
    %11 = sbr.rel (%p9) target = $region8
  $region5: #{tasnet_forward.3} parent=0 // loop_body
    %s13 = ssub.s32 %s8, 1
    %s14 = ssub.s32 %s8, 2
    %s15 = sadd.s32 %s8, 1
    %s16 = ssub.s32 %s8, %s15
    %p17 = scmp.eq.s32.totalorder %s16, 0
    %s19 = sadd.s32 %s18, 1
    %s20 = scalar_select %p17, %s18, %s19
    %p23 = pneg %p17
    %p24 = scmp.eq.s32.totalorder %s8, 3
    %p25 = por %p23, %p24
    %p26 = scmp.ne.s32.totalorder %s18, %s21
    %p27 = scmp.eq.s32.totalorder %s8, 0
    %p28 = por %p26, %p27
    %p29 = scmp.ne.s32.totalorder %s18, %s21
    %p30 = scmp.eq.s32.totalorder %s13, 3
    %p31 = por %p29, %p30
    %p32 = scmp.ne.s32.totalorder %s21, %s22
    %p33 = scmp.eq.s32.totalorder %s13, 0
    %p34 = por %p32, %p33
    %p35 = scmp.ne.s32.totalorder %s21, %s22
    %p36 = scmp.eq.s32.totalorder %s14, 3
    %p37 = por %p35, %p36
    %p39 = scmp.ne.s32.totalorder %s22, %s38
    %p40 = scmp.eq.s32.totalorder %s14, 0
    %p41 = por %p39, %p40
    %s43 = sadd.s32 %s42, 1
    %p46 = scmp.eq.s32.totalorder %s8, 3
    %p47 = scmp.ne.s32.totalorder %s42, %s44
    %p48 = scmp.eq.s32.totalorder %s8, 0
    %p49 = por %p47, %p48
    %p50 = scmp.ne.s32.totalorder %s42, %s44
    %p51 = scmp.eq.s32.totalorder %s13, 3
    %p52 = por %p50, %p51
    %p53 = scmp.ne.s32.totalorder %s44, %s45
    %p54 = scmp.eq.s32.totalorder %s13, 0
    %p55 = por %p53, %p54
    %p56 = scmp.ne.s32.totalorder %s44, %s45
    %p57 = scmp.eq.s32.totalorder %s14, 3
    %p58 = por %p56, %p57
    %p60 = scmp.ne.s32.totalorder %s45, %s59
    %p61 = scmp.eq.s32.totalorder %s14, 0
    %p62 = por %p60, %p61
    %s63 = ssub.s32 %s8, %s15
    %p64 = scmp.eq.s32.totalorder %s63, 0
    %s66 = sadd.s32 %s65, 1
    %s67 = scalar_select %p64, %s65, %s66
    %p70 = pneg %p64
    %p71 = scmp.eq.s32.totalorder %s8, 3
    %p72 = por %p70, %p71
    %p73 = scmp.ne.s32.totalorder %s65, %s68
    %p74 = scmp.eq.s32.totalorder %s8, 0
    %p75 = por %p73, %p74
    %p76 = scmp.ne.s32.totalorder %s65, %s68
    %p77 = scmp.eq.s32.totalorder %s13, 3
    %p78 = por %p76, %p77
    %p79 = scmp.ne.s32.totalorder %s68, %s69
    %p80 = scmp.eq.s32.totalorder %s13, 0
    %p81 = por %p79, %p80
    %p82 = scmp.ne.s32.totalorder %s68, %s69
    %p83 = scmp.eq.s32.totalorder %s14, 3
    %p84 = por %p82, %p83
    %p86 = scmp.ne.s32.totalorder %s69, %s85
    %p87 = scmp.eq.s32.totalorder %s14, 0
    %p88 = por %p86, %p87
    %p89 = scmp.le.s32.totalorder 1, %s8
    %p90 = scmp.lt.s32.totalorder %s8, 5
    %p91 = pnand %p89, %p90
    %p92 = pneg %p91
    // Predicated region
    $region9: #{tasnet_forward.3} parent=5 // pred_check
      _
    $region10: #{tasnet_forward.3} parent=5 // pred_check_branch
      %94 = sbr.rel (%p91) target = $region12
    $region11: #{tasnet_forward.3} parent=5 // pred_region
      %s95 = ssub.s32 %s8, 1
      // Predicated region
      $region13: #{tasnet_forward.3} parent=11 // pred_check
        %p96 = pneg %p55
      $region14: #{tasnet_forward.3} parent=11 // pred_check_branch
        %98 = sbr.rel (%p96) target = $region16
      $region15: #{tasnet_forward.3} parent=11 // pred_region
        _
      $region16: #{tasnet_forward.3} parent=11 // pred_fallthru
        _
    $region12: #{tasnet_forward.3} parent=5 // pred_fallthru
      _
    %p99 = scmp.lt.s32.totalorder %s8, 4
    // Predicated region
    $region17: #{tasnet_forward.3} parent=5 // pred_check
      %p100 = pneg %p99
    $region18: #{tasnet_forward.3} parent=5 // pred_check_branch
      %102 = sbr.rel (%p100) target = $region20
    $region19: #{tasnet_forward.3} parent=5 // pred_region
      // Predicated region
      $region21: #{tasnet_forward.3} parent=19 // pred_check
        %p103 = pneg %p28
      $region22: #{tasnet_forward.3} parent=19 // pred_check_branch
        %105 = sbr.rel (%p103) target = $region24
      $region23: #{tasnet_forward.3} parent=19 // pred_region
        %p106 = scmp.lt.s32.totalorder %s8, 3
        %s107 = scalar_select %p106, %s8, 3
        %s108 = smul.addr %s107, 2
        %s109 = smul.addr %s108, 8
        %s110 = scalar_lea.vmem %s0, %s109
      $region24: #{tasnet_forward.3} parent=19 // pred_fallthru
        _
    $region20: #{tasnet_forward.3} parent=5 // pred_fallthru
      _
    %p111 = scmp.le.s32.totalorder 1, %s8
    %p112 = scmp.lt.s32.totalorder %s8, 5
    %p113 = pnand %p111, %p112
    %p114 = pneg %p113
    // Predicated region
    $region25: #{tasnet_forward.3} parent=5 // pred_check
      _
    $region26: #{tasnet_forward.3} parent=5 // pred_check_branch
      %116 = sbr.rel (%p113) target = $region28
    $region27: #{tasnet_forward.3} parent=5 // pred_region
      %s117 = ssub.s32 %s8, 1
      %p118 = scmp.lt.s32.totalorder %s13, 3
      %s119 = scalar_select %p118, %s13, 3
      %s120 = smul.addr %s119, 2
      %s121 = smul.addr %s120, 8
      %s122 = scalar_lea.vmem %s0, %s121
      %p123 = pneg %p34
      %p124 = pneg %p31
      %p125 = pneg %p55
      %p126 = pneg %p52
      %p127 = pneg %p81
      %p128 = pneg %p78
      %p129 = scmp.lt.s32.totalorder %s13, 3
      %s130 = scalar_select %p129, %s13, 3
      %s131 = smul.addr %s130, 8
      %s132 = smul.addr %s131, 8
      %s133 = scalar_lea.vmem %s2, %s132
      %p134 = scmp.lt.s32.totalorder %s13, 3
      %s135 = scalar_select %p134, %s13, 3
      %s136 = smul.addr %s135, 2
      %s137 = smul.addr %s136, 8
      %s138 = scalar_lea.vmem %s0, %s137
      %p139 = scmp.lt.s32.totalorder %s13, 3
      %s140 = scalar_select %p139, %s13, 3
      %s141 = smul.addr %s140, 8
      %s142 = smul.addr %s141, 8
      %s143 = scalar_lea.vmem %s2, %s142
      %v145 = vld [vmem:[%s138] sm:$0xff]
      %v146 = vld [vmem:[%s138 + $0x8] sm:$0xff]
      %v147 = vpack.c.bf16 %v145, %v145
      %v148 = vpack.c.bf16 %v146, %v146
      %v151 = vunpack.c.l.b16 %v147
      %v152 = vunpack.c.l.b16 %v148
      %v153 = vpack.c.b16 %v152, %v151
      %155 = vrot.lane.b32.xlu0 %v153, 127
      %v156 = vpop.permute.xlu0 %155
      %v158 = vld [vmem:[%s1] sm:$0xf]
      %v159 = vld [vmem:[%s1 + $0x4] sm:$0xf]
      %v160 = vld [vmem:[%s1 + $0x8] sm:$0xf]
      %v161 = vld [vmem:[%s1 + $0xc] sm:$0xf]
      %v162 = vld [vmem:[%s1 + $0x10] sm:$0xf]
      %v163 = vld [vmem:[%s1 + $0x14] sm:$0xf]
      %v164 = vld [vmem:[%s1 + $0x18] sm:$0xf]
      %v165 = vld [vmem:[%s1 + $0x1c] sm:$0xf]
      %v174 = vunpack.c.l.b16 %v158
      %v175 = vunpack.c.l.b16 %v159
      %v176 = vunpack.c.l.b16 %v160
      %v177 = vunpack.c.l.b16 %v161
      %v178 = vunpack.c.l.b16 %v162
      %v179 = vunpack.c.l.b16 %v163
      %v180 = vunpack.c.l.b16 %v164
      %v181 = vunpack.c.l.b16 %v165
      %v182 = vpack.c.b16 %v175, %v174
      %v183 = vpack.c.b16 %v177, %v176
      %v184 = vpack.c.b16 %v179, %v178
      %v185 = vpack.c.b16 %v181, %v180
      %vm186 = vcmask 261120
      %v188 = vsel %vm186, %v182, 0
      %v191 = vsel %vm186, %v183, 0
      %v194 = vsel %vm186, %v184, 0
      %v197 = vsel %vm186, %v185, 0
      %199 = vmatpush.bf16.msra.mxu0 0
      %200 = vmatpush.bf16.msra.mxu0 0
      %201 = vmatpush.bf16.msra.mxu0 0
      %202 = vmatpush.bf16.msra.mxu0 0
      %203 = vmatpush.bf16.msra.mxu0 0
      %204 = vmatpush.bf16.msra.mxu0 0
      %205 = vmatpush.bf16.msra.mxu0 %v156
      %206 = vmatpush.bf16.msra.mxu0 %v153
      %207 = vmatmul.bf16.gmra.mxu0 %v188
      %v208 = vpop.f32.mrf.mxu0
      %v209 = vadd.f32 0.0, %v208
      %v210 = vpop.f32.mrf.mxu0
      %v211 = vadd.f32 0.0, %v210
      %212 = vmatmul.bf16.gmra.mxu0 %v191
      %v213 = vpop.f32.mrf.mxu0
      %v214 = vadd.f32 0.0, %v213
      %v215 = vpop.f32.mrf.mxu0
      %v216 = vadd.f32 0.0, %v215
      %217 = vmatmul.bf16.gmra.mxu0 %v194
      %v218 = vpop.f32.mrf.mxu0
      %v219 = vadd.f32 0.0, %v218
      %v220 = vpop.f32.mrf.mxu0
      %v221 = vadd.f32 0.0, %v220
      %222 = vmatmul.bf16.gmra.mxu0 %v197
      %v223 = vpop.f32.mrf.mxu0
      %v224 = vadd.f32 0.0, %v223
      %v225 = vpop.f32.mrf.mxu0
      %v226 = vadd.f32 0.0, %v225
      %227 = vdwg.mxu0
      %228 = vst.msk [vmem:[%s143] sm:$0xff] %vm186, %v209
      %229 = vst.msk [vmem:[%s143 + $0x8] sm:$0xff] %vm186, %v211
      %230 = vst.msk [vmem:[%s143 + $0x10] sm:$0xff] %vm186, %v214
      %231 = vst.msk [vmem:[%s143 + $0x18] sm:$0xff] %vm186, %v216
      %232 = vst.msk [vmem:[%s143 + $0x20] sm:$0xff] %vm186, %v219
      %233 = vst.msk [vmem:[%s143 + $0x28] sm:$0xff] %vm186, %v221
      %234 = vst.msk [vmem:[%s143 + $0x30] sm:$0xff] %vm186, %v224
      %235 = vst.msk [vmem:[%s143 + $0x38] sm:$0xff] %vm186, %v226
      %p236 = scmp.lt.s32.totalorder %s13, 3
      %s237 = scalar_select %p236, %s13, 3
      %s238 = smul.addr %s237, 8
      %s239 = smul.addr %s238, 8
      %s240 = scalar_lea.vmem %s2, %s239
      // Predicated region
      $region29: #{tasnet_forward.3} parent=27 // pred_check
        %p241 = pneg %p78
      $region30: #{tasnet_forward.3} parent=27 // pred_check_branch
        %243 = sbr.rel (%p241) target = $region32
      $region31: #{tasnet_forward.3} parent=27 // pred_region
        _
      $region32: #{tasnet_forward.3} parent=27 // pred_fallthru
        _
    $region28: #{tasnet_forward.3} parent=5 // pred_fallthru
      _
    %p244 = scmp.le.s32.totalorder 2, %s8
    // Predicated region
    $region33: #{tasnet_forward.3} parent=5 // pred_check
      %p245 = pneg %p244
    $region34: #{tasnet_forward.3} parent=5 // pred_check_branch
      %247 = sbr.rel (%p245) target = $region36
    $region35: #{tasnet_forward.3} parent=5 // pred_region
      %s248 = ssub.s32 %s8, 2
      // Predicated region
      $region37: #{tasnet_forward.3} parent=35 // pred_check
        %p249 = pneg %p84
      $region38: #{tasnet_forward.3} parent=35 // pred_check_branch
        %251 = sbr.rel (%p249) target = $region40
      $region39: #{tasnet_forward.3} parent=35 // pred_region
        %p252 = scmp.lt.s32.totalorder %s14, 3
        %s253 = scalar_select %p252, %s14, 3
        %s254 = smul.addr %s253, 8
        %s255 = smul.addr %s254, 8
        %s256 = scalar_lea.vmem %s2, %s255
      $region40: #{tasnet_forward.3} parent=35 // pred_fallthru
        _
    $region36: #{tasnet_forward.3} parent=5 // pred_fallthru
      _
  $region6: #{tasnet_forward.3} parent=0 // loop_footer
    %s12 = sadd.s32 1, %s8
  $region7: #{tasnet_forward.3} parent=0 // loop_footer_branch
    %7 = sbr.rel target = $region3
  $region8: #{tasnet_forward.3} parent=0 // loop_exit
    _

// kernel: tasnet_forward.5
$region0: #{tasnet_forward.5}
  #allocation0 [shape = 'u32[]', space=smem, size = 0x4, offset = 0x4, fixed_abs, tag = 'smem constant byte address 0x4 - core index']
  #allocation1 [shape = 'u32[72,128]{1,0:T(1,128)}', space=vmem, size = 0x9000, scoped, tag = 'internal scratch']
  #allocation2 [shape = 'f32[1]{0:T(128)S(6)}', space=smem, size = 0x200, scoped, tag = 'scoped memory for tasnet_forward.5']
  %s0 = inlined_call_operand.vmem [shape: f32[2,32,32], index: 0, kind: input, shape index: {}]
  %s1 = inlined_call_operand.vmem [shape: f32[2,64,32], index: 1, kind: input, shape index: {}]
  %s2 = inlined_call_operand.vmem [shape: bf16[128,32], index: 2, kind: input, shape index: {}]
  %s3 = inlined_call_operand.vmem [shape: f32[128,1], index: 3, kind: input, shape index: {}]
  %s4 = inlined_call_operand.<no memory space> [shape: f32[1], index: 4, kind: input, shape index: {}]
  %s5 = inlined_call_operand.vmem [shape: bf16[32,64], index: 5, kind: input, shape index: {}]
  %s6 = inlined_call_operand.vmem [shape: f32[2,2,16,33], index: 6, kind: output, shape index: {}]
  %s7 = sld [smem:[#allocation0]]
  $region57: #{tasnet_forward.5} parent=0
    _
  %s9 = ssub.s32 1, %s7
  %s10 = scalar_select 0, %s9, %s7
  %11 = sst [smem:[#allocation2]] %s4
  loop: start=0, step=1, limit=4
  $region2: #{tasnet_forward.5} parent=0 // loop_pre_header
    _
  $region3: #{tasnet_forward.5} parent=0 // loop_header
    %s13 = sphi 0, %s17
    %p14 = scmp.ge.s32.totalorder %s13, 4
    %s23 = sphi 0, %s25
    %s26 = sphi 0, %s23
    %s27 = sphi 0, %s26
    %s43 = sphi 0, %s27
    %s49 = sphi 0, %s51
    %s52 = sphi 0, %s49
    %s53 = sphi 0, %s52
    %s69 = sphi 0, %s53
    %s73 = sphi 0, %s73
    %s75 = sphi 0, %s73
    %s76 = sphi 0, %s75
    %s90 = sphi 0, %s76
    %s94 = sphi 0, %s94
    %s96 = sphi 0, %s94
    %s97 = sphi 0, %s96
    %s111 = sphi 0, %s97
    %s115 = sphi 0, %s115
    %s117 = sphi 0, %s115
    %s118 = sphi 0, %s117
    %s132 = sphi 0, %s118
    %s136 = sphi 0, %s136
    %s138 = sphi 0, %s136
    %s139 = sphi 0, %s138
    %s153 = sphi 0, %s139
    %s159 = sphi 0, %s161
    %s162 = sphi 0, %s159
    %s163 = sphi 0, %s162
    %s179 = sphi 0, %s163
  $region4: #{tasnet_forward.5} parent=0 // loop_header_branch
    %16 = sbr.rel (%p14) target = $region8
  $region5: #{tasnet_forward.5} parent=0 // loop_body
    %s18 = ssub.s32 %s13, 1
    %s19 = ssub.s32 %s13, 2
    %s20 = sadd.s32 %s13, 1
    %s21 = ssub.s32 %s13, %s20
    %p22 = scmp.eq.s32.totalorder %s21, 0
    %s24 = sadd.s32 %s23, 1
    %s25 = scalar_select %p22, %s23, %s24
    %p28 = pneg %p22
    %p29 = scmp.eq.s32.totalorder %s13, 1
    %p30 = por %p28, %p29
    %p31 = scmp.ne.s32.totalorder %s23, %s26
    %p32 = scmp.eq.s32.totalorder %s13, 0
    %p33 = por %p31, %p32
    %p34 = scmp.ne.s32.totalorder %s23, %s26
    %p35 = scmp.eq.s32.totalorder %s18, 1
    %p36 = por %p34, %p35
    %p37 = scmp.ne.s32.totalorder %s26, %s27
    %p38 = scmp.eq.s32.totalorder %s18, 0
    %p39 = por %p37, %p38
    %p40 = scmp.ne.s32.totalorder %s26, %s27
    %p41 = scmp.eq.s32.totalorder %s19, 1
    %p42 = por %p40, %p41
    %p44 = scmp.ne.s32.totalorder %s27, %s43
    %p45 = scmp.eq.s32.totalorder %s19, 0
    %p46 = por %p44, %p45
    %s47 = ssub.s32 %s13, %s20
    %p48 = scmp.eq.s32.totalorder %s47, 0
    %s50 = sadd.s32 %s49, 1
    %s51 = scalar_select %p48, %s49, %s50
    %p54 = pneg %p48
    %p55 = scmp.eq.s32.totalorder %s13, 1
    %p56 = por %p54, %p55
    %p57 = scmp.ne.s32.totalorder %s49, %s52
    %p58 = scmp.eq.s32.totalorder %s13, 0
    %p59 = por %p57, %p58
    %p60 = scmp.ne.s32.totalorder %s49, %s52
    %p61 = scmp.eq.s32.totalorder %s18, 1
    %p62 = por %p60, %p61
    %p63 = scmp.ne.s32.totalorder %s52, %s53
    %p64 = scmp.eq.s32.totalorder %s18, 0
    %p65 = por %p63, %p64
    %p66 = scmp.ne.s32.totalorder %s52, %s53
    %p67 = scmp.eq.s32.totalorder %s19, 1
    %p68 = por %p66, %p67
    %p70 = scmp.ne.s32.totalorder %s53, %s69
    %p71 = scmp.eq.s32.totalorder %s19, 0
    %p72 = por %p70, %p71
    %s74 = sadd.s32 %s73, 1
    %p77 = scmp.eq.s32.totalorder %s13, 1
    %p78 = scmp.ne.s32.totalorder %s73, %s75
    %p79 = scmp.eq.s32.totalorder %s13, 0
    %p80 = por %p78, %p79
    %p81 = scmp.ne.s32.totalorder %s73, %s75
    %p82 = scmp.eq.s32.totalorder %s18, 1
    %p83 = por %p81, %p82
    %p84 = scmp.ne.s32.totalorder %s75, %s76
    %p85 = scmp.eq.s32.totalorder %s18, 0
    %p86 = por %p84, %p85
    %p87 = scmp.ne.s32.totalorder %s75, %s76
    %p88 = scmp.eq.s32.totalorder %s19, 1
    %p89 = por %p87, %p88
    %p91 = scmp.ne.s32.totalorder %s76, %s90
    %p92 = scmp.eq.s32.totalorder %s19, 0
    %p93 = por %p91, %p92
    %s95 = sadd.s32 %s94, 1
    %p98 = scmp.eq.s32.totalorder %s13, 1
    %p99 = scmp.ne.s32.totalorder %s94, %s96
    %p100 = scmp.eq.s32.totalorder %s13, 0
    %p101 = por %p99, %p100
    %p102 = scmp.ne.s32.totalorder %s94, %s96
    %p103 = scmp.eq.s32.totalorder %s18, 1
    %p104 = por %p102, %p103
    %p105 = scmp.ne.s32.totalorder %s96, %s97
    %p106 = scmp.eq.s32.totalorder %s18, 0
    %p107 = por %p105, %p106
    %p108 = scmp.ne.s32.totalorder %s96, %s97
    %p109 = scmp.eq.s32.totalorder %s19, 1
    %p110 = por %p108, %p109
    %p112 = scmp.ne.s32.totalorder %s97, %s111
    %p113 = scmp.eq.s32.totalorder %s19, 0
    %p114 = por %p112, %p113
    %s116 = sadd.s32 %s115, 1
    %p119 = scmp.eq.s32.totalorder %s13, 1
    %p120 = scmp.ne.s32.totalorder %s115, %s117
    %p121 = scmp.eq.s32.totalorder %s13, 0
    %p122 = por %p120, %p121
    %p123 = scmp.ne.s32.totalorder %s115, %s117
    %p124 = scmp.eq.s32.totalorder %s18, 1
    %p125 = por %p123, %p124
    %p126 = scmp.ne.s32.totalorder %s117, %s118
    %p127 = scmp.eq.s32.totalorder %s18, 0
    %p128 = por %p126, %p127
    %p129 = scmp.ne.s32.totalorder %s117, %s118
    %p130 = scmp.eq.s32.totalorder %s19, 1
    %p131 = por %p129, %p130
    %p133 = scmp.ne.s32.totalorder %s118, %s132
    %p134 = scmp.eq.s32.totalorder %s19, 0
    %p135 = por %p133, %p134
    %s137 = sadd.s32 %s136, 1
    %p140 = scmp.eq.s32.totalorder %s13, 1
    %p141 = scmp.ne.s32.totalorder %s136, %s138
    %p142 = scmp.eq.s32.totalorder %s13, 0
    %p143 = por %p141, %p142
    %p144 = scmp.ne.s32.totalorder %s136, %s138
    %p145 = scmp.eq.s32.totalorder %s18, 1
    %p146 = por %p144, %p145
    %p147 = scmp.ne.s32.totalorder %s138, %s139
    %p148 = scmp.eq.s32.totalorder %s18, 0
    %p149 = por %p147, %p148
    %p150 = scmp.ne.s32.totalorder %s138, %s139
    %p151 = scmp.eq.s32.totalorder %s19, 1
    %p152 = por %p150, %p151
    %p154 = scmp.ne.s32.totalorder %s139, %s153
    %p155 = scmp.eq.s32.totalorder %s19, 0
    %p156 = por %p154, %p155
    %s157 = ssub.s32 %s13, %s20
    %p158 = scmp.eq.s32.totalorder %s157, 0
    %s160 = sadd.s32 %s159, 1
    %s161 = scalar_select %p158, %s159, %s160
    %p164 = pneg %p158
    %p165 = scmp.eq.s32.totalorder %s13, 1
    %p166 = por %p164, %p165
    %p167 = scmp.ne.s32.totalorder %s159, %s162
    %p168 = scmp.eq.s32.totalorder %s13, 0
    %p169 = por %p167, %p168
    %p170 = scmp.ne.s32.totalorder %s159, %s162
    %p171 = scmp.eq.s32.totalorder %s18, 1
    %p172 = por %p170, %p171
    %p173 = scmp.ne.s32.totalorder %s162, %s163
    %p174 = scmp.eq.s32.totalorder %s18, 0
    %p175 = por %p173, %p174
    %p176 = scmp.ne.s32.totalorder %s162, %s163
    %p177 = scmp.eq.s32.totalorder %s19, 1
    %p178 = por %p176, %p177
    %p180 = scmp.ne.s32.totalorder %s163, %s179
    %p181 = scmp.eq.s32.totalorder %s19, 0
    %p182 = por %p180, %p181
    %p183 = scmp.le.s32.totalorder 1, %s13
    %p184 = scmp.lt.s32.totalorder %s13, 3
    %p185 = pnand %p183, %p184
    %p186 = pneg %p185
    // Predicated region
    $region9: #{tasnet_forward.5} parent=5 // pred_check
      _
    $region10: #{tasnet_forward.5} parent=5 // pred_check_branch
      %188 = sbr.rel (%p185) target = $region12
    $region11: #{tasnet_forward.5} parent=5 // pred_region
      %s189 = ssub.s32 %s13, 1
      // Predicated region
      $region13: #{tasnet_forward.5} parent=11 // pred_check
        %p190 = pneg %p86
      $region14: #{tasnet_forward.5} parent=11 // pred_check_branch
        %192 = sbr.rel (%p190) target = $region16
      $region15: #{tasnet_forward.5} parent=11 // pred_region
        _
      $region16: #{tasnet_forward.5} parent=11 // pred_fallthru
        _
      // Predicated region
      $region17: #{tasnet_forward.5} parent=11 // pred_check
        %p193 = pneg %p107
      $region18: #{tasnet_forward.5} parent=11 // pred_check_branch
        %195 = sbr.rel (%p193) target = $region20
      $region19: #{tasnet_forward.5} parent=11 // pred_region
        _
      $region20: #{tasnet_forward.5} parent=11 // pred_fallthru
        _
      // Predicated region
      $region21: #{tasnet_forward.5} parent=11 // pred_check
        %p196 = pneg %p128
      $region22: #{tasnet_forward.5} parent=11 // pred_check_branch
        %198 = sbr.rel (%p196) target = $region24
      $region23: #{tasnet_forward.5} parent=11 // pred_region
        _
      $region24: #{tasnet_forward.5} parent=11 // pred_fallthru
        _
      // Predicated region
      $region25: #{tasnet_forward.5} parent=11 // pred_check
        %p199 = pneg %p149
      $region26: #{tasnet_forward.5} parent=11 // pred_check_branch
        %201 = sbr.rel (%p199) target = $region28
      $region27: #{tasnet_forward.5} parent=11 // pred_region
        _
      $region28: #{tasnet_forward.5} parent=11 // pred_fallthru
        _
    $region12: #{tasnet_forward.5} parent=5 // pred_fallthru
      _
    %p202 = scmp.lt.s32.totalorder %s13, 2
    // Predicated region
    $region29: #{tasnet_forward.5} parent=5 // pred_check
      %p203 = pneg %p202
    $region30: #{tasnet_forward.5} parent=5 // pred_check_branch
      %205 = sbr.rel (%p203) target = $region32
    $region31: #{tasnet_forward.5} parent=5 // pred_region
      // Predicated region
      $region33: #{tasnet_forward.5} parent=31 // pred_check
        %p206 = pneg %p33
      $region34: #{tasnet_forward.5} parent=31 // pred_check_branch
        %208 = sbr.rel (%p206) target = $region36
      $region35: #{tasnet_forward.5} parent=31 // pred_region
        %p209 = scmp.lt.s32.totalorder %s13, 1
        %s210 = scalar_select %p209, %s13, 1
        %s211 = smul.addr %s210, 4
        %s212 = smul.addr %s211, 8
        %s213 = scalar_lea.vmem %s0, %s212
      $region36: #{tasnet_forward.5} parent=31 // pred_fallthru
        _
      // Predicated region
      $region37: #{tasnet_forward.5} parent=31 // pred_check
        %p214 = pneg %p59
      $region38: #{tasnet_forward.5} parent=31 // pred_check_branch
        %216 = sbr.rel (%p214) target = $region40
      $region39: #{tasnet_forward.5} parent=31 // pred_region
        %p217 = scmp.lt.s32.totalorder %s13, 1
        %s218 = scalar_select %p217, %s13, 1
        %s219 = smul.addr %s218, 8
        %s220 = smul.addr %s219, 8
        %s221 = scalar_lea.vmem %s1, %s220
      $region40: #{tasnet_forward.5} parent=31 // pred_fallthru
        _
    $region32: #{tasnet_forward.5} parent=5 // pred_fallthru
      _
    %p222 = scmp.le.s32.totalorder 1, %s13
    %p223 = scmp.lt.s32.totalorder %s13, 3
    %p224 = pnand %p222, %p223
    %p225 = pneg %p224
    // Predicated region
    $region41: #{tasnet_forward.5} parent=5 // pred_check
      _
    $region42: #{tasnet_forward.5} parent=5 // pred_check_branch
      %227 = sbr.rel (%p224) target = $region44
    $region43: #{tasnet_forward.5} parent=5 // pred_region
      %s228 = ssub.s32 %s13, 1
      %p229 = scmp.lt.s32.totalorder %s18, 1
      %s230 = scalar_select %p229, %s18, 1
      %s231 = smul.addr %s230, 4
      %s232 = smul.addr %s231, 8
      %s233 = scalar_lea.vmem %s0, %s232
      %p234 = pneg %p39
      %p235 = pneg %p36
      %p236 = scmp.lt.s32.totalorder %s18, 1
      %s237 = scalar_select %p236, %s18, 1
      %s238 = smul.addr %s237, 8
      %s239 = smul.addr %s238, 8
      %s240 = scalar_lea.vmem %s1, %s239
      %p241 = pneg %p65
      %p242 = pneg %p62
      %p243 = pneg %p86
      %p244 = pneg %p83
      %p245 = pneg %p107
      %p246 = pneg %p104
      %p247 = pneg %p128
      %p248 = pneg %p125
      %p249 = pneg %p149
      %p250 = pneg %p146
      %p251 = pneg %p175
      %p252 = pneg %p172
      %p253 = scmp.lt.s32.totalorder %s18, 1
      %s254 = scalar_select %p253, %s18, 1
      %s255 = smul.addr %s254, 4
      %s256 = smul.addr %s255, 8
      %s257 = scalar_lea.vmem %s6, %s256
      %p258 = scmp.lt.s32.totalorder %s18, 1
      %s259 = scalar_select %p258, %s18, 1
      %s260 = smul.addr %s259, 4
      %s261 = smul.addr %s260, 8
      %s262 = scalar_lea.vmem %s0, %s261
      %p263 = scmp.lt.s32.totalorder %s18, 1
      %s264 = scalar_select %p263, %s18, 1
      %s265 = smul.addr %s264, 8
      %s266 = smul.addr %s265, 8
      %s267 = scalar_lea.vmem %s1, %s266
      %p268 = scmp.lt.s32.totalorder %s18, 1
      %s269 = scalar_select %p268, %s18, 1
      %s270 = smul.addr %s269, 4
      %s271 = smul.addr %s270, 8
      %s272 = scalar_lea.vmem %s6, %s271
      %v274 = vld [vmem:[%s262] sm:$0xff]
      %v275 = vld [vmem:[%s262 + $0x8] sm:$0xff]
      %v276 = vld [vmem:[%s262 + $0x10] sm:$0xff]
      %v277 = vld [vmem:[%s262 + $0x18] sm:$0xff]
      %s278 = sld [smem:[#allocation2]]
      %vm279 = vcmp.ge.f32.partialorder %v274, 0.0
      %vm280 = vcmp.ge.f32.partialorder %v275, 0.0
      %vm281 = vcmp.ge.f32.partialorder %v276, 0.0
      %vm282 = vcmp.ge.f32.partialorder %v277, 0.0
      %v283 = vstv %s278
      %v284 = vmul.f32 %v283, %v274
      %v285 = vmul.f32 %v283, %v275
      %v286 = vmul.f32 %v283, %v276
      %v287 = vmul.f32 %v283, %v277
      %v288 = vsel %vm279, %v274, %v284
      %v289 = vsel %vm280, %v275, %v285
      %v290 = vsel %vm281, %v276, %v286
      %v291 = vsel %vm282, %v277, %v287
      %v292 = vld [vmem:[%s2] sm:$0xf]
      %v293 = vld [vmem:[%s2 + $0x4] sm:$0xf]
      %v294 = vld [vmem:[%s2 + $0x8] sm:$0xf]
      %v295 = vld [vmem:[%s2 + $0xc] sm:$0xf]
      %v296 = vld [vmem:[%s2 + $0x10] sm:$0xf]
      %v297 = vld [vmem:[%s2 + $0x14] sm:$0xf]
      %v298 = vld [vmem:[%s2 + $0x18] sm:$0xf]
      %v299 = vld [vmem:[%s2 + $0x1c] sm:$0xf]
      %v300 = vld [vmem:[%s2 + $0x20] sm:$0xf]
      %v301 = vld [vmem:[%s2 + $0x24] sm:$0xf]
      %v302 = vld [vmem:[%s2 + $0x28] sm:$0xf]
      %v303 = vld [vmem:[%s2 + $0x2c] sm:$0xf]
      %v304 = vld [vmem:[%s2 + $0x30] sm:$0xf]
      %v305 = vld [vmem:[%s2 + $0x34] sm:$0xf]
      %v306 = vld [vmem:[%s2 + $0x38] sm:$0xf]
      %v307 = vld [vmem:[%s2 + $0x3c] sm:$0xf]
      %v308 = vpack.c.bf16 %v289, %v288
      %v309 = vpack.c.bf16 %v291, %v290
      %v310 = vld [vmem:[%s3] sm:$0xff]
      %v311 = vld [vmem:[%s3 + $0x8] sm:$0xff]
      %v312 = vld [vmem:[%s3 + $0x10] sm:$0xff]
      %v313 = vld [vmem:[%s3 + $0x18] sm:$0xff]
      %v314 = vld [vmem:[%s3 + $0x20] sm:$0xff]
      %v315 = vld [vmem:[%s3 + $0x28] sm:$0xff]
      %v316 = vld [vmem:[%s3 + $0x30] sm:$0xff]
      %v317 = vld [vmem:[%s3 + $0x38] sm:$0xff]
      %v318 = vld [vmem:[%s3 + $0x40] sm:$0xff]
      %v319 = vld [vmem:[%s3 + $0x48] sm:$0xff]
      %v320 = vld [vmem:[%s3 + $0x50] sm:$0xff]
      %v321 = vld [vmem:[%s3 + $0x58] sm:$0xff]
      %v322 = vld [vmem:[%s3 + $0x60] sm:$0xff]
      %v323 = vld [vmem:[%s3 + $0x68] sm:$0xff]
      %v324 = vld [vmem:[%s3 + $0x70] sm:$0xff]
      %v325 = vld [vmem:[%s3 + $0x78] sm:$0xff]
      %327 = vset.pattern.permute.xlu0 0
      %328 = vperm.xlu0 %327, %v310
      %v329 = vpop.permute.xlu0 %328
      %332 = vset.pattern.permute.xlu0 0
      %333 = vperm.xlu0 %332, %v311
      %v334 = vpop.permute.xlu0 %333
      %337 = vset.pattern.permute.xlu0 0
      %338 = vperm.xlu0 %337, %v312
      %v339 = vpop.permute.xlu0 %338
      %342 = vset.pattern.permute.xlu0 0
      %343 = vperm.xlu0 %342, %v313
      %v344 = vpop.permute.xlu0 %343
      %347 = vset.pattern.permute.xlu0 0
      %348 = vperm.xlu0 %347, %v314
      %v349 = vpop.permute.xlu0 %348
      %352 = vset.pattern.permute.xlu0 0
      %353 = vperm.xlu0 %352, %v315
      %v354 = vpop.permute.xlu0 %353
      %357 = vset.pattern.permute.xlu0 0
      %358 = vperm.xlu0 %357, %v316
      %v359 = vpop.permute.xlu0 %358
      %362 = vset.pattern.permute.xlu0 0
      %363 = vperm.xlu0 %362, %v317
      %v364 = vpop.permute.xlu0 %363
      %367 = vset.pattern.permute.xlu0 0
      %368 = vperm.xlu0 %367, %v318
      %v369 = vpop.permute.xlu0 %368
      %372 = vset.pattern.permute.xlu0 0
      %373 = vperm.xlu0 %372, %v319
      %v374 = vpop.permute.xlu0 %373
      %377 = vset.pattern.permute.xlu0 0
      %378 = vperm.xlu0 %377, %v320
      %v379 = vpop.permute.xlu0 %378
      %382 = vset.pattern.permute.xlu0 0
      %383 = vperm.xlu0 %382, %v321
      %v384 = vpop.permute.xlu0 %383
      %387 = vset.pattern.permute.xlu0 0
      %388 = vperm.xlu0 %387, %v322
      %v389 = vpop.permute.xlu0 %388
      %392 = vset.pattern.permute.xlu0 0
      %393 = vperm.xlu0 %392, %v323
      %v394 = vpop.permute.xlu0 %393
      %397 = vset.pattern.permute.xlu0 0
      %398 = vperm.xlu0 %397, %v324
      %v399 = vpop.permute.xlu0 %398
      %402 = vset.pattern.permute.xlu0 0
      %403 = vperm.xlu0 %402, %v325
      %v404 = vpop.permute.xlu0 %403
      %v422 = vunpack.c.l.b16 %v292
      %v423 = vunpack.c.l.b16 %v293
      %v424 = vunpack.c.l.b16 %v294
      %v425 = vunpack.c.l.b16 %v295
      %v426 = vunpack.c.l.b16 %v296
      %v427 = vunpack.c.l.b16 %v297
      %v428 = vunpack.c.l.b16 %v298
      %v429 = vunpack.c.l.b16 %v299
      %v430 = vunpack.c.l.b16 %v300
      %v431 = vunpack.c.l.b16 %v301
      %v432 = vunpack.c.l.b16 %v302
      %v433 = vunpack.c.l.b16 %v303
      %v434 = vunpack.c.l.b16 %v304
      %v435 = vunpack.c.l.b16 %v305
      %v436 = vunpack.c.l.b16 %v306
      %v437 = vunpack.c.l.b16 %v307
      %v438 = vpack.c.b16 %v423, %v422
      %v439 = vpack.c.b16 %v425, %v424
      %v440 = vpack.c.b16 %v427, %v426
      %v441 = vpack.c.b16 %v429, %v428
      %v442 = vpack.c.b16 %v431, %v430
      %v443 = vpack.c.b16 %v433, %v432
      %v444 = vpack.c.b16 %v435, %v434
      %v445 = vpack.c.b16 %v437, %v436
      %vm446 = vcmask 261120
      %v448 = vsel %vm446, %v438, 0
      %v451 = vsel %vm446, %v439, 0
      %v454 = vsel %vm446, %v440, 0
      %v457 = vsel %vm446, %v441, 0
      %v460 = vsel %vm446, %v442, 0
      %v463 = vsel %vm446, %v443, 0
      %v466 = vsel %vm446, %v444, 0
      %v469 = vsel %vm446, %v445, 0
      %471 = vmatpush.bf16.msra.mxu0 0
      %472 = vmatpush.bf16.msra.mxu0 0
      %473 = vmatpush.bf16.msra.mxu0 0
      %474 = vmatpush.bf16.msra.mxu0 0
      %475 = vmatpush.bf16.msra.mxu0 0
      %476 = vmatpush.bf16.msra.mxu0 0
      %477 = vmatpush.bf16.msra.mxu0 %v309
      %478 = vmatpush.bf16.msra.mxu0 %v308
      %479 = vmatmul.bf16.gmra.mxu0 %v448
      %v480 = vpop.f32.mrf.mxu0
      %v481 = vadd.f32 %v329, %v480
      %v482 = vpop.f32.mrf.mxu0
      %v483 = vadd.f32 %v334, %v482
      %484 = vmatmul.bf16.gmra.mxu0 %v451
      %v485 = vpop.f32.mrf.mxu0
      %v486 = vadd.f32 %v339, %v485
      %v487 = vpop.f32.mrf.mxu0
      %v488 = vadd.f32 %v344, %v487
      %489 = vmatmul.bf16.gmra.mxu0 %v454
      %v490 = vpop.f32.mrf.mxu0
      %v491 = vadd.f32 %v349, %v490
      %v492 = vpop.f32.mrf.mxu0
      %v493 = vadd.f32 %v354, %v492
      %494 = vmatmul.bf16.gmra.mxu0 %v457
      %v495 = vpop.f32.mrf.mxu0
      %v496 = vadd.f32 %v359, %v495
      %v497 = vpop.f32.mrf.mxu0
      %v498 = vadd.f32 %v364, %v497
      %499 = vmatmul.bf16.gmra.mxu0 %v460
      %v500 = vpop.f32.mrf.mxu0
      %v501 = vadd.f32 %v369, %v500
      %v502 = vpop.f32.mrf.mxu0
      %v503 = vadd.f32 %v374, %v502
      %504 = vmatmul.bf16.gmra.mxu0 %v463
      %v505 = vpop.f32.mrf.mxu0
      %v506 = vadd.f32 %v379, %v505
      %v507 = vpop.f32.mrf.mxu0
      %v508 = vadd.f32 %v384, %v507
      %509 = vmatmul.bf16.gmra.mxu0 %v466
      %v510 = vpop.f32.mrf.mxu0
      %v511 = vadd.f32 %v389, %v510
      %v512 = vpop.f32.mrf.mxu0
      %v513 = vadd.f32 %v394, %v512
      %514 = vmatmul.bf16.gmra.mxu0 %v469
      %v515 = vpop.f32.mrf.mxu0
      %v516 = vadd.f32 %v399, %v515
      %v517 = vpop.f32.mrf.mxu0
      %v518 = vadd.f32 %v404, %v517
      %519 = vdwg.mxu0
      %v520 = vxor.u32 %v481, 2147483648
      %v521 = vxor.u32 %v483, 2147483648
      %v522 = vxor.u32 %v486, 2147483648
      %v523 = vxor.u32 %v488, 2147483648
      %v524 = vxor.u32 %v491, 2147483648
      %v525 = vxor.u32 %v493, 2147483648
      %v526 = vxor.u32 %v496, 2147483648
      %v527 = vxor.u32 %v498, 2147483648
      %v528 = vxor.u32 %v501, 2147483648
      %v529 = vxor.u32 %v503, 2147483648
      %v530 = vxor.u32 %v506, 2147483648
      %v531 = vxor.u32 %v508, 2147483648
      %v532 = vxor.u32 %v511, 2147483648
      %v533 = vxor.u32 %v513, 2147483648
      %v534 = vxor.u32 %v516, 2147483648
      %v535 = vxor.u32 %v518, 2147483648
      %v536 = vmul.f32 %v520, 1.442695
      %v537 = vpow.pop %v536
      %v538 = vmul.f32 %v521, 1.442695
      %v539 = vpow.pop %v538
      %v540 = vmul.f32 %v522, 1.442695
      %v541 = vpow.pop %v540
      %v542 = vmul.f32 %v523, 1.442695
      %v543 = vpow.pop %v542
      %v544 = vmul.f32 %v524, 1.442695
      %v545 = vpow.pop %v544
      %v546 = vmul.f32 %v525, 1.442695
      %v547 = vpow.pop %v546
      %v548 = vmul.f32 %v526, 1.442695
      %v549 = vpow.pop %v548
      %v550 = vmul.f32 %v527, 1.442695
      %v551 = vpow.pop %v550
      %v552 = vmul.f32 %v528, 1.442695
      %v553 = vpow.pop %v552
      %v554 = vmul.f32 %v529, 1.442695
      %v555 = vpow.pop %v554
      %v556 = vmul.f32 %v530, 1.442695
      %v557 = vpow.pop %v556
      %v558 = vmul.f32 %v531, 1.442695
      %v559 = vpow.pop %v558
      %v560 = vmul.f32 %v532, 1.442695
      %v561 = vpow.pop %v560
      %v562 = vmul.f32 %v533, 1.442695
      %v563 = vpow.pop %v562
      %v564 = vmul.f32 %v534, 1.442695
      %v565 = vpow.pop %v564
      %v566 = vmul.f32 %v535, 1.442695
      %v567 = vpow.pop %v566
      %v568 = vadd.f32 %v537, 1.0
      %v569 = vadd.f32 %v539, 1.0
      %v570 = vadd.f32 %v541, 1.0
      %v571 = vadd.f32 %v543, 1.0
      %v572 = vadd.f32 %v545, 1.0
      %v573 = vadd.f32 %v547, 1.0
      %v574 = vadd.f32 %v549, 1.0
      %v575 = vadd.f32 %v551, 1.0
      %v576 = vadd.f32 %v553, 1.0
      %v577 = vadd.f32 %v555, 1.0
      %v578 = vadd.f32 %v557, 1.0
      %v579 = vadd.f32 %v559, 1.0
      %v580 = vadd.f32 %v561, 1.0
      %v581 = vadd.f32 %v563, 1.0
      %v582 = vadd.f32 %v565, 1.0
      %v583 = vadd.f32 %v567, 1.0
      %v584 = vrcp.pop %v568
      %v585 = vmul.f32 %v568, %v584
      %v586 = vsub.f32 1.0, %v585
      %v587 = vmul.f32 %v584, %v586
      %v588 = vadd.f32 %v584, %v587
      %vm589 = vweird.f32 %v568
      %vm590 = vweird.f32 %v584
      %vm591 = vmor %vm589, %vm590
      %v592 = vsel %vm591, %v584, %v588
      %v593 = vand.u32 2147483647, %v568
      %vm594 = vcmp.eq.f32.partialorder %v593, 8.507059e+37
      %v595 = vand.u32 %v568, 2147483648
      %v596 = vor.u32 1.1754944e-38, %v595
      %v597 = vsel %vm594, %v596, %v592
      %v598 = vmul.f32 1.0, %v597
      %v599 = vrcp.pop %v569
      %v600 = vmul.f32 %v569, %v599
      %v601 = vsub.f32 1.0, %v600
      %v602 = vmul.f32 %v599, %v601
      %v603 = vadd.f32 %v599, %v602
      %vm604 = vweird.f32 %v569
      %vm605 = vweird.f32 %v599
      %vm606 = vmor %vm604, %vm605
      %v607 = vsel %vm606, %v599, %v603
      %v608 = vand.u32 2147483647, %v569
      %vm609 = vcmp.eq.f32.partialorder %v608, 8.507059e+37
      %v610 = vand.u32 %v569, 2147483648
      %v611 = vor.u32 1.1754944e-38, %v610
      %v612 = vsel %vm609, %v611, %v607
      %v613 = vmul.f32 1.0, %v612
      %v614 = vrcp.pop %v570
      %v615 = vmul.f32 %v570, %v614
      %v616 = vsub.f32 1.0, %v615
      %v617 = vmul.f32 %v614, %v616
      %v618 = vadd.f32 %v614, %v617
      %vm619 = vweird.f32 %v570
      %vm620 = vweird.f32 %v614
      %vm621 = vmor %vm619, %vm620
      %v622 = vsel %vm621, %v614, %v618
      %v623 = vand.u32 2147483647, %v570
      %vm624 = vcmp.eq.f32.partialorder %v623, 8.507059e+37
      %v625 = vand.u32 %v570, 2147483648
      %v626 = vor.u32 1.1754944e-38, %v625
      %v627 = vsel %vm624, %v626, %v622
      %v628 = vmul.f32 1.0, %v627
      %v629 = vrcp.pop %v571
      %v630 = vmul.f32 %v571, %v629
      %v631 = vsub.f32 1.0, %v630
      %v632 = vmul.f32 %v629, %v631
      %v633 = vadd.f32 %v629, %v632
      %vm634 = vweird.f32 %v571
      %vm635 = vweird.f32 %v629
      %vm636 = vmor %vm634, %vm635
      %v637 = vsel %vm636, %v629, %v633
      %v638 = vand.u32 2147483647, %v571
      %vm639 = vcmp.eq.f32.partialorder %v638, 8.507059e+37
      %v640 = vand.u32 %v571, 2147483648
      %v641 = vor.u32 1.1754944e-38, %v640
      %v642 = vsel %vm639, %v641, %v637
      %v643 = vmul.f32 1.0, %v642
      %v644 = vrcp.pop %v572
      %v645 = vmul.f32 %v572, %v644
      %v646 = vsub.f32 1.0, %v645
      %v647 = vmul.f32 %v644, %v646
      %v648 = vadd.f32 %v644, %v647
      %vm649 = vweird.f32 %v572
      %vm650 = vweird.f32 %v644
      %vm651 = vmor %vm649, %vm650
      %v652 = vsel %vm651, %v644, %v648
      %v653 = vand.u32 2147483647, %v572
      %vm654 = vcmp.eq.f32.partialorder %v653, 8.507059e+37
      %v655 = vand.u32 %v572, 2147483648
      %v656 = vor.u32 1.1754944e-38, %v655
      %v657 = vsel %vm654, %v656, %v652
      %v658 = vmul.f32 1.0, %v657
      %v659 = vrcp.pop %v573
      %v660 = vmul.f32 %v573, %v659
      %v661 = vsub.f32 1.0, %v660
      %v662 = vmul.f32 %v659, %v661
      %v663 = vadd.f32 %v659, %v662
      %vm664 = vweird.f32 %v573
      %vm665 = vweird.f32 %v659
      %vm666 = vmor %vm664, %vm665
      %v667 = vsel %vm666, %v659, %v663
      %v668 = vand.u32 2147483647, %v573
      %vm669 = vcmp.eq.f32.partialorder %v668, 8.507059e+37
      %v670 = vand.u32 %v573, 2147483648
      %v671 = vor.u32 1.1754944e-38, %v670
      %v672 = vsel %vm669, %v671, %v667
      %v673 = vmul.f32 1.0, %v672
      %v674 = vrcp.pop %v574
      %v675 = vmul.f32 %v574, %v674
      %v676 = vsub.f32 1.0, %v675
      %v677 = vmul.f32 %v674, %v676
      %v678 = vadd.f32 %v674, %v677
      %vm679 = vweird.f32 %v574
      %vm680 = vweird.f32 %v674
      %vm681 = vmor %vm679, %vm680
      %v682 = vsel %vm681, %v674, %v678
      %v683 = vand.u32 2147483647, %v574
      %vm684 = vcmp.eq.f32.partialorder %v683, 8.507059e+37
      %v685 = vand.u32 %v574, 2147483648
      %v686 = vor.u32 1.1754944e-38, %v685
      %v687 = vsel %vm684, %v686, %v682
      %v688 = vmul.f32 1.0, %v687
      %v689 = vrcp.pop %v575
      %v690 = vmul.f32 %v575, %v689
      %v691 = vsub.f32 1.0, %v690
      %v692 = vmul.f32 %v689, %v691
      %v693 = vadd.f32 %v689, %v692
      %vm694 = vweird.f32 %v575
      %vm695 = vweird.f32 %v689
      %vm696 = vmor %vm694, %vm695
      %v697 = vsel %vm696, %v689, %v693
      %v698 = vand.u32 2147483647, %v575
      %vm699 = vcmp.eq.f32.partialorder %v698, 8.507059e+37
      %v700 = vand.u32 %v575, 2147483648
      %v701 = vor.u32 1.1754944e-38, %v700
      %v702 = vsel %vm699, %v701, %v697
      %v703 = vmul.f32 1.0, %v702
      %v704 = vrcp.pop %v576
      %v705 = vmul.f32 %v576, %v704
      %v706 = vsub.f32 1.0, %v705
      %v707 = vmul.f32 %v704, %v706
      %v708 = vadd.f32 %v704, %v707
      %vm709 = vweird.f32 %v576
      %vm710 = vweird.f32 %v704
      %vm711 = vmor %vm709, %vm710
      %v712 = vsel %vm711, %v704, %v708
      %v713 = vand.u32 2147483647, %v576
      %vm714 = vcmp.eq.f32.partialorder %v713, 8.507059e+37
      %v715 = vand.u32 %v576, 2147483648
      %v716 = vor.u32 1.1754944e-38, %v715
      %v717 = vsel %vm714, %v716, %v712
      %v718 = vmul.f32 1.0, %v717
      %v719 = vrcp.pop %v577
      %v720 = vmul.f32 %v577, %v719
      %v721 = vsub.f32 1.0, %v720
      %v722 = vmul.f32 %v719, %v721
      %v723 = vadd.f32 %v719, %v722
      %vm724 = vweird.f32 %v577
      %vm725 = vweird.f32 %v719
      %vm726 = vmor %vm724, %vm725
      %v727 = vsel %vm726, %v719, %v723
      %v728 = vand.u32 2147483647, %v577
      %vm729 = vcmp.eq.f32.partialorder %v728, 8.507059e+37
      %v730 = vand.u32 %v577, 2147483648
      %v731 = vor.u32 1.1754944e-38, %v730
      %v732 = vsel %vm729, %v731, %v727
      %v733 = vmul.f32 1.0, %v732
      %v734 = vrcp.pop %v578
      %v735 = vmul.f32 %v578, %v734
      %v736 = vsub.f32 1.0, %v735
      %v737 = vmul.f32 %v734, %v736
      %v738 = vadd.f32 %v734, %v737
      %vm739 = vweird.f32 %v578
      %vm740 = vweird.f32 %v734
      %vm741 = vmor %vm739, %vm740
      %v742 = vsel %vm741, %v734, %v738
      %v743 = vand.u32 2147483647, %v578
      %vm744 = vcmp.eq.f32.partialorder %v743, 8.507059e+37
      %v745 = vand.u32 %v578, 2147483648
      %v746 = vor.u32 1.1754944e-38, %v745
      %v747 = vsel %vm744, %v746, %v742
      %v748 = vmul.f32 1.0, %v747
      %v749 = vrcp.pop %v579
      %v750 = vmul.f32 %v579, %v749
      %v751 = vsub.f32 1.0, %v750
      %v752 = vmul.f32 %v749, %v751
      %v753 = vadd.f32 %v749, %v752
      %vm754 = vweird.f32 %v579
      %vm755 = vweird.f32 %v749
      %vm756 = vmor %vm754, %vm755
      %v757 = vsel %vm756, %v749, %v753
      %v758 = vand.u32 2147483647, %v579
      %vm759 = vcmp.eq.f32.partialorder %v758, 8.507059e+37
      %v760 = vand.u32 %v579, 2147483648
      %v761 = vor.u32 1.1754944e-38, %v760
      %v762 = vsel %vm759, %v761, %v757
      %v763 = vmul.f32 1.0, %v762
      %v764 = vrcp.pop %v580
      %v765 = vmul.f32 %v580, %v764
      %v766 = vsub.f32 1.0, %v765
      %v767 = vmul.f32 %v764, %v766
      %v768 = vadd.f32 %v764, %v767
      %vm769 = vweird.f32 %v580
      %vm770 = vweird.f32 %v764
      %vm771 = vmor %vm769, %vm770
      %v772 = vsel %vm771, %v764, %v768
      %v773 = vand.u32 2147483647, %v580
      %vm774 = vcmp.eq.f32.partialorder %v773, 8.507059e+37
      %v775 = vand.u32 %v580, 2147483648
      %v776 = vor.u32 1.1754944e-38, %v775
      %v777 = vsel %vm774, %v776, %v772
      %v778 = vmul.f32 1.0, %v777
      %v779 = vrcp.pop %v581
      %v780 = vmul.f32 %v581, %v779
      %v781 = vsub.f32 1.0, %v780
      %v782 = vmul.f32 %v779, %v781
      %v783 = vadd.f32 %v779, %v782
      %vm784 = vweird.f32 %v581
      %vm785 = vweird.f32 %v779
      %vm786 = vmor %vm784, %vm785
      %v787 = vsel %vm786, %v779, %v783
      %v788 = vand.u32 2147483647, %v581
      %vm789 = vcmp.eq.f32.partialorder %v788, 8.507059e+37
      %v790 = vand.u32 %v581, 2147483648
      %v791 = vor.u32 1.1754944e-38, %v790
      %v792 = vsel %vm789, %v791, %v787
      %v793 = vmul.f32 1.0, %v792
      %v794 = vrcp.pop %v582
      %v795 = vmul.f32 %v582, %v794
      %v796 = vsub.f32 1.0, %v795
      %v797 = vmul.f32 %v794, %v796
      %v798 = vadd.f32 %v794, %v797
      %vm799 = vweird.f32 %v582
      %vm800 = vweird.f32 %v794
      %vm801 = vmor %vm799, %vm800
      %v802 = vsel %vm801, %v794, %v798
      %v803 = vand.u32 2147483647, %v582
      %vm804 = vcmp.eq.f32.partialorder %v803, 8.507059e+37
      %v805 = vand.u32 %v582, 2147483648
      %v806 = vor.u32 1.1754944e-38, %v805
      %v807 = vsel %vm804, %v806, %v802
      %v808 = vmul.f32 1.0, %v807
      %v809 = vrcp.pop %v583
      %v810 = vmul.f32 %v583, %v809
      %v811 = vsub.f32 1.0, %v810
      %v812 = vmul.f32 %v809, %v811
      %v813 = vadd.f32 %v809, %v812
      %vm814 = vweird.f32 %v583
      %vm815 = vweird.f32 %v809
      %vm816 = vmor %vm814, %vm815
      %v817 = vsel %vm816, %v809, %v813
      %v818 = vand.u32 2147483647, %v583
      %vm819 = vcmp.eq.f32.partialorder %v818, 8.507059e+37
      %v820 = vand.u32 %v583, 2147483648
      %v821 = vor.u32 1.1754944e-38, %v820
      %v822 = vsel %vm819, %v821, %v817
      %v823 = vmul.f32 1.0, %v822
      %v824 = vld [vmem:[%s267] sm:$0xff]
      %v825 = vld [vmem:[%s267 + $0x8] sm:$0xff]
      %v826 = vld [vmem:[%s267 + $0x10] sm:$0xff]
      %v827 = vld [vmem:[%s267 + $0x18] sm:$0xff]
      %v828 = vld [vmem:[%s267 + $0x20] sm:$0xff]
      %v829 = vld [vmem:[%s267 + $0x28] sm:$0xff]
      %v830 = vld [vmem:[%s267 + $0x30] sm:$0xff]
      %v831 = vld [vmem:[%s267 + $0x38] sm:$0xff]
      %v832 = vmul.f32 %v598, %v824
      %v833 = vmul.f32 %v613, %v825
      %v834 = vmul.f32 %v628, %v826
      %v835 = vmul.f32 %v643, %v827
      %v836 = vmul.f32 %v658, %v828
      %v837 = vmul.f32 %v673, %v829
      %v838 = vmul.f32 %v688, %v830
      %v839 = vmul.f32 %v703, %v831
      %v840 = vld [vmem:[%s5] sm:$0xf]
      %v841 = vld [vmem:[%s5 + $0x4] sm:$0xf]
      %v842 = vld [vmem:[%s5 + $0x8] sm:$0xf]
      %v843 = vld [vmem:[%s5 + $0xc] sm:$0xf]
      %v844 = vpack.c.bf16 %v833, %v832
      %v845 = vpack.c.bf16 %v835, %v834
      %v846 = vpack.c.bf16 %v837, %v836
      %v847 = vpack.c.bf16 %v839, %v838
      %v852 = vunpack.c.l.b16 %v840
      %v853 = vunpack.c.l.b16 %v841
      %v854 = vunpack.c.l.b16 %v842
      %v855 = vunpack.c.l.b16 %v843
      %v856 = vpack.c.b16 %v853, %v852
      %v857 = vpack.c.b16 %v855, %v854
      %vm858 = vcmask 523264
      %v860 = vsel %vm858, %v856, 0
      %v863 = vsel %vm858, %v857, 0
      %865 = vmatpush.bf16.msra.mxu0 0
      %866 = vmatpush.bf16.msra.mxu0 0
      %867 = vmatpush.bf16.msra.mxu0 0
      %868 = vmatpush.bf16.msra.mxu0 0
      %869 = vmatpush.bf16.msra.mxu0 %v847
      %870 = vmatpush.bf16.msra.mxu0 %v846
      %871 = vmatpush.bf16.msra.mxu0 %v845
      %872 = vmatpush.bf16.msra.mxu0 %v844
      %873 = vmatmul.bf16.gmra.mxu0 %v860
      %v874 = vpop.f32.mrf.mxu0
      %v875 = vadd.f32 0.0, %v874
      %v876 = vpop.f32.mrf.mxu0
      %v877 = vadd.f32 0.0, %v876
      %878 = vmatmul.bf16.gmra.mxu0 %v863
      %v879 = vpop.f32.mrf.mxu0
      %v880 = vadd.f32 0.0, %v879
      %v881 = vpop.f32.mrf.mxu0
      %v882 = vadd.f32 0.0, %v881
      %883 = vdwg.mxu0
      %v884 = vsel %vm446, %v875, 0.0
      %v885 = vsel %vm446, %v877, 0.0
      %888 = vrot.lane.b32.xlu0 %v880, 1
      %v889 = vpop.permute.xlu0 %888
      %890 = vrot.lane.b32.xlu0 %v882, 1
      %v891 = vpop.permute.xlu0 %890
      %vm894 = vcmask 7168
      %v895 = vsel %vm894, 0.0, %v889
      %v896 = vsel %vm894, 0.0, %v891
      %v897 = vadd.f32 %v884, %v895
      %v898 = vadd.f32 %v885, %v896
      %vm899 = vcmask 269312
      %900 = vst.msk [vmem:[%s272] sm:$0xff] %vm899, %v897
      %901 = vst.msk [vmem:[%s272 + $0x8] sm:$0xff] %vm899, %v898
      %v902 = vmul.f32 %v718, %v824
      %v903 = vmul.f32 %v733, %v825
      %v904 = vmul.f32 %v748, %v826
      %v905 = vmul.f32 %v763, %v827
      %v906 = vmul.f32 %v778, %v828
      %v907 = vmul.f32 %v793, %v829
      %v908 = vmul.f32 %v808, %v830
      %v909 = vmul.f32 %v823, %v831
      %v910 = vld [vmem:[%s5] sm:$0xf]
      %v911 = vld [vmem:[%s5 + $0x4] sm:$0xf]
      %v912 = vld [vmem:[%s5 + $0x8] sm:$0xf]
      %v913 = vld [vmem:[%s5 + $0xc] sm:$0xf]
      %v914 = vpack.c.bf16 %v903, %v902
      %v915 = vpack.c.bf16 %v905, %v904
      %v916 = vpack.c.bf16 %v907, %v906
      %v917 = vpack.c.bf16 %v909, %v908
      %v922 = vunpack.c.l.b16 %v910
      %v923 = vunpack.c.l.b16 %v911
      %v924 = vunpack.c.l.b16 %v912
      %v925 = vunpack.c.l.b16 %v913
      %v926 = vpack.c.b16 %v923, %v922
      %v927 = vpack.c.b16 %v925, %v924
      %v929 = vsel %vm858, %v926, 0
      %v932 = vsel %vm858, %v927, 0
      %934 = vmatpush.bf16.msra.mxu0 0
      %935 = vmatpush.bf16.msra.mxu0 0
      %936 = vmatpush.bf16.msra.mxu0 0
      %937 = vmatpush.bf16.msra.mxu0 0
      %938 = vmatpush.bf16.msra.mxu0 %v917
      %939 = vmatpush.bf16.msra.mxu0 %v916
      %940 = vmatpush.bf16.msra.mxu0 %v915
      %941 = vmatpush.bf16.msra.mxu0 %v914
      %942 = vmatmul.bf16.gmra.mxu0 %v929
      %v943 = vpop.f32.mrf.mxu0
      %v944 = vadd.f32 0.0, %v943
      %v945 = vpop.f32.mrf.mxu0
      %v946 = vadd.f32 0.0, %v945
      %947 = vmatmul.bf16.gmra.mxu0 %v932
      %v948 = vpop.f32.mrf.mxu0
      %v949 = vadd.f32 0.0, %v948
      %v950 = vpop.f32.mrf.mxu0
      %v951 = vadd.f32 0.0, %v950
      %952 = vdwg.mxu0
      %v953 = vsel %vm446, %v944, 0.0
      %v954 = vsel %vm446, %v946, 0.0
      %957 = vrot.lane.b32.xlu0 %v949, 1
      %v958 = vpop.permute.xlu0 %957
      %959 = vrot.lane.b32.xlu0 %v951, 1
      %v960 = vpop.permute.xlu0 %959
      %v963 = vsel %vm894, 0.0, %v958
      %v964 = vsel %vm894, 0.0, %v960
      %v965 = vadd.f32 %v953, %v963
      %v966 = vadd.f32 %v954, %v964
      %s967 = scalar_lea.vmem %s272, 16
      %968 = vst.msk [vmem:[%s967] sm:$0xff] %vm899, %v965
      %969 = vst.msk [vmem:[%s967 + $0x8] sm:$0xff] %vm899, %v966
      %p970 = scmp.lt.s32.totalorder %s18, 1
      %s971 = scalar_select %p970, %s18, 1
      %s972 = smul.addr %s971, 4
      %s973 = smul.addr %s972, 8
      %s974 = scalar_lea.vmem %s6, %s973
      // Predicated region
      $region45: #{tasnet_forward.5} parent=43 // pred_check
        %p975 = pneg %p172
      $region46: #{tasnet_forward.5} parent=43 // pred_check_branch
        %977 = sbr.rel (%p975) target = $region48
      $region47: #{tasnet_forward.5} parent=43 // pred_region
        _
      $region48: #{tasnet_forward.5} parent=43 // pred_fallthru
        _
    $region44: #{tasnet_forward.5} parent=5 // pred_fallthru
      _
    %p978 = scmp.le.s32.totalorder 2, %s13
    // Predicated region
    $region49: #{tasnet_forward.5} parent=5 // pred_check
      %p979 = pneg %p978
    $region50: #{tasnet_forward.5} parent=5 // pred_check_branch
      %981 = sbr.rel (%p979) target = $region52
    $region51: #{tasnet_forward.5} parent=5 // pred_region
      %s982 = ssub.s32 %s13, 2
      // Predicated region
      $region53: #{tasnet_forward.5} parent=51 // pred_check
        %p983 = pneg %p178
      $region54: #{tasnet_forward.5} parent=51 // pred_check_branch
        %985 = sbr.rel (%p983) target = $region56
      $region55: #{tasnet_forward.5} parent=51 // pred_region
        %p986 = scmp.lt.s32.totalorder %s19, 1
        %s987 = scalar_select %p986, %s19, 1
        %s988 = smul.addr %s987, 4
        %s989 = smul.addr %s988, 8
        %s990 = scalar_lea.vmem %s6, %s989
      $region56: #{tasnet_forward.5} parent=51 // pred_fallthru
        _
    $region52: #{tasnet_forward.5} parent=5 // pred_fallthru
      _
  $region6: #{tasnet_forward.5} parent=0 // loop_footer
    %s17 = sadd.s32 1, %s13
  $region7: #{tasnet_forward.5} parent=0 // loop_footer_branch
    %12 = sbr.rel target = $region3
  $region8: #{tasnet_forward.5} parent=0 // loop_exit
    _

// kernel: tasnet_forward.4
$region0: #{tasnet_forward.4}
  #allocation0 [shape = 'u32[]', space=smem, size = 0x4, offset = 0x4, fixed_abs, tag = 'smem constant byte address 0x4 - core index']
  #allocation1 [shape = 'u32[72,128]{1,0:T(1,128)}', space=vmem, size = 0x9000, scoped, tag = 'internal scratch']
  #allocation2 [shape = 'f32[128,160]{1,0:T(8,128)}', space=vmem, size = 0x20000, scoped, tag = 'scratch operand']
  %s0 = inlined_call_operand.vmem [shape: f32[2,128,32], index: 0, kind: input, shape index: {}]
  %s1 = inlined_call_operand.vmem [shape: f32[2,24,32], index: 1, kind: input, shape index: {}]
  %s2 = inlined_call_operand.vmem [shape: f32[128,1], index: 2, kind: input, shape index: {}]
  %s3 = inlined_call_operand.vmem [shape: f32[128,1], index: 3, kind: input, shape index: {}]
  %s4 = inlined_call_operand.vmem [shape: bf16[32,128], index: 4, kind: input, shape index: {}]
  %s5 = inlined_call_operand.vmem [shape: f32[32,1], index: 5, kind: input, shape index: {}]
  %s6 = inlined_call_operand.vmem [shape: bf16[64,24], index: 6, kind: input, shape index: {}]
  %s7 = inlined_call_operand.vmem [shape: f32[64,1], index: 7, kind: input, shape index: {}]
  %s8 = inlined_call_operand.vmem [shape: bf16[2,128,32], index: 8, kind: input, shape index: {}]
  %s9 = inlined_call_operand.vmem [shape: f32[2,128,6], index: 9, kind: input, shape index: {}]
  %s10 = inlined_call_operand.vmem [shape: f32[2,128,3], index: 10, kind: input, shape index: {}]
  %s11 = inlined_call_operand.vmem [shape: bf16[2,32,128], index: 11, kind: input, shape index: {}]
  %s12 = inlined_call_operand.vmem [shape: f32[2,32,1], index: 12, kind: input, shape index: {}]
  %s13 = inlined_call_operand.vmem [shape: f32[2,2], index: 13, kind: input, shape index: {}]
  %s14 = inlined_call_operand.vmem [shape: f32[2,32,32], index: 14, kind: output, shape index: {}]
  %s15 = sld [smem:[#allocation0]]
  $region93: #{tasnet_forward.4} parent=0
    _
  %s17 = ssub.s32 1, %s15
  %s18 = scalar_select 0, %s17, %s15
  $region1: #{tasnet_forward.4} parent=0
    #allocation3 [shape = 'u8[1024]{0}', space=smem, size = 0x400, scoped, tag = 'input window, operand 13, single buffered']
    #allocation4 [shape = 's32[2]{0}', space=sflag, size = 0x8, scoped, tag = 'scoped memory for tasnet_forward.4']
    %19 = vsyncpa [#allocation4], 0
    loop: start=0, step=1, limit=4
    $region2: #{tasnet_forward.4} parent=1 // loop_pre_header
      _
    $region3: #{tasnet_forward.4} parent=1 // loop_header
      %s21 = sphi 0, %s25
      %p22 = scmp.ge.s32.totalorder %s21, 4
      %s31 = sphi 0, %s33
      %s34 = sphi 0, %s31
      %s35 = sphi 0, %s34
      %s51 = sphi 0, %s35
      %s57 = sphi 0, %s59
      %s60 = sphi 0, %s57
      %s61 = sphi 0, %s60
      %s77 = sphi 0, %s61
      %s81 = sphi 0, %s81
      %s83 = sphi 0, %s81
      %s84 = sphi 0, %s83
      %s98 = sphi 0, %s84
      %s102 = sphi 0, %s102
      %s104 = sphi 0, %s102
      %s105 = sphi 0, %s104
      %s119 = sphi 0, %s105
      %s123 = sphi 0, %s123
      %s125 = sphi 0, %s123
      %s126 = sphi 0, %s125
      %s140 = sphi 0, %s126
      %s144 = sphi 0, %s144
      %s146 = sphi 0, %s144
      %s147 = sphi 0, %s146
      %s161 = sphi 0, %s147
      %s165 = sphi 0, %s165
      %s167 = sphi 0, %s165
      %s168 = sphi 0, %s167
      %s182 = sphi 0, %s168
      %s186 = sphi 0, %s186
      %s188 = sphi 0, %s186
      %s189 = sphi 0, %s188
      %s203 = sphi 0, %s189
      %s207 = sphi 0, %s207
      %s209 = sphi 0, %s207
      %s210 = sphi 0, %s209
      %s224 = sphi 0, %s210
      %s228 = sphi 0, %s228
      %s230 = sphi 0, %s228
      %s231 = sphi 0, %s230
      %s245 = sphi 0, %s231
      %s249 = sphi 0, %s249
      %s251 = sphi 0, %s249
      %s252 = sphi 0, %s251
      %s266 = sphi 0, %s252
      %s270 = sphi 0, %s270
      %s272 = sphi 0, %s270
      %s273 = sphi 0, %s272
      %s287 = sphi 0, %s273
      %s291 = sphi 0, %s291
      %s293 = sphi 0, %s291
      %s294 = sphi 0, %s293
      %s308 = sphi 0, %s294
      %s312 = sphi 0, %s312
      %s314 = sphi 0, %s312
      %s315 = sphi 0, %s314
      %s329 = sphi 0, %s315
      %s335 = sphi 0, %s337
      %s338 = sphi 0, %s335
      %s339 = sphi 0, %s338
      %s355 = sphi 0, %s339
    $region4: #{tasnet_forward.4} parent=1 // loop_header_branch
      %24 = sbr.rel (%p22) target = $region8
    $region5: #{tasnet_forward.4} parent=1 // loop_body
      %s26 = ssub.s32 %s21, 1
      %s27 = ssub.s32 %s21, 2
      %s28 = sadd.s32 %s21, 1
      %s29 = ssub.s32 %s21, %s28
      %p30 = scmp.eq.s32.totalorder %s29, 0
      %s32 = sadd.s32 %s31, 1
      %s33 = scalar_select %p30, %s31, %s32
      %p36 = pneg %p30
      %p37 = scmp.eq.s32.totalorder %s21, 1
      %p38 = por %p36, %p37
      %p39 = scmp.ne.s32.totalorder %s31, %s34
      %p40 = scmp.eq.s32.totalorder %s21, 0
      %p41 = por %p39, %p40
      %p42 = scmp.ne.s32.totalorder %s31, %s34
      %p43 = scmp.eq.s32.totalorder %s26, 1
      %p44 = por %p42, %p43
      %p45 = scmp.ne.s32.totalorder %s34, %s35
      %p46 = scmp.eq.s32.totalorder %s26, 0
      %p47 = por %p45, %p46
      %p48 = scmp.ne.s32.totalorder %s34, %s35
      %p49 = scmp.eq.s32.totalorder %s27, 1
      %p50 = por %p48, %p49
      %p52 = scmp.ne.s32.totalorder %s35, %s51
      %p53 = scmp.eq.s32.totalorder %s27, 0
      %p54 = por %p52, %p53
      %s55 = ssub.s32 %s21, %s28
      %p56 = scmp.eq.s32.totalorder %s55, 0
      %s58 = sadd.s32 %s57, 1
      %s59 = scalar_select %p56, %s57, %s58
      %p62 = pneg %p56
      %p63 = scmp.eq.s32.totalorder %s21, 1
      %p64 = por %p62, %p63
      %p65 = scmp.ne.s32.totalorder %s57, %s60
      %p66 = scmp.eq.s32.totalorder %s21, 0
      %p67 = por %p65, %p66
      %p68 = scmp.ne.s32.totalorder %s57, %s60
      %p69 = scmp.eq.s32.totalorder %s26, 1
      %p70 = por %p68, %p69
      %p71 = scmp.ne.s32.totalorder %s60, %s61
      %p72 = scmp.eq.s32.totalorder %s26, 0
      %p73 = por %p71, %p72
      %p74 = scmp.ne.s32.totalorder %s60, %s61
      %p75 = scmp.eq.s32.totalorder %s27, 1
      %p76 = por %p74, %p75
      %p78 = scmp.ne.s32.totalorder %s61, %s77
      %p79 = scmp.eq.s32.totalorder %s27, 0
      %p80 = por %p78, %p79
      %s82 = sadd.s32 %s81, 1
      %p85 = scmp.eq.s32.totalorder %s21, 1
      %p86 = scmp.ne.s32.totalorder %s81, %s83
      %p87 = scmp.eq.s32.totalorder %s21, 0
      %p88 = por %p86, %p87
      %p89 = scmp.ne.s32.totalorder %s81, %s83
      %p90 = scmp.eq.s32.totalorder %s26, 1
      %p91 = por %p89, %p90
      %p92 = scmp.ne.s32.totalorder %s83, %s84
      %p93 = scmp.eq.s32.totalorder %s26, 0
      %p94 = por %p92, %p93
      %p95 = scmp.ne.s32.totalorder %s83, %s84
      %p96 = scmp.eq.s32.totalorder %s27, 1
      %p97 = por %p95, %p96
      %p99 = scmp.ne.s32.totalorder %s84, %s98
      %p100 = scmp.eq.s32.totalorder %s27, 0
      %p101 = por %p99, %p100
      %s103 = sadd.s32 %s102, 1
      %p106 = scmp.eq.s32.totalorder %s21, 1
      %p107 = scmp.ne.s32.totalorder %s102, %s104
      %p108 = scmp.eq.s32.totalorder %s21, 0
      %p109 = por %p107, %p108
      %p110 = scmp.ne.s32.totalorder %s102, %s104
      %p111 = scmp.eq.s32.totalorder %s26, 1
      %p112 = por %p110, %p111
      %p113 = scmp.ne.s32.totalorder %s104, %s105
      %p114 = scmp.eq.s32.totalorder %s26, 0
      %p115 = por %p113, %p114
      %p116 = scmp.ne.s32.totalorder %s104, %s105
      %p117 = scmp.eq.s32.totalorder %s27, 1
      %p118 = por %p116, %p117
      %p120 = scmp.ne.s32.totalorder %s105, %s119
      %p121 = scmp.eq.s32.totalorder %s27, 0
      %p122 = por %p120, %p121
      %s124 = sadd.s32 %s123, 1
      %p127 = scmp.eq.s32.totalorder %s21, 1
      %p128 = scmp.ne.s32.totalorder %s123, %s125
      %p129 = scmp.eq.s32.totalorder %s21, 0
      %p130 = por %p128, %p129
      %p131 = scmp.ne.s32.totalorder %s123, %s125
      %p132 = scmp.eq.s32.totalorder %s26, 1
      %p133 = por %p131, %p132
      %p134 = scmp.ne.s32.totalorder %s125, %s126
      %p135 = scmp.eq.s32.totalorder %s26, 0
      %p136 = por %p134, %p135
      %p137 = scmp.ne.s32.totalorder %s125, %s126
      %p138 = scmp.eq.s32.totalorder %s27, 1
      %p139 = por %p137, %p138
      %p141 = scmp.ne.s32.totalorder %s126, %s140
      %p142 = scmp.eq.s32.totalorder %s27, 0
      %p143 = por %p141, %p142
      %s145 = sadd.s32 %s144, 1
      %p148 = scmp.eq.s32.totalorder %s21, 1
      %p149 = scmp.ne.s32.totalorder %s144, %s146
      %p150 = scmp.eq.s32.totalorder %s21, 0
      %p151 = por %p149, %p150
      %p152 = scmp.ne.s32.totalorder %s144, %s146
      %p153 = scmp.eq.s32.totalorder %s26, 1
      %p154 = por %p152, %p153
      %p155 = scmp.ne.s32.totalorder %s146, %s147
      %p156 = scmp.eq.s32.totalorder %s26, 0
      %p157 = por %p155, %p156
      %p158 = scmp.ne.s32.totalorder %s146, %s147
      %p159 = scmp.eq.s32.totalorder %s27, 1
      %p160 = por %p158, %p159
      %p162 = scmp.ne.s32.totalorder %s147, %s161
      %p163 = scmp.eq.s32.totalorder %s27, 0
      %p164 = por %p162, %p163
      %s166 = sadd.s32 %s165, 1
      %p169 = scmp.eq.s32.totalorder %s21, 1
      %p170 = scmp.ne.s32.totalorder %s165, %s167
      %p171 = scmp.eq.s32.totalorder %s21, 0
      %p172 = por %p170, %p171
      %p173 = scmp.ne.s32.totalorder %s165, %s167
      %p174 = scmp.eq.s32.totalorder %s26, 1
      %p175 = por %p173, %p174
      %p176 = scmp.ne.s32.totalorder %s167, %s168
      %p177 = scmp.eq.s32.totalorder %s26, 0
      %p178 = por %p176, %p177
      %p179 = scmp.ne.s32.totalorder %s167, %s168
      %p180 = scmp.eq.s32.totalorder %s27, 1
      %p181 = por %p179, %p180
      %p183 = scmp.ne.s32.totalorder %s168, %s182
      %p184 = scmp.eq.s32.totalorder %s27, 0
      %p185 = por %p183, %p184
      %s187 = sadd.s32 %s186, 1
      %p190 = scmp.eq.s32.totalorder %s21, 1
      %p191 = scmp.ne.s32.totalorder %s186, %s188
      %p192 = scmp.eq.s32.totalorder %s21, 0
      %p193 = por %p191, %p192
      %p194 = scmp.ne.s32.totalorder %s186, %s188
      %p195 = scmp.eq.s32.totalorder %s26, 1
      %p196 = por %p194, %p195
      %p197 = scmp.ne.s32.totalorder %s188, %s189
      %p198 = scmp.eq.s32.totalorder %s26, 0
      %p199 = por %p197, %p198
      %p200 = scmp.ne.s32.totalorder %s188, %s189
      %p201 = scmp.eq.s32.totalorder %s27, 1
      %p202 = por %p200, %p201
      %p204 = scmp.ne.s32.totalorder %s189, %s203
      %p205 = scmp.eq.s32.totalorder %s27, 0
      %p206 = por %p204, %p205
      %s208 = sadd.s32 %s207, 1
      %p211 = scmp.eq.s32.totalorder %s21, 1
      %p212 = scmp.ne.s32.totalorder %s207, %s209
      %p213 = scmp.eq.s32.totalorder %s21, 0
      %p214 = por %p212, %p213
      %p215 = scmp.ne.s32.totalorder %s207, %s209
      %p216 = scmp.eq.s32.totalorder %s26, 1
      %p217 = por %p215, %p216
      %p218 = scmp.ne.s32.totalorder %s209, %s210
      %p219 = scmp.eq.s32.totalorder %s26, 0
      %p220 = por %p218, %p219
      %p221 = scmp.ne.s32.totalorder %s209, %s210
      %p222 = scmp.eq.s32.totalorder %s27, 1
      %p223 = por %p221, %p222
      %p225 = scmp.ne.s32.totalorder %s210, %s224
      %p226 = scmp.eq.s32.totalorder %s27, 0
      %p227 = por %p225, %p226
      %s229 = sadd.s32 %s228, 1
      %p232 = scmp.eq.s32.totalorder %s21, 1
      %p233 = scmp.ne.s32.totalorder %s228, %s230
      %p234 = scmp.eq.s32.totalorder %s21, 0
      %p235 = por %p233, %p234
      %p236 = scmp.ne.s32.totalorder %s228, %s230
      %p237 = scmp.eq.s32.totalorder %s26, 1
      %p238 = por %p236, %p237
      %p239 = scmp.ne.s32.totalorder %s230, %s231
      %p240 = scmp.eq.s32.totalorder %s26, 0
      %p241 = por %p239, %p240
      %p242 = scmp.ne.s32.totalorder %s230, %s231
      %p243 = scmp.eq.s32.totalorder %s27, 1
      %p244 = por %p242, %p243
      %p246 = scmp.ne.s32.totalorder %s231, %s245
      %p247 = scmp.eq.s32.totalorder %s27, 0
      %p248 = por %p246, %p247
      %s250 = sadd.s32 %s249, 1
      %p253 = scmp.eq.s32.totalorder %s21, 1
      %p254 = scmp.ne.s32.totalorder %s249, %s251
      %p255 = scmp.eq.s32.totalorder %s21, 0
      %p256 = por %p254, %p255
      %p257 = scmp.ne.s32.totalorder %s249, %s251
      %p258 = scmp.eq.s32.totalorder %s26, 1
      %p259 = por %p257, %p258
      %p260 = scmp.ne.s32.totalorder %s251, %s252
      %p261 = scmp.eq.s32.totalorder %s26, 0
      %p262 = por %p260, %p261
      %p263 = scmp.ne.s32.totalorder %s251, %s252
      %p264 = scmp.eq.s32.totalorder %s27, 1
      %p265 = por %p263, %p264
      %p267 = scmp.ne.s32.totalorder %s252, %s266
      %p268 = scmp.eq.s32.totalorder %s27, 0
      %p269 = por %p267, %p268
      %s271 = sadd.s32 %s270, 1
      %p274 = scmp.eq.s32.totalorder %s21, 1
      %p275 = scmp.ne.s32.totalorder %s270, %s272
      %p276 = scmp.eq.s32.totalorder %s21, 0
      %p277 = por %p275, %p276
      %p278 = scmp.ne.s32.totalorder %s270, %s272
      %p279 = scmp.eq.s32.totalorder %s26, 1
      %p280 = por %p278, %p279
      %p281 = scmp.ne.s32.totalorder %s272, %s273
      %p282 = scmp.eq.s32.totalorder %s26, 0
      %p283 = por %p281, %p282
      %p284 = scmp.ne.s32.totalorder %s272, %s273
      %p285 = scmp.eq.s32.totalorder %s27, 1
      %p286 = por %p284, %p285
      %p288 = scmp.ne.s32.totalorder %s273, %s287
      %p289 = scmp.eq.s32.totalorder %s27, 0
      %p290 = por %p288, %p289
      %s292 = sadd.s32 %s291, 1
      %p295 = scmp.eq.s32.totalorder %s21, 1
      %p296 = scmp.ne.s32.totalorder %s291, %s293
      %p297 = scmp.eq.s32.totalorder %s21, 0
      %p298 = por %p296, %p297
      %p299 = scmp.ne.s32.totalorder %s291, %s293
      %p300 = scmp.eq.s32.totalorder %s26, 1
      %p301 = por %p299, %p300
      %p302 = scmp.ne.s32.totalorder %s293, %s294
      %p303 = scmp.eq.s32.totalorder %s26, 0
      %p304 = por %p302, %p303
      %p305 = scmp.ne.s32.totalorder %s293, %s294
      %p306 = scmp.eq.s32.totalorder %s27, 1
      %p307 = por %p305, %p306
      %p309 = scmp.ne.s32.totalorder %s294, %s308
      %p310 = scmp.eq.s32.totalorder %s27, 0
      %p311 = por %p309, %p310
      %s313 = sadd.s32 %s312, 1
      %p316 = scmp.eq.s32.totalorder %s21, 1
      %p317 = scmp.ne.s32.totalorder %s312, %s314
      %p318 = scmp.eq.s32.totalorder %s21, 0
      %p319 = por %p317, %p318
      %p320 = scmp.ne.s32.totalorder %s312, %s314
      %p321 = scmp.eq.s32.totalorder %s26, 1
      %p322 = por %p320, %p321
      %p323 = scmp.ne.s32.totalorder %s314, %s315
      %p324 = scmp.eq.s32.totalorder %s26, 0
      %p325 = por %p323, %p324
      %p326 = scmp.ne.s32.totalorder %s314, %s315
      %p327 = scmp.eq.s32.totalorder %s27, 1
      %p328 = por %p326, %p327
      %p330 = scmp.ne.s32.totalorder %s315, %s329
      %p331 = scmp.eq.s32.totalorder %s27, 0
      %p332 = por %p330, %p331
      %s333 = ssub.s32 %s21, %s28
      %p334 = scmp.eq.s32.totalorder %s333, 0
      %s336 = sadd.s32 %s335, 1
      %s337 = scalar_select %p334, %s335, %s336
      %p340 = pneg %p334
      %p341 = scmp.eq.s32.totalorder %s21, 1
      %p342 = por %p340, %p341
      %p343 = scmp.ne.s32.totalorder %s335, %s338
      %p344 = scmp.eq.s32.totalorder %s21, 0
      %p345 = por %p343, %p344
      %p346 = scmp.ne.s32.totalorder %s335, %s338
      %p347 = scmp.eq.s32.totalorder %s26, 1
      %p348 = por %p346, %p347
      %p349 = scmp.ne.s32.totalorder %s338, %s339
      %p350 = scmp.eq.s32.totalorder %s26, 0
      %p351 = por %p349, %p350
      %p352 = scmp.ne.s32.totalorder %s338, %s339
      %p353 = scmp.eq.s32.totalorder %s27, 1
      %p354 = por %p352, %p353
      %p356 = scmp.ne.s32.totalorder %s339, %s355
      %p357 = scmp.eq.s32.totalorder %s27, 0
      %p358 = por %p356, %p357
      %p359 = scmp.le.s32.totalorder 1, %s21
      %p360 = scmp.lt.s32.totalorder %s21, 3
      %p361 = pnand %p359, %p360
      %p362 = pneg %p361
      // Predicated region
      $region9: #{tasnet_forward.4} parent=5 // pred_check
        _
      $region10: #{tasnet_forward.4} parent=5 // pred_check_branch
        %364 = sbr.rel (%p361) target = $region12
      $region11: #{tasnet_forward.4} parent=5 // pred_region
        %s365 = ssub.s32 %s21, 1
        // Predicated region
        $region13: #{tasnet_forward.4} parent=11 // pred_check
          %p366 = pneg %p94
        $region14: #{tasnet_forward.4} parent=11 // pred_check_branch
          %368 = sbr.rel (%p366) target = $region16
        $region15: #{tasnet_forward.4} parent=11 // pred_region
          _
        $region16: #{tasnet_forward.4} parent=11 // pred_fallthru
          _
        // Predicated region
        $region17: #{tasnet_forward.4} parent=11 // pred_check
          %p369 = pneg %p115
        $region18: #{tasnet_forward.4} parent=11 // pred_check_branch
          %371 = sbr.rel (%p369) target = $region20
        $region19: #{tasnet_forward.4} parent=11 // pred_region
          _
        $region20: #{tasnet_forward.4} parent=11 // pred_fallthru
          _
        // Predicated region
        $region21: #{tasnet_forward.4} parent=11 // pred_check
          %p372 = pneg %p136
        $region22: #{tasnet_forward.4} parent=11 // pred_check_branch
          %374 = sbr.rel (%p372) target = $region24
        $region23: #{tasnet_forward.4} parent=11 // pred_region
          _
        $region24: #{tasnet_forward.4} parent=11 // pred_fallthru
          _
        // Predicated region
        $region25: #{tasnet_forward.4} parent=11 // pred_check
          %p375 = pneg %p157
        $region26: #{tasnet_forward.4} parent=11 // pred_check_branch
          %377 = sbr.rel (%p375) target = $region28
        $region27: #{tasnet_forward.4} parent=11 // pred_region
          _
        $region28: #{tasnet_forward.4} parent=11 // pred_fallthru
          _
        // Predicated region
        $region29: #{tasnet_forward.4} parent=11 // pred_check
          %p378 = pneg %p178
        $region30: #{tasnet_forward.4} parent=11 // pred_check_branch
          %380 = sbr.rel (%p378) target = $region32
        $region31: #{tasnet_forward.4} parent=11 // pred_region
          _
        $region32: #{tasnet_forward.4} parent=11 // pred_fallthru
          _
        // Predicated region
        $region33: #{tasnet_forward.4} parent=11 // pred_check
          %p381 = pneg %p199
        $region34: #{tasnet_forward.4} parent=11 // pred_check_branch
          %383 = sbr.rel (%p381) target = $region36
        $region35: #{tasnet_forward.4} parent=11 // pred_region
          _
        $region36: #{tasnet_forward.4} parent=11 // pred_fallthru
          _
        // Predicated region
        $region37: #{tasnet_forward.4} parent=11 // pred_check
          %p384 = pneg %p220
        $region38: #{tasnet_forward.4} parent=11 // pred_check_branch
          %386 = sbr.rel (%p384) target = $region40
        $region39: #{tasnet_forward.4} parent=11 // pred_region
          _
        $region40: #{tasnet_forward.4} parent=11 // pred_fallthru
          _
        // Predicated region
        $region41: #{tasnet_forward.4} parent=11 // pred_check
          %p387 = pneg %p241
        $region42: #{tasnet_forward.4} parent=11 // pred_check_branch
          %389 = sbr.rel (%p387) target = $region44
        $region43: #{tasnet_forward.4} parent=11 // pred_region
          _
        $region44: #{tasnet_forward.4} parent=11 // pred_fallthru
          _
        // Predicated region
        $region45: #{tasnet_forward.4} parent=11 // pred_check
          %p390 = pneg %p262
        $region46: #{tasnet_forward.4} parent=11 // pred_check_branch
          %392 = sbr.rel (%p390) target = $region48
        $region47: #{tasnet_forward.4} parent=11 // pred_region
          _
        $region48: #{tasnet_forward.4} parent=11 // pred_fallthru
          _
        // Predicated region
        $region49: #{tasnet_forward.4} parent=11 // pred_check
          %p393 = pneg %p283
        $region50: #{tasnet_forward.4} parent=11 // pred_check_branch
          %395 = sbr.rel (%p393) target = $region52
        $region51: #{tasnet_forward.4} parent=11 // pred_region
          _
        $region52: #{tasnet_forward.4} parent=11 // pred_fallthru
          _
        // Predicated region
        $region53: #{tasnet_forward.4} parent=11 // pred_check
          %p396 = pneg %p304
        $region54: #{tasnet_forward.4} parent=11 // pred_check_branch
          %398 = sbr.rel (%p396) target = $region56
        $region55: #{tasnet_forward.4} parent=11 // pred_region
          _
        $region56: #{tasnet_forward.4} parent=11 // pred_fallthru
          _
        // Predicated region
        $region57: #{tasnet_forward.4} parent=11 // pred_check
          %p399 = pneg %p325
        $region58: #{tasnet_forward.4} parent=11 // pred_check_branch
          %401 = sbr.rel (%p399) target = $region60
        $region59: #{tasnet_forward.4} parent=11 // pred_region
          %403 = vsyncadd [#allocation4], 0
          %s405 = sshll.u32 %s13, 4
          %s406 = int_to_ptr.vmem [resolvable:$true] %s405
          %408 = dma.vmem_to_smem %s406, 32, [#allocation3], [#allocation4]
        $region60: #{tasnet_forward.4} parent=11 // pred_fallthru
          _
      $region12: #{tasnet_forward.4} parent=5 // pred_fallthru
        _
      %p409 = scmp.lt.s32.totalorder %s21, 2
      // Predicated region
      $region61: #{tasnet_forward.4} parent=5 // pred_check
        %p410 = pneg %p409
      $region62: #{tasnet_forward.4} parent=5 // pred_check_branch
        %412 = sbr.rel (%p410) target = $region64
      $region63: #{tasnet_forward.4} parent=5 // pred_region
        // Predicated region
        $region65: #{tasnet_forward.4} parent=63 // pred_check
          %p413 = pneg %p41
        $region66: #{tasnet_forward.4} parent=63 // pred_check_branch
          %415 = sbr.rel (%p413) target = $region68
        $region67: #{tasnet_forward.4} parent=63 // pred_region
          %p416 = scmp.lt.s32.totalorder %s21, 1
          %s417 = scalar_select %p416, %s21, 1
          %s418 = smul.addr %s417, 16
          %s419 = smul.addr %s418, 8
          %s420 = scalar_lea.vmem %s0, %s419
        $region68: #{tasnet_forward.4} parent=63 // pred_fallthru
          _
        // Predicated region
        $region69: #{tasnet_forward.4} parent=63 // pred_check
          %p421 = pneg %p67
        $region70: #{tasnet_forward.4} parent=63 // pred_check_branch
          %423 = sbr.rel (%p421) target = $region72
        $region71: #{tasnet_forward.4} parent=63 // pred_region
          %p424 = scmp.lt.s32.totalorder %s21, 1
          %s425 = scalar_select %p424, %s21, 1
          %s426 = smul.addr %s425, 3
          %s427 = smul.addr %s426, 8
          %s428 = scalar_lea.vmem %s1, %s427
        $region72: #{tasnet_forward.4} parent=63 // pred_fallthru
          _
      $region64: #{tasnet_forward.4} parent=5 // pred_fallthru
        _
      %p429 = scmp.le.s32.totalorder 1, %s21
      %p430 = scmp.lt.s32.totalorder %s21, 3
      %p431 = pnand %p429, %p430
      %p432 = pneg %p431
      // Predicated region
      $region73: #{tasnet_forward.4} parent=5 // pred_check
        _
      $region74: #{tasnet_forward.4} parent=5 // pred_check_branch
        %434 = sbr.rel (%p431) target = $region76
      $region75: #{tasnet_forward.4} parent=5 // pred_region
        %s435 = ssub.s32 %s21, 1
        // Predicated region
        $region77: #{tasnet_forward.4} parent=75 // pred_check
          %p436 = pneg %p325
        $region78: #{tasnet_forward.4} parent=75 // pred_check_branch
          %438 = sbr.rel (%p436) target = $region80
        $region79: #{tasnet_forward.4} parent=75 // pred_region
          %440 = dma.done [#allocation4], 32
        $region80: #{tasnet_forward.4} parent=75 // pred_fallthru
          _
        %441 = sfence
        %p442 = scmp.lt.s32.totalorder %s26, 1
        %s443 = scalar_select %p442, %s26, 1
        %s444 = smul.addr %s443, 16
        %s445 = smul.addr %s444, 8
        %s446 = scalar_lea.vmem %s0, %s445
        %p447 = pneg %p47
        %p448 = pneg %p44
        %p449 = scmp.lt.s32.totalorder %s26, 1
        %s450 = scalar_select %p449, %s26, 1
        %s451 = smul.addr %s450, 3
        %s452 = smul.addr %s451, 8
        %s453 = scalar_lea.vmem %s1, %s452
        %p454 = pneg %p73
        %p455 = pneg %p70
        %p456 = pneg %p94
        %p457 = pneg %p91
        %p458 = pneg %p115
        %p459 = pneg %p112
        %p460 = pneg %p136
        %p461 = pneg %p133
        %p462 = pneg %p157
        %p463 = pneg %p154
        %p464 = pneg %p178
        %p465 = pneg %p175
        %p466 = pneg %p199
        %p467 = pneg %p196
        %p468 = pneg %p220
        %p469 = pneg %p217
        %p470 = pneg %p241
        %p471 = pneg %p238
        %p472 = pneg %p262
        %p473 = pneg %p259
        %p474 = pneg %p283
        %p475 = pneg %p280
        %p476 = pneg %p304
        %p477 = pneg %p301
        %p478 = pneg %p325
        %p479 = pneg %p322
        %p480 = pneg %p351
        %p481 = pneg %p348
        %p482 = scmp.lt.s32.totalorder %s26, 1
        %s483 = scalar_select %p482, %s26, 1
        %s484 = smul.addr %s483, 4
        %s485 = smul.addr %s484, 8
        %s486 = scalar_lea.vmem %s14, %s485
        %p487 = scmp.lt.s32.totalorder %s26, 1
        %s488 = scalar_select %p487, %s26, 1
        %s489 = smul.addr %s488, 16
        %s490 = smul.addr %s489, 8
        %s491 = scalar_lea.vmem %s0, %s490
        %p492 = scmp.lt.s32.totalorder %s26, 1
        %s493 = scalar_select %p492, %s26, 1
        %s494 = smul.addr %s493, 3
        %s495 = smul.addr %s494, 8
        %s496 = scalar_lea.vmem %s1, %s495
        %p497 = scmp.lt.s32.totalorder %s26, 1
        %s498 = scalar_select %p497, %s26, 1
        %s499 = smul.addr %s498, 4
        %s500 = smul.addr %s499, 8
        %s501 = scalar_lea.vmem %s14, %s500
        %vm503 = vcmask 1048544
        %504 = vst.msk [vmem:[#allocation2] sm:$0xff] %vm503, 0.0
        %505 = vst.msk [vmem:[#allocation2 + $0x10] sm:$0xff] %vm503, 0.0
        %506 = vst.msk [vmem:[#allocation2 + $0x20] sm:$0xff] %vm503, 0.0
        %507 = vst.msk [vmem:[#allocation2 + $0x30] sm:$0xff] %vm503, 0.0
        %508 = vst.msk [vmem:[#allocation2 + $0x40] sm:$0xff] %vm503, 0.0
        %509 = vst.msk [vmem:[#allocation2 + $0x50] sm:$0xff] %vm503, 0.0
        %510 = vst.msk [vmem:[#allocation2 + $0x60] sm:$0xff] %vm503, 0.0
        %511 = vst.msk [vmem:[#allocation2 + $0x70] sm:$0xff] %vm503, 0.0
        %512 = vst.msk [vmem:[#allocation2 + $0x80] sm:$0xff] %vm503, 0.0
        %513 = vst.msk [vmem:[#allocation2 + $0x90] sm:$0xff] %vm503, 0.0
        %514 = vst.msk [vmem:[#allocation2 + $0xa0] sm:$0xff] %vm503, 0.0
        %515 = vst.msk [vmem:[#allocation2 + $0xb0] sm:$0xff] %vm503, 0.0
        %516 = vst.msk [vmem:[#allocation2 + $0xc0] sm:$0xff] %vm503, 0.0
        %517 = vst.msk [vmem:[#allocation2 + $0xd0] sm:$0xff] %vm503, 0.0
        %518 = vst.msk [vmem:[#allocation2 + $0xe0] sm:$0xff] %vm503, 0.0
        %519 = vst.msk [vmem:[#allocation2 + $0xf0] sm:$0xff] %vm503, 0.0
        %v520 = vld [vmem:[%s491] sm:$0xff]
        %v521 = vld [vmem:[%s491 + $0x8] sm:$0xff]
        %v522 = vld [vmem:[%s491 + $0x10] sm:$0xff]
        %v523 = vld [vmem:[%s491 + $0x18] sm:$0xff]
        %v524 = vld [vmem:[%s491 + $0x20] sm:$0xff]
        %v525 = vld [vmem:[%s491 + $0x28] sm:$0xff]
        %v526 = vld [vmem:[%s491 + $0x30] sm:$0xff]
        %v527 = vld [vmem:[%s491 + $0x38] sm:$0xff]
        %v528 = vld [vmem:[%s491 + $0x40] sm:$0xff]
        %v529 = vld [vmem:[%s491 + $0x48] sm:$0xff]
        %v530 = vld [vmem:[%s491 + $0x50] sm:$0xff]
        %v531 = vld [vmem:[%s491 + $0x58] sm:$0xff]
        %v532 = vld [vmem:[%s491 + $0x60] sm:$0xff]
        %v533 = vld [vmem:[%s491 + $0x68] sm:$0xff]
        %v534 = vld [vmem:[%s491 + $0x70] sm:$0xff]
        %v535 = vld [vmem:[%s491 + $0x78] sm:$0xff]
        %v536 = vld [vmem:[%s2] sm:$0xff]
        %v537 = vld [vmem:[%s2 + $0x8] sm:$0xff]
        %v538 = vld [vmem:[%s2 + $0x10] sm:$0xff]
        %v539 = vld [vmem:[%s2 + $0x18] sm:$0xff]
        %v540 = vld [vmem:[%s2 + $0x20] sm:$0xff]
        %v541 = vld [vmem:[%s2 + $0x28] sm:$0xff]
        %v542 = vld [vmem:[%s2 + $0x30] sm:$0xff]
        %v543 = vld [vmem:[%s2 + $0x38] sm:$0xff]
        %v544 = vld [vmem:[%s2 + $0x40] sm:$0xff]
        %v545 = vld [vmem:[%s2 + $0x48] sm:$0xff]
        %v546 = vld [vmem:[%s2 + $0x50] sm:$0xff]
        %v547 = vld [vmem:[%s2 + $0x58] sm:$0xff]
        %v548 = vld [vmem:[%s2 + $0x60] sm:$0xff]
        %v549 = vld [vmem:[%s2 + $0x68] sm:$0xff]
        %v550 = vld [vmem:[%s2 + $0x70] sm:$0xff]
        %v551 = vld [vmem:[%s2 + $0x78] sm:$0xff]
        %v552 = vld [vmem:[%s3] sm:$0xff]
        %v553 = vld [vmem:[%s3 + $0x8] sm:$0xff]
        %v554 = vld [vmem:[%s3 + $0x10] sm:$0xff]
        %v555 = vld [vmem:[%s3 + $0x18] sm:$0xff]
        %v556 = vld [vmem:[%s3 + $0x20] sm:$0xff]
        %v557 = vld [vmem:[%s3 + $0x28] sm:$0xff]
        %v558 = vld [vmem:[%s3 + $0x30] sm:$0xff]
        %v559 = vld [vmem:[%s3 + $0x38] sm:$0xff]
        %v560 = vld [vmem:[%s3 + $0x40] sm:$0xff]
        %v561 = vld [vmem:[%s3 + $0x48] sm:$0xff]
        %v562 = vld [vmem:[%s3 + $0x50] sm:$0xff]
        %v563 = vld [vmem:[%s3 + $0x58] sm:$0xff]
        %v564 = vld [vmem:[%s3 + $0x60] sm:$0xff]
        %v565 = vld [vmem:[%s3 + $0x68] sm:$0xff]
        %v566 = vld [vmem:[%s3 + $0x70] sm:$0xff]
        %v567 = vld [vmem:[%s3 + $0x78] sm:$0xff]
        %vm568 = vcmask 261120
        %v569 = vsel %vm568, %v520, 0.0
        %v570 = vsel %vm568, %v521, 0.0
        %v571 = vadd.f32 %v569, %v570
        %v572 = vsel %vm568, %v522, 0.0
        %v573 = vadd.f32 %v571, %v572
        %v574 = vsel %vm568, %v523, 0.0
        %v575 = vadd.f32 %v573, %v574
        %v576 = vsel %vm568, %v524, 0.0
        %v577 = vadd.f32 %v575, %v576
        %v578 = vsel %vm568, %v525, 0.0
        %v579 = vadd.f32 %v577, %v578
        %v580 = vsel %vm568, %v526, 0.0
        %v581 = vadd.f32 %v579, %v580
        %v582 = vsel %vm568, %v527, 0.0
        %v583 = vadd.f32 %v581, %v582
        %v584 = vsel %vm568, %v528, 0.0
        %v585 = vadd.f32 %v583, %v584
        %v586 = vsel %vm568, %v529, 0.0
        %v587 = vadd.f32 %v585, %v586
        %v588 = vsel %vm568, %v530, 0.0
        %v589 = vadd.f32 %v587, %v588
        %v590 = vsel %vm568, %v531, 0.0
        %v591 = vadd.f32 %v589, %v590
        %v592 = vsel %vm568, %v532, 0.0
        %v593 = vadd.f32 %v591, %v592
        %v594 = vsel %vm568, %v533, 0.0
        %v595 = vadd.f32 %v593, %v594
        %v596 = vsel %vm568, %v534, 0.0
        %v597 = vadd.f32 %v595, %v596
        %v598 = vsel %vm568, %v535, 0.0
        %v599 = vadd.f32 %v597, %v598
        %v600 = vrot.slane %v599, 4
        %v601 = vadd.f32 %v599, %v600
        %v602 = vrot.slane %v601, 2
        %v603 = vadd.f32 %v601, %v602
        %v604 = vrot.slane %v603, 1
        %v605 = vadd.f32 %v603, %v604
        %v606 = vmul.f32 %v520, %v520
        %v607 = vmul.f32 %v521, %v521
        %v608 = vmul.f32 %v522, %v522
        %v609 = vmul.f32 %v523, %v523
        %v610 = vmul.f32 %v524, %v524
        %v611 = vmul.f32 %v525, %v525
        %v612 = vmul.f32 %v526, %v526
        %v613 = vmul.f32 %v527, %v527
        %v614 = vmul.f32 %v528, %v528
        %v615 = vmul.f32 %v529, %v529
        %v616 = vmul.f32 %v530, %v530
        %v617 = vmul.f32 %v531, %v531
        %v618 = vmul.f32 %v532, %v532
        %v619 = vmul.f32 %v533, %v533
        %v620 = vmul.f32 %v534, %v534
        %v621 = vmul.f32 %v535, %v535
        %v622 = vsel %vm568, %v606, 0.0
        %v623 = vsel %vm568, %v607, 0.0
        %v624 = vadd.f32 %v622, %v623
        %v625 = vsel %vm568, %v608, 0.0
        %v626 = vadd.f32 %v624, %v625
        %v627 = vsel %vm568, %v609, 0.0
        %v628 = vadd.f32 %v626, %v627
        %v629 = vsel %vm568, %v610, 0.0
        %v630 = vadd.f32 %v628, %v629
        %v631 = vsel %vm568, %v611, 0.0
        %v632 = vadd.f32 %v630, %v631
        %v633 = vsel %vm568, %v612, 0.0
        %v634 = vadd.f32 %v632, %v633
        %v635 = vsel %vm568, %v613, 0.0
        %v636 = vadd.f32 %v634, %v635
        %v637 = vsel %vm568, %v614, 0.0
        %v638 = vadd.f32 %v636, %v637
        %v639 = vsel %vm568, %v615, 0.0
        %v640 = vadd.f32 %v638, %v639
        %v641 = vsel %vm568, %v616, 0.0
        %v642 = vadd.f32 %v640, %v641
        %v643 = vsel %vm568, %v617, 0.0
        %v644 = vadd.f32 %v642, %v643
        %v645 = vsel %vm568, %v618, 0.0
        %v646 = vadd.f32 %v644, %v645
        %v647 = vsel %vm568, %v619, 0.0
        %v648 = vadd.f32 %v646, %v647
        %v649 = vsel %vm568, %v620, 0.0
        %v650 = vadd.f32 %v648, %v649
        %v651 = vsel %vm568, %v621, 0.0
        %v652 = vadd.f32 %v650, %v651
        %v653 = vrot.slane %v652, 4
        %v654 = vadd.f32 %v652, %v653
        %v655 = vrot.slane %v654, 2
        %v656 = vadd.f32 %v654, %v655
        %v657 = vrot.slane %v656, 1
        %v658 = vadd.f32 %v656, %v657
        %vm659 = vcmask 1040384
        %v660 = vsel %vm659, %v605, %v658
        %662 = vrot.lane.b32.xlu0 %v660, 1
        %v663 = vpop.permute.xlu0 %662
        %vm665 = vcmask 7168
        %v666 = vsel %vm665, 0.0, %v663
        %v667 = vadd.f32 %v660, %v666
        %669 = vrot.lane.b32.xlu0 %v667, 2
        %v670 = vpop.permute.xlu0 %669
        %vm672 = vcmask 15360
        %v673 = vsel %vm672, 0.0, %v670
        %v674 = vadd.f32 %v667, %v673
        %676 = vrot.lane.b32.xlu0 %v674, 4
        %v677 = vpop.permute.xlu0 %676
        %vm679 = vcmask 31744
        %v680 = vsel %vm679, 0.0, %v677
        %v681 = vadd.f32 %v674, %v680
        %683 = vrot.lane.b32.xlu0 %v681, 8
        %v684 = vpop.permute.xlu0 %683
        %vm686 = vcmask 64512
        %v687 = vsel %vm686, 0.0, %v684
        %v688 = vadd.f32 %v681, %v687
        %690 = vrot.lane.b32.xlu0 %v688, 16
        %v691 = vpop.permute.xlu0 %690
        %vm693 = vcmask 130048
        %v694 = vsel %vm693, 0.0, %v691
        %v695 = vadd.f32 %v688, %v694
        %v696 = vlaneseq
        %v697 = vand.u32 %v696, 127
        %v698 = vcvt.s32.f32 %v697
        %v699 = vadd.f32 %v698, 1.0
        %v700 = vmul.f32 %v699, 128.0
        %v701 = vrcp.pop %v700
        %v702 = vmul.f32 %v700, %v701
        %v703 = vsub.f32 1.0, %v702
        %v704 = vmul.f32 %v701, %v703
        %v705 = vadd.f32 %v701, %v704
        %vm706 = vweird.f32 %v700
        %vm707 = vweird.f32 %v701
        %vm708 = vmor %vm706, %vm707
        %v709 = vsel %vm708, %v701, %v705
        %v710 = vand.u32 2147483647, %v700
        %vm711 = vcmp.eq.f32.partialorder %v710, 8.507059e+37
        %v712 = vand.u32 %v700, 2147483648
        %v713 = vor.u32 1.1754944e-38, %v712
        %v714 = vsel %vm711, %v713, %v709
        %v715 = vmul.f32 %v695, %v714
        %v716 = vmul.f32 %v715, 2.0
        %v717 = vmul.f32 %v716, %v695
        %v719 = vrot.slane %v717, 7
        %v721 = vsub.f32 %v695, %v719
        %v722 = vmul.f32 %v721, %v714
        %v723 = vmul.f32 %v715, %v715
        %v725 = vrot.slane %v723, 7
        %v727 = vadd.f32 %v722, %v725
        %v728 = vmax.f32 %v727, 0.0
        %v729 = vadd.f32 %v728, 1e-08
        %v730 = vrsqrt.pop %v729
        %v731 = vmul.f32 %v730, %v729
        %v732 = vmul.f32 %v731, %v730
        %v733 = vmul.f32 0.5, %v732
        %v734 = vsub.f32 1.5, %v733
        %v735 = vmul.f32 %v730, %v734
        %vm736 = vweird.f32 %v729
        %vm737 = vweird.f32 %v730
        %vm738 = vmor %vm736, %vm737
        %v739 = vsel %vm738, %v730, %v735
        %v740 = vperm.slane %v715, 0
        %v741 = vsub.f32 %v520, %v740
        %v742 = vsub.f32 %v521, %v740
        %v743 = vsub.f32 %v522, %v740
        %v744 = vsub.f32 %v523, %v740
        %v745 = vsub.f32 %v524, %v740
        %v746 = vsub.f32 %v525, %v740
        %v747 = vsub.f32 %v526, %v740
        %v748 = vsub.f32 %v527, %v740
        %v749 = vsub.f32 %v528, %v740
        %v750 = vsub.f32 %v529, %v740
        %v751 = vsub.f32 %v530, %v740
        %v752 = vsub.f32 %v531, %v740
        %v753 = vsub.f32 %v532, %v740
        %v754 = vsub.f32 %v533, %v740
        %v755 = vsub.f32 %v534, %v740
        %v756 = vsub.f32 %v535, %v740
        %v757 = vperm.slane %v739, 1
        %v758 = vmul.f32 %v741, %v757
        %v759 = vmul.f32 %v742, %v757
        %v760 = vmul.f32 %v743, %v757
        %v761 = vmul.f32 %v744, %v757
        %v762 = vmul.f32 %v745, %v757
        %v763 = vmul.f32 %v746, %v757
        %v764 = vmul.f32 %v747, %v757
        %v765 = vmul.f32 %v748, %v757
        %v766 = vmul.f32 %v749, %v757
        %v767 = vmul.f32 %v750, %v757
        %v768 = vmul.f32 %v751, %v757
        %v769 = vmul.f32 %v752, %v757
        %v770 = vmul.f32 %v753, %v757
        %v771 = vmul.f32 %v754, %v757
        %v772 = vmul.f32 %v755, %v757
        %v773 = vmul.f32 %v756, %v757
        %775 = vset.pattern.permute.xlu0 0
        %776 = vperm.xlu0 %775, %v536
        %v777 = vpop.permute.xlu0 %776
        %780 = vset.pattern.permute.xlu0 0
        %781 = vperm.xlu0 %780, %v537
        %v782 = vpop.permute.xlu0 %781
        %785 = vset.pattern.permute.xlu0 0
        %786 = vperm.xlu0 %785, %v538
        %v787 = vpop.permute.xlu0 %786
        %790 = vset.pattern.permute.xlu0 0
        %791 = vperm.xlu0 %790, %v539
        %v792 = vpop.permute.xlu0 %791
        %795 = vset.pattern.permute.xlu0 0
        %796 = vperm.xlu0 %795, %v540
        %v797 = vpop.permute.xlu0 %796
        %800 = vset.pattern.permute.xlu0 0
        %801 = vperm.xlu0 %800, %v541
        %v802 = vpop.permute.xlu0 %801
        %805 = vset.pattern.permute.xlu0 0
        %806 = vperm.xlu0 %805, %v542
        %v807 = vpop.permute.xlu0 %806
        %810 = vset.pattern.permute.xlu0 0
        %811 = vperm.xlu0 %810, %v543
        %v812 = vpop.permute.xlu0 %811
        %815 = vset.pattern.permute.xlu0 0
        %816 = vperm.xlu0 %815, %v544
        %v817 = vpop.permute.xlu0 %816
        %820 = vset.pattern.permute.xlu0 0
        %821 = vperm.xlu0 %820, %v545
        %v822 = vpop.permute.xlu0 %821
        %825 = vset.pattern.permute.xlu0 0
        %826 = vperm.xlu0 %825, %v546
        %v827 = vpop.permute.xlu0 %826
        %830 = vset.pattern.permute.xlu0 0
        %831 = vperm.xlu0 %830, %v547
        %v832 = vpop.permute.xlu0 %831
        %835 = vset.pattern.permute.xlu0 0
        %836 = vperm.xlu0 %835, %v548
        %v837 = vpop.permute.xlu0 %836
        %840 = vset.pattern.permute.xlu0 0
        %841 = vperm.xlu0 %840, %v549
        %v842 = vpop.permute.xlu0 %841
        %845 = vset.pattern.permute.xlu0 0
        %846 = vperm.xlu0 %845, %v550
        %v847 = vpop.permute.xlu0 %846
        %850 = vset.pattern.permute.xlu0 0
        %851 = vperm.xlu0 %850, %v551
        %v852 = vpop.permute.xlu0 %851
        %v854 = vmul.f32 %v758, %v777
        %v855 = vmul.f32 %v759, %v782
        %v856 = vmul.f32 %v760, %v787
        %v857 = vmul.f32 %v761, %v792
        %v858 = vmul.f32 %v762, %v797
        %v859 = vmul.f32 %v763, %v802
        %v860 = vmul.f32 %v764, %v807
        %v861 = vmul.f32 %v765, %v812
        %v862 = vmul.f32 %v766, %v817
        %v863 = vmul.f32 %v767, %v822
        %v864 = vmul.f32 %v768, %v827
        %v865 = vmul.f32 %v769, %v832
        %v866 = vmul.f32 %v770, %v837
        %v867 = vmul.f32 %v771, %v842
        %v868 = vmul.f32 %v772, %v847
        %v869 = vmul.f32 %v773, %v852
        %871 = vset.pattern.permute.xlu0 0
        %872 = vperm.xlu0 %871, %v552
        %v873 = vpop.permute.xlu0 %872
        %876 = vset.pattern.permute.xlu0 0
        %877 = vperm.xlu0 %876, %v553
        %v878 = vpop.permute.xlu0 %877
        %881 = vset.pattern.permute.xlu0 0
        %882 = vperm.xlu0 %881, %v554
        %v883 = vpop.permute.xlu0 %882
        %886 = vset.pattern.permute.xlu0 0
        %887 = vperm.xlu0 %886, %v555
        %v888 = vpop.permute.xlu0 %887
        %891 = vset.pattern.permute.xlu0 0
        %892 = vperm.xlu0 %891, %v556
        %v893 = vpop.permute.xlu0 %892
        %896 = vset.pattern.permute.xlu0 0
        %897 = vperm.xlu0 %896, %v557
        %v898 = vpop.permute.xlu0 %897
        %901 = vset.pattern.permute.xlu0 0
        %902 = vperm.xlu0 %901, %v558
        %v903 = vpop.permute.xlu0 %902
        %906 = vset.pattern.permute.xlu0 0
        %907 = vperm.xlu0 %906, %v559
        %v908 = vpop.permute.xlu0 %907
        %911 = vset.pattern.permute.xlu0 0
        %912 = vperm.xlu0 %911, %v560
        %v913 = vpop.permute.xlu0 %912
        %916 = vset.pattern.permute.xlu0 0
        %917 = vperm.xlu0 %916, %v561
        %v918 = vpop.permute.xlu0 %917
        %921 = vset.pattern.permute.xlu0 0
        %922 = vperm.xlu0 %921, %v562
        %v923 = vpop.permute.xlu0 %922
        %926 = vset.pattern.permute.xlu0 0
        %927 = vperm.xlu0 %926, %v563
        %v928 = vpop.permute.xlu0 %927
        %931 = vset.pattern.permute.xlu0 0
        %932 = vperm.xlu0 %931, %v564
        %v933 = vpop.permute.xlu0 %932
        %936 = vset.pattern.permute.xlu0 0
        %937 = vperm.xlu0 %936, %v565
        %v938 = vpop.permute.xlu0 %937
        %941 = vset.pattern.permute.xlu0 0
        %942 = vperm.xlu0 %941, %v566
        %v943 = vpop.permute.xlu0 %942
        %946 = vset.pattern.permute.xlu0 0
        %947 = vperm.xlu0 %946, %v567
        %v948 = vpop.permute.xlu0 %947
        %v950 = vadd.f32 %v854, %v873
        %v951 = vadd.f32 %v855, %v878
        %v952 = vadd.f32 %v856, %v883
        %v953 = vadd.f32 %v857, %v888
        %v954 = vadd.f32 %v858, %v893
        %v955 = vadd.f32 %v859, %v898
        %v956 = vadd.f32 %v860, %v903
        %v957 = vadd.f32 %v861, %v908
        %v958 = vadd.f32 %v862, %v913
        %v959 = vadd.f32 %v863, %v918
        %v960 = vadd.f32 %v864, %v923
        %v961 = vadd.f32 %v865, %v928
        %v962 = vadd.f32 %v866, %v933
        %v963 = vadd.f32 %v867, %v938
        %v964 = vadd.f32 %v868, %v943
        %v965 = vadd.f32 %v869, %v948
        %v966 = vld [vmem:[%s4] sm:$0xf]
        %v967 = vld [vmem:[%s4 + $0x4] sm:$0xf]
        %v968 = vld [vmem:[%s4 + $0x8] sm:$0xf]
        %v969 = vld [vmem:[%s4 + $0xc] sm:$0xf]
        %v970 = vpack.c.bf16 %v951, %v950
        %v971 = vpack.c.bf16 %v953, %v952
        %v972 = vpack.c.bf16 %v955, %v954
        %v973 = vpack.c.bf16 %v957, %v956
        %v974 = vpack.c.bf16 %v959, %v958
        %v975 = vpack.c.bf16 %v961, %v960
        %v976 = vpack.c.bf16 %v963, %v962
        %v977 = vpack.c.bf16 %v965, %v964
        %v978 = vld [vmem:[%s5] sm:$0xff]
        %v979 = vld [vmem:[%s5 + $0x8] sm:$0xff]
        %v980 = vld [vmem:[%s5 + $0x10] sm:$0xff]
        %v981 = vld [vmem:[%s5 + $0x18] sm:$0xff]
        %983 = vset.pattern.permute.xlu0 0
        %984 = vperm.xlu0 %983, %v978
        %v985 = vpop.permute.xlu0 %984
        %988 = vset.pattern.permute.xlu0 0
        %989 = vperm.xlu0 %988, %v979
        %v990 = vpop.permute.xlu0 %989
        %993 = vset.pattern.permute.xlu0 0
        %994 = vperm.xlu0 %993, %v980
        %v995 = vpop.permute.xlu0 %994
        %998 = vset.pattern.permute.xlu0 0
        %999 = vperm.xlu0 %998, %v981
        %v1000 = vpop.permute.xlu0 %999
        %v1006 = vunpack.c.l.b16 %v966
        %v1007 = vunpack.c.l.b16 %v967
        %v1008 = vunpack.c.l.b16 %v968
        %v1009 = vunpack.c.l.b16 %v969
        %v1010 = vpack.c.b16 %v1007, %v1006
        %v1011 = vpack.c.b16 %v1009, %v1008
        %1014 = vmatpush.bf16.msra.mxu0 %v977
        %1015 = vmatpush.bf16.msra.mxu0 %v976
        %1016 = vmatpush.bf16.msra.mxu0 %v975
        %1017 = vmatpush.bf16.msra.mxu0 %v974
        %1018 = vmatpush.bf16.msra.mxu0 %v973
        %1019 = vmatpush.bf16.msra.mxu0 %v972
        %1020 = vmatpush.bf16.msra.mxu0 %v971
        %1021 = vmatpush.bf16.msra.mxu0 %v970
        %1022 = vmatmul.bf16.gmra.mxu0 %v1010
        %v1023 = vpop.f32.mrf.mxu0
        %v1024 = vadd.f32 %v985, %v1023
        %v1025 = vpop.f32.mrf.mxu0
        %v1026 = vadd.f32 %v990, %v1025
        %1027 = vmatmul.bf16.gmra.mxu0 %v1011
        %v1028 = vpop.f32.mrf.mxu0
        %v1029 = vadd.f32 %v995, %v1028
        %v1030 = vpop.f32.mrf.mxu0
        %v1031 = vadd.f32 %v1000, %v1030
        %1032 = vdwg.mxu0
        %v1033 = vld [vmem:[%s9] sm:$0xff]
        %v1034 = vld [vmem:[%s9 + $0x8] sm:$0xff]
        %v1035 = vld [vmem:[%s9 + $0x10] sm:$0xff]
        %v1036 = vld [vmem:[%s9 + $0x18] sm:$0xff]
        %v1037 = vld [vmem:[%s9 + $0x20] sm:$0xff]
        %v1038 = vld [vmem:[%s9 + $0x28] sm:$0xff]
        %v1039 = vld [vmem:[%s9 + $0x30] sm:$0xff]
        %v1040 = vld [vmem:[%s9 + $0x38] sm:$0xff]
        %v1041 = vld [vmem:[%s9 + $0x40] sm:$0xff]
        %v1042 = vld [vmem:[%s9 + $0x48] sm:$0xff]
        %v1043 = vld [vmem:[%s9 + $0x50] sm:$0xff]
        %v1044 = vld [vmem:[%s9 + $0x58] sm:$0xff]
        %v1045 = vld [vmem:[%s9 + $0x60] sm:$0xff]
        %v1046 = vld [vmem:[%s9 + $0x68] sm:$0xff]
        %v1047 = vld [vmem:[%s9 + $0x70] sm:$0xff]
        %v1048 = vld [vmem:[%s9 + $0x78] sm:$0xff]
        %s1049 = sld [smem:[#allocation3]]
        %s1050 = sld [smem:[#allocation3 + $0x1]]
        %v1051 = vld [vmem:[%s8] sm:$0xf]
        %v1052 = vld [vmem:[%s8 + $0x4] sm:$0xf]
        %v1053 = vld [vmem:[%s8 + $0x8] sm:$0xf]
        %v1054 = vld [vmem:[%s8 + $0xc] sm:$0xf]
        %v1055 = vld [vmem:[%s8 + $0x10] sm:$0xf]
        %v1056 = vld [vmem:[%s8 + $0x14] sm:$0xf]
        %v1057 = vld [vmem:[%s8 + $0x18] sm:$0xf]
        %v1058 = vld [vmem:[%s8 + $0x1c] sm:$0xf]
        %v1059 = vld [vmem:[%s8 + $0x20] sm:$0xf]
        %v1060 = vld [vmem:[%s8 + $0x24] sm:$0xf]
        %v1061 = vld [vmem:[%s8 + $0x28] sm:$0xf]
        %v1062 = vld [vmem:[%s8 + $0x2c] sm:$0xf]
        %v1063 = vld [vmem:[%s8 + $0x30] sm:$0xf]
        %v1064 = vld [vmem:[%s8 + $0x34] sm:$0xf]
        %v1065 = vld [vmem:[%s8 + $0x38] sm:$0xf]
        %v1066 = vld [vmem:[%s8 + $0x3c] sm:$0xf]
        %v1067 = vpack.c.bf16 %v1026, %v1024
        %v1068 = vpack.c.bf16 %v1031, %v1029
        %1070 = vset.pattern.permute.xlu0 0
        %1071 = vperm.xlu0 %1070, %v1033
        %v1072 = vpop.permute.xlu0 %1071
        %1075 = vset.pattern.permute.xlu0 0
        %1076 = vperm.xlu0 %1075, %v1034
        %v1077 = vpop.permute.xlu0 %1076
        %1080 = vset.pattern.permute.xlu0 0
        %1081 = vperm.xlu0 %1080, %v1035
        %v1082 = vpop.permute.xlu0 %1081
        %1085 = vset.pattern.permute.xlu0 0
        %1086 = vperm.xlu0 %1085, %v1036
        %v1087 = vpop.permute.xlu0 %1086
        %1090 = vset.pattern.permute.xlu0 0
        %1091 = vperm.xlu0 %1090, %v1037
        %v1092 = vpop.permute.xlu0 %1091
        %1095 = vset.pattern.permute.xlu0 0
        %1096 = vperm.xlu0 %1095, %v1038
        %v1097 = vpop.permute.xlu0 %1096
        %1100 = vset.pattern.permute.xlu0 0
        %1101 = vperm.xlu0 %1100, %v1039
        %v1102 = vpop.permute.xlu0 %1101
        %1105 = vset.pattern.permute.xlu0 0
        %1106 = vperm.xlu0 %1105, %v1040
        %v1107 = vpop.permute.xlu0 %1106
        %1110 = vset.pattern.permute.xlu0 0
        %1111 = vperm.xlu0 %1110, %v1041
        %v1112 = vpop.permute.xlu0 %1111
        %1115 = vset.pattern.permute.xlu0 0
        %1116 = vperm.xlu0 %1115, %v1042
        %v1117 = vpop.permute.xlu0 %1116
        %1120 = vset.pattern.permute.xlu0 0
        %1121 = vperm.xlu0 %1120, %v1043
        %v1122 = vpop.permute.xlu0 %1121
        %1125 = vset.pattern.permute.xlu0 0
        %1126 = vperm.xlu0 %1125, %v1044
        %v1127 = vpop.permute.xlu0 %1126
        %1130 = vset.pattern.permute.xlu0 0
        %1131 = vperm.xlu0 %1130, %v1045
        %v1132 = vpop.permute.xlu0 %1131
        %1135 = vset.pattern.permute.xlu0 0
        %1136 = vperm.xlu0 %1135, %v1046
        %v1137 = vpop.permute.xlu0 %1136
        %1140 = vset.pattern.permute.xlu0 0
        %1141 = vperm.xlu0 %1140, %v1047
        %v1142 = vpop.permute.xlu0 %1141
        %1145 = vset.pattern.permute.xlu0 0
        %1146 = vperm.xlu0 %1145, %v1048
        %v1147 = vpop.permute.xlu0 %1146
        %v1165 = vunpack.c.l.b16 %v1051
        %v1166 = vunpack.c.l.b16 %v1052
        %v1167 = vunpack.c.l.b16 %v1053
        %v1168 = vunpack.c.l.b16 %v1054
        %v1169 = vunpack.c.l.b16 %v1055
        %v1170 = vunpack.c.l.b16 %v1056
        %v1171 = vunpack.c.l.b16 %v1057
        %v1172 = vunpack.c.l.b16 %v1058
        %v1173 = vunpack.c.l.b16 %v1059
        %v1174 = vunpack.c.l.b16 %v1060
        %v1175 = vunpack.c.l.b16 %v1061
        %v1176 = vunpack.c.l.b16 %v1062
        %v1177 = vunpack.c.l.b16 %v1063
        %v1178 = vunpack.c.l.b16 %v1064
        %v1179 = vunpack.c.l.b16 %v1065
        %v1180 = vunpack.c.l.b16 %v1066
        %v1181 = vpack.c.b16 %v1166, %v1165
        %v1182 = vpack.c.b16 %v1168, %v1167
        %v1183 = vpack.c.b16 %v1170, %v1169
        %v1184 = vpack.c.b16 %v1172, %v1171
        %v1185 = vpack.c.b16 %v1174, %v1173
        %v1186 = vpack.c.b16 %v1176, %v1175
        %v1187 = vpack.c.b16 %v1178, %v1177
        %v1188 = vpack.c.b16 %v1180, %v1179
        %v1190 = vsel %vm568, %v1181, 0
        %v1193 = vsel %vm568, %v1182, 0
        %v1196 = vsel %vm568, %v1183, 0
        %v1199 = vsel %vm568, %v1184, 0
        %v1202 = vsel %vm568, %v1185, 0
        %v1205 = vsel %vm568, %v1186, 0
        %v1208 = vsel %vm568, %v1187, 0
        %v1211 = vsel %vm568, %v1188, 0
        %1213 = vmatpush.bf16.msra.mxu0 0
        %1214 = vmatpush.bf16.msra.mxu0 0
        %1215 = vmatpush.bf16.msra.mxu0 0
        %1216 = vmatpush.bf16.msra.mxu0 0
        %1217 = vmatpush.bf16.msra.mxu0 0
        %1218 = vmatpush.bf16.msra.mxu0 0
        %1219 = vmatpush.bf16.msra.mxu0 %v1068
        %1220 = vmatpush.bf16.msra.mxu0 %v1067
        %1221 = vmatmul.bf16.gmra.mxu0 %v1190
        %v1222 = vpop.f32.mrf.mxu0
        %v1223 = vadd.f32 %v1072, %v1222
        %v1224 = vpop.f32.mrf.mxu0
        %v1225 = vadd.f32 %v1077, %v1224
        %1226 = vmatmul.bf16.gmra.mxu0 %v1193
        %v1227 = vpop.f32.mrf.mxu0
        %v1228 = vadd.f32 %v1082, %v1227
        %v1229 = vpop.f32.mrf.mxu0
        %v1230 = vadd.f32 %v1087, %v1229
        %1231 = vmatmul.bf16.gmra.mxu0 %v1196
        %v1232 = vpop.f32.mrf.mxu0
        %v1233 = vadd.f32 %v1092, %v1232
        %v1234 = vpop.f32.mrf.mxu0
        %v1235 = vadd.f32 %v1097, %v1234
        %1236 = vmatmul.bf16.gmra.mxu0 %v1199
        %v1237 = vpop.f32.mrf.mxu0
        %v1238 = vadd.f32 %v1102, %v1237
        %v1239 = vpop.f32.mrf.mxu0
        %v1240 = vadd.f32 %v1107, %v1239
        %1241 = vmatmul.bf16.gmra.mxu0 %v1202
        %v1242 = vpop.f32.mrf.mxu0
        %v1243 = vadd.f32 %v1112, %v1242
        %v1244 = vpop.f32.mrf.mxu0
        %v1245 = vadd.f32 %v1117, %v1244
        %1246 = vmatmul.bf16.gmra.mxu0 %v1205
        %v1247 = vpop.f32.mrf.mxu0
        %v1248 = vadd.f32 %v1122, %v1247
        %v1249 = vpop.f32.mrf.mxu0
        %v1250 = vadd.f32 %v1127, %v1249
        %1251 = vmatmul.bf16.gmra.mxu0 %v1208
        %v1252 = vpop.f32.mrf.mxu0
        %v1253 = vadd.f32 %v1132, %v1252
        %v1254 = vpop.f32.mrf.mxu0
        %v1255 = vadd.f32 %v1137, %v1254
        %1256 = vmatmul.bf16.gmra.mxu0 %v1211
        %v1257 = vpop.f32.mrf.mxu0
        %v1258 = vadd.f32 %v1142, %v1257
        %v1259 = vpop.f32.mrf.mxu0
        %v1260 = vadd.f32 %v1147, %v1259
        %1261 = vdwg.mxu0
        %vm1262 = vcmp.ge.f32.partialorder %v1223, 0.0
        %vm1263 = vcmp.ge.f32.partialorder %v1225, 0.0
        %vm1264 = vcmp.ge.f32.partialorder %v1228, 0.0
        %vm1265 = vcmp.ge.f32.partialorder %v1230, 0.0
        %vm1266 = vcmp.ge.f32.partialorder %v1233, 0.0
        %vm1267 = vcmp.ge.f32.partialorder %v1235, 0.0
        %vm1268 = vcmp.ge.f32.partialorder %v1238, 0.0
        %vm1269 = vcmp.ge.f32.partialorder %v1240, 0.0
        %vm1270 = vcmp.ge.f32.partialorder %v1243, 0.0
        %vm1271 = vcmp.ge.f32.partialorder %v1245, 0.0
        %vm1272 = vcmp.ge.f32.partialorder %v1248, 0.0
        %vm1273 = vcmp.ge.f32.partialorder %v1250, 0.0
        %vm1274 = vcmp.ge.f32.partialorder %v1253, 0.0
        %vm1275 = vcmp.ge.f32.partialorder %v1255, 0.0
        %vm1276 = vcmp.ge.f32.partialorder %v1258, 0.0
        %vm1277 = vcmp.ge.f32.partialorder %v1260, 0.0
        %v1278 = vstv %s1049
        %v1279 = vmul.f32 %v1278, %v1223
        %v1280 = vmul.f32 %v1278, %v1225
        %v1281 = vmul.f32 %v1278, %v1228
        %v1282 = vmul.f32 %v1278, %v1230
        %v1283 = vmul.f32 %v1278, %v1233
        %v1284 = vmul.f32 %v1278, %v1235
        %v1285 = vmul.f32 %v1278, %v1238
        %v1286 = vmul.f32 %v1278, %v1240
        %v1287 = vmul.f32 %v1278, %v1243
        %v1288 = vmul.f32 %v1278, %v1245
        %v1289 = vmul.f32 %v1278, %v1248
        %v1290 = vmul.f32 %v1278, %v1250
        %v1291 = vmul.f32 %v1278, %v1253
        %v1292 = vmul.f32 %v1278, %v1255
        %v1293 = vmul.f32 %v1278, %v1258
        %v1294 = vmul.f32 %v1278, %v1260
        %v1295 = vsel %vm1262, %v1223, %v1279
        %v1296 = vsel %vm1263, %v1225, %v1280
        %v1297 = vsel %vm1264, %v1228, %v1281
        %v1298 = vsel %vm1265, %v1230, %v1282
        %v1299 = vsel %vm1266, %v1233, %v1283
        %v1300 = vsel %vm1267, %v1235, %v1284
        %v1301 = vsel %vm1268, %v1238, %v1285
        %v1302 = vsel %vm1269, %v1240, %v1286
        %v1303 = vsel %vm1270, %v1243, %v1287
        %v1304 = vsel %vm1271, %v1245, %v1288
        %v1305 = vsel %vm1272, %v1248, %v1289
        %v1306 = vsel %vm1273, %v1250, %v1290
        %v1307 = vsel %vm1274, %v1253, %v1291
        %v1308 = vsel %vm1275, %v1255, %v1292
        %v1309 = vsel %vm1276, %v1258, %v1293
        %v1310 = vsel %vm1277, %v1260, %v1294
        %v1311 = vsel %vm568, %v1295, 0.0
        %v1312 = vsel %vm568, %v1296, 0.0
        %v1313 = vadd.f32 %v1311, %v1312
        %v1314 = vsel %vm568, %v1297, 0.0
        %v1315 = vadd.f32 %v1313, %v1314
        %v1316 = vsel %vm568, %v1298, 0.0
        %v1317 = vadd.f32 %v1315, %v1316
        %v1318 = vsel %vm568, %v1299, 0.0
        %v1319 = vadd.f32 %v1317, %v1318
        %v1320 = vsel %vm568, %v1300, 0.0
        %v1321 = vadd.f32 %v1319, %v1320
        %v1322 = vsel %vm568, %v1301, 0.0
        %v1323 = vadd.f32 %v1321, %v1322
        %v1324 = vsel %vm568, %v1302, 0.0
        %v1325 = vadd.f32 %v1323, %v1324
        %v1326 = vsel %vm568, %v1303, 0.0
        %v1327 = vadd.f32 %v1325, %v1326
        %v1328 = vsel %vm568, %v1304, 0.0
        %v1329 = vadd.f32 %v1327, %v1328
        %v1330 = vsel %vm568, %v1305, 0.0
        %v1331 = vadd.f32 %v1329, %v1330
        %v1332 = vsel %vm568, %v1306, 0.0
        %v1333 = vadd.f32 %v1331, %v1332
        %v1334 = vsel %vm568, %v1307, 0.0
        %v1335 = vadd.f32 %v1333, %v1334
        %v1336 = vsel %vm568, %v1308, 0.0
        %v1337 = vadd.f32 %v1335, %v1336
        %v1338 = vsel %vm568, %v1309, 0.0
        %v1339 = vadd.f32 %v1337, %v1338
        %v1340 = vsel %vm568, %v1310, 0.0
        %v1341 = vadd.f32 %v1339, %v1340
        %v1342 = vrot.slane %v1341, 4
        %v1343 = vadd.f32 %v1341, %v1342
        %v1344 = vrot.slane %v1343, 2
        %v1345 = vadd.f32 %v1343, %v1344
        %v1346 = vrot.slane %v1345, 1
        %v1347 = vadd.f32 %v1345, %v1346
        %v1348 = vmul.f32 %v1295, %v1295
        %v1349 = vmul.f32 %v1296, %v1296
        %v1350 = vmul.f32 %v1297, %v1297
        %v1351 = vmul.f32 %v1298, %v1298
        %v1352 = vmul.f32 %v1299, %v1299
        %v1353 = vmul.f32 %v1300, %v1300
        %v1354 = vmul.f32 %v1301, %v1301
        %v1355 = vmul.f32 %v1302, %v1302
        %v1356 = vmul.f32 %v1303, %v1303
        %v1357 = vmul.f32 %v1304, %v1304
        %v1358 = vmul.f32 %v1305, %v1305
        %v1359 = vmul.f32 %v1306, %v1306
        %v1360 = vmul.f32 %v1307, %v1307
        %v1361 = vmul.f32 %v1308, %v1308
        %v1362 = vmul.f32 %v1309, %v1309
        %v1363 = vmul.f32 %v1310, %v1310
        %v1364 = vsel %vm568, %v1348, 0.0
        %v1365 = vsel %vm568, %v1349, 0.0
        %v1366 = vadd.f32 %v1364, %v1365
        %v1367 = vsel %vm568, %v1350, 0.0
        %v1368 = vadd.f32 %v1366, %v1367
        %v1369 = vsel %vm568, %v1351, 0.0
        %v1370 = vadd.f32 %v1368, %v1369
        %v1371 = vsel %vm568, %v1352, 0.0
        %v1372 = vadd.f32 %v1370, %v1371
        %v1373 = vsel %vm568, %v1353, 0.0
        %v1374 = vadd.f32 %v1372, %v1373
        %v1375 = vsel %vm568, %v1354, 0.0
        %v1376 = vadd.f32 %v1374, %v1375
        %v1377 = vsel %vm568, %v1355, 0.0
        %v1378 = vadd.f32 %v1376, %v1377
        %v1379 = vsel %vm568, %v1356, 0.0
        %v1380 = vadd.f32 %v1378, %v1379
        %v1381 = vsel %vm568, %v1357, 0.0
        %v1382 = vadd.f32 %v1380, %v1381
        %v1383 = vsel %vm568, %v1358, 0.0
        %v1384 = vadd.f32 %v1382, %v1383
        %v1385 = vsel %vm568, %v1359, 0.0
        %v1386 = vadd.f32 %v1384, %v1385
        %v1387 = vsel %vm568, %v1360, 0.0
        %v1388 = vadd.f32 %v1386, %v1387
        %v1389 = vsel %vm568, %v1361, 0.0
        %v1390 = vadd.f32 %v1388, %v1389
        %v1391 = vsel %vm568, %v1362, 0.0
        %v1392 = vadd.f32 %v1390, %v1391
        %v1393 = vsel %vm568, %v1363, 0.0
        %v1394 = vadd.f32 %v1392, %v1393
        %v1395 = vrot.slane %v1394, 4
        %v1396 = vadd.f32 %v1394, %v1395
        %v1397 = vrot.slane %v1396, 2
        %v1398 = vadd.f32 %v1396, %v1397
        %v1399 = vrot.slane %v1398, 1
        %v1400 = vadd.f32 %v1398, %v1399
        %v1401 = vsel %vm659, %v1347, %v1400
        %1403 = vrot.lane.b32.xlu0 %v1401, 1
        %v1404 = vpop.permute.xlu0 %1403
        %v1406 = vsel %vm665, 0.0, %v1404
        %v1407 = vadd.f32 %v1401, %v1406
        %1409 = vrot.lane.b32.xlu0 %v1407, 2
        %v1410 = vpop.permute.xlu0 %1409
        %v1412 = vsel %vm672, 0.0, %v1410
        %v1413 = vadd.f32 %v1407, %v1412
        %1415 = vrot.lane.b32.xlu0 %v1413, 4
        %v1416 = vpop.permute.xlu0 %1415
        %v1418 = vsel %vm679, 0.0, %v1416
        %v1419 = vadd.f32 %v1413, %v1418
        %1421 = vrot.lane.b32.xlu0 %v1419, 8
        %v1422 = vpop.permute.xlu0 %1421
        %v1424 = vsel %vm686, 0.0, %v1422
        %v1425 = vadd.f32 %v1419, %v1424
        %1427 = vrot.lane.b32.xlu0 %v1425, 16
        %v1428 = vpop.permute.xlu0 %1427
        %v1430 = vsel %vm693, 0.0, %v1428
        %v1431 = vadd.f32 %v1425, %v1430
        %v1432 = vmul.f32 %v1431, %v714
        %v1433 = vmul.f32 %v1432, 2.0
        %v1434 = vmul.f32 %v1433, %v1431
        %v1436 = vrot.slane %v1434, 7
        %v1438 = vsub.f32 %v1431, %v1436
        %v1439 = vmul.f32 %v1438, %v714
        %v1440 = vmul.f32 %v1432, %v1432
        %v1442 = vrot.slane %v1440, 7
        %v1444 = vadd.f32 %v1439, %v1442
        %v1445 = vmax.f32 %v1444, 0.0
        %v1446 = vadd.f32 %v1445, 1e-08
        %v1447 = vrsqrt.pop %v1446
        %v1448 = vmul.f32 %v1447, %v1446
        %v1449 = vmul.f32 %v1448, %v1447
        %v1450 = vmul.f32 0.5, %v1449
        %v1451 = vsub.f32 1.5, %v1450
        %v1452 = vmul.f32 %v1447, %v1451
        %vm1453 = vweird.f32 %v1446
        %vm1454 = vweird.f32 %v1447
        %vm1455 = vmor %vm1453, %vm1454
        %v1456 = vsel %vm1455, %v1447, %v1452
        %v1457 = vperm.slane %v1432, 0
        %v1458 = vsub.f32 %v1295, %v1457
        %v1459 = vsub.f32 %v1296, %v1457
        %v1460 = vsub.f32 %v1297, %v1457
        %v1461 = vsub.f32 %v1298, %v1457
        %v1462 = vsub.f32 %v1299, %v1457
        %v1463 = vsub.f32 %v1300, %v1457
        %v1464 = vsub.f32 %v1301, %v1457
        %v1465 = vsub.f32 %v1302, %v1457
        %v1466 = vsub.f32 %v1303, %v1457
        %v1467 = vsub.f32 %v1304, %v1457
        %v1468 = vsub.f32 %v1305, %v1457
        %v1469 = vsub.f32 %v1306, %v1457
        %v1470 = vsub.f32 %v1307, %v1457
        %v1471 = vsub.f32 %v1308, %v1457
        %v1472 = vsub.f32 %v1309, %v1457
        %v1473 = vsub.f32 %v1310, %v1457
        %v1474 = vperm.slane %v1456, 1
        %v1475 = vmul.f32 %v1458, %v1474
        %v1476 = vmul.f32 %v1459, %v1474
        %v1477 = vmul.f32 %v1460, %v1474
        %v1478 = vmul.f32 %v1461, %v1474
        %v1479 = vmul.f32 %v1462, %v1474
        %v1480 = vmul.f32 %v1463, %v1474
        %v1481 = vmul.f32 %v1464, %v1474
        %v1482 = vmul.f32 %v1465, %v1474
        %v1483 = vmul.f32 %v1466, %v1474
        %v1484 = vmul.f32 %v1467, %v1474
        %v1485 = vmul.f32 %v1468, %v1474
        %v1486 = vmul.f32 %v1469, %v1474
        %v1487 = vmul.f32 %v1470, %v1474
        %v1488 = vmul.f32 %v1471, %v1474
        %v1489 = vmul.f32 %v1472, %v1474
        %v1490 = vmul.f32 %v1473, %v1474
        %1491 = vset.pattern.permute.xlu0 1
        %1492 = vperm.xlu0 %1491, %v1033
        %v1493 = vpop.permute.xlu0 %1492
        %1495 = vset.pattern.permute.xlu0 1
        %1496 = vperm.xlu0 %1495, %v1034
        %v1497 = vpop.permute.xlu0 %1496
        %1499 = vset.pattern.permute.xlu0 1
        %1500 = vperm.xlu0 %1499, %v1035
        %v1501 = vpop.permute.xlu0 %1500
        %1503 = vset.pattern.permute.xlu0 1
        %1504 = vperm.xlu0 %1503, %v1036
        %v1505 = vpop.permute.xlu0 %1504
        %1507 = vset.pattern.permute.xlu0 1
        %1508 = vperm.xlu0 %1507, %v1037
        %v1509 = vpop.permute.xlu0 %1508
        %1511 = vset.pattern.permute.xlu0 1
        %1512 = vperm.xlu0 %1511, %v1038
        %v1513 = vpop.permute.xlu0 %1512
        %1515 = vset.pattern.permute.xlu0 1
        %1516 = vperm.xlu0 %1515, %v1039
        %v1517 = vpop.permute.xlu0 %1516
        %1519 = vset.pattern.permute.xlu0 1
        %1520 = vperm.xlu0 %1519, %v1040
        %v1521 = vpop.permute.xlu0 %1520
        %1523 = vset.pattern.permute.xlu0 1
        %1524 = vperm.xlu0 %1523, %v1041
        %v1525 = vpop.permute.xlu0 %1524
        %1527 = vset.pattern.permute.xlu0 1
        %1528 = vperm.xlu0 %1527, %v1042
        %v1529 = vpop.permute.xlu0 %1528
        %1531 = vset.pattern.permute.xlu0 1
        %1532 = vperm.xlu0 %1531, %v1043
        %v1533 = vpop.permute.xlu0 %1532
        %1535 = vset.pattern.permute.xlu0 1
        %1536 = vperm.xlu0 %1535, %v1044
        %v1537 = vpop.permute.xlu0 %1536
        %1539 = vset.pattern.permute.xlu0 1
        %1540 = vperm.xlu0 %1539, %v1045
        %v1541 = vpop.permute.xlu0 %1540
        %1543 = vset.pattern.permute.xlu0 1
        %1544 = vperm.xlu0 %1543, %v1046
        %v1545 = vpop.permute.xlu0 %1544
        %1547 = vset.pattern.permute.xlu0 1
        %1548 = vperm.xlu0 %1547, %v1047
        %v1549 = vpop.permute.xlu0 %1548
        %1551 = vset.pattern.permute.xlu0 1
        %1552 = vperm.xlu0 %1551, %v1048
        %v1553 = vpop.permute.xlu0 %1552
        %v1555 = vmul.f32 %v1475, %v1493
        %v1556 = vmul.f32 %v1476, %v1497
        %v1557 = vmul.f32 %v1477, %v1501
        %v1558 = vmul.f32 %v1478, %v1505
        %v1559 = vmul.f32 %v1479, %v1509
        %v1560 = vmul.f32 %v1480, %v1513
        %v1561 = vmul.f32 %v1481, %v1517
        %v1562 = vmul.f32 %v1482, %v1521
        %v1563 = vmul.f32 %v1483, %v1525
        %v1564 = vmul.f32 %v1484, %v1529
        %v1565 = vmul.f32 %v1485, %v1533
        %v1566 = vmul.f32 %v1486, %v1537
        %v1567 = vmul.f32 %v1487, %v1541
        %v1568 = vmul.f32 %v1488, %v1545
        %v1569 = vmul.f32 %v1489, %v1549
        %v1570 = vmul.f32 %v1490, %v1553
        %1571 = vset.pattern.permute.xlu0 2
        %1572 = vperm.xlu0 %1571, %v1033
        %v1573 = vpop.permute.xlu0 %1572
        %1575 = vset.pattern.permute.xlu0 2
        %1576 = vperm.xlu0 %1575, %v1034
        %v1577 = vpop.permute.xlu0 %1576
        %1579 = vset.pattern.permute.xlu0 2
        %1580 = vperm.xlu0 %1579, %v1035
        %v1581 = vpop.permute.xlu0 %1580
        %1583 = vset.pattern.permute.xlu0 2
        %1584 = vperm.xlu0 %1583, %v1036
        %v1585 = vpop.permute.xlu0 %1584
        %1587 = vset.pattern.permute.xlu0 2
        %1588 = vperm.xlu0 %1587, %v1037
        %v1589 = vpop.permute.xlu0 %1588
        %1591 = vset.pattern.permute.xlu0 2
        %1592 = vperm.xlu0 %1591, %v1038
        %v1593 = vpop.permute.xlu0 %1592
        %1595 = vset.pattern.permute.xlu0 2
        %1596 = vperm.xlu0 %1595, %v1039
        %v1597 = vpop.permute.xlu0 %1596
        %1599 = vset.pattern.permute.xlu0 2
        %1600 = vperm.xlu0 %1599, %v1040
        %v1601 = vpop.permute.xlu0 %1600
        %1603 = vset.pattern.permute.xlu0 2
        %1604 = vperm.xlu0 %1603, %v1041
        %v1605 = vpop.permute.xlu0 %1604
        %1607 = vset.pattern.permute.xlu0 2
        %1608 = vperm.xlu0 %1607, %v1042
        %v1609 = vpop.permute.xlu0 %1608
        %1611 = vset.pattern.permute.xlu0 2
        %1612 = vperm.xlu0 %1611, %v1043
        %v1613 = vpop.permute.xlu0 %1612
        %1615 = vset.pattern.permute.xlu0 2
        %1616 = vperm.xlu0 %1615, %v1044
        %v1617 = vpop.permute.xlu0 %1616
        %1619 = vset.pattern.permute.xlu0 2
        %1620 = vperm.xlu0 %1619, %v1045
        %v1621 = vpop.permute.xlu0 %1620
        %1623 = vset.pattern.permute.xlu0 2
        %1624 = vperm.xlu0 %1623, %v1046
        %v1625 = vpop.permute.xlu0 %1624
        %1627 = vset.pattern.permute.xlu0 2
        %1628 = vperm.xlu0 %1627, %v1047
        %v1629 = vpop.permute.xlu0 %1628
        %1631 = vset.pattern.permute.xlu0 2
        %1632 = vperm.xlu0 %1631, %v1048
        %v1633 = vpop.permute.xlu0 %1632
        %v1635 = vadd.f32 %v1555, %v1573
        %v1636 = vadd.f32 %v1556, %v1577
        %v1637 = vadd.f32 %v1557, %v1581
        %v1638 = vadd.f32 %v1558, %v1585
        %v1639 = vadd.f32 %v1559, %v1589
        %v1640 = vadd.f32 %v1560, %v1593
        %v1641 = vadd.f32 %v1561, %v1597
        %v1642 = vadd.f32 %v1562, %v1601
        %v1643 = vadd.f32 %v1563, %v1605
        %v1644 = vadd.f32 %v1564, %v1609
        %v1645 = vadd.f32 %v1565, %v1613
        %v1646 = vadd.f32 %v1566, %v1617
        %v1647 = vadd.f32 %v1567, %v1621
        %v1648 = vadd.f32 %v1568, %v1625
        %v1649 = vadd.f32 %v1569, %v1629
        %v1650 = vadd.f32 %v1570, %v1633
        %1651 = vst.msk [vmem:[#allocation2 + $0x8] sm:$0xff] %vm568, %v1635
        %1652 = vst.msk [vmem:[#allocation2 + $0x18] sm:$0xff] %vm568, %v1636
        %1653 = vst.msk [vmem:[#allocation2 + $0x28] sm:$0xff] %vm568, %v1637
        %1654 = vst.msk [vmem:[#allocation2 + $0x38] sm:$0xff] %vm568, %v1638
        %1655 = vst.msk [vmem:[#allocation2 + $0x48] sm:$0xff] %vm568, %v1639
        %1656 = vst.msk [vmem:[#allocation2 + $0x58] sm:$0xff] %vm568, %v1640
        %1657 = vst.msk [vmem:[#allocation2 + $0x68] sm:$0xff] %vm568, %v1641
        %1658 = vst.msk [vmem:[#allocation2 + $0x78] sm:$0xff] %vm568, %v1642
        %1659 = vst.msk [vmem:[#allocation2 + $0x88] sm:$0xff] %vm568, %v1643
        %1660 = vst.msk [vmem:[#allocation2 + $0x98] sm:$0xff] %vm568, %v1644
        %1661 = vst.msk [vmem:[#allocation2 + $0xa8] sm:$0xff] %vm568, %v1645
        %1662 = vst.msk [vmem:[#allocation2 + $0xb8] sm:$0xff] %vm568, %v1646
        %1663 = vst.msk [vmem:[#allocation2 + $0xc8] sm:$0xff] %vm568, %v1647
        %1664 = vst.msk [vmem:[#allocation2 + $0xd8] sm:$0xff] %vm568, %v1648
        %1665 = vst.msk [vmem:[#allocation2 + $0xe8] sm:$0xff] %vm568, %v1649
        %1666 = vst.msk [vmem:[#allocation2 + $0xf8] sm:$0xff] %vm568, %v1650
        %v1667 = vld [vmem:[%s10] sm:$0xff]
        %v1668 = vld [vmem:[%s10 + $0x8] sm:$0xff]
        %v1669 = vld [vmem:[%s10 + $0x10] sm:$0xff]
        %v1670 = vld [vmem:[%s10 + $0x18] sm:$0xff]
        %v1671 = vld [vmem:[%s10 + $0x20] sm:$0xff]
        %v1672 = vld [vmem:[%s10 + $0x28] sm:$0xff]
        %v1673 = vld [vmem:[%s10 + $0x30] sm:$0xff]
        %v1674 = vld [vmem:[%s10 + $0x38] sm:$0xff]
        %v1675 = vld [vmem:[%s10 + $0x40] sm:$0xff]
        %v1676 = vld [vmem:[%s10 + $0x48] sm:$0xff]
        %v1677 = vld [vmem:[%s10 + $0x50] sm:$0xff]
        %v1678 = vld [vmem:[%s10 + $0x58] sm:$0xff]
        %v1679 = vld [vmem:[%s10 + $0x60] sm:$0xff]
        %v1680 = vld [vmem:[%s10 + $0x68] sm:$0xff]
        %v1681 = vld [vmem:[%s10 + $0x70] sm:$0xff]
        %v1682 = vld [vmem:[%s10 + $0x78] sm:$0xff]
        %v1683 = vld [vmem:[#allocation2] sm:$0xff]
        %v1684 = vld [vmem:[#allocation2 + $0x8] sm:$0xff]
        %v1685 = vld [vmem:[#allocation2 + $0x10] sm:$0xff]
        %v1686 = vld [vmem:[#allocation2 + $0x18] sm:$0xff]
        %v1687 = vld [vmem:[#allocation2 + $0x20] sm:$0xff]
        %v1688 = vld [vmem:[#allocation2 + $0x28] sm:$0xff]
        %v1689 = vld [vmem:[#allocation2 + $0x30] sm:$0xff]
        %v1690 = vld [vmem:[#allocation2 + $0x38] sm:$0xff]
        %v1691 = vld [vmem:[#allocation2 + $0x40] sm:$0xff]
        %v1692 = vld [vmem:[#allocation2 + $0x48] sm:$0xff]
        %v1693 = vld [vmem:[#allocation2 + $0x50] sm:$0xff]
        %v1694 = vld [vmem:[#allocation2 + $0x58] sm:$0xff]
        %v1695 = vld [vmem:[#allocation2 + $0x60] sm:$0xff]
        %v1696 = vld [vmem:[#allocation2 + $0x68] sm:$0xff]
        %v1697 = vld [vmem:[#allocation2 + $0x70] sm:$0xff]
        %v1698 = vld [vmem:[#allocation2 + $0x78] sm:$0xff]
        %v1699 = vld [vmem:[#allocation2 + $0x80] sm:$0xff]
        %v1700 = vld [vmem:[#allocation2 + $0x88] sm:$0xff]
        %v1701 = vld [vmem:[#allocation2 + $0x90] sm:$0xff]
        %v1702 = vld [vmem:[#allocation2 + $0x98] sm:$0xff]
        %v1703 = vld [vmem:[#allocation2 + $0xa0] sm:$0xff]
        %v1704 = vld [vmem:[#allocation2 + $0xa8] sm:$0xff]
        %v1705 = vld [vmem:[#allocation2 + $0xb0] sm:$0xff]
        %v1706 = vld [vmem:[#allocation2 + $0xb8] sm:$0xff]
        %v1707 = vld [vmem:[#allocation2 + $0xc0] sm:$0xff]
        %v1708 = vld [vmem:[#allocation2 + $0xc8] sm:$0xff]
        %v1709 = vld [vmem:[#allocation2 + $0xd0] sm:$0xff]
        %v1710 = vld [vmem:[#allocation2 + $0xd8] sm:$0xff]
        %v1711 = vld [vmem:[#allocation2 + $0xe0] sm:$0xff]
        %v1712 = vld [vmem:[#allocation2 + $0xe8] sm:$0xff]
        %v1713 = vld [vmem:[#allocation2 + $0xf0] sm:$0xff]
        %v1714 = vld [vmem:[#allocation2 + $0xf8] sm:$0xff]
        %1716 = vset.pattern.permute.xlu0 0
        %1717 = vperm.xlu0 %1716, %v1667
        %v1718 = vpop.permute.xlu0 %1717
        %1721 = vset.pattern.permute.xlu0 0
        %1722 = vperm.xlu0 %1721, %v1668
        %v1723 = vpop.permute.xlu0 %1722
        %1726 = vset.pattern.permute.xlu0 0
        %1727 = vperm.xlu0 %1726, %v1669
        %v1728 = vpop.permute.xlu0 %1727
        %1731 = vset.pattern.permute.xlu0 0
        %1732 = vperm.xlu0 %1731, %v1670
        %v1733 = vpop.permute.xlu0 %1732
        %1736 = vset.pattern.permute.xlu0 0
        %1737 = vperm.xlu0 %1736, %v1671
        %v1738 = vpop.permute.xlu0 %1737
        %1741 = vset.pattern.permute.xlu0 0
        %1742 = vperm.xlu0 %1741, %v1672
        %v1743 = vpop.permute.xlu0 %1742
        %1746 = vset.pattern.permute.xlu0 0
        %1747 = vperm.xlu0 %1746, %v1673
        %v1748 = vpop.permute.xlu0 %1747
        %1751 = vset.pattern.permute.xlu0 0
        %1752 = vperm.xlu0 %1751, %v1674
        %v1753 = vpop.permute.xlu0 %1752
        %1756 = vset.pattern.permute.xlu0 0
        %1757 = vperm.xlu0 %1756, %v1675
        %v1758 = vpop.permute.xlu0 %1757
        %1761 = vset.pattern.permute.xlu0 0
        %1762 = vperm.xlu0 %1761, %v1676
        %v1763 = vpop.permute.xlu0 %1762
        %1766 = vset.pattern.permute.xlu0 0
        %1767 = vperm.xlu0 %1766, %v1677
        %v1768 = vpop.permute.xlu0 %1767
        %1771 = vset.pattern.permute.xlu0 0
        %1772 = vperm.xlu0 %1771, %v1678
        %v1773 = vpop.permute.xlu0 %1772
        %1776 = vset.pattern.permute.xlu0 0
        %1777 = vperm.xlu0 %1776, %v1679
        %v1778 = vpop.permute.xlu0 %1777
        %1781 = vset.pattern.permute.xlu0 0
        %1782 = vperm.xlu0 %1781, %v1680
        %v1783 = vpop.permute.xlu0 %1782
        %1786 = vset.pattern.permute.xlu0 0
        %1787 = vperm.xlu0 %1786, %v1681
        %v1788 = vpop.permute.xlu0 %1787
        %1791 = vset.pattern.permute.xlu0 0
        %1792 = vperm.xlu0 %1791, %v1682
        %v1793 = vpop.permute.xlu0 %1792
        %v1795 = vmul.f32 %v1718, %v1683
        %v1796 = vmul.f32 %v1718, %v1684
        %v1797 = vmul.f32 %v1723, %v1685
        %v1798 = vmul.f32 %v1723, %v1686
        %v1799 = vmul.f32 %v1728, %v1687
        %v1800 = vmul.f32 %v1728, %v1688
        %v1801 = vmul.f32 %v1733, %v1689
        %v1802 = vmul.f32 %v1733, %v1690
        %v1803 = vmul.f32 %v1738, %v1691
        %v1804 = vmul.f32 %v1738, %v1692
        %v1805 = vmul.f32 %v1743, %v1693
        %v1806 = vmul.f32 %v1743, %v1694
        %v1807 = vmul.f32 %v1748, %v1695
        %v1808 = vmul.f32 %v1748, %v1696
        %v1809 = vmul.f32 %v1753, %v1697
        %v1810 = vmul.f32 %v1753, %v1698
        %v1811 = vmul.f32 %v1758, %v1699
        %v1812 = vmul.f32 %v1758, %v1700
        %v1813 = vmul.f32 %v1763, %v1701
        %v1814 = vmul.f32 %v1763, %v1702
        %v1815 = vmul.f32 %v1768, %v1703
        %v1816 = vmul.f32 %v1768, %v1704
        %v1817 = vmul.f32 %v1773, %v1705
        %v1818 = vmul.f32 %v1773, %v1706
        %v1819 = vmul.f32 %v1778, %v1707
        %v1820 = vmul.f32 %v1778, %v1708
        %v1821 = vmul.f32 %v1783, %v1709
        %v1822 = vmul.f32 %v1783, %v1710
        %v1823 = vmul.f32 %v1788, %v1711
        %v1824 = vmul.f32 %v1788, %v1712
        %v1825 = vmul.f32 %v1793, %v1713
        %v1826 = vmul.f32 %v1793, %v1714
        %1827 = vset.pattern.permute.xlu0 1
        %1828 = vperm.xlu0 %1827, %v1667
        %v1829 = vpop.permute.xlu0 %1828
        %1831 = vset.pattern.permute.xlu0 1
        %1832 = vperm.xlu0 %1831, %v1668
        %v1833 = vpop.permute.xlu0 %1832
        %1835 = vset.pattern.permute.xlu0 1
        %1836 = vperm.xlu0 %1835, %v1669
        %v1837 = vpop.permute.xlu0 %1836
        %1839 = vset.pattern.permute.xlu0 1
        %1840 = vperm.xlu0 %1839, %v1670
        %v1841 = vpop.permute.xlu0 %1840
        %1843 = vset.pattern.permute.xlu0 1
        %1844 = vperm.xlu0 %1843, %v1671
        %v1845 = vpop.permute.xlu0 %1844
        %1847 = vset.pattern.permute.xlu0 1
        %1848 = vperm.xlu0 %1847, %v1672
        %v1849 = vpop.permute.xlu0 %1848
        %1851 = vset.pattern.permute.xlu0 1
        %1852 = vperm.xlu0 %1851, %v1673
        %v1853 = vpop.permute.xlu0 %1852
        %1855 = vset.pattern.permute.xlu0 1
        %1856 = vperm.xlu0 %1855, %v1674
        %v1857 = vpop.permute.xlu0 %1856
        %1859 = vset.pattern.permute.xlu0 1
        %1860 = vperm.xlu0 %1859, %v1675
        %v1861 = vpop.permute.xlu0 %1860
        %1863 = vset.pattern.permute.xlu0 1
        %1864 = vperm.xlu0 %1863, %v1676
        %v1865 = vpop.permute.xlu0 %1864
        %1867 = vset.pattern.permute.xlu0 1
        %1868 = vperm.xlu0 %1867, %v1677
        %v1869 = vpop.permute.xlu0 %1868
        %1871 = vset.pattern.permute.xlu0 1
        %1872 = vperm.xlu0 %1871, %v1678
        %v1873 = vpop.permute.xlu0 %1872
        %1875 = vset.pattern.permute.xlu0 1
        %1876 = vperm.xlu0 %1875, %v1679
        %v1877 = vpop.permute.xlu0 %1876
        %1879 = vset.pattern.permute.xlu0 1
        %1880 = vperm.xlu0 %1879, %v1680
        %v1881 = vpop.permute.xlu0 %1880
        %1883 = vset.pattern.permute.xlu0 1
        %1884 = vperm.xlu0 %1883, %v1681
        %v1885 = vpop.permute.xlu0 %1884
        %1887 = vset.pattern.permute.xlu0 1
        %1888 = vperm.xlu0 %1887, %v1682
        %v1889 = vpop.permute.xlu0 %1888
        %v1891 = vmul.f32 %v1829, %v1683
        %v1892 = vmul.f32 %v1829, %v1684
        %v1893 = vmul.f32 %v1833, %v1685
        %v1894 = vmul.f32 %v1833, %v1686
        %v1895 = vmul.f32 %v1837, %v1687
        %v1896 = vmul.f32 %v1837, %v1688
        %v1897 = vmul.f32 %v1841, %v1689
        %v1898 = vmul.f32 %v1841, %v1690
        %v1899 = vmul.f32 %v1845, %v1691
        %v1900 = vmul.f32 %v1845, %v1692
        %v1901 = vmul.f32 %v1849, %v1693
        %v1902 = vmul.f32 %v1849, %v1694
        %v1903 = vmul.f32 %v1853, %v1695
        %v1904 = vmul.f32 %v1853, %v1696
        %v1905 = vmul.f32 %v1857, %v1697
        %v1906 = vmul.f32 %v1857, %v1698
        %v1907 = vmul.f32 %v1861, %v1699
        %v1908 = vmul.f32 %v1861, %v1700
        %v1909 = vmul.f32 %v1865, %v1701
        %v1910 = vmul.f32 %v1865, %v1702
        %v1911 = vmul.f32 %v1869, %v1703
        %v1912 = vmul.f32 %v1869, %v1704
        %v1913 = vmul.f32 %v1873, %v1705
        %v1914 = vmul.f32 %v1873, %v1706
        %v1915 = vmul.f32 %v1877, %v1707
        %v1916 = vmul.f32 %v1877, %v1708
        %v1917 = vmul.f32 %v1881, %v1709
        %v1918 = vmul.f32 %v1881, %v1710
        %v1919 = vmul.f32 %v1885, %v1711
        %v1920 = vmul.f32 %v1885, %v1712
        %v1921 = vmul.f32 %v1889, %v1713
        %v1922 = vmul.f32 %v1889, %v1714
        %1955 = vrot.lane.b32.xlu0 %v1891, 127
        %v1956 = vpop.permute.xlu0 %1955
        %1957 = vrot.lane.b32.xlu0 %v1892, 127
        %v1958 = vpop.permute.xlu0 %1957
        %1959 = vrot.lane.b32.xlu0 %v1893, 127
        %v1960 = vpop.permute.xlu0 %1959
        %1961 = vrot.lane.b32.xlu0 %v1894, 127
        %v1962 = vpop.permute.xlu0 %1961
        %1963 = vrot.lane.b32.xlu0 %v1895, 127
        %v1964 = vpop.permute.xlu0 %1963
        %1965 = vrot.lane.b32.xlu0 %v1896, 127
        %v1966 = vpop.permute.xlu0 %1965
        %1967 = vrot.lane.b32.xlu0 %v1897, 127
        %v1968 = vpop.permute.xlu0 %1967
        %1969 = vrot.lane.b32.xlu0 %v1898, 127
        %v1970 = vpop.permute.xlu0 %1969
        %1971 = vrot.lane.b32.xlu0 %v1899, 127
        %v1972 = vpop.permute.xlu0 %1971
        %1973 = vrot.lane.b32.xlu0 %v1900, 127
        %v1974 = vpop.permute.xlu0 %1973
        %1975 = vrot.lane.b32.xlu0 %v1901, 127
        %v1976 = vpop.permute.xlu0 %1975
        %1977 = vrot.lane.b32.xlu0 %v1902, 127
        %v1978 = vpop.permute.xlu0 %1977
        %1979 = vrot.lane.b32.xlu0 %v1903, 127
        %v1980 = vpop.permute.xlu0 %1979
        %1981 = vrot.lane.b32.xlu0 %v1904, 127
        %v1982 = vpop.permute.xlu0 %1981
        %1983 = vrot.lane.b32.xlu0 %v1905, 127
        %v1984 = vpop.permute.xlu0 %1983
        %1985 = vrot.lane.b32.xlu0 %v1906, 127
        %v1986 = vpop.permute.xlu0 %1985
        %1987 = vrot.lane.b32.xlu0 %v1907, 127
        %v1988 = vpop.permute.xlu0 %1987
        %1989 = vrot.lane.b32.xlu0 %v1908, 127
        %v1990 = vpop.permute.xlu0 %1989
        %1991 = vrot.lane.b32.xlu0 %v1909, 127
        %v1992 = vpop.permute.xlu0 %1991
        %1993 = vrot.lane.b32.xlu0 %v1910, 127
        %v1994 = vpop.permute.xlu0 %1993
        %1995 = vrot.lane.b32.xlu0 %v1911, 127
        %v1996 = vpop.permute.xlu0 %1995
        %1997 = vrot.lane.b32.xlu0 %v1912, 127
        %v1998 = vpop.permute.xlu0 %1997
        %1999 = vrot.lane.b32.xlu0 %v1913, 127
        %v2000 = vpop.permute.xlu0 %1999
        %2001 = vrot.lane.b32.xlu0 %v1914, 127
        %v2002 = vpop.permute.xlu0 %2001
        %2003 = vrot.lane.b32.xlu0 %v1915, 127
        %v2004 = vpop.permute.xlu0 %2003
        %2005 = vrot.lane.b32.xlu0 %v1916, 127
        %v2006 = vpop.permute.xlu0 %2005
        %2007 = vrot.lane.b32.xlu0 %v1917, 127
        %v2008 = vpop.permute.xlu0 %2007
        %2009 = vrot.lane.b32.xlu0 %v1918, 127
        %v2010 = vpop.permute.xlu0 %2009
        %2011 = vrot.lane.b32.xlu0 %v1919, 127
        %v2012 = vpop.permute.xlu0 %2011
        %2013 = vrot.lane.b32.xlu0 %v1920, 127
        %v2014 = vpop.permute.xlu0 %2013
        %2015 = vrot.lane.b32.xlu0 %v1921, 127
        %v2016 = vpop.permute.xlu0 %2015
        %2017 = vrot.lane.b32.xlu0 %v1922, 127
        %v2018 = vpop.permute.xlu0 %2017
        %vm2019 = vcmask 1039360
        %v2020 = vsel %vm2019, %v1956, %v1958
        %v2021 = vsel %vm2019, %v1960, %v1962
        %v2022 = vsel %vm2019, %v1964, %v1966
        %v2023 = vsel %vm2019, %v1968, %v1970
        %v2024 = vsel %vm2019, %v1972, %v1974
        %v2025 = vsel %vm2019, %v1976, %v1978
        %v2026 = vsel %vm2019, %v1980, %v1982
        %v2027 = vsel %vm2019, %v1984, %v1986
        %v2028 = vsel %vm2019, %v1988, %v1990
        %v2029 = vsel %vm2019, %v1992, %v1994
        %v2030 = vsel %vm2019, %v1996, %v1998
        %v2031 = vsel %vm2019, %v2000, %v2002
        %v2032 = vsel %vm2019, %v2004, %v2006
        %v2033 = vsel %vm2019, %v2008, %v2010
        %v2034 = vsel %vm2019, %v2012, %v2014
        %v2035 = vsel %vm2019, %v2016, %v2018
        %v2068 = vadd.f32 %v1795, %v2020
        %v2069 = vadd.f32 %v1796, %v1958
        %v2070 = vadd.f32 %v1797, %v2021
        %v2071 = vadd.f32 %v1798, %v1962
        %v2072 = vadd.f32 %v1799, %v2022
        %v2073 = vadd.f32 %v1800, %v1966
        %v2074 = vadd.f32 %v1801, %v2023
        %v2075 = vadd.f32 %v1802, %v1970
        %v2076 = vadd.f32 %v1803, %v2024
        %v2077 = vadd.f32 %v1804, %v1974
        %v2078 = vadd.f32 %v1805, %v2025
        %v2079 = vadd.f32 %v1806, %v1978
        %v2080 = vadd.f32 %v1807, %v2026
        %v2081 = vadd.f32 %v1808, %v1982
        %v2082 = vadd.f32 %v1809, %v2027
        %v2083 = vadd.f32 %v1810, %v1986
        %v2084 = vadd.f32 %v1811, %v2028
        %v2085 = vadd.f32 %v1812, %v1990
        %v2086 = vadd.f32 %v1813, %v2029
        %v2087 = vadd.f32 %v1814, %v1994
        %v2088 = vadd.f32 %v1815, %v2030
        %v2089 = vadd.f32 %v1816, %v1998
        %v2090 = vadd.f32 %v1817, %v2031
        %v2091 = vadd.f32 %v1818, %v2002
        %v2092 = vadd.f32 %v1819, %v2032
        %v2093 = vadd.f32 %v1820, %v2006
        %v2094 = vadd.f32 %v1821, %v2033
        %v2095 = vadd.f32 %v1822, %v2010
        %v2096 = vadd.f32 %v1823, %v2034
        %v2097 = vadd.f32 %v1824, %v2014
        %v2098 = vadd.f32 %v1825, %v2035
        %v2099 = vadd.f32 %v1826, %v2018
        %2100 = vset.pattern.permute.xlu0 2
        %2101 = vperm.xlu0 %2100, %v1667
        %v2102 = vpop.permute.xlu0 %2101
        %2104 = vset.pattern.permute.xlu0 2
        %2105 = vperm.xlu0 %2104, %v1668
        %v2106 = vpop.permute.xlu0 %2105
        %2108 = vset.pattern.permute.xlu0 2
        %2109 = vperm.xlu0 %2108, %v1669
        %v2110 = vpop.permute.xlu0 %2109
        %2112 = vset.pattern.permute.xlu0 2
        %2113 = vperm.xlu0 %2112, %v1670
        %v2114 = vpop.permute.xlu0 %2113
        %2116 = vset.pattern.permute.xlu0 2
        %2117 = vperm.xlu0 %2116, %v1671
        %v2118 = vpop.permute.xlu0 %2117
        %2120 = vset.pattern.permute.xlu0 2
        %2121 = vperm.xlu0 %2120, %v1672
        %v2122 = vpop.permute.xlu0 %2121
        %2124 = vset.pattern.permute.xlu0 2
        %2125 = vperm.xlu0 %2124, %v1673
        %v2126 = vpop.permute.xlu0 %2125
        %2128 = vset.pattern.permute.xlu0 2
        %2129 = vperm.xlu0 %2128, %v1674
        %v2130 = vpop.permute.xlu0 %2129
        %2132 = vset.pattern.permute.xlu0 2
        %2133 = vperm.xlu0 %2132, %v1675
        %v2134 = vpop.permute.xlu0 %2133
        %2136 = vset.pattern.permute.xlu0 2
        %2137 = vperm.xlu0 %2136, %v1676
        %v2138 = vpop.permute.xlu0 %2137
        %2140 = vset.pattern.permute.xlu0 2
        %2141 = vperm.xlu0 %2140, %v1677
        %v2142 = vpop.permute.xlu0 %2141
        %2144 = vset.pattern.permute.xlu0 2
        %2145 = vperm.xlu0 %2144, %v1678
        %v2146 = vpop.permute.xlu0 %2145
        %2148 = vset.pattern.permute.xlu0 2
        %2149 = vperm.xlu0 %2148, %v1679
        %v2150 = vpop.permute.xlu0 %2149
        %2152 = vset.pattern.permute.xlu0 2
        %2153 = vperm.xlu0 %2152, %v1680
        %v2154 = vpop.permute.xlu0 %2153
        %2156 = vset.pattern.permute.xlu0 2
        %2157 = vperm.xlu0 %2156, %v1681
        %v2158 = vpop.permute.xlu0 %2157
        %2160 = vset.pattern.permute.xlu0 2
        %2161 = vperm.xlu0 %2160, %v1682
        %v2162 = vpop.permute.xlu0 %2161
        %v2164 = vmul.f32 %v2102, %v1684
        %v2165 = vmul.f32 %v2106, %v1686
        %v2166 = vmul.f32 %v2110, %v1688
        %v2167 = vmul.f32 %v2114, %v1690
        %v2168 = vmul.f32 %v2118, %v1692
        %v2169 = vmul.f32 %v2122, %v1694
        %v2170 = vmul.f32 %v2126, %v1696
        %v2171 = vmul.f32 %v2130, %v1698
        %v2172 = vmul.f32 %v2134, %v1700
        %v2173 = vmul.f32 %v2138, %v1702
        %v2174 = vmul.f32 %v2142, %v1704
        %v2175 = vmul.f32 %v2146, %v1706
        %v2176 = vmul.f32 %v2150, %v1708
        %v2177 = vmul.f32 %v2154, %v1710
        %v2178 = vmul.f32 %v2158, %v1712
        %v2179 = vmul.f32 %v2162, %v1714
        %2196 = vrot.lane.b32.xlu0 %v2164, 126
        %v2197 = vpop.permute.xlu0 %2196
        %2198 = vrot.lane.b32.xlu0 %v2165, 126
        %v2199 = vpop.permute.xlu0 %2198
        %2200 = vrot.lane.b32.xlu0 %v2166, 126
        %v2201 = vpop.permute.xlu0 %2200
        %2202 = vrot.lane.b32.xlu0 %v2167, 126
        %v2203 = vpop.permute.xlu0 %2202
        %2204 = vrot.lane.b32.xlu0 %v2168, 126
        %v2205 = vpop.permute.xlu0 %2204
        %2206 = vrot.lane.b32.xlu0 %v2169, 126
        %v2207 = vpop.permute.xlu0 %2206
        %2208 = vrot.lane.b32.xlu0 %v2170, 126
        %v2209 = vpop.permute.xlu0 %2208
        %2210 = vrot.lane.b32.xlu0 %v2171, 126
        %v2211 = vpop.permute.xlu0 %2210
        %2212 = vrot.lane.b32.xlu0 %v2172, 126
        %v2213 = vpop.permute.xlu0 %2212
        %2214 = vrot.lane.b32.xlu0 %v2173, 126
        %v2215 = vpop.permute.xlu0 %2214
        %2216 = vrot.lane.b32.xlu0 %v2174, 126
        %v2217 = vpop.permute.xlu0 %2216
        %2218 = vrot.lane.b32.xlu0 %v2175, 126
        %v2219 = vpop.permute.xlu0 %2218
        %2220 = vrot.lane.b32.xlu0 %v2176, 126
        %v2221 = vpop.permute.xlu0 %2220
        %2222 = vrot.lane.b32.xlu0 %v2177, 126
        %v2223 = vpop.permute.xlu0 %2222
        %2224 = vrot.lane.b32.xlu0 %v2178, 126
        %v2225 = vpop.permute.xlu0 %2224
        %2226 = vrot.lane.b32.xlu0 %v2179, 126
        %v2227 = vpop.permute.xlu0 %2226
        %v2244 = vadd.f32 %v2068, %v2197
        %v2245 = vadd.f32 %v2069, %v2197
        %v2246 = vadd.f32 %v2070, %v2199
        %v2247 = vadd.f32 %v2071, %v2199
        %v2248 = vadd.f32 %v2072, %v2201
        %v2249 = vadd.f32 %v2073, %v2201
        %v2250 = vadd.f32 %v2074, %v2203
        %v2251 = vadd.f32 %v2075, %v2203
        %v2252 = vadd.f32 %v2076, %v2205
        %v2253 = vadd.f32 %v2077, %v2205
        %v2254 = vadd.f32 %v2078, %v2207
        %v2255 = vadd.f32 %v2079, %v2207
        %v2256 = vadd.f32 %v2080, %v2209
        %v2257 = vadd.f32 %v2081, %v2209
        %v2258 = vadd.f32 %v2082, %v2211
        %v2259 = vadd.f32 %v2083, %v2211
        %v2260 = vadd.f32 %v2084, %v2213
        %v2261 = vadd.f32 %v2085, %v2213
        %v2262 = vadd.f32 %v2086, %v2215
        %v2263 = vadd.f32 %v2087, %v2215
        %v2264 = vadd.f32 %v2088, %v2217
        %v2265 = vadd.f32 %v2089, %v2217
        %v2266 = vadd.f32 %v2090, %v2219
        %v2267 = vadd.f32 %v2091, %v2219
        %v2268 = vadd.f32 %v2092, %v2221
        %v2269 = vadd.f32 %v2093, %v2221
        %v2270 = vadd.f32 %v2094, %v2223
        %v2271 = vadd.f32 %v2095, %v2223
        %v2272 = vadd.f32 %v2096, %v2225
        %v2273 = vadd.f32 %v2097, %v2225
        %v2274 = vadd.f32 %v2098, %v2227
        %v2275 = vadd.f32 %v2099, %v2227
        %2276 = vset.pattern.permute.xlu0 3
        %2277 = vperm.xlu0 %2276, %v1033
        %v2278 = vpop.permute.xlu0 %2277
        %2280 = vset.pattern.permute.xlu0 3
        %2281 = vperm.xlu0 %2280, %v1034
        %v2282 = vpop.permute.xlu0 %2281
        %2284 = vset.pattern.permute.xlu0 3
        %2285 = vperm.xlu0 %2284, %v1035
        %v2286 = vpop.permute.xlu0 %2285
        %2288 = vset.pattern.permute.xlu0 3
        %2289 = vperm.xlu0 %2288, %v1036
        %v2290 = vpop.permute.xlu0 %2289
        %2292 = vset.pattern.permute.xlu0 3
        %2293 = vperm.xlu0 %2292, %v1037
        %v2294 = vpop.permute.xlu0 %2293
        %2296 = vset.pattern.permute.xlu0 3
        %2297 = vperm.xlu0 %2296, %v1038
        %v2298 = vpop.permute.xlu0 %2297
        %2300 = vset.pattern.permute.xlu0 3
        %2301 = vperm.xlu0 %2300, %v1039
        %v2302 = vpop.permute.xlu0 %2301
        %2304 = vset.pattern.permute.xlu0 3
        %2305 = vperm.xlu0 %2304, %v1040
        %v2306 = vpop.permute.xlu0 %2305
        %2308 = vset.pattern.permute.xlu0 3
        %2309 = vperm.xlu0 %2308, %v1041
        %v2310 = vpop.permute.xlu0 %2309
        %2312 = vset.pattern.permute.xlu0 3
        %2313 = vperm.xlu0 %2312, %v1042
        %v2314 = vpop.permute.xlu0 %2313
        %2316 = vset.pattern.permute.xlu0 3
        %2317 = vperm.xlu0 %2316, %v1043
        %v2318 = vpop.permute.xlu0 %2317
        %2320 = vset.pattern.permute.xlu0 3
        %2321 = vperm.xlu0 %2320, %v1044
        %v2322 = vpop.permute.xlu0 %2321
        %2324 = vset.pattern.permute.xlu0 3
        %2325 = vperm.xlu0 %2324, %v1045
        %v2326 = vpop.permute.xlu0 %2325
        %2328 = vset.pattern.permute.xlu0 3
        %2329 = vperm.xlu0 %2328, %v1046
        %v2330 = vpop.permute.xlu0 %2329
        %2332 = vset.pattern.permute.xlu0 3
        %2333 = vperm.xlu0 %2332, %v1047
        %v2334 = vpop.permute.xlu0 %2333
        %2336 = vset.pattern.permute.xlu0 3
        %2337 = vperm.xlu0 %2336, %v1048
        %v2338 = vpop.permute.xlu0 %2337
        %v2340 = vadd.f32 %v2244, %v2278
        %v2341 = vadd.f32 %v2245, %v2278
        %v2342 = vadd.f32 %v2246, %v2282
        %v2343 = vadd.f32 %v2247, %v2282
        %v2344 = vadd.f32 %v2248, %v2286
        %v2345 = vadd.f32 %v2249, %v2286
        %v2346 = vadd.f32 %v2250, %v2290
        %v2347 = vadd.f32 %v2251, %v2290
        %v2348 = vadd.f32 %v2252, %v2294
        %v2349 = vadd.f32 %v2253, %v2294
        %v2350 = vadd.f32 %v2254, %v2298
        %v2351 = vadd.f32 %v2255, %v2298
        %v2352 = vadd.f32 %v2256, %v2302
        %v2353 = vadd.f32 %v2257, %v2302
        %v2354 = vadd.f32 %v2258, %v2306
        %v2355 = vadd.f32 %v2259, %v2306
        %v2356 = vadd.f32 %v2260, %v2310
        %v2357 = vadd.f32 %v2261, %v2310
        %v2358 = vadd.f32 %v2262, %v2314
        %v2359 = vadd.f32 %v2263, %v2314
        %v2360 = vadd.f32 %v2264, %v2318
        %v2361 = vadd.f32 %v2265, %v2318
        %v2362 = vadd.f32 %v2266, %v2322
        %v2363 = vadd.f32 %v2267, %v2322
        %v2364 = vadd.f32 %v2268, %v2326
        %v2365 = vadd.f32 %v2269, %v2326
        %v2366 = vadd.f32 %v2270, %v2330
        %v2367 = vadd.f32 %v2271, %v2330
        %v2368 = vadd.f32 %v2272, %v2334
        %v2369 = vadd.f32 %v2273, %v2334
        %v2370 = vadd.f32 %v2274, %v2338
        %v2371 = vadd.f32 %v2275, %v2338
        %vm2372 = vcmp.ge.f32.partialorder %v2340, 0.0
        %vm2373 = vcmp.ge.f32.partialorder %v2341, 0.0
        %vm2374 = vcmp.ge.f32.partialorder %v2342, 0.0
        %vm2375 = vcmp.ge.f32.partialorder %v2343, 0.0
        %vm2376 = vcmp.ge.f32.partialorder %v2344, 0.0
        %vm2377 = vcmp.ge.f32.partialorder %v2345, 0.0
        %vm2378 = vcmp.ge.f32.partialorder %v2346, 0.0
        %vm2379 = vcmp.ge.f32.partialorder %v2347, 0.0
        %vm2380 = vcmp.ge.f32.partialorder %v2348, 0.0
        %vm2381 = vcmp.ge.f32.partialorder %v2349, 0.0
        %vm2382 = vcmp.ge.f32.partialorder %v2350, 0.0
        %vm2383 = vcmp.ge.f32.partialorder %v2351, 0.0
        %vm2384 = vcmp.ge.f32.partialorder %v2352, 0.0
        %vm2385 = vcmp.ge.f32.partialorder %v2353, 0.0
        %vm2386 = vcmp.ge.f32.partialorder %v2354, 0.0
        %vm2387 = vcmp.ge.f32.partialorder %v2355, 0.0
        %vm2388 = vcmp.ge.f32.partialorder %v2356, 0.0
        %vm2389 = vcmp.ge.f32.partialorder %v2357, 0.0
        %vm2390 = vcmp.ge.f32.partialorder %v2358, 0.0
        %vm2391 = vcmp.ge.f32.partialorder %v2359, 0.0
        %vm2392 = vcmp.ge.f32.partialorder %v2360, 0.0
        %vm2393 = vcmp.ge.f32.partialorder %v2361, 0.0
        %vm2394 = vcmp.ge.f32.partialorder %v2362, 0.0
        %vm2395 = vcmp.ge.f32.partialorder %v2363, 0.0
        %vm2396 = vcmp.ge.f32.partialorder %v2364, 0.0
        %vm2397 = vcmp.ge.f32.partialorder %v2365, 0.0
        %vm2398 = vcmp.ge.f32.partialorder %v2366, 0.0
        %vm2399 = vcmp.ge.f32.partialorder %v2367, 0.0
        %vm2400 = vcmp.ge.f32.partialorder %v2368, 0.0
        %vm2401 = vcmp.ge.f32.partialorder %v2369, 0.0
        %vm2402 = vcmp.ge.f32.partialorder %v2370, 0.0
        %vm2403 = vcmp.ge.f32.partialorder %v2371, 0.0
        %v2404 = vstv %s1050
        %v2405 = vmul.f32 %v2404, %v2340
        %v2406 = vmul.f32 %v2404, %v2341
        %v2407 = vmul.f32 %v2404, %v2342
        %v2408 = vmul.f32 %v2404, %v2343
        %v2409 = vmul.f32 %v2404, %v2344
        %v2410 = vmul.f32 %v2404, %v2345
        %v2411 = vmul.f32 %v2404, %v2346
        %v2412 = vmul.f32 %v2404, %v2347
        %v2413 = vmul.f32 %v2404, %v2348
        %v2414 = vmul.f32 %v2404, %v2349
        %v2415 = vmul.f32 %v2404, %v2350
        %v2416 = vmul.f32 %v2404, %v2351
        %v2417 = vmul.f32 %v2404, %v2352
        %v2418 = vmul.f32 %v2404, %v2353
        %v2419 = vmul.f32 %v2404, %v2354
        %v2420 = vmul.f32 %v2404, %v2355
        %v2421 = vmul.f32 %v2404, %v2356
        %v2422 = vmul.f32 %v2404, %v2357
        %v2423 = vmul.f32 %v2404, %v2358
        %v2424 = vmul.f32 %v2404, %v2359
        %v2425 = vmul.f32 %v2404, %v2360
        %v2426 = vmul.f32 %v2404, %v2361
        %v2427 = vmul.f32 %v2404, %v2362
        %v2428 = vmul.f32 %v2404, %v2363
        %v2429 = vmul.f32 %v2404, %v2364
        %v2430 = vmul.f32 %v2404, %v2365
        %v2431 = vmul.f32 %v2404, %v2366
        %v2432 = vmul.f32 %v2404, %v2367
        %v2433 = vmul.f32 %v2404, %v2368
        %v2434 = vmul.f32 %v2404, %v2369
        %v2435 = vmul.f32 %v2404, %v2370
        %v2436 = vmul.f32 %v2404, %v2371
        %v2437 = vsel %vm2372, %v2340, %v2405
        %v2438 = vsel %vm2373, %v2341, %v2406
        %v2439 = vsel %vm2374, %v2342, %v2407
        %v2440 = vsel %vm2375, %v2343, %v2408
        %v2441 = vsel %vm2376, %v2344, %v2409
        %v2442 = vsel %vm2377, %v2345, %v2410
        %v2443 = vsel %vm2378, %v2346, %v2411
        %v2444 = vsel %vm2379, %v2347, %v2412
        %v2445 = vsel %vm2380, %v2348, %v2413
        %v2446 = vsel %vm2381, %v2349, %v2414
        %v2447 = vsel %vm2382, %v2350, %v2415
        %v2448 = vsel %vm2383, %v2351, %v2416
        %v2449 = vsel %vm2384, %v2352, %v2417
        %v2450 = vsel %vm2385, %v2353, %v2418
        %v2451 = vsel %vm2386, %v2354, %v2419
        %v2452 = vsel %vm2387, %v2355, %v2420
        %v2453 = vsel %vm2388, %v2356, %v2421
        %v2454 = vsel %vm2389, %v2357, %v2422
        %v2455 = vsel %vm2390, %v2358, %v2423
        %v2456 = vsel %vm2391, %v2359, %v2424
        %v2457 = vsel %vm2392, %v2360, %v2425
        %v2458 = vsel %vm2393, %v2361, %v2426
        %v2459 = vsel %vm2394, %v2362, %v2427
        %v2460 = vsel %vm2395, %v2363, %v2428
        %v2461 = vsel %vm2396, %v2364, %v2429
        %v2462 = vsel %vm2397, %v2365, %v2430
        %v2463 = vsel %vm2398, %v2366, %v2431
        %v2464 = vsel %vm2399, %v2367, %v2432
        %v2465 = vsel %vm2400, %v2368, %v2433
        %v2466 = vsel %vm2401, %v2369, %v2434
        %v2467 = vsel %vm2402, %v2370, %v2435
        %v2468 = vsel %vm2403, %v2371, %v2436
        %vm2469 = vcmask 1048560
        %v2470 = vsel %vm2469, %v2437, 0.0
        %v2471 = vsel %vm2469, %v2439, 0.0
        %v2472 = vadd.f32 %v2470, %v2471
        %v2473 = vsel %vm2469, %v2441, 0.0
        %v2474 = vadd.f32 %v2472, %v2473
        %v2475 = vsel %vm2469, %v2443, 0.0
        %v2476 = vadd.f32 %v2474, %v2475
        %v2477 = vsel %vm2469, %v2445, 0.0
        %v2478 = vadd.f32 %v2476, %v2477
        %v2479 = vsel %vm2469, %v2447, 0.0
        %v2480 = vadd.f32 %v2478, %v2479
        %v2481 = vsel %vm2469, %v2449, 0.0
        %v2482 = vadd.f32 %v2480, %v2481
        %v2483 = vsel %vm2469, %v2451, 0.0
        %v2484 = vadd.f32 %v2482, %v2483
        %v2485 = vsel %vm2469, %v2453, 0.0
        %v2486 = vadd.f32 %v2484, %v2485
        %v2487 = vsel %vm2469, %v2455, 0.0
        %v2488 = vadd.f32 %v2486, %v2487
        %v2489 = vsel %vm2469, %v2457, 0.0
        %v2490 = vadd.f32 %v2488, %v2489
        %v2491 = vsel %vm2469, %v2459, 0.0
        %v2492 = vadd.f32 %v2490, %v2491
        %v2493 = vsel %vm2469, %v2461, 0.0
        %v2494 = vadd.f32 %v2492, %v2493
        %v2495 = vsel %vm2469, %v2463, 0.0
        %v2496 = vadd.f32 %v2494, %v2495
        %v2497 = vsel %vm2469, %v2465, 0.0
        %v2498 = vadd.f32 %v2496, %v2497
        %v2499 = vsel %vm2469, %v2467, 0.0
        %v2500 = vadd.f32 %v2498, %v2499
        %v2501 = vrot.slane %v2500, 4
        %v2502 = vadd.f32 %v2500, %v2501
        %v2503 = vrot.slane %v2502, 2
        %v2504 = vadd.f32 %v2502, %v2503
        %v2505 = vrot.slane %v2504, 1
        %v2506 = vadd.f32 %v2504, %v2505
        %vm2507 = vcmask 244736
        %v2508 = vsel %vm2507, %v2438, 0.0
        %v2509 = vsel %vm2507, %v2440, 0.0
        %v2510 = vadd.f32 %v2508, %v2509
        %v2511 = vsel %vm2507, %v2442, 0.0
        %v2512 = vadd.f32 %v2510, %v2511
        %v2513 = vsel %vm2507, %v2444, 0.0
        %v2514 = vadd.f32 %v2512, %v2513
        %v2515 = vsel %vm2507, %v2446, 0.0
        %v2516 = vadd.f32 %v2514, %v2515
        %v2517 = vsel %vm2507, %v2448, 0.0
        %v2518 = vadd.f32 %v2516, %v2517
        %v2519 = vsel %vm2507, %v2450, 0.0
        %v2520 = vadd.f32 %v2518, %v2519
        %v2521 = vsel %vm2507, %v2452, 0.0
        %v2522 = vadd.f32 %v2520, %v2521
        %v2523 = vsel %vm2507, %v2454, 0.0
        %v2524 = vadd.f32 %v2522, %v2523
        %v2525 = vsel %vm2507, %v2456, 0.0
        %v2526 = vadd.f32 %v2524, %v2525
        %v2527 = vsel %vm2507, %v2458, 0.0
        %v2528 = vadd.f32 %v2526, %v2527
        %v2529 = vsel %vm2507, %v2460, 0.0
        %v2530 = vadd.f32 %v2528, %v2529
        %v2531 = vsel %vm2507, %v2462, 0.0
        %v2532 = vadd.f32 %v2530, %v2531
        %v2533 = vsel %vm2507, %v2464, 0.0
        %v2534 = vadd.f32 %v2532, %v2533
        %v2535 = vsel %vm2507, %v2466, 0.0
        %v2536 = vadd.f32 %v2534, %v2535
        %v2537 = vsel %vm2507, %v2468, 0.0
        %v2538 = vadd.f32 %v2536, %v2537
        %v2539 = vrot.slane %v2538, 4
        %v2540 = vadd.f32 %v2538, %v2539
        %v2541 = vrot.slane %v2540, 2
        %v2542 = vadd.f32 %v2540, %v2541
        %v2543 = vrot.slane %v2542, 1
        %v2544 = vadd.f32 %v2542, %v2543
        %v2545 = vmul.f32 %v2437, %v2437
        %v2546 = vmul.f32 %v2438, %v2438
        %v2547 = vmul.f32 %v2439, %v2439
        %v2548 = vmul.f32 %v2440, %v2440
        %v2549 = vmul.f32 %v2441, %v2441
        %v2550 = vmul.f32 %v2442, %v2442
        %v2551 = vmul.f32 %v2443, %v2443
        %v2552 = vmul.f32 %v2444, %v2444
        %v2553 = vmul.f32 %v2445, %v2445
        %v2554 = vmul.f32 %v2446, %v2446
        %v2555 = vmul.f32 %v2447, %v2447
        %v2556 = vmul.f32 %v2448, %v2448
        %v2557 = vmul.f32 %v2449, %v2449
        %v2558 = vmul.f32 %v2450, %v2450
        %v2559 = vmul.f32 %v2451, %v2451
        %v2560 = vmul.f32 %v2452, %v2452
        %v2561 = vmul.f32 %v2453, %v2453
        %v2562 = vmul.f32 %v2454, %v2454
        %v2563 = vmul.f32 %v2455, %v2455
        %v2564 = vmul.f32 %v2456, %v2456
        %v2565 = vmul.f32 %v2457, %v2457
        %v2566 = vmul.f32 %v2458, %v2458
        %v2567 = vmul.f32 %v2459, %v2459
        %v2568 = vmul.f32 %v2460, %v2460
        %v2569 = vmul.f32 %v2461, %v2461
        %v2570 = vmul.f32 %v2462, %v2462
        %v2571 = vmul.f32 %v2463, %v2463
        %v2572 = vmul.f32 %v2464, %v2464
        %v2573 = vmul.f32 %v2465, %v2465
        %v2574 = vmul.f32 %v2466, %v2466
        %v2575 = vmul.f32 %v2467, %v2467
        %v2576 = vmul.f32 %v2468, %v2468
        %v2577 = vsel %vm2469, %v2545, 0.0
        %v2578 = vsel %vm2469, %v2547, 0.0
        %v2579 = vadd.f32 %v2577, %v2578
        %v2580 = vsel %vm2469, %v2549, 0.0
        %v2581 = vadd.f32 %v2579, %v2580
        %v2582 = vsel %vm2469, %v2551, 0.0
        %v2583 = vadd.f32 %v2581, %v2582
        %v2584 = vsel %vm2469, %v2553, 0.0
        %v2585 = vadd.f32 %v2583, %v2584
        %v2586 = vsel %vm2469, %v2555, 0.0
        %v2587 = vadd.f32 %v2585, %v2586
        %v2588 = vsel %vm2469, %v2557, 0.0
        %v2589 = vadd.f32 %v2587, %v2588
        %v2590 = vsel %vm2469, %v2559, 0.0
        %v2591 = vadd.f32 %v2589, %v2590
        %v2592 = vsel %vm2469, %v2561, 0.0
        %v2593 = vadd.f32 %v2591, %v2592
        %v2594 = vsel %vm2469, %v2563, 0.0
        %v2595 = vadd.f32 %v2593, %v2594
        %v2596 = vsel %vm2469, %v2565, 0.0
        %v2597 = vadd.f32 %v2595, %v2596
        %v2598 = vsel %vm2469, %v2567, 0.0
        %v2599 = vadd.f32 %v2597, %v2598
        %v2600 = vsel %vm2469, %v2569, 0.0
        %v2601 = vadd.f32 %v2599, %v2600
        %v2602 = vsel %vm2469, %v2571, 0.0
        %v2603 = vadd.f32 %v2601, %v2602
        %v2604 = vsel %vm2469, %v2573, 0.0
        %v2605 = vadd.f32 %v2603, %v2604
        %v2606 = vsel %vm2469, %v2575, 0.0
        %v2607 = vadd.f32 %v2605, %v2606
        %v2608 = vrot.slane %v2607, 4
        %v2609 = vadd.f32 %v2607, %v2608
        %v2610 = vrot.slane %v2609, 2
        %v2611 = vadd.f32 %v2609, %v2610
        %v2612 = vrot.slane %v2611, 1
        %v2613 = vadd.f32 %v2611, %v2612
        %v2614 = vsel %vm2507, %v2546, 0.0
        %v2615 = vsel %vm2507, %v2548, 0.0
        %v2616 = vadd.f32 %v2614, %v2615
        %v2617 = vsel %vm2507, %v2550, 0.0
        %v2618 = vadd.f32 %v2616, %v2617
        %v2619 = vsel %vm2507, %v2552, 0.0
        %v2620 = vadd.f32 %v2618, %v2619
        %v2621 = vsel %vm2507, %v2554, 0.0
        %v2622 = vadd.f32 %v2620, %v2621
        %v2623 = vsel %vm2507, %v2556, 0.0
        %v2624 = vadd.f32 %v2622, %v2623
        %v2625 = vsel %vm2507, %v2558, 0.0
        %v2626 = vadd.f32 %v2624, %v2625
        %v2627 = vsel %vm2507, %v2560, 0.0
        %v2628 = vadd.f32 %v2626, %v2627
        %v2629 = vsel %vm2507, %v2562, 0.0
        %v2630 = vadd.f32 %v2628, %v2629
        %v2631 = vsel %vm2507, %v2564, 0.0
        %v2632 = vadd.f32 %v2630, %v2631
        %v2633 = vsel %vm2507, %v2566, 0.0
        %v2634 = vadd.f32 %v2632, %v2633
        %v2635 = vsel %vm2507, %v2568, 0.0
        %v2636 = vadd.f32 %v2634, %v2635
        %v2637 = vsel %vm2507, %v2570, 0.0
        %v2638 = vadd.f32 %v2636, %v2637
        %v2639 = vsel %vm2507, %v2572, 0.0
        %v2640 = vadd.f32 %v2638, %v2639
        %v2641 = vsel %vm2507, %v2574, 0.0
        %v2642 = vadd.f32 %v2640, %v2641
        %v2643 = vsel %vm2507, %v2576, 0.0
        %v2644 = vadd.f32 %v2642, %v2643
        %v2645 = vrot.slane %v2644, 4
        %v2646 = vadd.f32 %v2644, %v2645
        %v2647 = vrot.slane %v2646, 2
        %v2648 = vadd.f32 %v2646, %v2647
        %v2649 = vrot.slane %v2648, 1
        %v2650 = vadd.f32 %v2648, %v2649
        %v2651 = vsel %vm659, %v2506, %v2613
        %v2652 = vsel %vm659, %v2544, %v2650
        %2655 = vrot.lane.b32.xlu0 %v2651, 3
        %v2656 = vpop.permute.xlu0 %2655
        %2657 = vrot.lane.b32.xlu0 %v2652, 3
        %v2658 = vpop.permute.xlu0 %2657
        %vm2659 = vcmask 23552
        %v2660 = vsel %vm2659, %v2656, %v2658
        %v2662 = vsel %vm665, 0.0, %v2660
        %2664 = vrot.lane.b32.xlu0 %v2662, 126
        %v2665 = vpop.permute.xlu0 %2664
        %v2667 = vadd.f32 %v2651, %v2665
        %v2668 = vadd.f32 %v2652, %v2665
        %2671 = vrot.lane.b32.xlu0 %v2667, 4
        %v2672 = vpop.permute.xlu0 %2671
        %2673 = vrot.lane.b32.xlu0 %v2668, 4
        %v2674 = vpop.permute.xlu0 %2673
        %v2675 = vsel %vm679, %v2672, %v2674
        %v2677 = vsel %vm672, 0.0, %v2675
        %2679 = vrot.lane.b32.xlu0 %v2677, 126
        %v2680 = vpop.permute.xlu0 %2679
        %v2682 = vadd.f32 %v2667, %v2680
        %v2683 = vadd.f32 %v2668, %v2680
        %2686 = vrot.lane.b32.xlu0 %v2682, 6
        %v2687 = vpop.permute.xlu0 %2686
        %2688 = vrot.lane.b32.xlu0 %v2683, 6
        %v2689 = vpop.permute.xlu0 %2688
        %vm2690 = vcmask 48128
        %v2691 = vsel %vm2690, %v2687, %v2689
        %v2693 = vsel %vm679, 0.0, %v2691
        %2695 = vrot.lane.b32.xlu0 %v2693, 126
        %v2696 = vpop.permute.xlu0 %2695
        %v2698 = vadd.f32 %v2682, %v2696
        %v2699 = vadd.f32 %v2683, %v2696
        %2702 = vrot.lane.b32.xlu0 %v2698, 10
        %v2703 = vpop.permute.xlu0 %2702
        %2704 = vrot.lane.b32.xlu0 %v2699, 10
        %v2705 = vpop.permute.xlu0 %2704
        %vm2706 = vcmask 80896
        %v2707 = vsel %vm2706, %v2703, %v2705
        %v2709 = vsel %vm686, 0.0, %v2707
        %2711 = vrot.lane.b32.xlu0 %v2709, 126
        %v2712 = vpop.permute.xlu0 %2711
        %v2714 = vadd.f32 %v2698, %v2712
        %v2715 = vadd.f32 %v2699, %v2712
        %2718 = vrot.lane.b32.xlu0 %v2714, 18
        %v2719 = vpop.permute.xlu0 %2718
        %2720 = vrot.lane.b32.xlu0 %v2715, 18
        %v2721 = vpop.permute.xlu0 %2720
        %vm2722 = vcmask 146432
        %v2723 = vsel %vm2722, %v2719, %v2721
        %v2725 = vsel %vm693, 0.0, %v2723
        %2727 = vrot.lane.b32.xlu0 %v2725, 126
        %v2728 = vpop.permute.xlu0 %2727
        %v2730 = vadd.f32 %v2714, %v2728
        %v2731 = vadd.f32 %v2715, %v2728
        %2733 = vrot.lane.b32.xlu0 %v700, 126
        %v2734 = vpop.permute.xlu0 %2733
        %v2736 = vrcp.pop %v2734
        %v2737 = vmul.f32 %v2734, %v2736
        %v2738 = vsub.f32 1.0, %v2737
        %v2739 = vmul.f32 %v2736, %v2738
        %v2740 = vadd.f32 %v2736, %v2739
        %vm2741 = vweird.f32 %v2734
        %vm2742 = vweird.f32 %v2736
        %vm2743 = vmor %vm2741, %vm2742
        %v2744 = vsel %vm2743, %v2736, %v2740
        %v2745 = vand.u32 2147483647, %v2734
        %vm2746 = vcmp.eq.f32.partialorder %v2745, 8.507059e+37
        %v2747 = vand.u32 %v2734, 2147483648
        %v2748 = vor.u32 1.1754944e-38, %v2747
        %v2749 = vsel %vm2746, %v2748, %v2744
        %v2750 = vmul.f32 %v2730, %v2749
        %v2751 = vmul.f32 %v2731, %v2749
        %v2752 = vmul.f32 %v2750, 2.0
        %v2753 = vmul.f32 %v2751, 2.0
        %v2754 = vmul.f32 %v2752, %v2730
        %v2755 = vmul.f32 %v2753, %v2731
        %v2758 = vrot.slane %v2754, 7
        %v2759 = vrot.slane %v2755, 7
        %v2762 = vsub.f32 %v2730, %v2758
        %v2763 = vsub.f32 %v2731, %v2759
        %v2764 = vmul.f32 %v2762, %v2749
        %v2765 = vmul.f32 %v2763, %v2749
        %v2766 = vmul.f32 %v2750, %v2750
        %v2767 = vmul.f32 %v2751, %v2751
        %v2770 = vrot.slane %v2766, 7
        %v2771 = vrot.slane %v2767, 7
        %v2774 = vadd.f32 %v2764, %v2770
        %v2775 = vadd.f32 %v2765, %v2771
        %v2776 = vmax.f32 %v2774, 0.0
        %v2777 = vmax.f32 %v2775, 0.0
        %v2778 = vadd.f32 %v2776, 1e-08
        %v2779 = vadd.f32 %v2777, 1e-08
        %v2780 = vrsqrt.pop %v2778
        %v2781 = vmul.f32 %v2780, %v2778
        %v2782 = vmul.f32 %v2781, %v2780
        %v2783 = vmul.f32 0.5, %v2782
        %v2784 = vsub.f32 1.5, %v2783
        %v2785 = vmul.f32 %v2780, %v2784
        %vm2786 = vweird.f32 %v2778
        %vm2787 = vweird.f32 %v2780
        %vm2788 = vmor %vm2786, %vm2787
        %v2789 = vsel %vm2788, %v2780, %v2785
        %v2790 = vrsqrt.pop %v2779
        %v2791 = vmul.f32 %v2790, %v2779
        %v2792 = vmul.f32 %v2791, %v2790
        %v2793 = vmul.f32 0.5, %v2792
        %v2794 = vsub.f32 1.5, %v2793
        %v2795 = vmul.f32 %v2790, %v2794
        %vm2796 = vweird.f32 %v2779
        %vm2797 = vweird.f32 %v2790
        %vm2798 = vmor %vm2796, %vm2797
        %v2799 = vsel %vm2798, %v2790, %v2795
        %v2800 = vperm.slane %v2750, 0
        %v2801 = vperm.slane %v2751, 0
        %v2802 = vsub.f32 %v2437, %v2800
        %v2803 = vsub.f32 %v2438, %v2801
        %v2804 = vsub.f32 %v2439, %v2800
        %v2805 = vsub.f32 %v2440, %v2801
        %v2806 = vsub.f32 %v2441, %v2800
        %v2807 = vsub.f32 %v2442, %v2801
        %v2808 = vsub.f32 %v2443, %v2800
        %v2809 = vsub.f32 %v2444, %v2801
        %v2810 = vsub.f32 %v2445, %v2800
        %v2811 = vsub.f32 %v2446, %v2801
        %v2812 = vsub.f32 %v2447, %v2800
        %v2813 = vsub.f32 %v2448, %v2801
        %v2814 = vsub.f32 %v2449, %v2800
        %v2815 = vsub.f32 %v2450, %v2801
        %v2816 = vsub.f32 %v2451, %v2800
        %v2817 = vsub.f32 %v2452, %v2801
        %v2818 = vsub.f32 %v2453, %v2800
        %v2819 = vsub.f32 %v2454, %v2801
        %v2820 = vsub.f32 %v2455, %v2800
        %v2821 = vsub.f32 %v2456, %v2801
        %v2822 = vsub.f32 %v2457, %v2800
        %v2823 = vsub.f32 %v2458, %v2801
        %v2824 = vsub.f32 %v2459, %v2800
        %v2825 = vsub.f32 %v2460, %v2801
        %v2826 = vsub.f32 %v2461, %v2800
        %v2827 = vsub.f32 %v2462, %v2801
        %v2828 = vsub.f32 %v2463, %v2800
        %v2829 = vsub.f32 %v2464, %v2801
        %v2830 = vsub.f32 %v2465, %v2800
        %v2831 = vsub.f32 %v2466, %v2801
        %v2832 = vsub.f32 %v2467, %v2800
        %v2833 = vsub.f32 %v2468, %v2801
        %v2834 = vperm.slane %v2789, 1
        %v2835 = vperm.slane %v2799, 1
        %v2836 = vmul.f32 %v2802, %v2834
        %v2837 = vmul.f32 %v2803, %v2835
        %v2838 = vmul.f32 %v2804, %v2834
        %v2839 = vmul.f32 %v2805, %v2835
        %v2840 = vmul.f32 %v2806, %v2834
        %v2841 = vmul.f32 %v2807, %v2835
        %v2842 = vmul.f32 %v2808, %v2834
        %v2843 = vmul.f32 %v2809, %v2835
        %v2844 = vmul.f32 %v2810, %v2834
        %v2845 = vmul.f32 %v2811, %v2835
        %v2846 = vmul.f32 %v2812, %v2834
        %v2847 = vmul.f32 %v2813, %v2835
        %v2848 = vmul.f32 %v2814, %v2834
        %v2849 = vmul.f32 %v2815, %v2835
        %v2850 = vmul.f32 %v2816, %v2834
        %v2851 = vmul.f32 %v2817, %v2835
        %v2852 = vmul.f32 %v2818, %v2834
        %v2853 = vmul.f32 %v2819, %v2835
        %v2854 = vmul.f32 %v2820, %v2834
        %v2855 = vmul.f32 %v2821, %v2835
        %v2856 = vmul.f32 %v2822, %v2834
        %v2857 = vmul.f32 %v2823, %v2835
        %v2858 = vmul.f32 %v2824, %v2834
        %v2859 = vmul.f32 %v2825, %v2835
        %v2860 = vmul.f32 %v2826, %v2834
        %v2861 = vmul.f32 %v2827, %v2835
        %v2862 = vmul.f32 %v2828, %v2834
        %v2863 = vmul.f32 %v2829, %v2835
        %v2864 = vmul.f32 %v2830, %v2834
        %v2865 = vmul.f32 %v2831, %v2835
        %v2866 = vmul.f32 %v2832, %v2834
        %v2867 = vmul.f32 %v2833, %v2835
        %2868 = vset.pattern.permute.xlu0 4
        %2869 = vperm.xlu0 %2868, %v1033
        %v2870 = vpop.permute.xlu0 %2869
        %2872 = vset.pattern.permute.xlu0 4
        %2873 = vperm.xlu0 %2872, %v1034
        %v2874 = vpop.permute.xlu0 %2873
        %2876 = vset.pattern.permute.xlu0 4
        %2877 = vperm.xlu0 %2876, %v1035
        %v2878 = vpop.permute.xlu0 %2877
        %2880 = vset.pattern.permute.xlu0 4
        %2881 = vperm.xlu0 %2880, %v1036
        %v2882 = vpop.permute.xlu0 %2881
        %2884 = vset.pattern.permute.xlu0 4
        %2885 = vperm.xlu0 %2884, %v1037
        %v2886 = vpop.permute.xlu0 %2885
        %2888 = vset.pattern.permute.xlu0 4
        %2889 = vperm.xlu0 %2888, %v1038
        %v2890 = vpop.permute.xlu0 %2889
        %2892 = vset.pattern.permute.xlu0 4
        %2893 = vperm.xlu0 %2892, %v1039
        %v2894 = vpop.permute.xlu0 %2893
        %2896 = vset.pattern.permute.xlu0 4
        %2897 = vperm.xlu0 %2896, %v1040
        %v2898 = vpop.permute.xlu0 %2897
        %2900 = vset.pattern.permute.xlu0 4
        %2901 = vperm.xlu0 %2900, %v1041
        %v2902 = vpop.permute.xlu0 %2901
        %2904 = vset.pattern.permute.xlu0 4
        %2905 = vperm.xlu0 %2904, %v1042
        %v2906 = vpop.permute.xlu0 %2905
        %2908 = vset.pattern.permute.xlu0 4
        %2909 = vperm.xlu0 %2908, %v1043
        %v2910 = vpop.permute.xlu0 %2909
        %2912 = vset.pattern.permute.xlu0 4
        %2913 = vperm.xlu0 %2912, %v1044
        %v2914 = vpop.permute.xlu0 %2913
        %2916 = vset.pattern.permute.xlu0 4
        %2917 = vperm.xlu0 %2916, %v1045
        %v2918 = vpop.permute.xlu0 %2917
        %2920 = vset.pattern.permute.xlu0 4
        %2921 = vperm.xlu0 %2920, %v1046
        %v2922 = vpop.permute.xlu0 %2921
        %2924 = vset.pattern.permute.xlu0 4
        %2925 = vperm.xlu0 %2924, %v1047
        %v2926 = vpop.permute.xlu0 %2925
        %2928 = vset.pattern.permute.xlu0 4
        %2929 = vperm.xlu0 %2928, %v1048
        %v2930 = vpop.permute.xlu0 %2929
        %v2932 = vmul.f32 %v2836, %v2870
        %v2933 = vmul.f32 %v2837, %v2870
        %v2934 = vmul.f32 %v2838, %v2874
        %v2935 = vmul.f32 %v2839, %v2874
        %v2936 = vmul.f32 %v2840, %v2878
        %v2937 = vmul.f32 %v2841, %v2878
        %v2938 = vmul.f32 %v2842, %v2882
        %v2939 = vmul.f32 %v2843, %v2882
        %v2940 = vmul.f32 %v2844, %v2886
        %v2941 = vmul.f32 %v2845, %v2886
        %v2942 = vmul.f32 %v2846, %v2890
        %v2943 = vmul.f32 %v2847, %v2890
        %v2944 = vmul.f32 %v2848, %v2894
        %v2945 = vmul.f32 %v2849, %v2894
        %v2946 = vmul.f32 %v2850, %v2898
        %v2947 = vmul.f32 %v2851, %v2898
        %v2948 = vmul.f32 %v2852, %v2902
        %v2949 = vmul.f32 %v2853, %v2902
        %v2950 = vmul.f32 %v2854, %v2906
        %v2951 = vmul.f32 %v2855, %v2906
        %v2952 = vmul.f32 %v2856, %v2910
        %v2953 = vmul.f32 %v2857, %v2910
        %v2954 = vmul.f32 %v2858, %v2914
        %v2955 = vmul.f32 %v2859, %v2914
        %v2956 = vmul.f32 %v2860, %v2918
        %v2957 = vmul.f32 %v2861, %v2918
        %v2958 = vmul.f32 %v2862, %v2922
        %v2959 = vmul.f32 %v2863, %v2922
        %v2960 = vmul.f32 %v2864, %v2926
        %v2961 = vmul.f32 %v2865, %v2926
        %v2962 = vmul.f32 %v2866, %v2930
        %v2963 = vmul.f32 %v2867, %v2930
        %2964 = vset.pattern.permute.xlu0 5
        %2965 = vperm.xlu0 %2964, %v1033
        %v2966 = vpop.permute.xlu0 %2965
        %2968 = vset.pattern.permute.xlu0 5
        %2969 = vperm.xlu0 %2968, %v1034
        %v2970 = vpop.permute.xlu0 %2969
        %2972 = vset.pattern.permute.xlu0 5
        %2973 = vperm.xlu0 %2972, %v1035
        %v2974 = vpop.permute.xlu0 %2973
        %2976 = vset.pattern.permute.xlu0 5
        %2977 = vperm.xlu0 %2976, %v1036
        %v2978 = vpop.permute.xlu0 %2977
        %2980 = vset.pattern.permute.xlu0 5
        %2981 = vperm.xlu0 %2980, %v1037
        %v2982 = vpop.permute.xlu0 %2981
        %2984 = vset.pattern.permute.xlu0 5
        %2985 = vperm.xlu0 %2984, %v1038
        %v2986 = vpop.permute.xlu0 %2985
        %2988 = vset.pattern.permute.xlu0 5
        %2989 = vperm.xlu0 %2988, %v1039
        %v2990 = vpop.permute.xlu0 %2989
        %2992 = vset.pattern.permute.xlu0 5
        %2993 = vperm.xlu0 %2992, %v1040
        %v2994 = vpop.permute.xlu0 %2993
        %2996 = vset.pattern.permute.xlu0 5
        %2997 = vperm.xlu0 %2996, %v1041
        %v2998 = vpop.permute.xlu0 %2997
        %3000 = vset.pattern.permute.xlu0 5
        %3001 = vperm.xlu0 %3000, %v1042
        %v3002 = vpop.permute.xlu0 %3001
        %3004 = vset.pattern.permute.xlu0 5
        %3005 = vperm.xlu0 %3004, %v1043
        %v3006 = vpop.permute.xlu0 %3005
        %3008 = vset.pattern.permute.xlu0 5
        %3009 = vperm.xlu0 %3008, %v1044
        %v3010 = vpop.permute.xlu0 %3009
        %3012 = vset.pattern.permute.xlu0 5
        %3013 = vperm.xlu0 %3012, %v1045
        %v3014 = vpop.permute.xlu0 %3013
        %3016 = vset.pattern.permute.xlu0 5
        %3017 = vperm.xlu0 %3016, %v1046
        %v3018 = vpop.permute.xlu0 %3017
        %3020 = vset.pattern.permute.xlu0 5
        %3021 = vperm.xlu0 %3020, %v1047
        %v3022 = vpop.permute.xlu0 %3021
        %3024 = vset.pattern.permute.xlu0 5
        %3025 = vperm.xlu0 %3024, %v1048
        %v3026 = vpop.permute.xlu0 %3025
        %v3028 = vadd.f32 %v2932, %v2966
        %v3029 = vadd.f32 %v2933, %v2966
        %v3030 = vadd.f32 %v2934, %v2970
        %v3031 = vadd.f32 %v2935, %v2970
        %v3032 = vadd.f32 %v2936, %v2974
        %v3033 = vadd.f32 %v2937, %v2974
        %v3034 = vadd.f32 %v2938, %v2978
        %v3035 = vadd.f32 %v2939, %v2978
        %v3036 = vadd.f32 %v2940, %v2982
        %v3037 = vadd.f32 %v2941, %v2982
        %v3038 = vadd.f32 %v2942, %v2986
        %v3039 = vadd.f32 %v2943, %v2986
        %v3040 = vadd.f32 %v2944, %v2990
        %v3041 = vadd.f32 %v2945, %v2990
        %v3042 = vadd.f32 %v2946, %v2994
        %v3043 = vadd.f32 %v2947, %v2994
        %v3044 = vadd.f32 %v2948, %v2998
        %v3045 = vadd.f32 %v2949, %v2998
        %v3046 = vadd.f32 %v2950, %v3002
        %v3047 = vadd.f32 %v2951, %v3002
        %v3048 = vadd.f32 %v2952, %v3006
        %v3049 = vadd.f32 %v2953, %v3006
        %v3050 = vadd.f32 %v2954, %v3010
        %v3051 = vadd.f32 %v2955, %v3010
        %v3052 = vadd.f32 %v2956, %v3014
        %v3053 = vadd.f32 %v2957, %v3014
        %v3054 = vadd.f32 %v2958, %v3018
        %v3055 = vadd.f32 %v2959, %v3018
        %v3056 = vadd.f32 %v2960, %v3022
        %v3057 = vadd.f32 %v2961, %v3022
        %v3058 = vadd.f32 %v2962, %v3026
        %v3059 = vadd.f32 %v2963, %v3026
        %v3060 = vld [vmem:[%s11] sm:$0xf]
        %v3061 = vld [vmem:[%s11 + $0x4] sm:$0xf]
        %v3062 = vld [vmem:[%s11 + $0x8] sm:$0xf]
        %v3063 = vld [vmem:[%s11 + $0xc] sm:$0xf]
        %v3064 = vpack.c.bf16 %v3030, %v3028
        %v3065 = vpack.c.bf16 %v3031, %v3029
        %v3066 = vpack.c.bf16 %v3034, %v3032
        %v3067 = vpack.c.bf16 %v3035, %v3033
        %v3068 = vpack.c.bf16 %v3038, %v3036
        %v3069 = vpack.c.bf16 %v3039, %v3037
        %v3070 = vpack.c.bf16 %v3042, %v3040
        %v3071 = vpack.c.bf16 %v3043, %v3041
        %v3072 = vpack.c.bf16 %v3046, %v3044
        %v3073 = vpack.c.bf16 %v3047, %v3045
        %v3074 = vpack.c.bf16 %v3050, %v3048
        %v3075 = vpack.c.bf16 %v3051, %v3049
        %v3076 = vpack.c.bf16 %v3054, %v3052
        %v3077 = vpack.c.bf16 %v3055, %v3053
        %v3078 = vpack.c.bf16 %v3058, %v3056
        %v3079 = vpack.c.bf16 %v3059, %v3057
        %v3084 = vunpack.c.l.b16 %v3060
        %v3085 = vunpack.c.l.b16 %v3061
        %v3086 = vunpack.c.l.b16 %v3062
        %v3087 = vunpack.c.l.b16 %v3063
        %v3088 = vpack.c.b16 %v3085, %v3084
        %v3089 = vpack.c.b16 %v3087, %v3086
        %3108 = vrot.lane.b32.xlu0 %v3064, 2
        %v3109 = vpop.permute.xlu0 %3108
        %3110 = vrot.lane.b32.xlu0 %v3065, 2
        %v3111 = vpop.permute.xlu0 %3110
        %3112 = vrot.lane.b32.xlu0 %v3066, 2
        %v3113 = vpop.permute.xlu0 %3112
        %3114 = vrot.lane.b32.xlu0 %v3067, 2
        %v3115 = vpop.permute.xlu0 %3114
        %3116 = vrot.lane.b32.xlu0 %v3068, 2
        %v3117 = vpop.permute.xlu0 %3116
        %3118 = vrot.lane.b32.xlu0 %v3069, 2
        %v3119 = vpop.permute.xlu0 %3118
        %3120 = vrot.lane.b32.xlu0 %v3070, 2
        %v3121 = vpop.permute.xlu0 %3120
        %3122 = vrot.lane.b32.xlu0 %v3071, 2
        %v3123 = vpop.permute.xlu0 %3122
        %3124 = vrot.lane.b32.xlu0 %v3072, 2
        %v3125 = vpop.permute.xlu0 %3124
        %3126 = vrot.lane.b32.xlu0 %v3073, 2
        %v3127 = vpop.permute.xlu0 %3126
        %3128 = vrot.lane.b32.xlu0 %v3074, 2
        %v3129 = vpop.permute.xlu0 %3128
        %3130 = vrot.lane.b32.xlu0 %v3075, 2
        %v3131 = vpop.permute.xlu0 %3130
        %3132 = vrot.lane.b32.xlu0 %v3076, 2
        %v3133 = vpop.permute.xlu0 %3132
        %3134 = vrot.lane.b32.xlu0 %v3077, 2
        %v3135 = vpop.permute.xlu0 %3134
        %3136 = vrot.lane.b32.xlu0 %v3078, 2
        %v3137 = vpop.permute.xlu0 %3136
        %3138 = vrot.lane.b32.xlu0 %v3079, 2
        %v3139 = vpop.permute.xlu0 %3138
        %vm3140 = vcmask 15360
        %v3141 = vsel %vm3140, %v3109, %v3111
        %v3142 = vsel %vm3140, %v3113, %v3115
        %v3143 = vsel %vm3140, %v3117, %v3119
        %v3144 = vsel %vm3140, %v3121, %v3123
        %v3145 = vsel %vm3140, %v3125, %v3127
        %v3146 = vsel %vm3140, %v3129, %v3131
        %v3147 = vsel %vm3140, %v3133, %v3135
        %v3148 = vsel %vm3140, %v3137, %v3139
        %3157 = vmatpush.bf16.msra.mxu0 %v3148
        %3158 = vmatpush.bf16.msra.mxu0 %v3147
        %3159 = vmatpush.bf16.msra.mxu0 %v3146
        %3160 = vmatpush.bf16.msra.mxu0 %v3145
        %3161 = vmatpush.bf16.msra.mxu0 %v3144
        %3162 = vmatpush.bf16.msra.mxu0 %v3143
        %3163 = vmatpush.bf16.msra.mxu0 %v3142
        %3164 = vmatpush.bf16.msra.mxu0 %v3141
        %3165 = vmatmul.bf16.gmra.mxu0 %v3088
        %v3166 = vpop.f32.mrf.mxu0
        %v3167 = vadd.f32 0.0, %v3166
        %v3168 = vpop.f32.mrf.mxu0
        %v3169 = vadd.f32 0.0, %v3168
        %3170 = vmatmul.bf16.gmra.mxu0 %v3089
        %v3171 = vpop.f32.mrf.mxu0
        %v3172 = vadd.f32 0.0, %v3171
        %v3173 = vpop.f32.mrf.mxu0
        %v3174 = vadd.f32 0.0, %v3173
        %3175 = vdwg.mxu0
        %v3176 = vadd.f32 %v1024, %v3167
        %v3177 = vadd.f32 %v1026, %v3169
        %v3178 = vadd.f32 %v1029, %v3172
        %v3179 = vadd.f32 %v1031, %v3174
        %v3180 = vld [vmem:[%s12] sm:$0xff]
        %v3181 = vld [vmem:[%s12 + $0x8] sm:$0xff]
        %v3182 = vld [vmem:[%s12 + $0x10] sm:$0xff]
        %v3183 = vld [vmem:[%s12 + $0x18] sm:$0xff]
        %3185 = vset.pattern.permute.xlu0 0
        %3186 = vperm.xlu0 %3185, %v3180
        %v3187 = vpop.permute.xlu0 %3186
        %3190 = vset.pattern.permute.xlu0 0
        %3191 = vperm.xlu0 %3190, %v3181
        %v3192 = vpop.permute.xlu0 %3191
        %3195 = vset.pattern.permute.xlu0 0
        %3196 = vperm.xlu0 %3195, %v3182
        %v3197 = vpop.permute.xlu0 %3196
        %3200 = vset.pattern.permute.xlu0 0
        %3201 = vperm.xlu0 %3200, %v3183
        %v3202 = vpop.permute.xlu0 %3201
        %v3204 = vadd.f32 %v3176, %v3187
        %v3205 = vadd.f32 %v3177, %v3192
        %v3206 = vadd.f32 %v3178, %v3197
        %v3207 = vadd.f32 %v3179, %v3202
        %v3208 = vld [vmem:[%s6] sm:$0xf]
        %v3209 = vld [vmem:[%s6 + $0x4] sm:$0xf]
        %v3210 = vld [vmem:[%s6 + $0x8] sm:$0xf]
        %v3211 = vld [vmem:[%s6 + $0xc] sm:$0xf]
        %v3212 = vld [vmem:[%s6 + $0x10] sm:$0xf]
        %v3213 = vld [vmem:[%s6 + $0x14] sm:$0xf]
        %v3214 = vld [vmem:[%s6 + $0x18] sm:$0xf]
        %v3215 = vld [vmem:[%s6 + $0x1c] sm:$0xf]
        %v3216 = vld [vmem:[%s496] sm:$0xff]
        %v3217 = vld [vmem:[%s496 + $0x8] sm:$0xff]
        %v3218 = vld [vmem:[%s496 + $0x10] sm:$0xff]
        %v3219 = vpack.c.bf16 %v3217, %v3216
        %v3220 = vpack.c.bf16 %v3218, %v3218
        %v3221 = vld [vmem:[%s7] sm:$0xff]
        %v3222 = vld [vmem:[%s7 + $0x8] sm:$0xff]
        %v3223 = vld [vmem:[%s7 + $0x10] sm:$0xff]
        %v3224 = vld [vmem:[%s7 + $0x18] sm:$0xff]
        %v3225 = vld [vmem:[%s7 + $0x20] sm:$0xff]
        %v3226 = vld [vmem:[%s7 + $0x28] sm:$0xff]
        %v3227 = vld [vmem:[%s7 + $0x30] sm:$0xff]
        %v3228 = vld [vmem:[%s7 + $0x38] sm:$0xff]
        %3230 = vset.pattern.permute.xlu0 0
        %3231 = vperm.xlu0 %3230, %v3221
        %v3232 = vpop.permute.xlu0 %3231
        %3235 = vset.pattern.permute.xlu0 0
        %3236 = vperm.xlu0 %3235, %v3222
        %v3237 = vpop.permute.xlu0 %3236
        %3240 = vset.pattern.permute.xlu0 0
        %3241 = vperm.xlu0 %3240, %v3223
        %v3242 = vpop.permute.xlu0 %3241
        %3245 = vset.pattern.permute.xlu0 0
        %3246 = vperm.xlu0 %3245, %v3224
        %v3247 = vpop.permute.xlu0 %3246
        %3250 = vset.pattern.permute.xlu0 0
        %3251 = vperm.xlu0 %3250, %v3225
        %v3252 = vpop.permute.xlu0 %3251
        %3255 = vset.pattern.permute.xlu0 0
        %3256 = vperm.xlu0 %3255, %v3226
        %v3257 = vpop.permute.xlu0 %3256
        %3260 = vset.pattern.permute.xlu0 0
        %3261 = vperm.xlu0 %3260, %v3227
        %v3262 = vpop.permute.xlu0 %3261
        %3265 = vset.pattern.permute.xlu0 0
        %3266 = vperm.xlu0 %3265, %v3228
        %v3267 = vpop.permute.xlu0 %3266
        %v3277 = vunpack.c.l.b16 %v3208
        %v3278 = vunpack.c.l.b16 %v3209
        %v3279 = vunpack.c.l.b16 %v3210
        %v3280 = vunpack.c.l.b16 %v3211
        %v3281 = vunpack.c.l.b16 %v3212
        %v3282 = vunpack.c.l.b16 %v3213
        %v3283 = vunpack.c.l.b16 %v3214
        %v3284 = vunpack.c.l.b16 %v3215
        %v3285 = vpack.c.b16 %v3278, %v3277
        %v3286 = vpack.c.b16 %v3280, %v3279
        %v3287 = vpack.c.b16 %v3282, %v3281
        %v3288 = vpack.c.b16 %v3284, %v3283
        %vm3289 = vcmask 195584
        %v3291 = vsel %vm3289, %v3285, 0
        %v3294 = vsel %vm3289, %v3286, 0
        %v3297 = vsel %vm3289, %v3287, 0
        %v3300 = vsel %vm3289, %v3288, 0
        %vm3302 = vcmask 1043456
        %v3304 = vsel %vm3302, %v3220, 0
        %3306 = vmatpush.bf16.msra.mxu0 0
        %3307 = vmatpush.bf16.msra.mxu0 0
        %3308 = vmatpush.bf16.msra.mxu0 0
        %3309 = vmatpush.bf16.msra.mxu0 0
        %3310 = vmatpush.bf16.msra.mxu0 0
        %3311 = vmatpush.bf16.msra.mxu0 0
        %3312 = vmatpush.bf16.msra.mxu0 %v3304
        %3313 = vmatpush.bf16.msra.mxu0 %v3219
        %3314 = vmatmul.bf16.gmra.mxu0 %v3291
        %v3315 = vpop.f32.mrf.mxu0
        %v3316 = vadd.f32 %v3232, %v3315
        %v3317 = vpop.f32.mrf.mxu0
        %v3318 = vadd.f32 %v3237, %v3317
        %3319 = vmatmul.bf16.gmra.mxu0 %v3294
        %v3320 = vpop.f32.mrf.mxu0
        %v3321 = vadd.f32 %v3242, %v3320
        %v3322 = vpop.f32.mrf.mxu0
        %v3323 = vadd.f32 %v3247, %v3322
        %3324 = vmatmul.bf16.gmra.mxu0 %v3297
        %v3325 = vpop.f32.mrf.mxu0
        %v3326 = vadd.f32 %v3252, %v3325
        %v3327 = vpop.f32.mrf.mxu0
        %v3328 = vadd.f32 %v3257, %v3327
        %3329 = vmatmul.bf16.gmra.mxu0 %v3300
        %v3330 = vpop.f32.mrf.mxu0
        %v3331 = vadd.f32 %v3262, %v3330
        %v3332 = vpop.f32.mrf.mxu0
        %v3333 = vadd.f32 %v3267, %v3332
        %3334 = vdwg.mxu0
        %v3335 = vmul.f32 %v3204, %v3316
        %v3336 = vmul.f32 %v3205, %v3318
        %v3337 = vmul.f32 %v3206, %v3321
        %v3338 = vmul.f32 %v3207, %v3323
        %v3339 = vadd.f32 %v3335, %v3326
        %v3340 = vadd.f32 %v3336, %v3328
        %v3341 = vadd.f32 %v3337, %v3331
        %v3342 = vadd.f32 %v3338, %v3333
        %s3343 = scalar_lea.vmem %s9, 128
        %v3344 = vld [vmem:[%s3343] sm:$0xff]
        %v3345 = vld [vmem:[%s3343 + $0x8] sm:$0xff]
        %v3346 = vld [vmem:[%s3343 + $0x10] sm:$0xff]
        %v3347 = vld [vmem:[%s3343 + $0x18] sm:$0xff]
        %v3348 = vld [vmem:[%s3343 + $0x20] sm:$0xff]
        %v3349 = vld [vmem:[%s3343 + $0x28] sm:$0xff]
        %v3350 = vld [vmem:[%s3343 + $0x30] sm:$0xff]
        %v3351 = vld [vmem:[%s3343 + $0x38] sm:$0xff]
        %v3352 = vld [vmem:[%s3343 + $0x40] sm:$0xff]
        %v3353 = vld [vmem:[%s3343 + $0x48] sm:$0xff]
        %v3354 = vld [vmem:[%s3343 + $0x50] sm:$0xff]
        %v3355 = vld [vmem:[%s3343 + $0x58] sm:$0xff]
        %v3356 = vld [vmem:[%s3343 + $0x60] sm:$0xff]
        %v3357 = vld [vmem:[%s3343 + $0x68] sm:$0xff]
        %v3358 = vld [vmem:[%s3343 + $0x70] sm:$0xff]
        %v3359 = vld [vmem:[%s3343 + $0x78] sm:$0xff]
        %s3360 = sld [smem:[#allocation3 + $0x80]]
        %s3361 = sld [smem:[#allocation3 + $0x81]]
        %s3362 = scalar_lea.vmem %s8, 64
        %v3363 = vld [vmem:[%s3362] sm:$0xf]
        %v3364 = vld [vmem:[%s3362 + $0x4] sm:$0xf]
        %v3365 = vld [vmem:[%s3362 + $0x8] sm:$0xf]
        %v3366 = vld [vmem:[%s3362 + $0xc] sm:$0xf]
        %v3367 = vld [vmem:[%s3362 + $0x10] sm:$0xf]
        %v3368 = vld [vmem:[%s3362 + $0x14] sm:$0xf]
        %v3369 = vld [vmem:[%s3362 + $0x18] sm:$0xf]
        %v3370 = vld [vmem:[%s3362 + $0x1c] sm:$0xf]
        %v3371 = vld [vmem:[%s3362 + $0x20] sm:$0xf]
        %v3372 = vld [vmem:[%s3362 + $0x24] sm:$0xf]
        %v3373 = vld [vmem:[%s3362 + $0x28] sm:$0xf]
        %v3374 = vld [vmem:[%s3362 + $0x2c] sm:$0xf]
        %v3375 = vld [vmem:[%s3362 + $0x30] sm:$0xf]
        %v3376 = vld [vmem:[%s3362 + $0x34] sm:$0xf]
        %v3377 = vld [vmem:[%s3362 + $0x38] sm:$0xf]
        %v3378 = vld [vmem:[%s3362 + $0x3c] sm:$0xf]
        %v3379 = vpack.c.bf16 %v3340, %v3339
        %v3380 = vpack.c.bf16 %v3342, %v3341
        %3382 = vset.pattern.permute.xlu0 0
        %3383 = vperm.xlu0 %3382, %v3344
        %v3384 = vpop.permute.xlu0 %3383
        %3387 = vset.pattern.permute.xlu0 0
        %3388 = vperm.xlu0 %3387, %v3345
        %v3389 = vpop.permute.xlu0 %3388
        %3392 = vset.pattern.permute.xlu0 0
        %3393 = vperm.xlu0 %3392, %v3346
        %v3394 = vpop.permute.xlu0 %3393
        %3397 = vset.pattern.permute.xlu0 0
        %3398 = vperm.xlu0 %3397, %v3347
        %v3399 = vpop.permute.xlu0 %3398
        %3402 = vset.pattern.permute.xlu0 0
        %3403 = vperm.xlu0 %3402, %v3348
        %v3404 = vpop.permute.xlu0 %3403
        %3407 = vset.pattern.permute.xlu0 0
        %3408 = vperm.xlu0 %3407, %v3349
        %v3409 = vpop.permute.xlu0 %3408
        %3412 = vset.pattern.permute.xlu0 0
        %3413 = vperm.xlu0 %3412, %v3350
        %v3414 = vpop.permute.xlu0 %3413
        %3417 = vset.pattern.permute.xlu0 0
        %3418 = vperm.xlu0 %3417, %v3351
        %v3419 = vpop.permute.xlu0 %3418
        %3422 = vset.pattern.permute.xlu0 0
        %3423 = vperm.xlu0 %3422, %v3352
        %v3424 = vpop.permute.xlu0 %3423
        %3427 = vset.pattern.permute.xlu0 0
        %3428 = vperm.xlu0 %3427, %v3353
        %v3429 = vpop.permute.xlu0 %3428
        %3432 = vset.pattern.permute.xlu0 0
        %3433 = vperm.xlu0 %3432, %v3354
        %v3434 = vpop.permute.xlu0 %3433
        %3437 = vset.pattern.permute.xlu0 0
        %3438 = vperm.xlu0 %3437, %v3355
        %v3439 = vpop.permute.xlu0 %3438
        %3442 = vset.pattern.permute.xlu0 0
        %3443 = vperm.xlu0 %3442, %v3356
        %v3444 = vpop.permute.xlu0 %3443
        %3447 = vset.pattern.permute.xlu0 0
        %3448 = vperm.xlu0 %3447, %v3357
        %v3449 = vpop.permute.xlu0 %3448
        %3452 = vset.pattern.permute.xlu0 0
        %3453 = vperm.xlu0 %3452, %v3358
        %v3454 = vpop.permute.xlu0 %3453
        %3457 = vset.pattern.permute.xlu0 0
        %3458 = vperm.xlu0 %3457, %v3359
        %v3459 = vpop.permute.xlu0 %3458
        %v3477 = vunpack.c.l.b16 %v3363
        %v3478 = vunpack.c.l.b16 %v3364
        %v3479 = vunpack.c.l.b16 %v3365
        %v3480 = vunpack.c.l.b16 %v3366
        %v3481 = vunpack.c.l.b16 %v3367
        %v3482 = vunpack.c.l.b16 %v3368
        %v3483 = vunpack.c.l.b16 %v3369
        %v3484 = vunpack.c.l.b16 %v3370
        %v3485 = vunpack.c.l.b16 %v3371
        %v3486 = vunpack.c.l.b16 %v3372
        %v3487 = vunpack.c.l.b16 %v3373
        %v3488 = vunpack.c.l.b16 %v3374
        %v3489 = vunpack.c.l.b16 %v3375
        %v3490 = vunpack.c.l.b16 %v3376
        %v3491 = vunpack.c.l.b16 %v3377
        %v3492 = vunpack.c.l.b16 %v3378
        %v3493 = vpack.c.b16 %v3478, %v3477
        %v3494 = vpack.c.b16 %v3480, %v3479
        %v3495 = vpack.c.b16 %v3482, %v3481
        %v3496 = vpack.c.b16 %v3484, %v3483
        %v3497 = vpack.c.b16 %v3486, %v3485
        %v3498 = vpack.c.b16 %v3488, %v3487
        %v3499 = vpack.c.b16 %v3490, %v3489
        %v3500 = vpack.c.b16 %v3492, %v3491
        %v3502 = vsel %vm568, %v3493, 0
        %v3505 = vsel %vm568, %v3494, 0
        %v3508 = vsel %vm568, %v3495, 0
        %v3511 = vsel %vm568, %v3496, 0
        %v3514 = vsel %vm568, %v3497, 0
        %v3517 = vsel %vm568, %v3498, 0
        %v3520 = vsel %vm568, %v3499, 0
        %v3523 = vsel %vm568, %v3500, 0
        %3525 = vmatpush.bf16.msra.mxu0 0
        %3526 = vmatpush.bf16.msra.mxu0 0
        %3527 = vmatpush.bf16.msra.mxu0 0
        %3528 = vmatpush.bf16.msra.mxu0 0
        %3529 = vmatpush.bf16.msra.mxu0 0
        %3530 = vmatpush.bf16.msra.mxu0 0
        %3531 = vmatpush.bf16.msra.mxu0 %v3380
        %3532 = vmatpush.bf16.msra.mxu0 %v3379
        %3533 = vmatmul.bf16.gmra.mxu0 %v3502
        %v3534 = vpop.f32.mrf.mxu0
        %v3535 = vadd.f32 %v3384, %v3534
        %v3536 = vpop.f32.mrf.mxu0
        %v3537 = vadd.f32 %v3389, %v3536
        %3538 = vmatmul.bf16.gmra.mxu0 %v3505
        %v3539 = vpop.f32.mrf.mxu0
        %v3540 = vadd.f32 %v3394, %v3539
        %v3541 = vpop.f32.mrf.mxu0
        %v3542 = vadd.f32 %v3399, %v3541
        %3543 = vmatmul.bf16.gmra.mxu0 %v3508
        %v3544 = vpop.f32.mrf.mxu0
        %v3545 = vadd.f32 %v3404, %v3544
        %v3546 = vpop.f32.mrf.mxu0
        %v3547 = vadd.f32 %v3409, %v3546
        %3548 = vmatmul.bf16.gmra.mxu0 %v3511
        %v3549 = vpop.f32.mrf.mxu0
        %v3550 = vadd.f32 %v3414, %v3549
        %v3551 = vpop.f32.mrf.mxu0
        %v3552 = vadd.f32 %v3419, %v3551
        %3553 = vmatmul.bf16.gmra.mxu0 %v3514
        %v3554 = vpop.f32.mrf.mxu0
        %v3555 = vadd.f32 %v3424, %v3554
        %v3556 = vpop.f32.mrf.mxu0
        %v3557 = vadd.f32 %v3429, %v3556
        %3558 = vmatmul.bf16.gmra.mxu0 %v3517
        %v3559 = vpop.f32.mrf.mxu0
        %v3560 = vadd.f32 %v3434, %v3559
        %v3561 = vpop.f32.mrf.mxu0
        %v3562 = vadd.f32 %v3439, %v3561
        %3563 = vmatmul.bf16.gmra.mxu0 %v3520
        %v3564 = vpop.f32.mrf.mxu0
        %v3565 = vadd.f32 %v3444, %v3564
        %v3566 = vpop.f32.mrf.mxu0
        %v3567 = vadd.f32 %v3449, %v3566
        %3568 = vmatmul.bf16.gmra.mxu0 %v3523
        %v3569 = vpop.f32.mrf.mxu0
        %v3570 = vadd.f32 %v3454, %v3569
        %v3571 = vpop.f32.mrf.mxu0
        %v3572 = vadd.f32 %v3459, %v3571
        %3573 = vdwg.mxu0
        %vm3574 = vcmp.ge.f32.partialorder %v3535, 0.0
        %vm3575 = vcmp.ge.f32.partialorder %v3537, 0.0
        %vm3576 = vcmp.ge.f32.partialorder %v3540, 0.0
        %vm3577 = vcmp.ge.f32.partialorder %v3542, 0.0
        %vm3578 = vcmp.ge.f32.partialorder %v3545, 0.0
        %vm3579 = vcmp.ge.f32.partialorder %v3547, 0.0
        %vm3580 = vcmp.ge.f32.partialorder %v3550, 0.0
        %vm3581 = vcmp.ge.f32.partialorder %v3552, 0.0
        %vm3582 = vcmp.ge.f32.partialorder %v3555, 0.0
        %vm3583 = vcmp.ge.f32.partialorder %v3557, 0.0
        %vm3584 = vcmp.ge.f32.partialorder %v3560, 0.0
        %vm3585 = vcmp.ge.f32.partialorder %v3562, 0.0
        %vm3586 = vcmp.ge.f32.partialorder %v3565, 0.0
        %vm3587 = vcmp.ge.f32.partialorder %v3567, 0.0
        %vm3588 = vcmp.ge.f32.partialorder %v3570, 0.0
        %vm3589 = vcmp.ge.f32.partialorder %v3572, 0.0
        %v3590 = vstv %s3360
        %v3591 = vmul.f32 %v3590, %v3535
        %v3592 = vmul.f32 %v3590, %v3537
        %v3593 = vmul.f32 %v3590, %v3540
        %v3594 = vmul.f32 %v3590, %v3542
        %v3595 = vmul.f32 %v3590, %v3545
        %v3596 = vmul.f32 %v3590, %v3547
        %v3597 = vmul.f32 %v3590, %v3550
        %v3598 = vmul.f32 %v3590, %v3552
        %v3599 = vmul.f32 %v3590, %v3555
        %v3600 = vmul.f32 %v3590, %v3557
        %v3601 = vmul.f32 %v3590, %v3560
        %v3602 = vmul.f32 %v3590, %v3562
        %v3603 = vmul.f32 %v3590, %v3565
        %v3604 = vmul.f32 %v3590, %v3567
        %v3605 = vmul.f32 %v3590, %v3570
        %v3606 = vmul.f32 %v3590, %v3572
        %v3607 = vsel %vm3574, %v3535, %v3591
        %v3608 = vsel %vm3575, %v3537, %v3592
        %v3609 = vsel %vm3576, %v3540, %v3593
        %v3610 = vsel %vm3577, %v3542, %v3594
        %v3611 = vsel %vm3578, %v3545, %v3595
        %v3612 = vsel %vm3579, %v3547, %v3596
        %v3613 = vsel %vm3580, %v3550, %v3597
        %v3614 = vsel %vm3581, %v3552, %v3598
        %v3615 = vsel %vm3582, %v3555, %v3599
        %v3616 = vsel %vm3583, %v3557, %v3600
        %v3617 = vsel %vm3584, %v3560, %v3601
        %v3618 = vsel %vm3585, %v3562, %v3602
        %v3619 = vsel %vm3586, %v3565, %v3603
        %v3620 = vsel %vm3587, %v3567, %v3604
        %v3621 = vsel %vm3588, %v3570, %v3605
        %v3622 = vsel %vm3589, %v3572, %v3606
        %v3623 = vsel %vm568, %v3607, 0.0
        %v3624 = vsel %vm568, %v3608, 0.0
        %v3625 = vadd.f32 %v3623, %v3624
        %v3626 = vsel %vm568, %v3609, 0.0
        %v3627 = vadd.f32 %v3625, %v3626
        %v3628 = vsel %vm568, %v3610, 0.0
        %v3629 = vadd.f32 %v3627, %v3628
        %v3630 = vsel %vm568, %v3611, 0.0
        %v3631 = vadd.f32 %v3629, %v3630
        %v3632 = vsel %vm568, %v3612, 0.0
        %v3633 = vadd.f32 %v3631, %v3632
        %v3634 = vsel %vm568, %v3613, 0.0
        %v3635 = vadd.f32 %v3633, %v3634
        %v3636 = vsel %vm568, %v3614, 0.0
        %v3637 = vadd.f32 %v3635, %v3636
        %v3638 = vsel %vm568, %v3615, 0.0
        %v3639 = vadd.f32 %v3637, %v3638
        %v3640 = vsel %vm568, %v3616, 0.0
        %v3641 = vadd.f32 %v3639, %v3640
        %v3642 = vsel %vm568, %v3617, 0.0
        %v3643 = vadd.f32 %v3641, %v3642
        %v3644 = vsel %vm568, %v3618, 0.0
        %v3645 = vadd.f32 %v3643, %v3644
        %v3646 = vsel %vm568, %v3619, 0.0
        %v3647 = vadd.f32 %v3645, %v3646
        %v3648 = vsel %vm568, %v3620, 0.0
        %v3649 = vadd.f32 %v3647, %v3648
        %v3650 = vsel %vm568, %v3621, 0.0
        %v3651 = vadd.f32 %v3649, %v3650
        %v3652 = vsel %vm568, %v3622, 0.0
        %v3653 = vadd.f32 %v3651, %v3652
        %v3654 = vrot.slane %v3653, 4
        %v3655 = vadd.f32 %v3653, %v3654
        %v3656 = vrot.slane %v3655, 2
        %v3657 = vadd.f32 %v3655, %v3656
        %v3658 = vrot.slane %v3657, 1
        %v3659 = vadd.f32 %v3657, %v3658
        %v3660 = vmul.f32 %v3607, %v3607
        %v3661 = vmul.f32 %v3608, %v3608
        %v3662 = vmul.f32 %v3609, %v3609
        %v3663 = vmul.f32 %v3610, %v3610
        %v3664 = vmul.f32 %v3611, %v3611
        %v3665 = vmul.f32 %v3612, %v3612
        %v3666 = vmul.f32 %v3613, %v3613
        %v3667 = vmul.f32 %v3614, %v3614
        %v3668 = vmul.f32 %v3615, %v3615
        %v3669 = vmul.f32 %v3616, %v3616
        %v3670 = vmul.f32 %v3617, %v3617
        %v3671 = vmul.f32 %v3618, %v3618
        %v3672 = vmul.f32 %v3619, %v3619
        %v3673 = vmul.f32 %v3620, %v3620
        %v3674 = vmul.f32 %v3621, %v3621
        %v3675 = vmul.f32 %v3622, %v3622
        %v3676 = vsel %vm568, %v3660, 0.0
        %v3677 = vsel %vm568, %v3661, 0.0
        %v3678 = vadd.f32 %v3676, %v3677
        %v3679 = vsel %vm568, %v3662, 0.0
        %v3680 = vadd.f32 %v3678, %v3679
        %v3681 = vsel %vm568, %v3663, 0.0
        %v3682 = vadd.f32 %v3680, %v3681
        %v3683 = vsel %vm568, %v3664, 0.0
        %v3684 = vadd.f32 %v3682, %v3683
        %v3685 = vsel %vm568, %v3665, 0.0
        %v3686 = vadd.f32 %v3684, %v3685
        %v3687 = vsel %vm568, %v3666, 0.0
        %v3688 = vadd.f32 %v3686, %v3687
        %v3689 = vsel %vm568, %v3667, 0.0
        %v3690 = vadd.f32 %v3688, %v3689
        %v3691 = vsel %vm568, %v3668, 0.0
        %v3692 = vadd.f32 %v3690, %v3691
        %v3693 = vsel %vm568, %v3669, 0.0
        %v3694 = vadd.f32 %v3692, %v3693
        %v3695 = vsel %vm568, %v3670, 0.0
        %v3696 = vadd.f32 %v3694, %v3695
        %v3697 = vsel %vm568, %v3671, 0.0
        %v3698 = vadd.f32 %v3696, %v3697
        %v3699 = vsel %vm568, %v3672, 0.0
        %v3700 = vadd.f32 %v3698, %v3699
        %v3701 = vsel %vm568, %v3673, 0.0
        %v3702 = vadd.f32 %v3700, %v3701
        %v3703 = vsel %vm568, %v3674, 0.0
        %v3704 = vadd.f32 %v3702, %v3703
        %v3705 = vsel %vm568, %v3675, 0.0
        %v3706 = vadd.f32 %v3704, %v3705
        %v3707 = vrot.slane %v3706, 4
        %v3708 = vadd.f32 %v3706, %v3707
        %v3709 = vrot.slane %v3708, 2
        %v3710 = vadd.f32 %v3708, %v3709
        %v3711 = vrot.slane %v3710, 1
        %v3712 = vadd.f32 %v3710, %v3711
        %v3713 = vsel %vm659, %v3659, %v3712
        %3715 = vrot.lane.b32.xlu0 %v3713, 1
        %v3716 = vpop.permute.xlu0 %3715
        %v3718 = vsel %vm665, 0.0, %v3716
        %v3719 = vadd.f32 %v3713, %v3718
        %3721 = vrot.lane.b32.xlu0 %v3719, 2
        %v3722 = vpop.permute.xlu0 %3721
        %v3724 = vsel %vm672, 0.0, %v3722
        %v3725 = vadd.f32 %v3719, %v3724
        %3727 = vrot.lane.b32.xlu0 %v3725, 4
        %v3728 = vpop.permute.xlu0 %3727
        %v3730 = vsel %vm679, 0.0, %v3728
        %v3731 = vadd.f32 %v3725, %v3730
        %3733 = vrot.lane.b32.xlu0 %v3731, 8
        %v3734 = vpop.permute.xlu0 %3733
        %v3736 = vsel %vm686, 0.0, %v3734
        %v3737 = vadd.f32 %v3731, %v3736
        %3739 = vrot.lane.b32.xlu0 %v3737, 16
        %v3740 = vpop.permute.xlu0 %3739
        %v3742 = vsel %vm693, 0.0, %v3740
        %v3743 = vadd.f32 %v3737, %v3742
        %v3744 = vmul.f32 %v3743, %v714
        %v3745 = vmul.f32 %v3744, 2.0
        %v3746 = vmul.f32 %v3745, %v3743
        %v3748 = vrot.slane %v3746, 7
        %v3750 = vsub.f32 %v3743, %v3748
        %v3751 = vmul.f32 %v3750, %v714
        %v3752 = vmul.f32 %v3744, %v3744
        %v3754 = vrot.slane %v3752, 7
        %v3756 = vadd.f32 %v3751, %v3754
        %v3757 = vmax.f32 %v3756, 0.0
        %v3758 = vadd.f32 %v3757, 1e-08
        %v3759 = vrsqrt.pop %v3758
        %v3760 = vmul.f32 %v3759, %v3758
        %v3761 = vmul.f32 %v3760, %v3759
        %v3762 = vmul.f32 0.5, %v3761
        %v3763 = vsub.f32 1.5, %v3762
        %v3764 = vmul.f32 %v3759, %v3763
        %vm3765 = vweird.f32 %v3758
        %vm3766 = vweird.f32 %v3759
        %vm3767 = vmor %vm3765, %vm3766
        %v3768 = vsel %vm3767, %v3759, %v3764
        %v3769 = vperm.slane %v3744, 0
        %v3770 = vsub.f32 %v3607, %v3769
        %v3771 = vsub.f32 %v3608, %v3769
        %v3772 = vsub.f32 %v3609, %v3769
        %v3773 = vsub.f32 %v3610, %v3769
        %v3774 = vsub.f32 %v3611, %v3769
        %v3775 = vsub.f32 %v3612, %v3769
        %v3776 = vsub.f32 %v3613, %v3769
        %v3777 = vsub.f32 %v3614, %v3769
        %v3778 = vsub.f32 %v3615, %v3769
        %v3779 = vsub.f32 %v3616, %v3769
        %v3780 = vsub.f32 %v3617, %v3769
        %v3781 = vsub.f32 %v3618, %v3769
        %v3782 = vsub.f32 %v3619, %v3769
        %v3783 = vsub.f32 %v3620, %v3769
        %v3784 = vsub.f32 %v3621, %v3769
        %v3785 = vsub.f32 %v3622, %v3769
        %v3786 = vperm.slane %v3768, 1
        %v3787 = vmul.f32 %v3770, %v3786
        %v3788 = vmul.f32 %v3771, %v3786
        %v3789 = vmul.f32 %v3772, %v3786
        %v3790 = vmul.f32 %v3773, %v3786
        %v3791 = vmul.f32 %v3774, %v3786
        %v3792 = vmul.f32 %v3775, %v3786
        %v3793 = vmul.f32 %v3776, %v3786
        %v3794 = vmul.f32 %v3777, %v3786
        %v3795 = vmul.f32 %v3778, %v3786
        %v3796 = vmul.f32 %v3779, %v3786
        %v3797 = vmul.f32 %v3780, %v3786
        %v3798 = vmul.f32 %v3781, %v3786
        %v3799 = vmul.f32 %v3782, %v3786
        %v3800 = vmul.f32 %v3783, %v3786
        %v3801 = vmul.f32 %v3784, %v3786
        %v3802 = vmul.f32 %v3785, %v3786
        %3803 = vset.pattern.permute.xlu0 1
        %3804 = vperm.xlu0 %3803, %v3344
        %v3805 = vpop.permute.xlu0 %3804
        %3807 = vset.pattern.permute.xlu0 1
        %3808 = vperm.xlu0 %3807, %v3345
        %v3809 = vpop.permute.xlu0 %3808
        %3811 = vset.pattern.permute.xlu0 1
        %3812 = vperm.xlu0 %3811, %v3346
        %v3813 = vpop.permute.xlu0 %3812
        %3815 = vset.pattern.permute.xlu0 1
        %3816 = vperm.xlu0 %3815, %v3347
        %v3817 = vpop.permute.xlu0 %3816
        %3819 = vset.pattern.permute.xlu0 1
        %3820 = vperm.xlu0 %3819, %v3348
        %v3821 = vpop.permute.xlu0 %3820
        %3823 = vset.pattern.permute.xlu0 1
        %3824 = vperm.xlu0 %3823, %v3349
        %v3825 = vpop.permute.xlu0 %3824
        %3827 = vset.pattern.permute.xlu0 1
        %3828 = vperm.xlu0 %3827, %v3350
        %v3829 = vpop.permute.xlu0 %3828
        %3831 = vset.pattern.permute.xlu0 1
        %3832 = vperm.xlu0 %3831, %v3351
        %v3833 = vpop.permute.xlu0 %3832
        %3835 = vset.pattern.permute.xlu0 1
        %3836 = vperm.xlu0 %3835, %v3352
        %v3837 = vpop.permute.xlu0 %3836
        %3839 = vset.pattern.permute.xlu0 1
        %3840 = vperm.xlu0 %3839, %v3353
        %v3841 = vpop.permute.xlu0 %3840
        %3843 = vset.pattern.permute.xlu0 1
        %3844 = vperm.xlu0 %3843, %v3354
        %v3845 = vpop.permute.xlu0 %3844
        %3847 = vset.pattern.permute.xlu0 1
        %3848 = vperm.xlu0 %3847, %v3355
        %v3849 = vpop.permute.xlu0 %3848
        %3851 = vset.pattern.permute.xlu0 1
        %3852 = vperm.xlu0 %3851, %v3356
        %v3853 = vpop.permute.xlu0 %3852
        %3855 = vset.pattern.permute.xlu0 1
        %3856 = vperm.xlu0 %3855, %v3357
        %v3857 = vpop.permute.xlu0 %3856
        %3859 = vset.pattern.permute.xlu0 1
        %3860 = vperm.xlu0 %3859, %v3358
        %v3861 = vpop.permute.xlu0 %3860
        %3863 = vset.pattern.permute.xlu0 1
        %3864 = vperm.xlu0 %3863, %v3359
        %v3865 = vpop.permute.xlu0 %3864
        %v3867 = vmul.f32 %v3787, %v3805
        %v3868 = vmul.f32 %v3788, %v3809
        %v3869 = vmul.f32 %v3789, %v3813
        %v3870 = vmul.f32 %v3790, %v3817
        %v3871 = vmul.f32 %v3791, %v3821
        %v3872 = vmul.f32 %v3792, %v3825
        %v3873 = vmul.f32 %v3793, %v3829
        %v3874 = vmul.f32 %v3794, %v3833
        %v3875 = vmul.f32 %v3795, %v3837
        %v3876 = vmul.f32 %v3796, %v3841
        %v3877 = vmul.f32 %v3797, %v3845
        %v3878 = vmul.f32 %v3798, %v3849
        %v3879 = vmul.f32 %v3799, %v3853
        %v3880 = vmul.f32 %v3800, %v3857
        %v3881 = vmul.f32 %v3801, %v3861
        %v3882 = vmul.f32 %v3802, %v3865
        %3883 = vset.pattern.permute.xlu0 2
        %3884 = vperm.xlu0 %3883, %v3344
        %v3885 = vpop.permute.xlu0 %3884
        %3887 = vset.pattern.permute.xlu0 2
        %3888 = vperm.xlu0 %3887, %v3345
        %v3889 = vpop.permute.xlu0 %3888
        %3891 = vset.pattern.permute.xlu0 2
        %3892 = vperm.xlu0 %3891, %v3346
        %v3893 = vpop.permute.xlu0 %3892
        %3895 = vset.pattern.permute.xlu0 2
        %3896 = vperm.xlu0 %3895, %v3347
        %v3897 = vpop.permute.xlu0 %3896
        %3899 = vset.pattern.permute.xlu0 2
        %3900 = vperm.xlu0 %3899, %v3348
        %v3901 = vpop.permute.xlu0 %3900
        %3903 = vset.pattern.permute.xlu0 2
        %3904 = vperm.xlu0 %3903, %v3349
        %v3905 = vpop.permute.xlu0 %3904
        %3907 = vset.pattern.permute.xlu0 2
        %3908 = vperm.xlu0 %3907, %v3350
        %v3909 = vpop.permute.xlu0 %3908
        %3911 = vset.pattern.permute.xlu0 2
        %3912 = vperm.xlu0 %3911, %v3351
        %v3913 = vpop.permute.xlu0 %3912
        %3915 = vset.pattern.permute.xlu0 2
        %3916 = vperm.xlu0 %3915, %v3352
        %v3917 = vpop.permute.xlu0 %3916
        %3919 = vset.pattern.permute.xlu0 2
        %3920 = vperm.xlu0 %3919, %v3353
        %v3921 = vpop.permute.xlu0 %3920
        %3923 = vset.pattern.permute.xlu0 2
        %3924 = vperm.xlu0 %3923, %v3354
        %v3925 = vpop.permute.xlu0 %3924
        %3927 = vset.pattern.permute.xlu0 2
        %3928 = vperm.xlu0 %3927, %v3355
        %v3929 = vpop.permute.xlu0 %3928
        %3931 = vset.pattern.permute.xlu0 2
        %3932 = vperm.xlu0 %3931, %v3356
        %v3933 = vpop.permute.xlu0 %3932
        %3935 = vset.pattern.permute.xlu0 2
        %3936 = vperm.xlu0 %3935, %v3357
        %v3937 = vpop.permute.xlu0 %3936
        %3939 = vset.pattern.permute.xlu0 2
        %3940 = vperm.xlu0 %3939, %v3358
        %v3941 = vpop.permute.xlu0 %3940
        %3943 = vset.pattern.permute.xlu0 2
        %3944 = vperm.xlu0 %3943, %v3359
        %v3945 = vpop.permute.xlu0 %3944
        %v3947 = vadd.f32 %v3867, %v3885
        %v3948 = vadd.f32 %v3868, %v3889
        %v3949 = vadd.f32 %v3869, %v3893
        %v3950 = vadd.f32 %v3870, %v3897
        %v3951 = vadd.f32 %v3871, %v3901
        %v3952 = vadd.f32 %v3872, %v3905
        %v3953 = vadd.f32 %v3873, %v3909
        %v3954 = vadd.f32 %v3874, %v3913
        %v3955 = vadd.f32 %v3875, %v3917
        %v3956 = vadd.f32 %v3876, %v3921
        %v3957 = vadd.f32 %v3877, %v3925
        %v3958 = vadd.f32 %v3878, %v3929
        %v3959 = vadd.f32 %v3879, %v3933
        %v3960 = vadd.f32 %v3880, %v3937
        %v3961 = vadd.f32 %v3881, %v3941
        %v3962 = vadd.f32 %v3882, %v3945
        %3963 = vst.msk [vmem:[#allocation2 + $0x8] sm:$0xff] %vm568, %v3947
        %3964 = vst.msk [vmem:[#allocation2 + $0x18] sm:$0xff] %vm568, %v3948
        %3965 = vst.msk [vmem:[#allocation2 + $0x28] sm:$0xff] %vm568, %v3949
        %3966 = vst.msk [vmem:[#allocation2 + $0x38] sm:$0xff] %vm568, %v3950
        %3967 = vst.msk [vmem:[#allocation2 + $0x48] sm:$0xff] %vm568, %v3951
        %3968 = vst.msk [vmem:[#allocation2 + $0x58] sm:$0xff] %vm568, %v3952
        %3969 = vst.msk [vmem:[#allocation2 + $0x68] sm:$0xff] %vm568, %v3953
        %3970 = vst.msk [vmem:[#allocation2 + $0x78] sm:$0xff] %vm568, %v3954
        %3971 = vst.msk [vmem:[#allocation2 + $0x88] sm:$0xff] %vm568, %v3955
        %3972 = vst.msk [vmem:[#allocation2 + $0x98] sm:$0xff] %vm568, %v3956
        %3973 = vst.msk [vmem:[#allocation2 + $0xa8] sm:$0xff] %vm568, %v3957
        %3974 = vst.msk [vmem:[#allocation2 + $0xb8] sm:$0xff] %vm568, %v3958
        %3975 = vst.msk [vmem:[#allocation2 + $0xc8] sm:$0xff] %vm568, %v3959
        %3976 = vst.msk [vmem:[#allocation2 + $0xd8] sm:$0xff] %vm568, %v3960
        %3977 = vst.msk [vmem:[#allocation2 + $0xe8] sm:$0xff] %vm568, %v3961
        %3978 = vst.msk [vmem:[#allocation2 + $0xf8] sm:$0xff] %vm568, %v3962
        %s3979 = scalar_lea.vmem %s10, 128
        %v3980 = vld [vmem:[%s3979] sm:$0xff]
        %v3981 = vld [vmem:[%s3979 + $0x8] sm:$0xff]
        %v3982 = vld [vmem:[%s3979 + $0x10] sm:$0xff]
        %v3983 = vld [vmem:[%s3979 + $0x18] sm:$0xff]
        %v3984 = vld [vmem:[%s3979 + $0x20] sm:$0xff]
        %v3985 = vld [vmem:[%s3979 + $0x28] sm:$0xff]
        %v3986 = vld [vmem:[%s3979 + $0x30] sm:$0xff]
        %v3987 = vld [vmem:[%s3979 + $0x38] sm:$0xff]
        %v3988 = vld [vmem:[%s3979 + $0x40] sm:$0xff]
        %v3989 = vld [vmem:[%s3979 + $0x48] sm:$0xff]
        %v3990 = vld [vmem:[%s3979 + $0x50] sm:$0xff]
        %v3991 = vld [vmem:[%s3979 + $0x58] sm:$0xff]
        %v3992 = vld [vmem:[%s3979 + $0x60] sm:$0xff]
        %v3993 = vld [vmem:[%s3979 + $0x68] sm:$0xff]
        %v3994 = vld [vmem:[%s3979 + $0x70] sm:$0xff]
        %v3995 = vld [vmem:[%s3979 + $0x78] sm:$0xff]
        %v3996 = vld [vmem:[#allocation2] sm:$0xff]
        %v3997 = vld [vmem:[#allocation2 + $0x8] sm:$0xff]
        %v3998 = vld [vmem:[#allocation2 + $0x10] sm:$0xff]
        %v3999 = vld [vmem:[#allocation2 + $0x18] sm:$0xff]
        %v4000 = vld [vmem:[#allocation2 + $0x20] sm:$0xff]
        %v4001 = vld [vmem:[#allocation2 + $0x28] sm:$0xff]
        %v4002 = vld [vmem:[#allocation2 + $0x30] sm:$0xff]
        %v4003 = vld [vmem:[#allocation2 + $0x38] sm:$0xff]
        %v4004 = vld [vmem:[#allocation2 + $0x40] sm:$0xff]
        %v4005 = vld [vmem:[#allocation2 + $0x48] sm:$0xff]
        %v4006 = vld [vmem:[#allocation2 + $0x50] sm:$0xff]
        %v4007 = vld [vmem:[#allocation2 + $0x58] sm:$0xff]
        %v4008 = vld [vmem:[#allocation2 + $0x60] sm:$0xff]
        %v4009 = vld [vmem:[#allocation2 + $0x68] sm:$0xff]
        %v4010 = vld [vmem:[#allocation2 + $0x70] sm:$0xff]
        %v4011 = vld [vmem:[#allocation2 + $0x78] sm:$0xff]
        %v4012 = vld [vmem:[#allocation2 + $0x80] sm:$0xff]
        %v4013 = vld [vmem:[#allocation2 + $0x88] sm:$0xff]
        %v4014 = vld [vmem:[#allocation2 + $0x90] sm:$0xff]
        %v4015 = vld [vmem:[#allocation2 + $0x98] sm:$0xff]
        %v4016 = vld [vmem:[#allocation2 + $0xa0] sm:$0xff]
        %v4017 = vld [vmem:[#allocation2 + $0xa8] sm:$0xff]
        %v4018 = vld [vmem:[#allocation2 + $0xb0] sm:$0xff]
        %v4019 = vld [vmem:[#allocation2 + $0xb8] sm:$0xff]
        %v4020 = vld [vmem:[#allocation2 + $0xc0] sm:$0xff]
        %v4021 = vld [vmem:[#allocation2 + $0xc8] sm:$0xff]
        %v4022 = vld [vmem:[#allocation2 + $0xd0] sm:$0xff]
        %v4023 = vld [vmem:[#allocation2 + $0xd8] sm:$0xff]
        %v4024 = vld [vmem:[#allocation2 + $0xe0] sm:$0xff]
        %v4025 = vld [vmem:[#allocation2 + $0xe8] sm:$0xff]
        %v4026 = vld [vmem:[#allocation2 + $0xf0] sm:$0xff]
        %v4027 = vld [vmem:[#allocation2 + $0xf8] sm:$0xff]
        %4029 = vset.pattern.permute.xlu0 0
        %4030 = vperm.xlu0 %4029, %v3980
        %v4031 = vpop.permute.xlu0 %4030
        %4034 = vset.pattern.permute.xlu0 0
        %4035 = vperm.xlu0 %4034, %v3981
        %v4036 = vpop.permute.xlu0 %4035
        %4039 = vset.pattern.permute.xlu0 0
        %4040 = vperm.xlu0 %4039, %v3982
        %v4041 = vpop.permute.xlu0 %4040
        %4044 = vset.pattern.permute.xlu0 0
        %4045 = vperm.xlu0 %4044, %v3983
        %v4046 = vpop.permute.xlu0 %4045
        %4049 = vset.pattern.permute.xlu0 0
        %4050 = vperm.xlu0 %4049, %v3984
        %v4051 = vpop.permute.xlu0 %4050
        %4054 = vset.pattern.permute.xlu0 0
        %4055 = vperm.xlu0 %4054, %v3985
        %v4056 = vpop.permute.xlu0 %4055
        %4059 = vset.pattern.permute.xlu0 0
        %4060 = vperm.xlu0 %4059, %v3986
        %v4061 = vpop.permute.xlu0 %4060
        %4064 = vset.pattern.permute.xlu0 0
        %4065 = vperm.xlu0 %4064, %v3987
        %v4066 = vpop.permute.xlu0 %4065
        %4069 = vset.pattern.permute.xlu0 0
        %4070 = vperm.xlu0 %4069, %v3988
        %v4071 = vpop.permute.xlu0 %4070
        %4074 = vset.pattern.permute.xlu0 0
        %4075 = vperm.xlu0 %4074, %v3989
        %v4076 = vpop.permute.xlu0 %4075
        %4079 = vset.pattern.permute.xlu0 0
        %4080 = vperm.xlu0 %4079, %v3990
        %v4081 = vpop.permute.xlu0 %4080
        %4084 = vset.pattern.permute.xlu0 0
        %4085 = vperm.xlu0 %4084, %v3991
        %v4086 = vpop.permute.xlu0 %4085
        %4089 = vset.pattern.permute.xlu0 0
        %4090 = vperm.xlu0 %4089, %v3992
        %v4091 = vpop.permute.xlu0 %4090
        %4094 = vset.pattern.permute.xlu0 0
        %4095 = vperm.xlu0 %4094, %v3993
        %v4096 = vpop.permute.xlu0 %4095
        %4099 = vset.pattern.permute.xlu0 0
        %4100 = vperm.xlu0 %4099, %v3994
        %v4101 = vpop.permute.xlu0 %4100
        %4104 = vset.pattern.permute.xlu0 0
        %4105 = vperm.xlu0 %4104, %v3995
        %v4106 = vpop.permute.xlu0 %4105
        %v4108 = vmul.f32 %v4031, %v3996
        %v4109 = vmul.f32 %v4031, %v3997
        %v4110 = vmul.f32 %v4036, %v3998
        %v4111 = vmul.f32 %v4036, %v3999
        %v4112 = vmul.f32 %v4041, %v4000
        %v4113 = vmul.f32 %v4041, %v4001
        %v4114 = vmul.f32 %v4046, %v4002
        %v4115 = vmul.f32 %v4046, %v4003
        %v4116 = vmul.f32 %v4051, %v4004
        %v4117 = vmul.f32 %v4051, %v4005
        %v4118 = vmul.f32 %v4056, %v4006
        %v4119 = vmul.f32 %v4056, %v4007
        %v4120 = vmul.f32 %v4061, %v4008
        %v4121 = vmul.f32 %v4061, %v4009
        %v4122 = vmul.f32 %v4066, %v4010
        %v4123 = vmul.f32 %v4066, %v4011
        %v4124 = vmul.f32 %v4071, %v4012
        %v4125 = vmul.f32 %v4071, %v4013
        %v4126 = vmul.f32 %v4076, %v4014
        %v4127 = vmul.f32 %v4076, %v4015
        %v4128 = vmul.f32 %v4081, %v4016
        %v4129 = vmul.f32 %v4081, %v4017
        %v4130 = vmul.f32 %v4086, %v4018
        %v4131 = vmul.f32 %v4086, %v4019
        %v4132 = vmul.f32 %v4091, %v4020
        %v4133 = vmul.f32 %v4091, %v4021
        %v4134 = vmul.f32 %v4096, %v4022
        %v4135 = vmul.f32 %v4096, %v4023
        %v4136 = vmul.f32 %v4101, %v4024
        %v4137 = vmul.f32 %v4101, %v4025
        %v4138 = vmul.f32 %v4106, %v4026
        %v4139 = vmul.f32 %v4106, %v4027
        %4140 = vset.pattern.permute.xlu0 1
        %4141 = vperm.xlu0 %4140, %v3980
        %v4142 = vpop.permute.xlu0 %4141
        %4144 = vset.pattern.permute.xlu0 1
        %4145 = vperm.xlu0 %4144, %v3981
        %v4146 = vpop.permute.xlu0 %4145
        %4148 = vset.pattern.permute.xlu0 1
        %4149 = vperm.xlu0 %4148, %v3982
        %v4150 = vpop.permute.xlu0 %4149
        %4152 = vset.pattern.permute.xlu0 1
        %4153 = vperm.xlu0 %4152, %v3983
        %v4154 = vpop.permute.xlu0 %4153
        %4156 = vset.pattern.permute.xlu0 1
        %4157 = vperm.xlu0 %4156, %v3984
        %v4158 = vpop.permute.xlu0 %4157
        %4160 = vset.pattern.permute.xlu0 1
        %4161 = vperm.xlu0 %4160, %v3985
        %v4162 = vpop.permute.xlu0 %4161
        %4164 = vset.pattern.permute.xlu0 1
        %4165 = vperm.xlu0 %4164, %v3986
        %v4166 = vpop.permute.xlu0 %4165
        %4168 = vset.pattern.permute.xlu0 1
        %4169 = vperm.xlu0 %4168, %v3987
        %v4170 = vpop.permute.xlu0 %4169
        %4172 = vset.pattern.permute.xlu0 1
        %4173 = vperm.xlu0 %4172, %v3988
        %v4174 = vpop.permute.xlu0 %4173
        %4176 = vset.pattern.permute.xlu0 1
        %4177 = vperm.xlu0 %4176, %v3989
        %v4178 = vpop.permute.xlu0 %4177
        %4180 = vset.pattern.permute.xlu0 1
        %4181 = vperm.xlu0 %4180, %v3990
        %v4182 = vpop.permute.xlu0 %4181
        %4184 = vset.pattern.permute.xlu0 1
        %4185 = vperm.xlu0 %4184, %v3991
        %v4186 = vpop.permute.xlu0 %4185
        %4188 = vset.pattern.permute.xlu0 1
        %4189 = vperm.xlu0 %4188, %v3992
        %v4190 = vpop.permute.xlu0 %4189
        %4192 = vset.pattern.permute.xlu0 1
        %4193 = vperm.xlu0 %4192, %v3993
        %v4194 = vpop.permute.xlu0 %4193
        %4196 = vset.pattern.permute.xlu0 1
        %4197 = vperm.xlu0 %4196, %v3994
        %v4198 = vpop.permute.xlu0 %4197
        %4200 = vset.pattern.permute.xlu0 1
        %4201 = vperm.xlu0 %4200, %v3995
        %v4202 = vpop.permute.xlu0 %4201
        %v4204 = vmul.f32 %v4142, %v3996
        %v4205 = vmul.f32 %v4142, %v3997
        %v4206 = vmul.f32 %v4146, %v3998
        %v4207 = vmul.f32 %v4146, %v3999
        %v4208 = vmul.f32 %v4150, %v4000
        %v4209 = vmul.f32 %v4150, %v4001
        %v4210 = vmul.f32 %v4154, %v4002
        %v4211 = vmul.f32 %v4154, %v4003
        %v4212 = vmul.f32 %v4158, %v4004
        %v4213 = vmul.f32 %v4158, %v4005
        %v4214 = vmul.f32 %v4162, %v4006
        %v4215 = vmul.f32 %v4162, %v4007
        %v4216 = vmul.f32 %v4166, %v4008
        %v4217 = vmul.f32 %v4166, %v4009
        %v4218 = vmul.f32 %v4170, %v4010
        %v4219 = vmul.f32 %v4170, %v4011
        %v4220 = vmul.f32 %v4174, %v4012
        %v4221 = vmul.f32 %v4174, %v4013
        %v4222 = vmul.f32 %v4178, %v4014
        %v4223 = vmul.f32 %v4178, %v4015
        %v4224 = vmul.f32 %v4182, %v4016
        %v4225 = vmul.f32 %v4182, %v4017
        %v4226 = vmul.f32 %v4186, %v4018
        %v4227 = vmul.f32 %v4186, %v4019
        %v4228 = vmul.f32 %v4190, %v4020
        %v4229 = vmul.f32 %v4190, %v4021
        %v4230 = vmul.f32 %v4194, %v4022
        %v4231 = vmul.f32 %v4194, %v4023
        %v4232 = vmul.f32 %v4198, %v4024
        %v4233 = vmul.f32 %v4198, %v4025
        %v4234 = vmul.f32 %v4202, %v4026
        %v4235 = vmul.f32 %v4202, %v4027
        %4268 = vrot.lane.b32.xlu0 %v4204, 126
        %v4269 = vpop.permute.xlu0 %4268
        %4270 = vrot.lane.b32.xlu0 %v4205, 126
        %v4271 = vpop.permute.xlu0 %4270
        %4272 = vrot.lane.b32.xlu0 %v4206, 126
        %v4273 = vpop.permute.xlu0 %4272
        %4274 = vrot.lane.b32.xlu0 %v4207, 126
        %v4275 = vpop.permute.xlu0 %4274
        %4276 = vrot.lane.b32.xlu0 %v4208, 126
        %v4277 = vpop.permute.xlu0 %4276
        %4278 = vrot.lane.b32.xlu0 %v4209, 126
        %v4279 = vpop.permute.xlu0 %4278
        %4280 = vrot.lane.b32.xlu0 %v4210, 126
        %v4281 = vpop.permute.xlu0 %4280
        %4282 = vrot.lane.b32.xlu0 %v4211, 126
        %v4283 = vpop.permute.xlu0 %4282
        %4284 = vrot.lane.b32.xlu0 %v4212, 126
        %v4285 = vpop.permute.xlu0 %4284
        %4286 = vrot.lane.b32.xlu0 %v4213, 126
        %v4287 = vpop.permute.xlu0 %4286
        %4288 = vrot.lane.b32.xlu0 %v4214, 126
        %v4289 = vpop.permute.xlu0 %4288
        %4290 = vrot.lane.b32.xlu0 %v4215, 126
        %v4291 = vpop.permute.xlu0 %4290
        %4292 = vrot.lane.b32.xlu0 %v4216, 126
        %v4293 = vpop.permute.xlu0 %4292
        %4294 = vrot.lane.b32.xlu0 %v4217, 126
        %v4295 = vpop.permute.xlu0 %4294
        %4296 = vrot.lane.b32.xlu0 %v4218, 126
        %v4297 = vpop.permute.xlu0 %4296
        %4298 = vrot.lane.b32.xlu0 %v4219, 126
        %v4299 = vpop.permute.xlu0 %4298
        %4300 = vrot.lane.b32.xlu0 %v4220, 126
        %v4301 = vpop.permute.xlu0 %4300
        %4302 = vrot.lane.b32.xlu0 %v4221, 126
        %v4303 = vpop.permute.xlu0 %4302
        %4304 = vrot.lane.b32.xlu0 %v4222, 126
        %v4305 = vpop.permute.xlu0 %4304
        %4306 = vrot.lane.b32.xlu0 %v4223, 126
        %v4307 = vpop.permute.xlu0 %4306
        %4308 = vrot.lane.b32.xlu0 %v4224, 126
        %v4309 = vpop.permute.xlu0 %4308
        %4310 = vrot.lane.b32.xlu0 %v4225, 126
        %v4311 = vpop.permute.xlu0 %4310
        %4312 = vrot.lane.b32.xlu0 %v4226, 126
        %v4313 = vpop.permute.xlu0 %4312
        %4314 = vrot.lane.b32.xlu0 %v4227, 126
        %v4315 = vpop.permute.xlu0 %4314
        %4316 = vrot.lane.b32.xlu0 %v4228, 126
        %v4317 = vpop.permute.xlu0 %4316
        %4318 = vrot.lane.b32.xlu0 %v4229, 126
        %v4319 = vpop.permute.xlu0 %4318
        %4320 = vrot.lane.b32.xlu0 %v4230, 126
        %v4321 = vpop.permute.xlu0 %4320
        %4322 = vrot.lane.b32.xlu0 %v4231, 126
        %v4323 = vpop.permute.xlu0 %4322
        %4324 = vrot.lane.b32.xlu0 %v4232, 126
        %v4325 = vpop.permute.xlu0 %4324
        %4326 = vrot.lane.b32.xlu0 %v4233, 126
        %v4327 = vpop.permute.xlu0 %4326
        %4328 = vrot.lane.b32.xlu0 %v4234, 126
        %v4329 = vpop.permute.xlu0 %4328
        %4330 = vrot.lane.b32.xlu0 %v4235, 126
        %v4331 = vpop.permute.xlu0 %4330
        %vm4332 = vcmask 1031168
        %v4333 = vsel %vm4332, %v4269, %v4271
        %v4334 = vsel %vm4332, %v4273, %v4275
        %v4335 = vsel %vm4332, %v4277, %v4279
        %v4336 = vsel %vm4332, %v4281, %v4283
        %v4337 = vsel %vm4332, %v4285, %v4287
        %v4338 = vsel %vm4332, %v4289, %v4291
        %v4339 = vsel %vm4332, %v4293, %v4295
        %v4340 = vsel %vm4332, %v4297, %v4299
        %v4341 = vsel %vm4332, %v4301, %v4303
        %v4342 = vsel %vm4332, %v4305, %v4307
        %v4343 = vsel %vm4332, %v4309, %v4311
        %v4344 = vsel %vm4332, %v4313, %v4315
        %v4345 = vsel %vm4332, %v4317, %v4319
        %v4346 = vsel %vm4332, %v4321, %v4323
        %v4347 = vsel %vm4332, %v4325, %v4327
        %v4348 = vsel %vm4332, %v4329, %v4331
        %v4381 = vadd.f32 %v4108, %v4333
        %v4382 = vadd.f32 %v4109, %v4271
        %v4383 = vadd.f32 %v4110, %v4334
        %v4384 = vadd.f32 %v4111, %v4275
        %v4385 = vadd.f32 %v4112, %v4335
        %v4386 = vadd.f32 %v4113, %v4279
        %v4387 = vadd.f32 %v4114, %v4336
        %v4388 = vadd.f32 %v4115, %v4283
        %v4389 = vadd.f32 %v4116, %v4337
        %v4390 = vadd.f32 %v4117, %v4287
        %v4391 = vadd.f32 %v4118, %v4338
        %v4392 = vadd.f32 %v4119, %v4291
        %v4393 = vadd.f32 %v4120, %v4339
        %v4394 = vadd.f32 %v4121, %v4295
        %v4395 = vadd.f32 %v4122, %v4340
        %v4396 = vadd.f32 %v4123, %v4299
        %v4397 = vadd.f32 %v4124, %v4341
        %v4398 = vadd.f32 %v4125, %v4303
        %v4399 = vadd.f32 %v4126, %v4342
        %v4400 = vadd.f32 %v4127, %v4307
        %v4401 = vadd.f32 %v4128, %v4343
        %v4402 = vadd.f32 %v4129, %v4311
        %v4403 = vadd.f32 %v4130, %v4344
        %v4404 = vadd.f32 %v4131, %v4315
        %v4405 = vadd.f32 %v4132, %v4345
        %v4406 = vadd.f32 %v4133, %v4319
        %v4407 = vadd.f32 %v4134, %v4346
        %v4408 = vadd.f32 %v4135, %v4323
        %v4409 = vadd.f32 %v4136, %v4347
        %v4410 = vadd.f32 %v4137, %v4327
        %v4411 = vadd.f32 %v4138, %v4348
        %v4412 = vadd.f32 %v4139, %v4331
        %4413 = vset.pattern.permute.xlu0 2
        %4414 = vperm.xlu0 %4413, %v3980
        %v4415 = vpop.permute.xlu0 %4414
        %4417 = vset.pattern.permute.xlu0 2
        %4418 = vperm.xlu0 %4417, %v3981
        %v4419 = vpop.permute.xlu0 %4418
        %4421 = vset.pattern.permute.xlu0 2
        %4422 = vperm.xlu0 %4421, %v3982
        %v4423 = vpop.permute.xlu0 %4422
        %4425 = vset.pattern.permute.xlu0 2
        %4426 = vperm.xlu0 %4425, %v3983
        %v4427 = vpop.permute.xlu0 %4426
        %4429 = vset.pattern.permute.xlu0 2
        %4430 = vperm.xlu0 %4429, %v3984
        %v4431 = vpop.permute.xlu0 %4430
        %4433 = vset.pattern.permute.xlu0 2
        %4434 = vperm.xlu0 %4433, %v3985
        %v4435 = vpop.permute.xlu0 %4434
        %4437 = vset.pattern.permute.xlu0 2
        %4438 = vperm.xlu0 %4437, %v3986
        %v4439 = vpop.permute.xlu0 %4438
        %4441 = vset.pattern.permute.xlu0 2
        %4442 = vperm.xlu0 %4441, %v3987
        %v4443 = vpop.permute.xlu0 %4442
        %4445 = vset.pattern.permute.xlu0 2
        %4446 = vperm.xlu0 %4445, %v3988
        %v4447 = vpop.permute.xlu0 %4446
        %4449 = vset.pattern.permute.xlu0 2
        %4450 = vperm.xlu0 %4449, %v3989
        %v4451 = vpop.permute.xlu0 %4450
        %4453 = vset.pattern.permute.xlu0 2
        %4454 = vperm.xlu0 %4453, %v3990
        %v4455 = vpop.permute.xlu0 %4454
        %4457 = vset.pattern.permute.xlu0 2
        %4458 = vperm.xlu0 %4457, %v3991
        %v4459 = vpop.permute.xlu0 %4458
        %4461 = vset.pattern.permute.xlu0 2
        %4462 = vperm.xlu0 %4461, %v3992
        %v4463 = vpop.permute.xlu0 %4462
        %4465 = vset.pattern.permute.xlu0 2
        %4466 = vperm.xlu0 %4465, %v3993
        %v4467 = vpop.permute.xlu0 %4466
        %4469 = vset.pattern.permute.xlu0 2
        %4470 = vperm.xlu0 %4469, %v3994
        %v4471 = vpop.permute.xlu0 %4470
        %4473 = vset.pattern.permute.xlu0 2
        %4474 = vperm.xlu0 %4473, %v3995
        %v4475 = vpop.permute.xlu0 %4474
        %v4477 = vmul.f32 %v4415, %v3997
        %v4478 = vmul.f32 %v4419, %v3999
        %v4479 = vmul.f32 %v4423, %v4001
        %v4480 = vmul.f32 %v4427, %v4003
        %v4481 = vmul.f32 %v4431, %v4005
        %v4482 = vmul.f32 %v4435, %v4007
        %v4483 = vmul.f32 %v4439, %v4009
        %v4484 = vmul.f32 %v4443, %v4011
        %v4485 = vmul.f32 %v4447, %v4013
        %v4486 = vmul.f32 %v4451, %v4015
        %v4487 = vmul.f32 %v4455, %v4017
        %v4488 = vmul.f32 %v4459, %v4019
        %v4489 = vmul.f32 %v4463, %v4021
        %v4490 = vmul.f32 %v4467, %v4023
        %v4491 = vmul.f32 %v4471, %v4025
        %v4492 = vmul.f32 %v4475, %v4027
        %4509 = vrot.lane.b32.xlu0 %v4477, 124
        %v4510 = vpop.permute.xlu0 %4509
        %4511 = vrot.lane.b32.xlu0 %v4478, 124
        %v4512 = vpop.permute.xlu0 %4511
        %4513 = vrot.lane.b32.xlu0 %v4479, 124
        %v4514 = vpop.permute.xlu0 %4513
        %4515 = vrot.lane.b32.xlu0 %v4480, 124
        %v4516 = vpop.permute.xlu0 %4515
        %4517 = vrot.lane.b32.xlu0 %v4481, 124
        %v4518 = vpop.permute.xlu0 %4517
        %4519 = vrot.lane.b32.xlu0 %v4482, 124
        %v4520 = vpop.permute.xlu0 %4519
        %4521 = vrot.lane.b32.xlu0 %v4483, 124
        %v4522 = vpop.permute.xlu0 %4521
        %4523 = vrot.lane.b32.xlu0 %v4484, 124
        %v4524 = vpop.permute.xlu0 %4523
        %4525 = vrot.lane.b32.xlu0 %v4485, 124
        %v4526 = vpop.permute.xlu0 %4525
        %4527 = vrot.lane.b32.xlu0 %v4486, 124
        %v4528 = vpop.permute.xlu0 %4527
        %4529 = vrot.lane.b32.xlu0 %v4487, 124
        %v4530 = vpop.permute.xlu0 %4529
        %4531 = vrot.lane.b32.xlu0 %v4488, 124
        %v4532 = vpop.permute.xlu0 %4531
        %4533 = vrot.lane.b32.xlu0 %v4489, 124
        %v4534 = vpop.permute.xlu0 %4533
        %4535 = vrot.lane.b32.xlu0 %v4490, 124
        %v4536 = vpop.permute.xlu0 %4535
        %4537 = vrot.lane.b32.xlu0 %v4491, 124
        %v4538 = vpop.permute.xlu0 %4537
        %4539 = vrot.lane.b32.xlu0 %v4492, 124
        %v4540 = vpop.permute.xlu0 %4539
        %v4557 = vadd.f32 %v4381, %v4510
        %v4558 = vadd.f32 %v4382, %v4510
        %v4559 = vadd.f32 %v4383, %v4512
        %v4560 = vadd.f32 %v4384, %v4512
        %v4561 = vadd.f32 %v4385, %v4514
        %v4562 = vadd.f32 %v4386, %v4514
        %v4563 = vadd.f32 %v4387, %v4516
        %v4564 = vadd.f32 %v4388, %v4516
        %v4565 = vadd.f32 %v4389, %v4518
        %v4566 = vadd.f32 %v4390, %v4518
        %v4567 = vadd.f32 %v4391, %v4520
        %v4568 = vadd.f32 %v4392, %v4520
        %v4569 = vadd.f32 %v4393, %v4522
        %v4570 = vadd.f32 %v4394, %v4522
        %v4571 = vadd.f32 %v4395, %v4524
        %v4572 = vadd.f32 %v4396, %v4524
        %v4573 = vadd.f32 %v4397, %v4526
        %v4574 = vadd.f32 %v4398, %v4526
        %v4575 = vadd.f32 %v4399, %v4528
        %v4576 = vadd.f32 %v4400, %v4528
        %v4577 = vadd.f32 %v4401, %v4530
        %v4578 = vadd.f32 %v4402, %v4530
        %v4579 = vadd.f32 %v4403, %v4532
        %v4580 = vadd.f32 %v4404, %v4532
        %v4581 = vadd.f32 %v4405, %v4534
        %v4582 = vadd.f32 %v4406, %v4534
        %v4583 = vadd.f32 %v4407, %v4536
        %v4584 = vadd.f32 %v4408, %v4536
        %v4585 = vadd.f32 %v4409, %v4538
        %v4586 = vadd.f32 %v4410, %v4538
        %v4587 = vadd.f32 %v4411, %v4540
        %v4588 = vadd.f32 %v4412, %v4540
        %4589 = vset.pattern.permute.xlu0 3
        %4590 = vperm.xlu0 %4589, %v3344
        %v4591 = vpop.permute.xlu0 %4590
        %4593 = vset.pattern.permute.xlu0 3
        %4594 = vperm.xlu0 %4593, %v3345
        %v4595 = vpop.permute.xlu0 %4594
        %4597 = vset.pattern.permute.xlu0 3
        %4598 = vperm.xlu0 %4597, %v3346
        %v4599 = vpop.permute.xlu0 %4598
        %4601 = vset.pattern.permute.xlu0 3
        %4602 = vperm.xlu0 %4601, %v3347
        %v4603 = vpop.permute.xlu0 %4602
        %4605 = vset.pattern.permute.xlu0 3
        %4606 = vperm.xlu0 %4605, %v3348
        %v4607 = vpop.permute.xlu0 %4606
        %4609 = vset.pattern.permute.xlu0 3
        %4610 = vperm.xlu0 %4609, %v3349
        %v4611 = vpop.permute.xlu0 %4610
        %4613 = vset.pattern.permute.xlu0 3
        %4614 = vperm.xlu0 %4613, %v3350
        %v4615 = vpop.permute.xlu0 %4614
        %4617 = vset.pattern.permute.xlu0 3
        %4618 = vperm.xlu0 %4617, %v3351
        %v4619 = vpop.permute.xlu0 %4618
        %4621 = vset.pattern.permute.xlu0 3
        %4622 = vperm.xlu0 %4621, %v3352
        %v4623 = vpop.permute.xlu0 %4622
        %4625 = vset.pattern.permute.xlu0 3
        %4626 = vperm.xlu0 %4625, %v3353
        %v4627 = vpop.permute.xlu0 %4626
        %4629 = vset.pattern.permute.xlu0 3
        %4630 = vperm.xlu0 %4629, %v3354
        %v4631 = vpop.permute.xlu0 %4630
        %4633 = vset.pattern.permute.xlu0 3
        %4634 = vperm.xlu0 %4633, %v3355
        %v4635 = vpop.permute.xlu0 %4634
        %4637 = vset.pattern.permute.xlu0 3
        %4638 = vperm.xlu0 %4637, %v3356
        %v4639 = vpop.permute.xlu0 %4638
        %4641 = vset.pattern.permute.xlu0 3
        %4642 = vperm.xlu0 %4641, %v3357
        %v4643 = vpop.permute.xlu0 %4642
        %4645 = vset.pattern.permute.xlu0 3
        %4646 = vperm.xlu0 %4645, %v3358
        %v4647 = vpop.permute.xlu0 %4646
        %4649 = vset.pattern.permute.xlu0 3
        %4650 = vperm.xlu0 %4649, %v3359
        %v4651 = vpop.permute.xlu0 %4650
        %v4653 = vadd.f32 %v4557, %v4591
        %v4654 = vadd.f32 %v4558, %v4591
        %v4655 = vadd.f32 %v4559, %v4595
        %v4656 = vadd.f32 %v4560, %v4595
        %v4657 = vadd.f32 %v4561, %v4599
        %v4658 = vadd.f32 %v4562, %v4599
        %v4659 = vadd.f32 %v4563, %v4603
        %v4660 = vadd.f32 %v4564, %v4603
        %v4661 = vadd.f32 %v4565, %v4607
        %v4662 = vadd.f32 %v4566, %v4607
        %v4663 = vadd.f32 %v4567, %v4611
        %v4664 = vadd.f32 %v4568, %v4611
        %v4665 = vadd.f32 %v4569, %v4615
        %v4666 = vadd.f32 %v4570, %v4615
        %v4667 = vadd.f32 %v4571, %v4619
        %v4668 = vadd.f32 %v4572, %v4619
        %v4669 = vadd.f32 %v4573, %v4623
        %v4670 = vadd.f32 %v4574, %v4623
        %v4671 = vadd.f32 %v4575, %v4627
        %v4672 = vadd.f32 %v4576, %v4627
        %v4673 = vadd.f32 %v4577, %v4631
        %v4674 = vadd.f32 %v4578, %v4631
        %v4675 = vadd.f32 %v4579, %v4635
        %v4676 = vadd.f32 %v4580, %v4635
        %v4677 = vadd.f32 %v4581, %v4639
        %v4678 = vadd.f32 %v4582, %v4639
        %v4679 = vadd.f32 %v4583, %v4643
        %v4680 = vadd.f32 %v4584, %v4643
        %v4681 = vadd.f32 %v4585, %v4647
        %v4682 = vadd.f32 %v4586, %v4647
        %v4683 = vadd.f32 %v4587, %v4651
        %v4684 = vadd.f32 %v4588, %v4651
        %vm4685 = vcmp.ge.f32.partialorder %v4653, 0.0
        %vm4686 = vcmp.ge.f32.partialorder %v4654, 0.0
        %vm4687 = vcmp.ge.f32.partialorder %v4655, 0.0
        %vm4688 = vcmp.ge.f32.partialorder %v4656, 0.0
        %vm4689 = vcmp.ge.f32.partialorder %v4657, 0.0
        %vm4690 = vcmp.ge.f32.partialorder %v4658, 0.0
        %vm4691 = vcmp.ge.f32.partialorder %v4659, 0.0
        %vm4692 = vcmp.ge.f32.partialorder %v4660, 0.0
        %vm4693 = vcmp.ge.f32.partialorder %v4661, 0.0
        %vm4694 = vcmp.ge.f32.partialorder %v4662, 0.0
        %vm4695 = vcmp.ge.f32.partialorder %v4663, 0.0
        %vm4696 = vcmp.ge.f32.partialorder %v4664, 0.0
        %vm4697 = vcmp.ge.f32.partialorder %v4665, 0.0
        %vm4698 = vcmp.ge.f32.partialorder %v4666, 0.0
        %vm4699 = vcmp.ge.f32.partialorder %v4667, 0.0
        %vm4700 = vcmp.ge.f32.partialorder %v4668, 0.0
        %vm4701 = vcmp.ge.f32.partialorder %v4669, 0.0
        %vm4702 = vcmp.ge.f32.partialorder %v4670, 0.0
        %vm4703 = vcmp.ge.f32.partialorder %v4671, 0.0
        %vm4704 = vcmp.ge.f32.partialorder %v4672, 0.0
        %vm4705 = vcmp.ge.f32.partialorder %v4673, 0.0
        %vm4706 = vcmp.ge.f32.partialorder %v4674, 0.0
        %vm4707 = vcmp.ge.f32.partialorder %v4675, 0.0
        %vm4708 = vcmp.ge.f32.partialorder %v4676, 0.0
        %vm4709 = vcmp.ge.f32.partialorder %v4677, 0.0
        %vm4710 = vcmp.ge.f32.partialorder %v4678, 0.0
        %vm4711 = vcmp.ge.f32.partialorder %v4679, 0.0
        %vm4712 = vcmp.ge.f32.partialorder %v4680, 0.0
        %vm4713 = vcmp.ge.f32.partialorder %v4681, 0.0
        %vm4714 = vcmp.ge.f32.partialorder %v4682, 0.0
        %vm4715 = vcmp.ge.f32.partialorder %v4683, 0.0
        %vm4716 = vcmp.ge.f32.partialorder %v4684, 0.0
        %v4717 = vstv %s3361
        %v4718 = vmul.f32 %v4717, %v4653
        %v4719 = vmul.f32 %v4717, %v4654
        %v4720 = vmul.f32 %v4717, %v4655
        %v4721 = vmul.f32 %v4717, %v4656
        %v4722 = vmul.f32 %v4717, %v4657
        %v4723 = vmul.f32 %v4717, %v4658
        %v4724 = vmul.f32 %v4717, %v4659
        %v4725 = vmul.f32 %v4717, %v4660
        %v4726 = vmul.f32 %v4717, %v4661
        %v4727 = vmul.f32 %v4717, %v4662
        %v4728 = vmul.f32 %v4717, %v4663
        %v4729 = vmul.f32 %v4717, %v4664
        %v4730 = vmul.f32 %v4717, %v4665
        %v4731 = vmul.f32 %v4717, %v4666
        %v4732 = vmul.f32 %v4717, %v4667
        %v4733 = vmul.f32 %v4717, %v4668
        %v4734 = vmul.f32 %v4717, %v4669
        %v4735 = vmul.f32 %v4717, %v4670
        %v4736 = vmul.f32 %v4717, %v4671
        %v4737 = vmul.f32 %v4717, %v4672
        %v4738 = vmul.f32 %v4717, %v4673
        %v4739 = vmul.f32 %v4717, %v4674
        %v4740 = vmul.f32 %v4717, %v4675
        %v4741 = vmul.f32 %v4717, %v4676
        %v4742 = vmul.f32 %v4717, %v4677
        %v4743 = vmul.f32 %v4717, %v4678
        %v4744 = vmul.f32 %v4717, %v4679
        %v4745 = vmul.f32 %v4717, %v4680
        %v4746 = vmul.f32 %v4717, %v4681
        %v4747 = vmul.f32 %v4717, %v4682
        %v4748 = vmul.f32 %v4717, %v4683
        %v4749 = vmul.f32 %v4717, %v4684
        %v4750 = vsel %vm4685, %v4653, %v4718
        %v4751 = vsel %vm4686, %v4654, %v4719
        %v4752 = vsel %vm4687, %v4655, %v4720
        %v4753 = vsel %vm4688, %v4656, %v4721
        %v4754 = vsel %vm4689, %v4657, %v4722
        %v4755 = vsel %vm4690, %v4658, %v4723
        %v4756 = vsel %vm4691, %v4659, %v4724
        %v4757 = vsel %vm4692, %v4660, %v4725
        %v4758 = vsel %vm4693, %v4661, %v4726
        %v4759 = vsel %vm4694, %v4662, %v4727
        %v4760 = vsel %vm4695, %v4663, %v4728
        %v4761 = vsel %vm4696, %v4664, %v4729
        %v4762 = vsel %vm4697, %v4665, %v4730
        %v4763 = vsel %vm4698, %v4666, %v4731
        %v4764 = vsel %vm4699, %v4667, %v4732
        %v4765 = vsel %vm4700, %v4668, %v4733
        %v4766 = vsel %vm4701, %v4669, %v4734
        %v4767 = vsel %vm4702, %v4670, %v4735
        %v4768 = vsel %vm4703, %v4671, %v4736
        %v4769 = vsel %vm4704, %v4672, %v4737
        %v4770 = vsel %vm4705, %v4673, %v4738
        %v4771 = vsel %vm4706, %v4674, %v4739
        %v4772 = vsel %vm4707, %v4675, %v4740
        %v4773 = vsel %vm4708, %v4676, %v4741
        %v4774 = vsel %vm4709, %v4677, %v4742
        %v4775 = vsel %vm4710, %v4678, %v4743
        %v4776 = vsel %vm4711, %v4679, %v4744
        %v4777 = vsel %vm4712, %v4680, %v4745
        %v4778 = vsel %vm4713, %v4681, %v4746
        %v4779 = vsel %vm4714, %v4682, %v4747
        %v4780 = vsel %vm4715, %v4683, %v4748
        %v4781 = vsel %vm4716, %v4684, %v4749
        %v4782 = vsel %vm503, %v4750, 0.0
        %v4783 = vsel %vm503, %v4752, 0.0
        %v4784 = vadd.f32 %v4782, %v4783
        %v4785 = vsel %vm503, %v4754, 0.0
        %v4786 = vadd.f32 %v4784, %v4785
        %v4787 = vsel %vm503, %v4756, 0.0
        %v4788 = vadd.f32 %v4786, %v4787
        %v4789 = vsel %vm503, %v4758, 0.0
        %v4790 = vadd.f32 %v4788, %v4789
        %v4791 = vsel %vm503, %v4760, 0.0
        %v4792 = vadd.f32 %v4790, %v4791
        %v4793 = vsel %vm503, %v4762, 0.0
        %v4794 = vadd.f32 %v4792, %v4793
        %v4795 = vsel %vm503, %v4764, 0.0
        %v4796 = vadd.f32 %v4794, %v4795
        %v4797 = vsel %vm503, %v4766, 0.0
        %v4798 = vadd.f32 %v4796, %v4797
        %v4799 = vsel %vm503, %v4768, 0.0
        %v4800 = vadd.f32 %v4798, %v4799
        %v4801 = vsel %vm503, %v4770, 0.0
        %v4802 = vadd.f32 %v4800, %v4801
        %v4803 = vsel %vm503, %v4772, 0.0
        %v4804 = vadd.f32 %v4802, %v4803
        %v4805 = vsel %vm503, %v4774, 0.0
        %v4806 = vadd.f32 %v4804, %v4805
        %v4807 = vsel %vm503, %v4776, 0.0
        %v4808 = vadd.f32 %v4806, %v4807
        %v4809 = vsel %vm503, %v4778, 0.0
        %v4810 = vadd.f32 %v4808, %v4809
        %v4811 = vsel %vm503, %v4780, 0.0
        %v4812 = vadd.f32 %v4810, %v4811
        %v4813 = vrot.slane %v4812, 4
        %v4814 = vadd.f32 %v4812, %v4813
        %v4815 = vrot.slane %v4814, 2
        %v4816 = vadd.f32 %v4814, %v4815
        %v4817 = vrot.slane %v4816, 1
        %v4818 = vadd.f32 %v4816, %v4817
        %vm4819 = vcmask 228352
        %v4820 = vsel %vm4819, %v4751, 0.0
        %v4821 = vsel %vm4819, %v4753, 0.0
        %v4822 = vadd.f32 %v4820, %v4821
        %v4823 = vsel %vm4819, %v4755, 0.0
        %v4824 = vadd.f32 %v4822, %v4823
        %v4825 = vsel %vm4819, %v4757, 0.0
        %v4826 = vadd.f32 %v4824, %v4825
        %v4827 = vsel %vm4819, %v4759, 0.0
        %v4828 = vadd.f32 %v4826, %v4827
        %v4829 = vsel %vm4819, %v4761, 0.0
        %v4830 = vadd.f32 %v4828, %v4829
        %v4831 = vsel %vm4819, %v4763, 0.0
        %v4832 = vadd.f32 %v4830, %v4831
        %v4833 = vsel %vm4819, %v4765, 0.0
        %v4834 = vadd.f32 %v4832, %v4833
        %v4835 = vsel %vm4819, %v4767, 0.0
        %v4836 = vadd.f32 %v4834, %v4835
        %v4837 = vsel %vm4819, %v4769, 0.0
        %v4838 = vadd.f32 %v4836, %v4837
        %v4839 = vsel %vm4819, %v4771, 0.0
        %v4840 = vadd.f32 %v4838, %v4839
        %v4841 = vsel %vm4819, %v4773, 0.0
        %v4842 = vadd.f32 %v4840, %v4841
        %v4843 = vsel %vm4819, %v4775, 0.0
        %v4844 = vadd.f32 %v4842, %v4843
        %v4845 = vsel %vm4819, %v4777, 0.0
        %v4846 = vadd.f32 %v4844, %v4845
        %v4847 = vsel %vm4819, %v4779, 0.0
        %v4848 = vadd.f32 %v4846, %v4847
        %v4849 = vsel %vm4819, %v4781, 0.0
        %v4850 = vadd.f32 %v4848, %v4849
        %v4851 = vrot.slane %v4850, 4
        %v4852 = vadd.f32 %v4850, %v4851
        %v4853 = vrot.slane %v4852, 2
        %v4854 = vadd.f32 %v4852, %v4853
        %v4855 = vrot.slane %v4854, 1
        %v4856 = vadd.f32 %v4854, %v4855
        %v4857 = vmul.f32 %v4750, %v4750
        %v4858 = vmul.f32 %v4751, %v4751
        %v4859 = vmul.f32 %v4752, %v4752
        %v4860 = vmul.f32 %v4753, %v4753
        %v4861 = vmul.f32 %v4754, %v4754
        %v4862 = vmul.f32 %v4755, %v4755
        %v4863 = vmul.f32 %v4756, %v4756
        %v4864 = vmul.f32 %v4757, %v4757
        %v4865 = vmul.f32 %v4758, %v4758
        %v4866 = vmul.f32 %v4759, %v4759
        %v4867 = vmul.f32 %v4760, %v4760
        %v4868 = vmul.f32 %v4761, %v4761
        %v4869 = vmul.f32 %v4762, %v4762
        %v4870 = vmul.f32 %v4763, %v4763
        %v4871 = vmul.f32 %v4764, %v4764
        %v4872 = vmul.f32 %v4765, %v4765
        %v4873 = vmul.f32 %v4766, %v4766
        %v4874 = vmul.f32 %v4767, %v4767
        %v4875 = vmul.f32 %v4768, %v4768
        %v4876 = vmul.f32 %v4769, %v4769
        %v4877 = vmul.f32 %v4770, %v4770
        %v4878 = vmul.f32 %v4771, %v4771
        %v4879 = vmul.f32 %v4772, %v4772
        %v4880 = vmul.f32 %v4773, %v4773
        %v4881 = vmul.f32 %v4774, %v4774
        %v4882 = vmul.f32 %v4775, %v4775
        %v4883 = vmul.f32 %v4776, %v4776
        %v4884 = vmul.f32 %v4777, %v4777
        %v4885 = vmul.f32 %v4778, %v4778
        %v4886 = vmul.f32 %v4779, %v4779
        %v4887 = vmul.f32 %v4780, %v4780
        %v4888 = vmul.f32 %v4781, %v4781
        %v4889 = vsel %vm503, %v4857, 0.0
        %v4890 = vsel %vm503, %v4859, 0.0
        %v4891 = vadd.f32 %v4889, %v4890
        %v4892 = vsel %vm503, %v4861, 0.0
        %v4893 = vadd.f32 %v4891, %v4892
        %v4894 = vsel %vm503, %v4863, 0.0
        %v4895 = vadd.f32 %v4893, %v4894
        %v4896 = vsel %vm503, %v4865, 0.0
        %v4897 = vadd.f32 %v4895, %v4896
        %v4898 = vsel %vm503, %v4867, 0.0
        %v4899 = vadd.f32 %v4897, %v4898
        %v4900 = vsel %vm503, %v4869, 0.0
        %v4901 = vadd.f32 %v4899, %v4900
        %v4902 = vsel %vm503, %v4871, 0.0
        %v4903 = vadd.f32 %v4901, %v4902
        %v4904 = vsel %vm503, %v4873, 0.0
        %v4905 = vadd.f32 %v4903, %v4904
        %v4906 = vsel %vm503, %v4875, 0.0
        %v4907 = vadd.f32 %v4905, %v4906
        %v4908 = vsel %vm503, %v4877, 0.0
        %v4909 = vadd.f32 %v4907, %v4908
        %v4910 = vsel %vm503, %v4879, 0.0
        %v4911 = vadd.f32 %v4909, %v4910
        %v4912 = vsel %vm503, %v4881, 0.0
        %v4913 = vadd.f32 %v4911, %v4912
        %v4914 = vsel %vm503, %v4883, 0.0
        %v4915 = vadd.f32 %v4913, %v4914
        %v4916 = vsel %vm503, %v4885, 0.0
        %v4917 = vadd.f32 %v4915, %v4916
        %v4918 = vsel %vm503, %v4887, 0.0
        %v4919 = vadd.f32 %v4917, %v4918
        %v4920 = vrot.slane %v4919, 4
        %v4921 = vadd.f32 %v4919, %v4920
        %v4922 = vrot.slane %v4921, 2
        %v4923 = vadd.f32 %v4921, %v4922
        %v4924 = vrot.slane %v4923, 1
        %v4925 = vadd.f32 %v4923, %v4924
        %v4926 = vsel %vm4819, %v4858, 0.0
        %v4927 = vsel %vm4819, %v4860, 0.0
        %v4928 = vadd.f32 %v4926, %v4927
        %v4929 = vsel %vm4819, %v4862, 0.0
        %v4930 = vadd.f32 %v4928, %v4929
        %v4931 = vsel %vm4819, %v4864, 0.0
        %v4932 = vadd.f32 %v4930, %v4931
        %v4933 = vsel %vm4819, %v4866, 0.0
        %v4934 = vadd.f32 %v4932, %v4933
        %v4935 = vsel %vm4819, %v4868, 0.0
        %v4936 = vadd.f32 %v4934, %v4935
        %v4937 = vsel %vm4819, %v4870, 0.0
        %v4938 = vadd.f32 %v4936, %v4937
        %v4939 = vsel %vm4819, %v4872, 0.0
        %v4940 = vadd.f32 %v4938, %v4939
        %v4941 = vsel %vm4819, %v4874, 0.0
        %v4942 = vadd.f32 %v4940, %v4941
        %v4943 = vsel %vm4819, %v4876, 0.0
        %v4944 = vadd.f32 %v4942, %v4943
        %v4945 = vsel %vm4819, %v4878, 0.0
        %v4946 = vadd.f32 %v4944, %v4945
        %v4947 = vsel %vm4819, %v4880, 0.0
        %v4948 = vadd.f32 %v4946, %v4947
        %v4949 = vsel %vm4819, %v4882, 0.0
        %v4950 = vadd.f32 %v4948, %v4949
        %v4951 = vsel %vm4819, %v4884, 0.0
        %v4952 = vadd.f32 %v4950, %v4951
        %v4953 = vsel %vm4819, %v4886, 0.0
        %v4954 = vadd.f32 %v4952, %v4953
        %v4955 = vsel %vm4819, %v4888, 0.0
        %v4956 = vadd.f32 %v4954, %v4955
        %v4957 = vrot.slane %v4956, 4
        %v4958 = vadd.f32 %v4956, %v4957
        %v4959 = vrot.slane %v4958, 2
        %v4960 = vadd.f32 %v4958, %v4959
        %v4961 = vrot.slane %v4960, 1
        %v4962 = vadd.f32 %v4960, %v4961
        %v4963 = vsel %vm659, %v4818, %v4925
        %v4964 = vsel %vm659, %v4856, %v4962
        %4967 = vrot.lane.b32.xlu0 %v4963, 5
        %v4968 = vpop.permute.xlu0 %4967
        %4969 = vrot.lane.b32.xlu0 %v4964, 5
        %v4970 = vpop.permute.xlu0 %4969
        %vm4971 = vcmask 39936
        %v4972 = vsel %vm4971, %v4968, %v4970
        %v4974 = vsel %vm665, 0.0, %v4972
        %4976 = vrot.lane.b32.xlu0 %v4974, 124
        %v4977 = vpop.permute.xlu0 %4976
        %v4979 = vadd.f32 %v4963, %v4977
        %v4980 = vadd.f32 %v4964, %v4977
        %4983 = vrot.lane.b32.xlu0 %v4979, 6
        %v4984 = vpop.permute.xlu0 %4983
        %4985 = vrot.lane.b32.xlu0 %v4980, 6
        %v4986 = vpop.permute.xlu0 %4985
        %v4987 = vsel %vm2690, %v4984, %v4986
        %v4989 = vsel %vm672, 0.0, %v4987
        %4991 = vrot.lane.b32.xlu0 %v4989, 124
        %v4992 = vpop.permute.xlu0 %4991
        %v4994 = vadd.f32 %v4979, %v4992
        %v4995 = vadd.f32 %v4980, %v4992
        %4998 = vrot.lane.b32.xlu0 %v4994, 8
        %v4999 = vpop.permute.xlu0 %4998
        %5000 = vrot.lane.b32.xlu0 %v4995, 8
        %v5001 = vpop.permute.xlu0 %5000
        %v5002 = vsel %vm686, %v4999, %v5001
        %v5004 = vsel %vm679, 0.0, %v5002
        %5006 = vrot.lane.b32.xlu0 %v5004, 124
        %v5007 = vpop.permute.xlu0 %5006
        %v5009 = vadd.f32 %v4994, %v5007
        %v5010 = vadd.f32 %v4995, %v5007
        %5013 = vrot.lane.b32.xlu0 %v5009, 12
        %v5014 = vpop.permute.xlu0 %5013
        %5015 = vrot.lane.b32.xlu0 %v5010, 12
        %v5016 = vpop.permute.xlu0 %5015
        %vm5017 = vcmask 97280
        %v5018 = vsel %vm5017, %v5014, %v5016
        %v5020 = vsel %vm686, 0.0, %v5018
        %5022 = vrot.lane.b32.xlu0 %v5020, 124
        %v5023 = vpop.permute.xlu0 %5022
        %v5025 = vadd.f32 %v5009, %v5023
        %v5026 = vadd.f32 %v5010, %v5023
        %5029 = vrot.lane.b32.xlu0 %v5025, 20
        %v5030 = vpop.permute.xlu0 %5029
        %5031 = vrot.lane.b32.xlu0 %v5026, 20
        %v5032 = vpop.permute.xlu0 %5031
        %vm5033 = vcmask 162816
        %v5034 = vsel %vm5033, %v5030, %v5032
        %v5036 = vsel %vm693, 0.0, %v5034
        %5038 = vrot.lane.b32.xlu0 %v5036, 124
        %v5039 = vpop.permute.xlu0 %5038
        %v5041 = vadd.f32 %v5025, %v5039
        %v5042 = vadd.f32 %v5026, %v5039
        %5043 = vrot.lane.b32.xlu0 %v700, 124
        %v5044 = vpop.permute.xlu0 %5043
        %v5046 = vrcp.pop %v5044
        %v5047 = vmul.f32 %v5044, %v5046
        %v5048 = vsub.f32 1.0, %v5047
        %v5049 = vmul.f32 %v5046, %v5048
        %v5050 = vadd.f32 %v5046, %v5049
        %vm5051 = vweird.f32 %v5044
        %vm5052 = vweird.f32 %v5046
        %vm5053 = vmor %vm5051, %vm5052
        %v5054 = vsel %vm5053, %v5046, %v5050
        %v5055 = vand.u32 2147483647, %v5044
        %vm5056 = vcmp.eq.f32.partialorder %v5055, 8.507059e+37
        %v5057 = vand.u32 %v5044, 2147483648
        %v5058 = vor.u32 1.1754944e-38, %v5057
        %v5059 = vsel %vm5056, %v5058, %v5054
        %v5060 = vmul.f32 %v5041, %v5059
        %v5061 = vmul.f32 %v5042, %v5059
        %v5062 = vmul.f32 %v5060, 2.0
        %v5063 = vmul.f32 %v5061, 2.0
        %v5064 = vmul.f32 %v5062, %v5041
        %v5065 = vmul.f32 %v5063, %v5042
        %v5068 = vrot.slane %v5064, 7
        %v5069 = vrot.slane %v5065, 7
        %v5072 = vsub.f32 %v5041, %v5068
        %v5073 = vsub.f32 %v5042, %v5069
        %v5074 = vmul.f32 %v5072, %v5059
        %v5075 = vmul.f32 %v5073, %v5059
        %v5076 = vmul.f32 %v5060, %v5060
        %v5077 = vmul.f32 %v5061, %v5061
        %v5080 = vrot.slane %v5076, 7
        %v5081 = vrot.slane %v5077, 7
        %v5084 = vadd.f32 %v5074, %v5080
        %v5085 = vadd.f32 %v5075, %v5081
        %v5086 = vmax.f32 %v5084, 0.0
        %v5087 = vmax.f32 %v5085, 0.0
        %v5088 = vadd.f32 %v5086, 1e-08
        %v5089 = vadd.f32 %v5087, 1e-08
        %v5090 = vrsqrt.pop %v5088
        %v5091 = vmul.f32 %v5090, %v5088
        %v5092 = vmul.f32 %v5091, %v5090
        %v5093 = vmul.f32 0.5, %v5092
        %v5094 = vsub.f32 1.5, %v5093
        %v5095 = vmul.f32 %v5090, %v5094
        %vm5096 = vweird.f32 %v5088
        %vm5097 = vweird.f32 %v5090
        %vm5098 = vmor %vm5096, %vm5097
        %v5099 = vsel %vm5098, %v5090, %v5095
        %v5100 = vrsqrt.pop %v5089
        %v5101 = vmul.f32 %v5100, %v5089
        %v5102 = vmul.f32 %v5101, %v5100
        %v5103 = vmul.f32 0.5, %v5102
        %v5104 = vsub.f32 1.5, %v5103
        %v5105 = vmul.f32 %v5100, %v5104
        %vm5106 = vweird.f32 %v5089
        %vm5107 = vweird.f32 %v5100
        %vm5108 = vmor %vm5106, %vm5107
        %v5109 = vsel %vm5108, %v5100, %v5105
        %v5110 = vperm.slane %v5060, 0
        %v5111 = vperm.slane %v5061, 0
        %v5112 = vsub.f32 %v4750, %v5110
        %v5113 = vsub.f32 %v4751, %v5111
        %v5114 = vsub.f32 %v4752, %v5110
        %v5115 = vsub.f32 %v4753, %v5111
        %v5116 = vsub.f32 %v4754, %v5110
        %v5117 = vsub.f32 %v4755, %v5111
        %v5118 = vsub.f32 %v4756, %v5110
        %v5119 = vsub.f32 %v4757, %v5111
        %v5120 = vsub.f32 %v4758, %v5110
        %v5121 = vsub.f32 %v4759, %v5111
        %v5122 = vsub.f32 %v4760, %v5110
        %v5123 = vsub.f32 %v4761, %v5111
        %v5124 = vsub.f32 %v4762, %v5110
        %v5125 = vsub.f32 %v4763, %v5111
        %v5126 = vsub.f32 %v4764, %v5110
        %v5127 = vsub.f32 %v4765, %v5111
        %v5128 = vsub.f32 %v4766, %v5110
        %v5129 = vsub.f32 %v4767, %v5111
        %v5130 = vsub.f32 %v4768, %v5110
        %v5131 = vsub.f32 %v4769, %v5111
        %v5132 = vsub.f32 %v4770, %v5110
        %v5133 = vsub.f32 %v4771, %v5111
        %v5134 = vsub.f32 %v4772, %v5110
        %v5135 = vsub.f32 %v4773, %v5111
        %v5136 = vsub.f32 %v4774, %v5110
        %v5137 = vsub.f32 %v4775, %v5111
        %v5138 = vsub.f32 %v4776, %v5110
        %v5139 = vsub.f32 %v4777, %v5111
        %v5140 = vsub.f32 %v4778, %v5110
        %v5141 = vsub.f32 %v4779, %v5111
        %v5142 = vsub.f32 %v4780, %v5110
        %v5143 = vsub.f32 %v4781, %v5111
        %v5144 = vperm.slane %v5099, 1
        %v5145 = vperm.slane %v5109, 1
        %v5146 = vmul.f32 %v5112, %v5144
        %v5147 = vmul.f32 %v5113, %v5145
        %v5148 = vmul.f32 %v5114, %v5144
        %v5149 = vmul.f32 %v5115, %v5145
        %v5150 = vmul.f32 %v5116, %v5144
        %v5151 = vmul.f32 %v5117, %v5145
        %v5152 = vmul.f32 %v5118, %v5144
        %v5153 = vmul.f32 %v5119, %v5145
        %v5154 = vmul.f32 %v5120, %v5144
        %v5155 = vmul.f32 %v5121, %v5145
        %v5156 = vmul.f32 %v5122, %v5144
        %v5157 = vmul.f32 %v5123, %v5145
        %v5158 = vmul.f32 %v5124, %v5144
        %v5159 = vmul.f32 %v5125, %v5145
        %v5160 = vmul.f32 %v5126, %v5144
        %v5161 = vmul.f32 %v5127, %v5145
        %v5162 = vmul.f32 %v5128, %v5144
        %v5163 = vmul.f32 %v5129, %v5145
        %v5164 = vmul.f32 %v5130, %v5144
        %v5165 = vmul.f32 %v5131, %v5145
        %v5166 = vmul.f32 %v5132, %v5144
        %v5167 = vmul.f32 %v5133, %v5145
        %v5168 = vmul.f32 %v5134, %v5144
        %v5169 = vmul.f32 %v5135, %v5145
        %v5170 = vmul.f32 %v5136, %v5144
        %v5171 = vmul.f32 %v5137, %v5145
        %v5172 = vmul.f32 %v5138, %v5144
        %v5173 = vmul.f32 %v5139, %v5145
        %v5174 = vmul.f32 %v5140, %v5144
        %v5175 = vmul.f32 %v5141, %v5145
        %v5176 = vmul.f32 %v5142, %v5144
        %v5177 = vmul.f32 %v5143, %v5145
        %5178 = vset.pattern.permute.xlu0 4
        %5179 = vperm.xlu0 %5178, %v3344
        %v5180 = vpop.permute.xlu0 %5179
        %5182 = vset.pattern.permute.xlu0 4
        %5183 = vperm.xlu0 %5182, %v3345
        %v5184 = vpop.permute.xlu0 %5183
        %5186 = vset.pattern.permute.xlu0 4
        %5187 = vperm.xlu0 %5186, %v3346
        %v5188 = vpop.permute.xlu0 %5187
        %5190 = vset.pattern.permute.xlu0 4
        %5191 = vperm.xlu0 %5190, %v3347
        %v5192 = vpop.permute.xlu0 %5191
        %5194 = vset.pattern.permute.xlu0 4
        %5195 = vperm.xlu0 %5194, %v3348
        %v5196 = vpop.permute.xlu0 %5195
        %5198 = vset.pattern.permute.xlu0 4
        %5199 = vperm.xlu0 %5198, %v3349
        %v5200 = vpop.permute.xlu0 %5199
        %5202 = vset.pattern.permute.xlu0 4
        %5203 = vperm.xlu0 %5202, %v3350
        %v5204 = vpop.permute.xlu0 %5203
        %5206 = vset.pattern.permute.xlu0 4
        %5207 = vperm.xlu0 %5206, %v3351
        %v5208 = vpop.permute.xlu0 %5207
        %5210 = vset.pattern.permute.xlu0 4
        %5211 = vperm.xlu0 %5210, %v3352
        %v5212 = vpop.permute.xlu0 %5211
        %5214 = vset.pattern.permute.xlu0 4
        %5215 = vperm.xlu0 %5214, %v3353
        %v5216 = vpop.permute.xlu0 %5215
        %5218 = vset.pattern.permute.xlu0 4
        %5219 = vperm.xlu0 %5218, %v3354
        %v5220 = vpop.permute.xlu0 %5219
        %5222 = vset.pattern.permute.xlu0 4
        %5223 = vperm.xlu0 %5222, %v3355
        %v5224 = vpop.permute.xlu0 %5223
        %5226 = vset.pattern.permute.xlu0 4
        %5227 = vperm.xlu0 %5226, %v3356
        %v5228 = vpop.permute.xlu0 %5227
        %5230 = vset.pattern.permute.xlu0 4
        %5231 = vperm.xlu0 %5230, %v3357
        %v5232 = vpop.permute.xlu0 %5231
        %5234 = vset.pattern.permute.xlu0 4
        %5235 = vperm.xlu0 %5234, %v3358
        %v5236 = vpop.permute.xlu0 %5235
        %5238 = vset.pattern.permute.xlu0 4
        %5239 = vperm.xlu0 %5238, %v3359
        %v5240 = vpop.permute.xlu0 %5239
        %v5242 = vmul.f32 %v5146, %v5180
        %v5243 = vmul.f32 %v5147, %v5180
        %v5244 = vmul.f32 %v5148, %v5184
        %v5245 = vmul.f32 %v5149, %v5184
        %v5246 = vmul.f32 %v5150, %v5188
        %v5247 = vmul.f32 %v5151, %v5188
        %v5248 = vmul.f32 %v5152, %v5192
        %v5249 = vmul.f32 %v5153, %v5192
        %v5250 = vmul.f32 %v5154, %v5196
        %v5251 = vmul.f32 %v5155, %v5196
        %v5252 = vmul.f32 %v5156, %v5200
        %v5253 = vmul.f32 %v5157, %v5200
        %v5254 = vmul.f32 %v5158, %v5204
        %v5255 = vmul.f32 %v5159, %v5204
        %v5256 = vmul.f32 %v5160, %v5208
        %v5257 = vmul.f32 %v5161, %v5208
        %v5258 = vmul.f32 %v5162, %v5212
        %v5259 = vmul.f32 %v5163, %v5212
        %v5260 = vmul.f32 %v5164, %v5216
        %v5261 = vmul.f32 %v5165, %v5216
        %v5262 = vmul.f32 %v5166, %v5220
        %v5263 = vmul.f32 %v5167, %v5220
        %v5264 = vmul.f32 %v5168, %v5224
        %v5265 = vmul.f32 %v5169, %v5224
        %v5266 = vmul.f32 %v5170, %v5228
        %v5267 = vmul.f32 %v5171, %v5228
        %v5268 = vmul.f32 %v5172, %v5232
        %v5269 = vmul.f32 %v5173, %v5232
        %v5270 = vmul.f32 %v5174, %v5236
        %v5271 = vmul.f32 %v5175, %v5236
        %v5272 = vmul.f32 %v5176, %v5240
        %v5273 = vmul.f32 %v5177, %v5240
        %5274 = vset.pattern.permute.xlu0 5
        %5275 = vperm.xlu0 %5274, %v3344
        %v5276 = vpop.permute.xlu0 %5275
        %5278 = vset.pattern.permute.xlu0 5
        %5279 = vperm.xlu0 %5278, %v3345
        %v5280 = vpop.permute.xlu0 %5279
        %5282 = vset.pattern.permute.xlu0 5
        %5283 = vperm.xlu0 %5282, %v3346
        %v5284 = vpop.permute.xlu0 %5283
        %5286 = vset.pattern.permute.xlu0 5
        %5287 = vperm.xlu0 %5286, %v3347
        %v5288 = vpop.permute.xlu0 %5287
        %5290 = vset.pattern.permute.xlu0 5
        %5291 = vperm.xlu0 %5290, %v3348
        %v5292 = vpop.permute.xlu0 %5291
        %5294 = vset.pattern.permute.xlu0 5
        %5295 = vperm.xlu0 %5294, %v3349
        %v5296 = vpop.permute.xlu0 %5295
        %5298 = vset.pattern.permute.xlu0 5
        %5299 = vperm.xlu0 %5298, %v3350
        %v5300 = vpop.permute.xlu0 %5299
        %5302 = vset.pattern.permute.xlu0 5
        %5303 = vperm.xlu0 %5302, %v3351
        %v5304 = vpop.permute.xlu0 %5303
        %5306 = vset.pattern.permute.xlu0 5
        %5307 = vperm.xlu0 %5306, %v3352
        %v5308 = vpop.permute.xlu0 %5307
        %5310 = vset.pattern.permute.xlu0 5
        %5311 = vperm.xlu0 %5310, %v3353
        %v5312 = vpop.permute.xlu0 %5311
        %5314 = vset.pattern.permute.xlu0 5
        %5315 = vperm.xlu0 %5314, %v3354
        %v5316 = vpop.permute.xlu0 %5315
        %5318 = vset.pattern.permute.xlu0 5
        %5319 = vperm.xlu0 %5318, %v3355
        %v5320 = vpop.permute.xlu0 %5319
        %5322 = vset.pattern.permute.xlu0 5
        %5323 = vperm.xlu0 %5322, %v3356
        %v5324 = vpop.permute.xlu0 %5323
        %5326 = vset.pattern.permute.xlu0 5
        %5327 = vperm.xlu0 %5326, %v3357
        %v5328 = vpop.permute.xlu0 %5327
        %5330 = vset.pattern.permute.xlu0 5
        %5331 = vperm.xlu0 %5330, %v3358
        %v5332 = vpop.permute.xlu0 %5331
        %5334 = vset.pattern.permute.xlu0 5
        %5335 = vperm.xlu0 %5334, %v3359
        %v5336 = vpop.permute.xlu0 %5335
        %v5338 = vadd.f32 %v5242, %v5276
        %v5339 = vadd.f32 %v5243, %v5276
        %v5340 = vadd.f32 %v5244, %v5280
        %v5341 = vadd.f32 %v5245, %v5280
        %v5342 = vadd.f32 %v5246, %v5284
        %v5343 = vadd.f32 %v5247, %v5284
        %v5344 = vadd.f32 %v5248, %v5288
        %v5345 = vadd.f32 %v5249, %v5288
        %v5346 = vadd.f32 %v5250, %v5292
        %v5347 = vadd.f32 %v5251, %v5292
        %v5348 = vadd.f32 %v5252, %v5296
        %v5349 = vadd.f32 %v5253, %v5296
        %v5350 = vadd.f32 %v5254, %v5300
        %v5351 = vadd.f32 %v5255, %v5300
        %v5352 = vadd.f32 %v5256, %v5304
        %v5353 = vadd.f32 %v5257, %v5304
        %v5354 = vadd.f32 %v5258, %v5308
        %v5355 = vadd.f32 %v5259, %v5308
        %v5356 = vadd.f32 %v5260, %v5312
        %v5357 = vadd.f32 %v5261, %v5312
        %v5358 = vadd.f32 %v5262, %v5316
        %v5359 = vadd.f32 %v5263, %v5316
        %v5360 = vadd.f32 %v5264, %v5320
        %v5361 = vadd.f32 %v5265, %v5320
        %v5362 = vadd.f32 %v5266, %v5324
        %v5363 = vadd.f32 %v5267, %v5324
        %v5364 = vadd.f32 %v5268, %v5328
        %v5365 = vadd.f32 %v5269, %v5328
        %v5366 = vadd.f32 %v5270, %v5332
        %v5367 = vadd.f32 %v5271, %v5332
        %v5368 = vadd.f32 %v5272, %v5336
        %v5369 = vadd.f32 %v5273, %v5336
        %s5370 = scalar_lea.vmem %s11, 16
        %v5371 = vld [vmem:[%s5370] sm:$0xf]
        %v5372 = vld [vmem:[%s5370 + $0x4] sm:$0xf]
        %v5373 = vld [vmem:[%s5370 + $0x8] sm:$0xf]
        %v5374 = vld [vmem:[%s5370 + $0xc] sm:$0xf]
        %v5375 = vpack.c.bf16 %v5340, %v5338
        %v5376 = vpack.c.bf16 %v5341, %v5339
        %v5377 = vpack.c.bf16 %v5344, %v5342
        %v5378 = vpack.c.bf16 %v5345, %v5343
        %v5379 = vpack.c.bf16 %v5348, %v5346
        %v5380 = vpack.c.bf16 %v5349, %v5347
        %v5381 = vpack.c.bf16 %v5352, %v5350
        %v5382 = vpack.c.bf16 %v5353, %v5351
        %v5383 = vpack.c.bf16 %v5356, %v5354
        %v5384 = vpack.c.bf16 %v5357, %v5355
        %v5385 = vpack.c.bf16 %v5360, %v5358
        %v5386 = vpack.c.bf16 %v5361, %v5359
        %v5387 = vpack.c.bf16 %v5364, %v5362
        %v5388 = vpack.c.bf16 %v5365, %v5363
        %v5389 = vpack.c.bf16 %v5368, %v5366
        %v5390 = vpack.c.bf16 %v5369, %v5367
        %v5395 = vunpack.c.l.b16 %v5371
        %v5396 = vunpack.c.l.b16 %v5372
        %v5397 = vunpack.c.l.b16 %v5373
        %v5398 = vunpack.c.l.b16 %v5374
        %v5399 = vpack.c.b16 %v5396, %v5395
        %v5400 = vpack.c.b16 %v5398, %v5397
        %5419 = vrot.lane.b32.xlu0 %v5375, 4
        %v5420 = vpop.permute.xlu0 %5419
        %5421 = vrot.lane.b32.xlu0 %v5376, 4
        %v5422 = vpop.permute.xlu0 %5421
        %5423 = vrot.lane.b32.xlu0 %v5377, 4
        %v5424 = vpop.permute.xlu0 %5423
        %5425 = vrot.lane.b32.xlu0 %v5378, 4
        %v5426 = vpop.permute.xlu0 %5425
        %5427 = vrot.lane.b32.xlu0 %v5379, 4
        %v5428 = vpop.permute.xlu0 %5427
        %5429 = vrot.lane.b32.xlu0 %v5380, 4
        %v5430 = vpop.permute.xlu0 %5429
        %5431 = vrot.lane.b32.xlu0 %v5381, 4
        %v5432 = vpop.permute.xlu0 %5431
        %5433 = vrot.lane.b32.xlu0 %v5382, 4
        %v5434 = vpop.permute.xlu0 %5433
        %5435 = vrot.lane.b32.xlu0 %v5383, 4
        %v5436 = vpop.permute.xlu0 %5435
        %5437 = vrot.lane.b32.xlu0 %v5384, 4
        %v5438 = vpop.permute.xlu0 %5437
        %5439 = vrot.lane.b32.xlu0 %v5385, 4
        %v5440 = vpop.permute.xlu0 %5439
        %5441 = vrot.lane.b32.xlu0 %v5386, 4
        %v5442 = vpop.permute.xlu0 %5441
        %5443 = vrot.lane.b32.xlu0 %v5387, 4
        %v5444 = vpop.permute.xlu0 %5443
        %5445 = vrot.lane.b32.xlu0 %v5388, 4
        %v5446 = vpop.permute.xlu0 %5445
        %5447 = vrot.lane.b32.xlu0 %v5389, 4
        %v5448 = vpop.permute.xlu0 %5447
        %5449 = vrot.lane.b32.xlu0 %v5390, 4
        %v5450 = vpop.permute.xlu0 %5449
        %vm5451 = vcmask 31744
        %v5452 = vsel %vm5451, %v5420, %v5422
        %v5453 = vsel %vm5451, %v5424, %v5426
        %v5454 = vsel %vm5451, %v5428, %v5430
        %v5455 = vsel %vm5451, %v5432, %v5434
        %v5456 = vsel %vm5451, %v5436, %v5438
        %v5457 = vsel %vm5451, %v5440, %v5442
        %v5458 = vsel %vm5451, %v5444, %v5446
        %v5459 = vsel %vm5451, %v5448, %v5450
        %5468 = vmatpush.bf16.msra.mxu0 %v5459
        %5469 = vmatpush.bf16.msra.mxu0 %v5458
        %5470 = vmatpush.bf16.msra.mxu0 %v5457
        %5471 = vmatpush.bf16.msra.mxu0 %v5456
        %5472 = vmatpush.bf16.msra.mxu0 %v5455
        %5473 = vmatpush.bf16.msra.mxu0 %v5454
        %5474 = vmatpush.bf16.msra.mxu0 %v5453
        %5475 = vmatpush.bf16.msra.mxu0 %v5452
        %5476 = vmatmul.bf16.gmra.mxu0 %v5399
        %v5477 = vpop.f32.mrf.mxu0
        %v5478 = vadd.f32 0.0, %v5477
        %v5479 = vpop.f32.mrf.mxu0
        %v5480 = vadd.f32 0.0, %v5479
        %5481 = vmatmul.bf16.gmra.mxu0 %v5400
        %v5482 = vpop.f32.mrf.mxu0
        %v5483 = vadd.f32 0.0, %v5482
        %v5484 = vpop.f32.mrf.mxu0
        %v5485 = vadd.f32 0.0, %v5484
        %5486 = vdwg.mxu0
        %v5487 = vadd.f32 %v3339, %v5478
        %v5488 = vadd.f32 %v3340, %v5480
        %v5489 = vadd.f32 %v3341, %v5483
        %v5490 = vadd.f32 %v3342, %v5485
        %s5491 = scalar_lea.vmem %s12, 32
        %v5492 = vld [vmem:[%s5491] sm:$0xff]
        %v5493 = vld [vmem:[%s5491 + $0x8] sm:$0xff]
        %v5494 = vld [vmem:[%s5491 + $0x10] sm:$0xff]
        %v5495 = vld [vmem:[%s5491 + $0x18] sm:$0xff]
        %5497 = vset.pattern.permute.xlu0 0
        %5498 = vperm.xlu0 %5497, %v5492
        %v5499 = vpop.permute.xlu0 %5498
        %5502 = vset.pattern.permute.xlu0 0
        %5503 = vperm.xlu0 %5502, %v5493
        %v5504 = vpop.permute.xlu0 %5503
        %5507 = vset.pattern.permute.xlu0 0
        %5508 = vperm.xlu0 %5507, %v5494
        %v5509 = vpop.permute.xlu0 %5508
        %5512 = vset.pattern.permute.xlu0 0
        %5513 = vperm.xlu0 %5512, %v5495
        %v5514 = vpop.permute.xlu0 %5513
        %v5516 = vadd.f32 %v5487, %v5499
        %v5517 = vadd.f32 %v5488, %v5504
        %v5518 = vadd.f32 %v5489, %v5509
        %v5519 = vadd.f32 %v5490, %v5514
        %5520 = vst.msk [vmem:[%s501] sm:$0xff] %vm568, %v5516
        %5521 = vst.msk [vmem:[%s501 + $0x8] sm:$0xff] %vm568, %v5517
        %5522 = vst.msk [vmem:[%s501 + $0x10] sm:$0xff] %vm568, %v5518
        %5523 = vst.msk [vmem:[%s501 + $0x18] sm:$0xff] %vm568, %v5519
        %p5524 = scmp.lt.s32.totalorder %s26, 1
        %s5525 = scalar_select %p5524, %s26, 1
        %s5526 = smul.addr %s5525, 4
        %s5527 = smul.addr %s5526, 8
        %s5528 = scalar_lea.vmem %s14, %s5527
        // Predicated region
        $region81: #{tasnet_forward.4} parent=75 // pred_check
          %p5529 = pneg %p348
        $region82: #{tasnet_forward.4} parent=75 // pred_check_branch
          %5531 = sbr.rel (%p5529) target = $region84
        $region83: #{tasnet_forward.4} parent=75 // pred_region
          _
        $region84: #{tasnet_forward.4} parent=75 // pred_fallthru
          _
      $region76: #{tasnet_forward.4} parent=5 // pred_fallthru
        _
      %p5532 = scmp.le.s32.totalorder 2, %s21
      // Predicated region
      $region85: #{tasnet_forward.4} parent=5 // pred_check
        %p5533 = pneg %p5532
      $region86: #{tasnet_forward.4} parent=5 // pred_check_branch
        %5535 = sbr.rel (%p5533) target = $region88
      $region87: #{tasnet_forward.4} parent=5 // pred_region
        %s5536 = ssub.s32 %s21, 2
        // Predicated region
        $region89: #{tasnet_forward.4} parent=87 // pred_check
          %p5537 = pneg %p354
        $region90: #{tasnet_forward.4} parent=87 // pred_check_branch
          %5539 = sbr.rel (%p5537) target = $region92
        $region91: #{tasnet_forward.4} parent=87 // pred_region
          %p5540 = scmp.lt.s32.totalorder %s27, 1
          %s5541 = scalar_select %p5540, %s27, 1
          %s5542 = smul.addr %s5541, 4
          %s5543 = smul.addr %s5542, 8
          %s5544 = scalar_lea.vmem %s14, %s5543
        $region92: #{tasnet_forward.4} parent=87 // pred_fallthru
          _
      $region88: #{tasnet_forward.4} parent=5 // pred_fallthru
        _
    $region6: #{tasnet_forward.4} parent=1 // loop_footer
      %s25 = sadd.s32 1, %s21
    $region7: #{tasnet_forward.4} parent=1 // loop_footer_branch
      %20 = sbr.rel target = $region3
    $region8: #{tasnet_forward.4} parent=1 // loop_exit
      _
    %5545 = vsyncpa [#allocation4], 1
    %s5546 = scalar_lea.sflag [#allocation4], 1
    %5547 = vsyncpa %s5546, 1

</llo_original>
